<compile_context>
chip_gen: v7x
topology: tpu7x:2x2x1
jax: 0.10.0
libtpu: 0.0.40
codegen_flags: <defaults>
</compile_context>

<pallas_src>
import functools

import jax
import jax.numpy as jnp
from jax.experimental import pallas as pl
from jax.experimental.pallas import tpu as pltpu

BN_EPS = 1e-5
TM_MAX = 128   # M-tile cap (matches the MXU on all generations)
SUB = 16       # sublane rounding safe for both f32 and bf16 tiles
LANE = 128

# Static architecture table: (name, kind, cin, cout, activation, has_bn)
LAYERS = (
    ("e1", "conv",  3,   64,  "leaky", False),
    ("e2", "conv",  64,  128, "leaky", True),
    ("e3", "conv",  128, 256, "leaky", True),
    ("m1", "conv",  256, 256, "relu",  True),
    ("m2", "convt", 256, 256, "relu",  True),
    ("d1", "convt", 256, 128, "relu",  True),
    ("d2", "convt", 128, 64,  "relu",  True),
    ("d3", "convt", 64,  3,   "tanh",  False),
)

# ConvTranspose2d(k=4, s=2, p=1) sub-pixel taps (per output parity):
#   parity 0 (even out row): y[2i]   = xp[i]  *w[3] + xp[i+1]*w[1]
#   parity 1 (odd  out row): y[2i+1] = xp[i+1]*w[2] + xp[i+2]*w[0]
# (xp = input zero-padded by 1; identical decomposition along width.)
_CT_TAPS = (((0, 3), (1, 1)),     # (padded-input offset, kernel tap index)
            ((1, 2), (2, 0)))


def _round_up(x, m):
    return ((x + m - 1) // m) * m


# ----------------------------------------------------------------------------
# Pallas kernel: (batched) GEMM + per-output-channel bias + activation
#   x_ref : (tm, Kp) bf16     w_ref : (Kp, tn) bf16 (BN scale pre-folded)
#   b_ref : (1, tn)  f32      o_ref : (tm, tn) out dtype
# Full K lives in VMEM, so each output tile is produced by one jnp.dot with an
# f32 accumulator and written exactly once (no k-loop, no scratch).
# ----------------------------------------------------------------------------
def _gemm_bias_act_kernel(x_ref, w_ref, b_ref, o_ref, *, act):
    y = jnp.dot(x_ref[...], w_ref[...], preferred_element_type=jnp.float32)
    y = y + b_ref[...]
    if act == "leaky":
        y = jnp.where(y > 0, y, 0.2 * y)
    elif act == "relu":
        y = jnp.maximum(y, 0.0)
    elif act == "tanh":
        y = jnp.tanh(y)
    o_ref[...] = y.astype(o_ref.dtype)


def gemm_bias_act(x_pmk, w_pkn, b_1n, act, out_dtype):
    """out[p] = act(x[p] @ w[p] + bias).  w/b are pre-packed (padded, bf16)."""
    P, M, K = x_pmk.shape
    _, Kp, Np = w_pkn.shape

    tm = min(TM_MAX, _round_up(M, SUB))        # per-layer M tile (tiny-M layers)
    tn = 256 if Np % 256 == 0 else 128          # 256-wide j tile for Cout=256
    Mp = _round_up(M, tm)

    xp = jnp.pad(x_pmk.astype(jnp.bfloat16),
                 ((0, 0), (0, Mp - M), (0, Kp - K)))

    out_isz = jnp.dtype(out_dtype).itemsize
    cost = pl.CostEstimate(
        flops=2 * P * Mp * Kp * Np,
        transcendentals=(P * Mp * Np) if act == "tanh" else 0,
        bytes_accessed=2 * (P * Mp * Kp + P * Kp * Np) + 4 * Np
                       + out_isz * P * Mp * Np)

    grid = (P, Mp // tm, Np // tn)
    out = pl.pallas_call(
        functools.partial(_gemm_bias_act_kernel, act=act),
        out_shape=jax.ShapeDtypeStruct((P, Mp, Np), out_dtype),
        grid_spec=pltpu.PrefetchScalarGridSpec(
            num_scalar_prefetch=0,
            grid=grid,
            in_specs=[
                pl.BlockSpec((None, tm, Kp), lambda p, i, j: (p, i, 0)),
                pl.BlockSpec((None, Kp, tn), lambda p, i, j: (p, 0, j)),
                pl.BlockSpec((1, tn), lambda p, i, j: (0, j)),
            ],
            out_specs=pl.BlockSpec((None, tm, tn), lambda p, i, j: (p, i, j)),
        ),
        compiler_params=pltpu.CompilerParams(
            # No reduction axis (full K resident) -> every axis independent.
            # TODO(synk): on v7x profile single-TC ("arbitrary") vs the 2-TC
            # split for these microsecond-scale grids.
            dimension_semantics=("parallel", "parallel", "parallel")),
        cost_estimate=cost,
    )(xp, w_pkn, b_1n)
    return out


# ----------------------------------------------------------------------------
# Conv2d lowered to im2col GEMM (gather glue fuses under jit; GEMM in Pallas)
# ----------------------------------------------------------------------------
def _im2col(x_nhwc, k, stride, pad):
    N, H, W, C = x_nhwc.shape
    xp = jnp.pad(x_nhwc, ((0, 0), (pad, pad), (pad, pad), (0, 0)))
    Ho = (H + 2 * pad - k) // stride + 1
    Wo = (W + 2 * pad - k) // stride + 1
    cols = []
    for di in range(k):
        for dj in range(k):
            cols.append(xp[:,
                           di:di + (Ho - 1) * stride + 1:stride,
                           dj:dj + (Wo - 1) * stride + 1:stride, :])
    p = jnp.stack(cols, axis=3)                      # (N, Ho, Wo, k*k, C) bf16
    return p.reshape(N * Ho * Wo, k * k * C), Ho, Wo


def conv2d(x_nhwc, w_packed, b_packed, cout, act, out_dtype,
           k=4, stride=2, pad=1):
    N = x_nhwc.shape[0]
    patches, Ho, Wo = _im2col(x_nhwc, k, stride, pad)
    y = gemm_bias_act(patches[None], w_packed, b_packed, act, out_dtype)
    M = N * Ho * Wo
    return y[0, :M, :cout].reshape(N, Ho, Wo, cout)


# ----------------------------------------------------------------------------
# ConvTranspose2d (k=4, s=2, p=1) via sub-pixel decomposition: 4 parity GEMMs
# ----------------------------------------------------------------------------
def conv_transpose2d(x_nhwc, w_packed, b_packed, cout, act, out_dtype):
    N, H, W, cin = x_nhwc.shape
    xp = jnp.pad(x_nhwc, ((0, 0), (1, 1), (1, 1), (0, 0)))
    patch_list = []
    for pi in range(2):
        for pj in range(2):
            cols = [xp[:, ro:ro + H, co:co + W, :]
                    for (ro, _) in _CT_TAPS[pi]
                    for (co, _) in _CT_TAPS[pj]]
            patch_list.append(
                jnp.stack(cols, axis=3).reshape(N * H * W, 4 * cin))
    patches = jnp.stack(patch_list, axis=0)            # (4, M, 4*cin) bf16
    y = gemm_bias_act(patches, w_packed, b_packed, act, out_dtype)
    M = N * H * W
    y = y[:, :M, :cout].reshape(2, 2, N, H, W, cout)
    # interleave parities: out[n, 2i+pi, 2j+pj, c] = y[pi, pj, n, i, j, c]
    y = jnp.transpose(y, (2, 3, 0, 4, 1, 5)).reshape(N, 2 * H, 2 * W, cout)
    return y


# ----------------------------------------------------------------------------
# One-time parameter packing: (K,N) layout, BN scale folded into the bf16
# weight, bias folded to one f32 row, K/N padded to tile multiples.
# ----------------------------------------------------------------------------
def pack_params(raw):
    packed = {}
    for name, kind, _, cout, _, has_bn in LAYERS:
        w = raw[name + "_w"].astype(jnp.float32)
        cb = raw[name + "_b"].astype(jnp.float32)
        if has_bn:
            bn = raw[name + "_bn"]
            scale = bn["gamma"] / jnp.sqrt(bn["var"] + BN_EPS)
            bias = (cb - bn["mean"]) * scale + bn["beta"]
        else:
            scale = jnp.ones((cout,), jnp.float32)
            bias = cb
        if kind == "conv":                    # w: (cout, cin, kh, kw)
            _, cin, kh, kw = w.shape
            K = kh * kw * cin
            wm = jnp.transpose(w, (2, 3, 1, 0)).reshape(K, cout)[None]  # (1,K,N)
        else:                                 # w: (cin, cout, kh, kw)
            cin = w.shape[0]
            K = 4 * cin
            mats = []
            for pi in range(2):
                for pj in range(2):
                    sub = [w[:, :, ki, kj]
                           for (_, ki) in _CT_TAPS[pi]
                           for (_, kj) in _CT_TAPS[pj]]
                    mats.append(jnp.stack(sub, axis=0).reshape(K, cout))
            wm = jnp.stack(mats, axis=0)                                # (4,K,N)
        wm = wm * scale[None, None, :]        # fold BN scale into the weight
        tn = min(256, _round_up(cout, 128))
        Kp = _round_up(K, LANE)
        Np = _round_up(cout, tn)
        packed[name] = dict(
            w=jnp.pad(wm, ((0, 0), (0, Kp - K), (0, Np - cout))
                      ).astype(jnp.bfloat16),
            b=jnp.pad(bias, (0, Np - cout)).astype(jnp.float32)[None, :],
        )
    return packed


# ----------------------------------------------------------------------------
# Generator forward (NCHW in / NCHW out, like the PyTorch module) -- jitted.
# ----------------------------------------------------------------------------
def _generator_forward_impl(packed, x_nchw):
    x = jnp.transpose(x_nchw, (0, 2, 3, 1)).astype(jnp.bfloat16)   # NHWC bf16
    for name, kind, _, cout, act, _ in LAYERS:
        lw, lb = packed[name]["w"], packed[name]["b"]
        out_dtype = jnp.float32 if act == "tanh" else jnp.bfloat16
        if kind == "conv":
            x = conv2d(x, lw, lb, cout, act, out_dtype)
        else:
            x = conv_transpose2d(x, lw, lb, cout, act, out_dtype)
    return jnp.transpose(x, (0, 3, 1, 2))                          # NCHW f32


generator_forward = jax.jit(_generator_forward_impl)


# ----------------------------------------------------------------------------
# Deterministic raw parameter construction (matches nn.Module shapes).
# He-style scaling keeps activations O(1) so the tanh output exercises its
# full range and the golden test below is meaningful.
# ----------------------------------------------------------------------------
def init_params(key):
    def conv_w(key, cout, cin, k=4):
        fan_in = cin * k * k
        return jax.random.normal(key, (cout, cin, k, k), jnp.float32) * jnp.sqrt(2.0 / fan_in)

    def convt_w(key, cin, cout, k=4, stride=2):
        fan_in_eff = cin * (k // stride) ** 2   # taps actually hitting an output
        return jax.random.normal(key, (cin, cout, k, k), jnp.float32) * jnp.sqrt(2.0 / fan_in_eff)

    def bn(key, c):
        k1, k2, k3, k4 = jax.random.split(key, 4)
        return dict(gamma=1.0 + 0.1 * jax.random.normal(k1, (c,), jnp.float32),
                    beta=0.1 * jax.random.normal(k2, (c,), jnp.float32),
                    mean=0.1 * jax.random.normal(k3, (c,), jnp.float32),
                    var=jnp.abs(1.0 + 0.1 * jax.random.normal(k4, (c,), jnp.float32)))

    keys = jax.random.split(key, 32)
    p = {}
    p["e1_w"] = conv_w(keys[0], 64, 3);    p["e1_b"] = 0.01 * jax.random.normal(keys[1], (64,))
    p["e2_w"] = conv_w(keys[2], 128, 64);  p["e2_b"] = 0.01 * jax.random.normal(keys[3], (128,))
    p["e2_bn"] = bn(keys[4], 128)
    p["e3_w"] = conv_w(keys[5], 256, 128); p["e3_b"] = 0.01 * jax.random.normal(keys[6], (256,))
    p["e3_bn"] = bn(keys[7], 256)
    p["m1_w"] = conv_w(keys[8], 256, 256); p["m1_b"] = 0.01 * jax.random.normal(keys[9], (256,))
    p["m1_bn"] = bn(keys[10], 256)
    p["m2_w"] = convt_w(keys[11], 256, 256); p["m2_b"] = 0.01 * jax.random.normal(keys[12], (256,))
    p["m2_bn"] = bn(keys[13], 256)
    p["d1_w"] = convt_w(keys[14], 256, 128); p["d1_b"] = 0.01 * jax.random.normal(keys[15], (128,))
    p["d1_bn"] = bn(keys[16], 128)
    p["d2_w"] = convt_w(keys[17], 128, 64);  p["d2_b"] = 0.01 * jax.random.normal(keys[18], (64,))
    p["d2_bn"] = bn(keys[19], 64)
    p["d3_w"] = convt_w(keys[20], 64, 3);    p["d3_b"] = 0.01 * jax.random.normal(keys[21], (3,))
    return p


# ----------------------------------------------------------------------------
# Pure-JAX f32 reference (XLA convs, eval-mode BatchNorm) for the golden test.
# ----------------------------------------------------------------------------
def reference_forward(raw, x_nchw):
    hp = jax.lax.Precision.HIGHEST
    x = jnp.transpose(x_nchw, (0, 2, 3, 1))

    def bn(v, p):
        return (v - p["mean"]) / jnp.sqrt(p["var"] + BN_EPS) * p["gamma"] + p["beta"]

    def conv(v, w, b):                 # w: (cout, cin, kh, kw)
        y = jax.lax.conv_general_dilated(
            v, jnp.transpose(w, (2, 3, 1, 0)), (2, 2), ((1, 1), (1, 1)),
            dimension_numbers=("NHWC", "HWIO", "NHWC"), precision=hp)
        return y + b

    def convt(v, w, b):                # w: (cin, cout, kh, kw)  (PyTorch semantics)
        wf = jnp.transpose(w[:, :, ::-1, ::-1], (2, 3, 0, 1))
        y = jax.lax.conv_general_dilated(
            v, wf, (1, 1), ((2, 2), (2, 2)), lhs_dilation=(2, 2),
            dimension_numbers=("NHWC", "HWIO", "NHWC"), precision=hp)
        return y + b

    leaky = lambda v: jnp.where(v > 0, v, 0.2 * v)
    x = leaky(conv(x, raw["e1_w"], raw["e1_b"]))
    x = leaky(bn(conv(x, raw["e2_w"], raw["e2_b"]), raw["e2_bn"]))
    x = leaky(bn(conv(x, raw["e3_w"], raw["e3_b"]), raw["e3_bn"]))
    x = jax.nn.relu(bn(conv(x, raw["m1_w"], raw["m1_b"]), raw["m1_bn"]))
    x = jax.nn.relu(bn(convt(x, raw["m2_w"], raw["m2_b"]), raw["m2_bn"]))
    x = jax.nn.relu(bn(convt(x, raw["d1_w"], raw["d1_b"]), raw["d1_bn"]))
    x = jax.nn.relu(bn(convt(x, raw["d2_w"], raw["d2_b"]), raw["d2_bn"]))
    x = jnp.tanh(convt(x, raw["d3_w"], raw["d3_b"]))
    return jnp.transpose(x, (0, 3, 1, 2))


if __name__ == "__main__":
    key = jax.random.PRNGKey(0)
    pkey, xkey = jax.random.split(key)
    raw = init_params(pkey)
    packed = jax.device_put(pack_params(raw))   # packed once, device-resident

    # 4 stride-2 downsamples (encoder + middle) need H, W >= 16
    x = jax.random.normal(xkey, (2, 3, 16, 16), jnp.float32)

    y = jax.block_until_ready(generator_forward(packed, x))

    assert y.shape == (2, 3, 16, 16), y.shape
    assert bool(jnp.all(jnp.isfinite(y)))
    assert bool(jnp.all(jnp.abs(y) <= 1.0 + 1e-6))   # tanh output range

    # Golden test vs. f32 reference. Tolerances cover bf16 drift over 8 layers;
    # a tap/parity/BN-fold bug would produce O(1) errors on tanh outputs.
    y_ref = reference_forward(raw, x)
    err = jnp.abs(y.astype(jnp.float32) - y_ref)
    assert float(err.max()) < 0.2, ("max err", float(err.max()))
    assert float(err.mean()) < 0.03, ("mean err", float(err.mean()))

    print("KERNEL_OK")
</pallas_src>

<mosaic_0001>
module attributes {stable_mosaic.version = 11 : i64} {
  func.func @_gemm_bias_act_kernel(%arg0: i32, %arg1: i32, %arg2: i32, %arg3: memref<1x128x128xbf16, #tpu.memory_space<vmem>>, %arg4: memref<1x128x128xbf16, #tpu.memory_space<vmem>>, %arg5: memref<1x128xf32, #tpu.memory_space<vmem>>, %arg6: memref<1x128x128xbf16, #tpu.memory_space<vmem>>) attributes {dimension_semantics = [#tpu.dimension_semantics<parallel>, #tpu.dimension_semantics<parallel>, #tpu.dimension_semantics<parallel>], iteration_bounds = array<i64: 1, 1, 1>, scalar_prefetch = 0 : i64, scratch_operands = 0 : i64, tpu.core_type = #tpu.core_type<tc>, window_params = [{transform_indices = @transform_0, window_bounds = array<i64: 1, 128, 128>}, {transform_indices = @transform_1, window_bounds = array<i64: 1, 128, 128>}, {transform_indices = @transform_2, window_bounds = array<i64: 1, 128>}, {transform_indices = @transform_3, window_bounds = array<i64: 1, 128, 128>}]} {
    %c0 = arith.constant 0 : index
    %c0_0 = arith.constant 0 : index
    %c0_1 = arith.constant 0 : index
    %0 = vector.load %arg3[%c0, %c0_0, %c0_1] : memref<1x128x128xbf16, #tpu.memory_space<vmem>>, vector<1x128x128xbf16>
    %1 = vector.shape_cast %0 : vector<1x128x128xbf16> to vector<128x128xbf16>
    %c0_2 = arith.constant 0 : index
    %c0_3 = arith.constant 0 : index
    %c0_4 = arith.constant 0 : index
    %2 = vector.load %arg4[%c0_2, %c0_3, %c0_4] : memref<1x128x128xbf16, #tpu.memory_space<vmem>>, vector<1x128x128xbf16>
    %3 = vector.shape_cast %2 : vector<1x128x128xbf16> to vector<128x128xbf16>
    %cst = arith.constant dense<0.000000e+00> : vector<128x128xf32>
    %4 = tpu.matmul %1, %3, %cst {dimension_numbers = #tpu.dot_dimension_numbers<[1], [0], [0], [1], [0, 0, 1, 1], [], []>} : vector<128x128xbf16>, vector<128x128xbf16>, vector<128x128xf32> -> vector<128x128xf32>
    %c0_5 = arith.constant 0 : index
    %c0_6 = arith.constant 0 : index
    %5 = vector.load %arg5[%c0_5, %c0_6] : memref<1x128xf32, #tpu.memory_space<vmem>>, vector<1x128xf32>
    %6 = vector.broadcast %5 : vector<1x128xf32> to vector<128x128xf32>
    %7 = arith.addf %4, %6 : vector<128x128xf32>
    %cst_7 = arith.constant 0.000000e+00 : f32
    %8 = vector.broadcast %cst_7 : f32 to vector<128x128xf32>
    %9 = arith.cmpf ogt, %7, %8 : vector<128x128xf32>
    %cst_8 = arith.constant 2.000000e-01 : f32
    %10 = vector.broadcast %cst_8 : f32 to vector<128x128xf32>
    %11 = arith.mulf %10, %7 : vector<128x128xf32>
    %12 = arith.select %9, %7, %11 : vector<128x128xi1>, vector<128x128xf32>
    %13 = arith.truncf %12 : vector<128x128xf32> to vector<128x128xbf16>
    %c0_9 = arith.constant 0 : index
    %c0_10 = arith.constant 0 : index
    %c0_11 = arith.constant 0 : index
    %14 = vector.load %arg6[%c0_9, %c0_10, %c0_11] : memref<1x128x128xbf16, #tpu.memory_space<vmem>>, vector<1x128x128xbf16>
    %15 = vector.shape_cast %14 : vector<1x128x128xbf16> to vector<128x128xbf16>
    %16 = vector.shape_cast %13 : vector<128x128xbf16> to vector<1x128x128xbf16>
    tpu.vector_store %arg6[%c0_9, %c0_10, %c0_11], %16 {strides = array<i32>} : memref<1x128x128xbf16, #tpu.memory_space<vmem>>, vector<1x128x128xbf16>,
    return
  }
  func.func @transform_0(%arg0: i32, %arg1: i32, %arg2: i32) -> (i32, i32, i32) {
    %c0_i32 = arith.constant 0 : i32
    %c0_i32_0 = arith.constant 0 : i32
    return %arg0, %arg1, %c0_i32 : i32, i32, i32
  }
  func.func @transform_1(%arg0: i32, %arg1: i32, %arg2: i32) -> (i32, i32, i32) {
    %c0_i32 = arith.constant 0 : i32
    %c0_i32_0 = arith.constant 0 : i32
    return %arg0, %c0_i32, %arg2 : i32, i32, i32
  }
  func.func @transform_2(%arg0: i32, %arg1: i32, %arg2: i32) -> (i32, i32) {
    %c0_i32 = arith.constant 0 : i32
    %c0_i32_0 = arith.constant 0 : i32
    return %c0_i32, %arg2 : i32, i32
  }
  func.func @transform_3(%arg0: i32, %arg1: i32, %arg2: i32) -> (i32, i32, i32) {
    %c0_i32 = arith.constant 0 : i32
    return %arg0, %arg1, %arg2 : i32, i32, i32
  }
}

module attributes {stable_mosaic.version = 11 : i64} {
  func.func @_gemm_bias_act_kernel(%arg0: i32, %arg1: i32, %arg2: i32, %arg3: memref<1x32x1024xbf16, #tpu.memory_space<vmem>>, %arg4: memref<1x1024x128xbf16, #tpu.memory_space<vmem>>, %arg5: memref<1x128xf32, #tpu.memory_space<vmem>>, %arg6: memref<1x32x128xbf16, #tpu.memory_space<vmem>>) attributes {dimension_semantics = [#tpu.dimension_semantics<parallel>, #tpu.dimension_semantics<parallel>, #tpu.dimension_semantics<parallel>], iteration_bounds = array<i64: 1, 1, 1>, scalar_prefetch = 0 : i64, scratch_operands = 0 : i64, tpu.core_type = #tpu.core_type<tc>, window_params = [{transform_indices = @transform_0, window_bounds = array<i64: 1, 32, 1024>}, {transform_indices = @transform_1, window_bounds = array<i64: 1, 1024, 128>}, {transform_indices = @transform_2, window_bounds = array<i64: 1, 128>}, {transform_indices = @transform_3, window_bounds = array<i64: 1, 32, 128>}]} {
    %c0 = arith.constant 0 : index
    %c0_0 = arith.constant 0 : index
    %c0_1 = arith.constant 0 : index
    %0 = vector.load %arg3[%c0, %c0_0, %c0_1] : memref<1x32x1024xbf16, #tpu.memory_space<vmem>>, vector<1x32x1024xbf16>
    %1 = vector.shape_cast %0 : vector<1x32x1024xbf16> to vector<32x1024xbf16>
    %c0_2 = arith.constant 0 : index
    %c0_3 = arith.constant 0 : index
    %c0_4 = arith.constant 0 : index
    %2 = vector.load %arg4[%c0_2, %c0_3, %c0_4] : memref<1x1024x128xbf16, #tpu.memory_space<vmem>>, vector<1x1024x128xbf16>
    %3 = vector.shape_cast %2 : vector<1x1024x128xbf16> to vector<1024x128xbf16>
    %cst = arith.constant dense<0.000000e+00> : vector<32x128xf32>
    %4 = tpu.matmul %1, %3, %cst {dimension_numbers = #tpu.dot_dimension_numbers<[1], [0], [0], [1], [0, 0, 1, 1], [], []>} : vector<32x1024xbf16>, vector<1024x128xbf16>, vector<32x128xf32> -> vector<32x128xf32>
    %c0_5 = arith.constant 0 : index
    %c0_6 = arith.constant 0 : index
    %5 = vector.load %arg5[%c0_5, %c0_6] : memref<1x128xf32, #tpu.memory_space<vmem>>, vector<1x128xf32>
    %6 = vector.broadcast %5 : vector<1x128xf32> to vector<32x128xf32>
    %7 = arith.addf %4, %6 : vector<32x128xf32>
    %cst_7 = arith.constant 0.000000e+00 : f32
    %8 = vector.broadcast %cst_7 : f32 to vector<32x128xf32>
    %9 = arith.cmpf ogt, %7, %8 : vector<32x128xf32>
    %cst_8 = arith.constant 2.000000e-01 : f32
    %10 = vector.broadcast %cst_8 : f32 to vector<32x128xf32>
    %11 = arith.mulf %10, %7 : vector<32x128xf32>
    %12 = arith.select %9, %7, %11 : vector<32x128xi1>, vector<32x128xf32>
    %13 = arith.truncf %12 : vector<32x128xf32> to vector<32x128xbf16>
    %c0_9 = arith.constant 0 : index
    %c0_10 = arith.constant 0 : index
    %c0_11 = arith.constant 0 : index
    %14 = vector.load %arg6[%c0_9, %c0_10, %c0_11] : memref<1x32x128xbf16, #tpu.memory_space<vmem>>, vector<1x32x128xbf16>
    %15 = vector.shape_cast %14 : vector<1x32x128xbf16> to vector<32x128xbf16>
    %16 = vector.shape_cast %13 : vector<32x128xbf16> to vector<1x32x128xbf16>
    tpu.vector_store %arg6[%c0_9, %c0_10, %c0_11], %16 {strides = array<i32>} : memref<1x32x128xbf16, #tpu.memory_space<vmem>>, vector<1x32x128xbf16>,
    return
  }
  func.func @transform_0(%arg0: i32, %arg1: i32, %arg2: i32) -> (i32, i32, i32) {
    %c0_i32 = arith.constant 0 : i32
    %c0_i32_0 = arith.constant 0 : i32
    return %arg0, %arg1, %c0_i32 : i32, i32, i32
  }
  func.func @transform_1(%arg0: i32, %arg1: i32, %arg2: i32) -> (i32, i32, i32) {
    %c0_i32 = arith.constant 0 : i32
    %c0_i32_0 = arith.constant 0 : i32
    return %arg0, %c0_i32, %arg2 : i32, i32, i32
  }
  func.func @transform_2(%arg0: i32, %arg1: i32, %arg2: i32) -> (i32, i32) {
    %c0_i32 = arith.constant 0 : i32
    %c0_i32_0 = arith.constant 0 : i32
    return %c0_i32, %arg2 : i32, i32
  }
  func.func @transform_3(%arg0: i32, %arg1: i32, %arg2: i32) -> (i32, i32, i32) {
    %c0_i32 = arith.constant 0 : i32
    return %arg0, %arg1, %arg2 : i32, i32, i32
  }
}

module attributes {stable_mosaic.version = 11 : i64} {
  func.func @_gemm_bias_act_kernel(%arg0: i32, %arg1: i32, %arg2: i32, %arg3: memref<1x16x2048xbf16, #tpu.memory_space<vmem>>, %arg4: memref<1x2048x256xbf16, #tpu.memory_space<vmem>>, %arg5: memref<1x256xf32, #tpu.memory_space<vmem>>, %arg6: memref<1x16x256xbf16, #tpu.memory_space<vmem>>) attributes {dimension_semantics = [#tpu.dimension_semantics<parallel>, #tpu.dimension_semantics<parallel>, #tpu.dimension_semantics<parallel>], iteration_bounds = array<i64: 1, 1, 1>, scalar_prefetch = 0 : i64, scratch_operands = 0 : i64, tpu.core_type = #tpu.core_type<tc>, window_params = [{transform_indices = @transform_0, window_bounds = array<i64: 1, 16, 2048>}, {transform_indices = @transform_1, window_bounds = array<i64: 1, 2048, 256>}, {transform_indices = @transform_2, window_bounds = array<i64: 1, 256>}, {transform_indices = @transform_3, window_bounds = array<i64: 1, 16, 256>}]} {
    %c0 = arith.constant 0 : index
    %c0_0 = arith.constant 0 : index
    %c0_1 = arith.constant 0 : index
    %0 = vector.load %arg3[%c0, %c0_0, %c0_1] : memref<1x16x2048xbf16, #tpu.memory_space<vmem>>, vector<1x16x2048xbf16>
    %1 = vector.shape_cast %0 : vector<1x16x2048xbf16> to vector<16x2048xbf16>
    %c0_2 = arith.constant 0 : index
    %c0_3 = arith.constant 0 : index
    %c0_4 = arith.constant 0 : index
    %2 = vector.load %arg4[%c0_2, %c0_3, %c0_4] : memref<1x2048x256xbf16, #tpu.memory_space<vmem>>, vector<1x2048x256xbf16>
    %3 = vector.shape_cast %2 : vector<1x2048x256xbf16> to vector<2048x256xbf16>
    %cst = arith.constant dense<0.000000e+00> : vector<16x256xf32>
    %4 = tpu.matmul %1, %3, %cst {dimension_numbers = #tpu.dot_dimension_numbers<[1], [0], [0], [1], [0, 0, 1, 1], [], []>} : vector<16x2048xbf16>, vector<2048x256xbf16>, vector<16x256xf32> -> vector<16x256xf32>
    %c0_5 = arith.constant 0 : index
    %c0_6 = arith.constant 0 : index
    %5 = vector.load %arg5[%c0_5, %c0_6] : memref<1x256xf32, #tpu.memory_space<vmem>>, vector<1x256xf32>
    %6 = vector.broadcast %5 : vector<1x256xf32> to vector<16x256xf32>
    %7 = arith.addf %4, %6 : vector<16x256xf32>
    %cst_7 = arith.constant 0.000000e+00 : f32
    %8 = vector.broadcast %cst_7 : f32 to vector<16x256xf32>
    %9 = arith.cmpf ogt, %7, %8 : vector<16x256xf32>
    %cst_8 = arith.constant 2.000000e-01 : f32
    %10 = vector.broadcast %cst_8 : f32 to vector<16x256xf32>
    %11 = arith.mulf %10, %7 : vector<16x256xf32>
    %12 = arith.select %9, %7, %11 : vector<16x256xi1>, vector<16x256xf32>
    %13 = arith.truncf %12 : vector<16x256xf32> to vector<16x256xbf16>
    %c0_9 = arith.constant 0 : index
    %c0_10 = arith.constant 0 : index
    %c0_11 = arith.constant 0 : index
    %14 = vector.load %arg6[%c0_9, %c0_10, %c0_11] : memref<1x16x256xbf16, #tpu.memory_space<vmem>>, vector<1x16x256xbf16>
    %15 = vector.shape_cast %14 : vector<1x16x256xbf16> to vector<16x256xbf16>
    %16 = vector.shape_cast %13 : vector<16x256xbf16> to vector<1x16x256xbf16>
    tpu.vector_store %arg6[%c0_9, %c0_10, %c0_11], %16 {strides = array<i32>} : memref<1x16x256xbf16, #tpu.memory_space<vmem>>, vector<1x16x256xbf16>,
    return
  }
  func.func @transform_0(%arg0: i32, %arg1: i32, %arg2: i32) -> (i32, i32, i32) {
    %c0_i32 = arith.constant 0 : i32
    %c0_i32_0 = arith.constant 0 : i32
    return %arg0, %arg1, %c0_i32 : i32, i32, i32
  }
  func.func @transform_1(%arg0: i32, %arg1: i32, %arg2: i32) -> (i32, i32, i32) {
    %c0_i32 = arith.constant 0 : i32
    %c0_i32_0 = arith.constant 0 : i32
    return %arg0, %c0_i32, %arg2 : i32, i32, i32
  }
  func.func @transform_2(%arg0: i32, %arg1: i32, %arg2: i32) -> (i32, i32) {
    %c0_i32 = arith.constant 0 : i32
    %c0_i32_0 = arith.constant 0 : i32
    return %c0_i32, %arg2 : i32, i32
  }
  func.func @transform_3(%arg0: i32, %arg1: i32, %arg2: i32) -> (i32, i32, i32) {
    %c0_i32 = arith.constant 0 : i32
    return %arg0, %arg1, %arg2 : i32, i32, i32
  }
}

module attributes {stable_mosaic.version = 11 : i64} {
  func.func @_gemm_bias_act_kernel(%arg0: i32, %arg1: i32, %arg2: i32, %arg3: memref<1x16x4096xbf16, #tpu.memory_space<vmem>>, %arg4: memref<1x4096x256xbf16, #tpu.memory_space<vmem>>, %arg5: memref<1x256xf32, #tpu.memory_space<vmem>>, %arg6: memref<1x16x256xbf16, #tpu.memory_space<vmem>>) attributes {dimension_semantics = [#tpu.dimension_semantics<parallel>, #tpu.dimension_semantics<parallel>, #tpu.dimension_semantics<parallel>], iteration_bounds = array<i64: 1, 1, 1>, scalar_prefetch = 0 : i64, scratch_operands = 0 : i64, tpu.core_type = #tpu.core_type<tc>, window_params = [{transform_indices = @transform_0, window_bounds = array<i64: 1, 16, 4096>}, {transform_indices = @transform_1, window_bounds = array<i64: 1, 4096, 256>}, {transform_indices = @transform_2, window_bounds = array<i64: 1, 256>}, {transform_indices = @transform_3, window_bounds = array<i64: 1, 16, 256>}]} {
    %c0 = arith.constant 0 : index
    %c0_0 = arith.constant 0 : index
    %c0_1 = arith.constant 0 : index
    %0 = vector.load %arg3[%c0, %c0_0, %c0_1] : memref<1x16x4096xbf16, #tpu.memory_space<vmem>>, vector<1x16x4096xbf16>
    %1 = vector.shape_cast %0 : vector<1x16x4096xbf16> to vector<16x4096xbf16>
    %c0_2 = arith.constant 0 : index
    %c0_3 = arith.constant 0 : index
    %c0_4 = arith.constant 0 : index
    %2 = vector.load %arg4[%c0_2, %c0_3, %c0_4] : memref<1x4096x256xbf16, #tpu.memory_space<vmem>>, vector<1x4096x256xbf16>
    %3 = vector.shape_cast %2 : vector<1x4096x256xbf16> to vector<4096x256xbf16>
    %cst = arith.constant dense<0.000000e+00> : vector<16x256xf32>
    %4 = tpu.matmul %1, %3, %cst {dimension_numbers = #tpu.dot_dimension_numbers<[1], [0], [0], [1], [0, 0, 1, 1], [], []>} : vector<16x4096xbf16>, vector<4096x256xbf16>, vector<16x256xf32> -> vector<16x256xf32>
    %c0_5 = arith.constant 0 : index
    %c0_6 = arith.constant 0 : index
    %5 = vector.load %arg5[%c0_5, %c0_6] : memref<1x256xf32, #tpu.memory_space<vmem>>, vector<1x256xf32>
    %6 = vector.broadcast %5 : vector<1x256xf32> to vector<16x256xf32>
    %7 = arith.addf %4, %6 : vector<16x256xf32>
    %cst_7 = arith.constant 0.000000e+00 : f32
    %8 = vector.broadcast %cst_7 : f32 to vector<16x256xf32>
    %9 = arith.maximumf %7, %8 : vector<16x256xf32>
    %10 = arith.truncf %9 : vector<16x256xf32> to vector<16x256xbf16>
    %c0_8 = arith.constant 0 : index
    %c0_9 = arith.constant 0 : index
    %c0_10 = arith.constant 0 : index
    %11 = vector.load %arg6[%c0_8, %c0_9, %c0_10] : memref<1x16x256xbf16, #tpu.memory_space<vmem>>, vector<1x16x256xbf16>
    %12 = vector.shape_cast %11 : vector<1x16x256xbf16> to vector<16x256xbf16>
    %13 = vector.shape_cast %10 : vector<16x256xbf16> to vector<1x16x256xbf16>
    tpu.vector_store %arg6[%c0_8, %c0_9, %c0_10], %13 {strides = array<i32>} : memref<1x16x256xbf16, #tpu.memory_space<vmem>>, vector<1x16x256xbf16>,
    return
  }
  func.func @transform_0(%arg0: i32, %arg1: i32, %arg2: i32) -> (i32, i32, i32) {
    %c0_i32 = arith.constant 0 : i32
    %c0_i32_0 = arith.constant 0 : i32
    return %arg0, %arg1, %c0_i32 : i32, i32, i32
  }
  func.func @transform_1(%arg0: i32, %arg1: i32, %arg2: i32) -> (i32, i32, i32) {
    %c0_i32 = arith.constant 0 : i32
    %c0_i32_0 = arith.constant 0 : i32
    return %arg0, %c0_i32, %arg2 : i32, i32, i32
  }
  func.func @transform_2(%arg0: i32, %arg1: i32, %arg2: i32) -> (i32, i32) {
    %c0_i32 = arith.constant 0 : i32
    %c0_i32_0 = arith.constant 0 : i32
    return %c0_i32, %arg2 : i32, i32
  }
  func.func @transform_3(%arg0: i32, %arg1: i32, %arg2: i32) -> (i32, i32, i32) {
    %c0_i32 = arith.constant 0 : i32
    return %arg0, %arg1, %arg2 : i32, i32, i32
  }
}

module attributes {stable_mosaic.version = 11 : i64} {
  func.func @_gemm_bias_act_kernel(%arg0: i32, %arg1: i32, %arg2: i32, %arg3: memref<1x16x1024xbf16, #tpu.memory_space<vmem>>, %arg4: memref<1x1024x256xbf16, #tpu.memory_space<vmem>>, %arg5: memref<1x256xf32, #tpu.memory_space<vmem>>, %arg6: memref<1x16x256xbf16, #tpu.memory_space<vmem>>) attributes {dimension_semantics = [#tpu.dimension_semantics<parallel>, #tpu.dimension_semantics<parallel>, #tpu.dimension_semantics<parallel>], iteration_bounds = array<i64: 4, 1, 1>, scalar_prefetch = 0 : i64, scratch_operands = 0 : i64, tpu.core_type = #tpu.core_type<tc>, window_params = [{transform_indices = @transform_0, window_bounds = array<i64: 1, 16, 1024>}, {transform_indices = @transform_1, window_bounds = array<i64: 1, 1024, 256>}, {transform_indices = @transform_2, window_bounds = array<i64: 1, 256>}, {transform_indices = @transform_3, window_bounds = array<i64: 1, 16, 256>}]} {
    %c0 = arith.constant 0 : index
    %c0_0 = arith.constant 0 : index
    %c0_1 = arith.constant 0 : index
    %0 = vector.load %arg3[%c0, %c0_0, %c0_1] : memref<1x16x1024xbf16, #tpu.memory_space<vmem>>, vector<1x16x1024xbf16>
    %1 = vector.shape_cast %0 : vector<1x16x1024xbf16> to vector<16x1024xbf16>
    %c0_2 = arith.constant 0 : index
    %c0_3 = arith.constant 0 : index
    %c0_4 = arith.constant 0 : index
    %2 = vector.load %arg4[%c0_2, %c0_3, %c0_4] : memref<1x1024x256xbf16, #tpu.memory_space<vmem>>, vector<1x1024x256xbf16>
    %3 = vector.shape_cast %2 : vector<1x1024x256xbf16> to vector<1024x256xbf16>
    %cst = arith.constant dense<0.000000e+00> : vector<16x256xf32>
    %4 = tpu.matmul %1, %3, %cst {dimension_numbers = #tpu.dot_dimension_numbers<[1], [0], [0], [1], [0, 0, 1, 1], [], []>} : vector<16x1024xbf16>, vector<1024x256xbf16>, vector<16x256xf32> -> vector<16x256xf32>
    %c0_5 = arith.constant 0 : index
    %c0_6 = arith.constant 0 : index
    %5 = vector.load %arg5[%c0_5, %c0_6] : memref<1x256xf32, #tpu.memory_space<vmem>>, vector<1x256xf32>
    %6 = vector.broadcast %5 : vector<1x256xf32> to vector<16x256xf32>
    %7 = arith.addf %4, %6 : vector<16x256xf32>
    %cst_7 = arith.constant 0.000000e+00 : f32
    %8 = vector.broadcast %cst_7 : f32 to vector<16x256xf32>
    %9 = arith.maximumf %7, %8 : vector<16x256xf32>
    %10 = arith.truncf %9 : vector<16x256xf32> to vector<16x256xbf16>
    %c0_8 = arith.constant 0 : index
    %c0_9 = arith.constant 0 : index
    %c0_10 = arith.constant 0 : index
    %11 = vector.load %arg6[%c0_8, %c0_9, %c0_10] : memref<1x16x256xbf16, #tpu.memory_space<vmem>>, vector<1x16x256xbf16>
    %12 = vector.shape_cast %11 : vector<1x16x256xbf16> to vector<16x256xbf16>
    %13 = vector.shape_cast %10 : vector<16x256xbf16> to vector<1x16x256xbf16>
    tpu.vector_store %arg6[%c0_8, %c0_9, %c0_10], %13 {strides = array<i32>} : memref<1x16x256xbf16, #tpu.memory_space<vmem>>, vector<1x16x256xbf16>,
    return
  }
  func.func @transform_0(%arg0: i32, %arg1: i32, %arg2: i32) -> (i32, i32, i32) {
    %c0_i32 = arith.constant 0 : i32
    %c0_i32_0 = arith.constant 0 : i32
    return %arg0, %arg1, %c0_i32 : i32, i32, i32
  }
  func.func @transform_1(%arg0: i32, %arg1: i32, %arg2: i32) -> (i32, i32, i32) {
    %c0_i32 = arith.constant 0 : i32
    %c0_i32_0 = arith.constant 0 : i32
    return %arg0, %c0_i32, %arg2 : i32, i32, i32
  }
  func.func @transform_2(%arg0: i32, %arg1: i32, %arg2: i32) -> (i32, i32) {
    %c0_i32 = arith.constant 0 : i32
    %c0_i32_0 = arith.constant 0 : i32
    return %c0_i32, %arg2 : i32, i32
  }
  func.func @transform_3(%arg0: i32, %arg1: i32, %arg2: i32) -> (i32, i32, i32) {
    %c0_i32 = arith.constant 0 : i32
    return %arg0, %arg1, %arg2 : i32, i32, i32
  }
}

module attributes {stable_mosaic.version = 11 : i64} {
  func.func @_gemm_bias_act_kernel(%arg0: i32, %arg1: i32, %arg2: i32, %arg3: memref<1x16x1024xbf16, #tpu.memory_space<vmem>>, %arg4: memref<1x1024x128xbf16, #tpu.memory_space<vmem>>, %arg5: memref<1x128xf32, #tpu.memory_space<vmem>>, %arg6: memref<1x16x128xbf16, #tpu.memory_space<vmem>>) attributes {dimension_semantics = [#tpu.dimension_semantics<parallel>, #tpu.dimension_semantics<parallel>, #tpu.dimension_semantics<parallel>], iteration_bounds = array<i64: 4, 1, 1>, scalar_prefetch = 0 : i64, scratch_operands = 0 : i64, tpu.core_type = #tpu.core_type<tc>, window_params = [{transform_indices = @transform_0, window_bounds = array<i64: 1, 16, 1024>}, {transform_indices = @transform_1, window_bounds = array<i64: 1, 1024, 128>}, {transform_indices = @transform_2, window_bounds = array<i64: 1, 128>}, {transform_indices = @transform_3, window_bounds = array<i64: 1, 16, 128>}]} {
    %c0 = arith.constant 0 : index
    %c0_0 = arith.constant 0 : index
    %c0_1 = arith.constant 0 : index
    %0 = vector.load %arg3[%c0, %c0_0, %c0_1] : memref<1x16x1024xbf16, #tpu.memory_space<vmem>>, vector<1x16x1024xbf16>
    %1 = vector.shape_cast %0 : vector<1x16x1024xbf16> to vector<16x1024xbf16>
    %c0_2 = arith.constant 0 : index
    %c0_3 = arith.constant 0 : index
    %c0_4 = arith.constant 0 : index
    %2 = vector.load %arg4[%c0_2, %c0_3, %c0_4] : memref<1x1024x128xbf16, #tpu.memory_space<vmem>>, vector<1x1024x128xbf16>
    %3 = vector.shape_cast %2 : vector<1x1024x128xbf16> to vector<1024x128xbf16>
    %cst = arith.constant dense<0.000000e+00> : vector<16x128xf32>
    %4 = tpu.matmul %1, %3, %cst {dimension_numbers = #tpu.dot_dimension_numbers<[1], [0], [0], [1], [0, 0, 1, 1], [], []>} : vector<16x1024xbf16>, vector<1024x128xbf16>, vector<16x128xf32> -> vector<16x128xf32>
    %c0_5 = arith.constant 0 : index
    %c0_6 = arith.constant 0 : index
    %5 = vector.load %arg5[%c0_5, %c0_6] : memref<1x128xf32, #tpu.memory_space<vmem>>, vector<1x128xf32>
    %6 = vector.broadcast %5 : vector<1x128xf32> to vector<16x128xf32>
    %7 = arith.addf %4, %6 : vector<16x128xf32>
    %cst_7 = arith.constant 0.000000e+00 : f32
    %8 = vector.broadcast %cst_7 : f32 to vector<16x128xf32>
    %9 = arith.maximumf %7, %8 : vector<16x128xf32>
    %10 = arith.truncf %9 : vector<16x128xf32> to vector<16x128xbf16>
    %c0_8 = arith.constant 0 : index
    %c0_9 = arith.constant 0 : index
    %c0_10 = arith.constant 0 : index
    %11 = vector.load %arg6[%c0_8, %c0_9, %c0_10] : memref<1x16x128xbf16, #tpu.memory_space<vmem>>, vector<1x16x128xbf16>
    %12 = vector.shape_cast %11 : vector<1x16x128xbf16> to vector<16x128xbf16>
    %13 = vector.shape_cast %10 : vector<16x128xbf16> to vector<1x16x128xbf16>
    tpu.vector_store %arg6[%c0_8, %c0_9, %c0_10], %13 {strides = array<i32>} : memref<1x16x128xbf16, #tpu.memory_space<vmem>>, vector<1x16x128xbf16>,
    return
  }
  func.func @transform_0(%arg0: i32, %arg1: i32, %arg2: i32) -> (i32, i32, i32) {
    %c0_i32 = arith.constant 0 : i32
    %c0_i32_0 = arith.constant 0 : i32
    return %arg0, %arg1, %c0_i32 : i32, i32, i32
  }
  func.func @transform_1(%arg0: i32, %arg1: i32, %arg2: i32) -> (i32, i32, i32) {
    %c0_i32 = arith.constant 0 : i32
    %c0_i32_0 = arith.constant 0 : i32
    return %arg0, %c0_i32, %arg2 : i32, i32, i32
  }
  func.func @transform_2(%arg0: i32, %arg1: i32, %arg2: i32) -> (i32, i32) {
    %c0_i32 = arith.constant 0 : i32
    %c0_i32_0 = arith.constant 0 : i32
    return %c0_i32, %arg2 : i32, i32
  }
  func.func @transform_3(%arg0: i32, %arg1: i32, %arg2: i32) -> (i32, i32, i32) {
    %c0_i32 = arith.constant 0 : i32
    return %arg0, %arg1, %arg2 : i32, i32, i32
  }
}

module attributes {stable_mosaic.version = 11 : i64} {
  func.func @_gemm_bias_act_kernel(%arg0: i32, %arg1: i32, %arg2: i32, %arg3: memref<1x32x512xbf16, #tpu.memory_space<vmem>>, %arg4: memref<1x512x128xbf16, #tpu.memory_space<vmem>>, %arg5: memref<1x128xf32, #tpu.memory_space<vmem>>, %arg6: memref<1x32x128xbf16, #tpu.memory_space<vmem>>) attributes {dimension_semantics = [#tpu.dimension_semantics<parallel>, #tpu.dimension_semantics<parallel>, #tpu.dimension_semantics<parallel>], iteration_bounds = array<i64: 4, 1, 1>, scalar_prefetch = 0 : i64, scratch_operands = 0 : i64, tpu.core_type = #tpu.core_type<tc>, window_params = [{transform_indices = @transform_0, window_bounds = array<i64: 1, 32, 512>}, {transform_indices = @transform_1, window_bounds = array<i64: 1, 512, 128>}, {transform_indices = @transform_2, window_bounds = array<i64: 1, 128>}, {transform_indices = @transform_3, window_bounds = array<i64: 1, 32, 128>}]} {
    %c0 = arith.constant 0 : index
    %c0_0 = arith.constant 0 : index
    %c0_1 = arith.constant 0 : index
    %0 = vector.load %arg3[%c0, %c0_0, %c0_1] : memref<1x32x512xbf16, #tpu.memory_space<vmem>>, vector<1x32x512xbf16>
    %1 = vector.shape_cast %0 : vector<1x32x512xbf16> to vector<32x512xbf16>
    %c0_2 = arith.constant 0 : index
    %c0_3 = arith.constant 0 : index
    %c0_4 = arith.constant 0 : index
    %2 = vector.load %arg4[%c0_2, %c0_3, %c0_4] : memref<1x512x128xbf16, #tpu.memory_space<vmem>>, vector<1x512x128xbf16>
    %3 = vector.shape_cast %2 : vector<1x512x128xbf16> to vector<512x128xbf16>
    %cst = arith.constant dense<0.000000e+00> : vector<32x128xf32>
    %4 = tpu.matmul %1, %3, %cst {dimension_numbers = #tpu.dot_dimension_numbers<[1], [0], [0], [1], [0, 0, 1, 1], [], []>} : vector<32x512xbf16>, vector<512x128xbf16>, vector<32x128xf32> -> vector<32x128xf32>
    %c0_5 = arith.constant 0 : index
    %c0_6 = arith.constant 0 : index
    %5 = vector.load %arg5[%c0_5, %c0_6] : memref<1x128xf32, #tpu.memory_space<vmem>>, vector<1x128xf32>
    %6 = vector.broadcast %5 : vector<1x128xf32> to vector<32x128xf32>
    %7 = arith.addf %4, %6 : vector<32x128xf32>
    %cst_7 = arith.constant 0.000000e+00 : f32
    %8 = vector.broadcast %cst_7 : f32 to vector<32x128xf32>
    %9 = arith.maximumf %7, %8 : vector<32x128xf32>
    %10 = arith.truncf %9 : vector<32x128xf32> to vector<32x128xbf16>
    %c0_8 = arith.constant 0 : index
    %c0_9 = arith.constant 0 : index
    %c0_10 = arith.constant 0 : index
    %11 = vector.load %arg6[%c0_8, %c0_9, %c0_10] : memref<1x32x128xbf16, #tpu.memory_space<vmem>>, vector<1x32x128xbf16>
    %12 = vector.shape_cast %11 : vector<1x32x128xbf16> to vector<32x128xbf16>
    %13 = vector.shape_cast %10 : vector<32x128xbf16> to vector<1x32x128xbf16>
    tpu.vector_store %arg6[%c0_8, %c0_9, %c0_10], %13 {strides = array<i32>} : memref<1x32x128xbf16, #tpu.memory_space<vmem>>, vector<1x32x128xbf16>,
    return
  }
  func.func @transform_0(%arg0: i32, %arg1: i32, %arg2: i32) -> (i32, i32, i32) {
    %c0_i32 = arith.constant 0 : i32
    %c0_i32_0 = arith.constant 0 : i32
    return %arg0, %arg1, %c0_i32 : i32, i32, i32
  }
  func.func @transform_1(%arg0: i32, %arg1: i32, %arg2: i32) -> (i32, i32, i32) {
    %c0_i32 = arith.constant 0 : i32
    %c0_i32_0 = arith.constant 0 : i32
    return %arg0, %c0_i32, %arg2 : i32, i32, i32
  }
  func.func @transform_2(%arg0: i32, %arg1: i32, %arg2: i32) -> (i32, i32) {
    %c0_i32 = arith.constant 0 : i32
    %c0_i32_0 = arith.constant 0 : i32
    return %c0_i32, %arg2 : i32, i32
  }
  func.func @transform_3(%arg0: i32, %arg1: i32, %arg2: i32) -> (i32, i32, i32) {
    %c0_i32 = arith.constant 0 : i32
    return %arg0, %arg1, %arg2 : i32, i32, i32
  }
}

module attributes {stable_mosaic.version = 11 : i64} {
  func.func @_gemm_bias_act_kernel(%arg0: i32, %arg1: i32, %arg2: i32, %arg3: memref<1x128x256xbf16, #tpu.memory_space<vmem>>, %arg4: memref<1x256x128xbf16, #tpu.memory_space<vmem>>, %arg5: memref<1x128xf32, #tpu.memory_space<vmem>>, %arg6: memref<1x128x128xf32, #tpu.memory_space<vmem>>) attributes {dimension_semantics = [#tpu.dimension_semantics<parallel>, #tpu.dimension_semantics<parallel>, #tpu.dimension_semantics<parallel>], iteration_bounds = array<i64: 4, 1, 1>, scalar_prefetch = 0 : i64, scratch_operands = 0 : i64, tpu.core_type = #tpu.core_type<tc>, window_params = [{transform_indices = @transform_0, window_bounds = array<i64: 1, 128, 256>}, {transform_indices = @transform_1, window_bounds = array<i64: 1, 256, 128>}, {transform_indices = @transform_2, window_bounds = array<i64: 1, 128>}, {transform_indices = @transform_3, window_bounds = array<i64: 1, 128, 128>}]} {
    %c0 = arith.constant 0 : index
    %c0_0 = arith.constant 0 : index
    %c0_1 = arith.constant 0 : index
    %0 = vector.load %arg3[%c0, %c0_0, %c0_1] : memref<1x128x256xbf16, #tpu.memory_space<vmem>>, vector<1x128x256xbf16>
    %1 = vector.shape_cast %0 : vector<1x128x256xbf16> to vector<128x256xbf16>
    %c0_2 = arith.constant 0 : index
    %c0_3 = arith.constant 0 : index
    %c0_4 = arith.constant 0 : index
    %2 = vector.load %arg4[%c0_2, %c0_3, %c0_4] : memref<1x256x128xbf16, #tpu.memory_space<vmem>>, vector<1x256x128xbf16>
    %3 = vector.shape_cast %2 : vector<1x256x128xbf16> to vector<256x128xbf16>
    %cst = arith.constant dense<0.000000e+00> : vector<128x128xf32>
    %4 = tpu.matmul %1, %3, %cst {dimension_numbers = #tpu.dot_dimension_numbers<[1], [0], [0], [1], [0, 0, 1, 1], [], []>} : vector<128x256xbf16>, vector<256x128xbf16>, vector<128x128xf32> -> vector<128x128xf32>
    %c0_5 = arith.constant 0 : index
    %c0_6 = arith.constant 0 : index
    %5 = vector.load %arg5[%c0_5, %c0_6] : memref<1x128xf32, #tpu.memory_space<vmem>>, vector<1x128xf32>
    %6 = vector.broadcast %5 : vector<1x128xf32> to vector<128x128xf32>
    %7 = arith.addf %4, %6 : vector<128x128xf32>
    %8 = math.tanh %7 : vector<128x128xf32>
    %c0_7 = arith.constant 0 : index
    %c0_8 = arith.constant 0 : index
    %c0_9 = arith.constant 0 : index
    %9 = vector.load %arg6[%c0_7, %c0_8, %c0_9] : memref<1x128x128xf32, #tpu.memory_space<vmem>>, vector<1x128x128xf32>
    %10 = vector.shape_cast %9 : vector<1x128x128xf32> to vector<128x128xf32>
    %11 = vector.shape_cast %8 : vector<128x128xf32> to vector<1x128x128xf32>
    tpu.vector_store %arg6[%c0_7, %c0_8, %c0_9], %11 {strides = array<i32>} : memref<1x128x128xf32, #tpu.memory_space<vmem>>, vector<1x128x128xf32>,
    return
  }
  func.func @transform_0(%arg0: i32, %arg1: i32, %arg2: i32) -> (i32, i32, i32) {
    %c0_i32 = arith.constant 0 : i32
    %c0_i32_0 = arith.constant 0 : i32
    return %arg0, %arg1, %c0_i32 : i32, i32, i32
  }
  func.func @transform_1(%arg0: i32, %arg1: i32, %arg2: i32) -> (i32, i32, i32) {
    %c0_i32 = arith.constant 0 : i32
    %c0_i32_0 = arith.constant 0 : i32
    return %arg0, %c0_i32, %arg2 : i32, i32, i32
  }
  func.func @transform_2(%arg0: i32, %arg1: i32, %arg2: i32) -> (i32, i32) {
    %c0_i32 = arith.constant 0 : i32
    %c0_i32_0 = arith.constant 0 : i32
    return %c0_i32, %arg2 : i32, i32
  }
  func.func @transform_3(%arg0: i32, %arg1: i32, %arg2: i32) -> (i32, i32, i32) {
    %c0_i32 = arith.constant 0 : i32
    return %arg0, %arg1, %arg2 : i32, i32, i32
  }
}

</mosaic_0001>

<llo_original>
// kernel: _generator_forward_impl.8
$region0: #{_generator_forward_impl.8}
  #allocation0 [shape = 'u32[]', space=smem, size = 0x4, offset = 0x4, fixed_abs, tag = 'smem constant byte address 0x4 - core index']
  #allocation1 [shape = 'u32[144,128]{1,0:T(1,128)}', space=vmem, size = 0x12000, scoped, tag = 'internal scratch']
  %s0 = inlined_call_operand.vmem [shape: bf16[1,128,128], index: 0, kind: input, shape index: {}]
  %s1 = inlined_call_operand.hbm [shape: bf16[1,128,128], index: 1, kind: input, shape index: {}]
  %s2 = inlined_call_operand.hbm [shape: f32[1,128], index: 2, kind: input, shape index: {}]
  %s3 = inlined_call_operand.vmem [shape: bf16[1,128,128], index: 3, kind: output, shape index: {}]
  %s4 = sld [smem:[#allocation0]]
  $region30: #{_generator_forward_impl.8} parent=0
    _
  %s6 = ssub.s32 1, %s4
  %s7 = scalar_select 0, %s6, %s4
  $region1: #{_generator_forward_impl.8} parent=0
    #allocation2 [shape = 'u8[32768]{0}', space=vmem, size = 0x8000, scoped, tag = 'input window, operand 1, single buffered']
    #allocation3 [shape = 's32[1]{0}', space=sflag, size = 0x4, scoped, tag = 'scoped memory for _generator_forward_impl.8']
    #allocation4 [shape = 'u8[512]{0}', space=vmem, size = 0x400, scoped, tag = 'input window, operand 2, single buffered']
    #allocation5 [shape = 's32[1]{0}', space=sflag, size = 0x4, scoped, tag = 'scoped memory for _generator_forward_impl.8']
    %8 = vsyncpa [#allocation3], 0
    %9 = vsyncpa [#allocation5], 0
    // Predicated region
    $region2: #{_generator_forward_impl.8} parent=1 // pred_check
      _
    $region3: #{_generator_forward_impl.8} parent=1 // pred_check_branch
      %11 = sbr.rel (0) target = $region5
    $region4: #{_generator_forward_impl.8} parent=1 // pred_region
      _
    $region5: #{_generator_forward_impl.8} parent=1 // pred_fallthru
      _
    // Predicated region
    $region6: #{_generator_forward_impl.8} parent=1 // pred_check
      _
    $region7: #{_generator_forward_impl.8} parent=1 // pred_check_branch
      %13 = sbr.rel (0) target = $region9
    $region8: #{_generator_forward_impl.8} parent=1 // pred_region
      %s15 = ssub.s32 1024, 1024
      %16 = vsyncadd [#allocation3], %s15
      %s17 = sshll.u32 [#allocation2], 4
      %s18 = int_to_ptr.vmem [resolvable:$true] %s17
      %23 = dma.hbm_to_vmem [thread:$0]  %s1, 1024, %s18, [#allocation3], 64, 64, 4
    $region9: #{_generator_forward_impl.8} parent=1 // pred_fallthru
      _
    // Predicated region
    $region10: #{_generator_forward_impl.8} parent=1 // pred_check
      _
    $region11: #{_generator_forward_impl.8} parent=1 // pred_check_branch
      %25 = sbr.rel (0) target = $region13
    $region12: #{_generator_forward_impl.8} parent=1 // pred_region
      %s27 = ssub.s32 16, 16
      %28 = vsyncadd [#allocation5], %s27
      %s30 = sshll.u32 [#allocation4], 4
      %s31 = int_to_ptr.vmem [resolvable:$true] %s30
      %33 = dma.hbm_to_vmem [thread:$0]  %s2, 16, %s31, [#allocation5]
    $region13: #{_generator_forward_impl.8} parent=1 // pred_fallthru
      _
    // Predicated region
    $region14: #{_generator_forward_impl.8} parent=1 // pred_check
      _
    $region15: #{_generator_forward_impl.8} parent=1 // pred_check_branch
      %35 = sbr.rel (0) target = $region17
    $region16: #{_generator_forward_impl.8} parent=1 // pred_region
      %36 = dma.done [#allocation3], 1024
    $region17: #{_generator_forward_impl.8} parent=1 // pred_fallthru
      _
    // Predicated region
    $region18: #{_generator_forward_impl.8} parent=1 // pred_check
      _
    $region19: #{_generator_forward_impl.8} parent=1 // pred_check_branch
      %38 = sbr.rel (0) target = $region21
    $region20: #{_generator_forward_impl.8} parent=1 // pred_region
      %39 = dma.done [#allocation5], 16
    $region21: #{_generator_forward_impl.8} parent=1 // pred_fallthru
      _
    %v41 = vld [vmem:[%s0] sm:$0xf]
    %v42 = vld [vmem:[%s0 + $0x4] sm:$0xf]
    %v43 = vld [vmem:[%s0 + $0x8] sm:$0xf]
    %v44 = vld [vmem:[%s0 + $0xc] sm:$0xf]
    %v45 = vld [vmem:[%s0 + $0x10] sm:$0xf]
    %v46 = vld [vmem:[%s0 + $0x14] sm:$0xf]
    %v47 = vld [vmem:[%s0 + $0x18] sm:$0xf]
    %v48 = vld [vmem:[%s0 + $0x1c] sm:$0xf]
    %v49 = vld [vmem:[%s0 + $0x20] sm:$0xf]
    %v50 = vld [vmem:[%s0 + $0x24] sm:$0xf]
    %v51 = vld [vmem:[%s0 + $0x28] sm:$0xf]
    %v52 = vld [vmem:[%s0 + $0x2c] sm:$0xf]
    %v53 = vld [vmem:[%s0 + $0x30] sm:$0xf]
    %v54 = vld [vmem:[%s0 + $0x34] sm:$0xf]
    %v55 = vld [vmem:[%s0 + $0x38] sm:$0xf]
    %v56 = vld [vmem:[%s0 + $0x3c] sm:$0xf]
    %v57 = vld [vmem:[#allocation2] sm:$0xf]
    %v58 = vld [vmem:[#allocation2 + $0x4] sm:$0xf]
    %v59 = vld [vmem:[#allocation2 + $0x8] sm:$0xf]
    %v60 = vld [vmem:[#allocation2 + $0xc] sm:$0xf]
    %v61 = vld [vmem:[#allocation2 + $0x10] sm:$0xf]
    %v62 = vld [vmem:[#allocation2 + $0x14] sm:$0xf]
    %v63 = vld [vmem:[#allocation2 + $0x18] sm:$0xf]
    %v64 = vld [vmem:[#allocation2 + $0x1c] sm:$0xf]
    %v65 = vld [vmem:[#allocation2 + $0x20] sm:$0xf]
    %v66 = vld [vmem:[#allocation2 + $0x24] sm:$0xf]
    %v67 = vld [vmem:[#allocation2 + $0x28] sm:$0xf]
    %v68 = vld [vmem:[#allocation2 + $0x2c] sm:$0xf]
    %v69 = vld [vmem:[#allocation2 + $0x30] sm:$0xf]
    %v70 = vld [vmem:[#allocation2 + $0x34] sm:$0xf]
    %v71 = vld [vmem:[#allocation2 + $0x38] sm:$0xf]
    %v72 = vld [vmem:[#allocation2 + $0x3c] sm:$0xf]
    %v73 = vld [vmem:[#allocation4] sm:$0x1]
    %v75 = vlaneseq
    %v76 = vshrl.u32 %v75, 7
    %v77 = vsub.s32 0, %v76
    %v78 = vrot.slane %v73, %v77
    %v96 = vunpack.c.l.b16 %v41
    %v97 = vunpack.c.l.b16 %v42
    %v98 = vunpack.c.l.b16 %v43
    %v99 = vunpack.c.l.b16 %v44
    %v100 = vunpack.c.l.b16 %v45
    %v101 = vunpack.c.l.b16 %v46
    %v102 = vunpack.c.l.b16 %v47
    %v103 = vunpack.c.l.b16 %v48
    %v104 = vunpack.c.l.b16 %v49
    %v105 = vunpack.c.l.b16 %v50
    %v106 = vunpack.c.l.b16 %v51
    %v107 = vunpack.c.l.b16 %v52
    %v108 = vunpack.c.l.b16 %v53
    %v109 = vunpack.c.l.b16 %v54
    %v110 = vunpack.c.l.b16 %v55
    %v111 = vunpack.c.l.b16 %v56
    %v112 = vpack.c.b16 %v97, %v96
    %v113 = vpack.c.b16 %v99, %v98
    %v114 = vpack.c.b16 %v101, %v100
    %v115 = vpack.c.b16 %v103, %v102
    %v116 = vpack.c.b16 %v105, %v104
    %v117 = vpack.c.b16 %v107, %v106
    %v118 = vpack.c.b16 %v109, %v108
    %v119 = vpack.c.b16 %v111, %v110
    %v144 = vunpack.c.l.b16 %v57
    %v145 = vunpack.c.l.b16 %v58
    %v146 = vunpack.c.l.b16 %v59
    %v147 = vunpack.c.l.b16 %v60
    %v148 = vunpack.c.l.b16 %v61
    %v149 = vunpack.c.l.b16 %v62
    %v150 = vunpack.c.l.b16 %v63
    %v151 = vunpack.c.l.b16 %v64
    %v152 = vunpack.c.l.b16 %v65
    %v153 = vunpack.c.l.b16 %v66
    %v154 = vunpack.c.l.b16 %v67
    %v155 = vunpack.c.l.b16 %v68
    %v156 = vunpack.c.l.b16 %v69
    %v157 = vunpack.c.l.b16 %v70
    %v158 = vunpack.c.l.b16 %v71
    %v159 = vunpack.c.l.b16 %v72
    %v160 = vpack.c.b16 %v145, %v144
    %v161 = vpack.c.b16 %v147, %v146
    %v162 = vpack.c.b16 %v149, %v148
    %v163 = vpack.c.b16 %v151, %v150
    %v164 = vpack.c.b16 %v153, %v152
    %v165 = vpack.c.b16 %v155, %v154
    %v166 = vpack.c.b16 %v157, %v156
    %v167 = vpack.c.b16 %v159, %v158
    %176 = vmatprep.subr.bf16.mxu0 0
    %177 = vmatpush1.bf16.msra.mxu0 %v160
    %178 = vmatprep.subr.bf16.mxu0 0
    %179 = vmatpush1.bf16.msra.mxu0 %v161
    %180 = vmatprep.subr.bf16.mxu0 0
    %181 = vmatpush1.bf16.msra.mxu0 %v162
    %182 = vmatprep.subr.bf16.mxu0 0
    %183 = vmatpush1.bf16.msra.mxu0 %v163
    %184 = vmatprep.subr.bf16.mxu0 0
    %185 = vmatpush1.bf16.msra.mxu0 %v164
    %186 = vmatprep.subr.bf16.mxu0 0
    %187 = vmatpush1.bf16.msra.mxu0 %v165
    %188 = vmatprep.subr.bf16.mxu0 0
    %189 = vmatpush1.bf16.msra.mxu0 %v166
    %190 = vmatprep.subr.bf16.mxu0 0
    %191 = vmatpush1.bf16.msra.mxu0 %v167
    %192 = vmatprep.subr.bf16.mxu0 0
    %193 = vmatpush1.bf16.msra.mxu0 0
    %194 = vmatprep.subr.bf16.mxu0 0
    %195 = vmatpush1.bf16.msra.mxu0 0
    %196 = vmatprep.subr.bf16.mxu0 0
    %197 = vmatpush1.bf16.msra.mxu0 0
    %198 = vmatprep.subr.bf16.mxu0 0
    %199 = vmatpush1.bf16.msra.mxu0 0
    %200 = vmatprep.subr.bf16.mxu0 0
    %201 = vmatpush1.bf16.msra.mxu0 0
    %202 = vmatprep.subr.bf16.mxu0 0
    %203 = vmatpush1.bf16.msra.mxu0 0
    %204 = vmatprep.subr.bf16.mxu0 0
    %205 = vmatpush1.bf16.msra.mxu0 0
    %206 = vmatprep.subr.bf16.mxu0 0
    %207 = vmatpush1.bf16.msra.mxu0 0
    %208 = vmatprep.mubr.bf16.mxu0 0
    %209 = vmatmul.mubr.bf16.gmra.mrb[0].mxu0 %v112
    %v210 = vpop.f32.mrb[0].mxu0
    %v211 = vadd.f32 %v78, %v210
    %v212 = vpop.f32.mrb[0].mxu0
    %v213 = vpop.f32.mrb[0].mxu0
    %v214 = vadd.f32 %v78, %v213
    %v215 = vpop.f32.mrb[0].mxu0
    %216 = vmatprep.mubr.bf16.mxu0 0
    %217 = vmatmul.mubr.bf16.gmra.mrb[0].mxu0 %v113
    %v218 = vpop.f32.mrb[0].mxu0
    %v219 = vadd.f32 %v78, %v218
    %v220 = vpop.f32.mrb[0].mxu0
    %v221 = vpop.f32.mrb[0].mxu0
    %v222 = vadd.f32 %v78, %v221
    %v223 = vpop.f32.mrb[0].mxu0
    %224 = vmatprep.mubr.bf16.mxu0 0
    %225 = vmatmul.mubr.bf16.gmra.mrb[0].mxu0 %v114
    %v226 = vpop.f32.mrb[0].mxu0
    %v227 = vadd.f32 %v78, %v226
    %v228 = vpop.f32.mrb[0].mxu0
    %v229 = vpop.f32.mrb[0].mxu0
    %v230 = vadd.f32 %v78, %v229
    %v231 = vpop.f32.mrb[0].mxu0
    %232 = vmatprep.mubr.bf16.mxu0 0
    %233 = vmatmul.mubr.bf16.gmra.mrb[0].mxu0 %v115
    %v234 = vpop.f32.mrb[0].mxu0
    %v235 = vadd.f32 %v78, %v234
    %v236 = vpop.f32.mrb[0].mxu0
    %v237 = vpop.f32.mrb[0].mxu0
    %v238 = vadd.f32 %v78, %v237
    %v239 = vpop.f32.mrb[0].mxu0
    %240 = vmatprep.mubr.bf16.mxu0 0
    %241 = vmatmul.mubr.bf16.gmra.mrb[0].mxu0 %v116
    %v242 = vpop.f32.mrb[0].mxu0
    %v243 = vadd.f32 %v78, %v242
    %v244 = vpop.f32.mrb[0].mxu0
    %v245 = vpop.f32.mrb[0].mxu0
    %v246 = vadd.f32 %v78, %v245
    %v247 = vpop.f32.mrb[0].mxu0
    %248 = vmatprep.mubr.bf16.mxu0 0
    %249 = vmatmul.mubr.bf16.gmra.mrb[0].mxu0 %v117
    %v250 = vpop.f32.mrb[0].mxu0
    %v251 = vadd.f32 %v78, %v250
    %v252 = vpop.f32.mrb[0].mxu0
    %v253 = vpop.f32.mrb[0].mxu0
    %v254 = vadd.f32 %v78, %v253
    %v255 = vpop.f32.mrb[0].mxu0
    %256 = vmatprep.mubr.bf16.mxu0 0
    %257 = vmatmul.mubr.bf16.gmra.mrb[0].mxu0 %v118
    %v258 = vpop.f32.mrb[0].mxu0
    %v259 = vadd.f32 %v78, %v258
    %v260 = vpop.f32.mrb[0].mxu0
    %v261 = vpop.f32.mrb[0].mxu0
    %v262 = vadd.f32 %v78, %v261
    %v263 = vpop.f32.mrb[0].mxu0
    %264 = vmatprep.mubr.bf16.mxu0 0
    %265 = vmatmul.mubr.bf16.gmra.mrb[0].mxu0 %v119
    %v266 = vpop.f32.mrb[0].mxu0
    %v267 = vadd.f32 %v78, %v266
    %v268 = vpop.f32.mrb[0].mxu0
    %v269 = vpop.f32.mrb[0].mxu0
    %v270 = vadd.f32 %v78, %v269
    %v271 = vpop.f32.mrb[0].mxu0
    %272 = vdwg.mxu0
    %vm273 = vcmp.gt.f32.partialorder %v211, 0.0
    %vm274 = vcmp.gt.f32.partialorder %v214, 0.0
    %vm275 = vcmp.gt.f32.partialorder %v219, 0.0
    %vm276 = vcmp.gt.f32.partialorder %v222, 0.0
    %vm277 = vcmp.gt.f32.partialorder %v227, 0.0
    %vm278 = vcmp.gt.f32.partialorder %v230, 0.0
    %vm279 = vcmp.gt.f32.partialorder %v235, 0.0
    %vm280 = vcmp.gt.f32.partialorder %v238, 0.0
    %vm281 = vcmp.gt.f32.partialorder %v243, 0.0
    %vm282 = vcmp.gt.f32.partialorder %v246, 0.0
    %vm283 = vcmp.gt.f32.partialorder %v251, 0.0
    %vm284 = vcmp.gt.f32.partialorder %v254, 0.0
    %vm285 = vcmp.gt.f32.partialorder %v259, 0.0
    %vm286 = vcmp.gt.f32.partialorder %v262, 0.0
    %vm287 = vcmp.gt.f32.partialorder %v267, 0.0
    %vm288 = vcmp.gt.f32.partialorder %v270, 0.0
    %v289 = vmul.f32 %v211, 0.2
    %v290 = vmul.f32 %v214, 0.2
    %v291 = vmul.f32 %v219, 0.2
    %v292 = vmul.f32 %v222, 0.2
    %v293 = vmul.f32 %v227, 0.2
    %v294 = vmul.f32 %v230, 0.2
    %v295 = vmul.f32 %v235, 0.2
    %v296 = vmul.f32 %v238, 0.2
    %v297 = vmul.f32 %v243, 0.2
    %v298 = vmul.f32 %v246, 0.2
    %v299 = vmul.f32 %v251, 0.2
    %v300 = vmul.f32 %v254, 0.2
    %v301 = vmul.f32 %v259, 0.2
    %v302 = vmul.f32 %v262, 0.2
    %v303 = vmul.f32 %v267, 0.2
    %v304 = vmul.f32 %v270, 0.2
    %v305 = vsel %vm273, %v211, %v289
    %v306 = vsel %vm274, %v214, %v290
    %v307 = vsel %vm275, %v219, %v291
    %v308 = vsel %vm276, %v222, %v292
    %v309 = vsel %vm277, %v227, %v293
    %v310 = vsel %vm278, %v230, %v294
    %v311 = vsel %vm279, %v235, %v295
    %v312 = vsel %vm280, %v238, %v296
    %v313 = vsel %vm281, %v243, %v297
    %v314 = vsel %vm282, %v246, %v298
    %v315 = vsel %vm283, %v251, %v299
    %v316 = vsel %vm284, %v254, %v300
    %v317 = vsel %vm285, %v259, %v301
    %v318 = vsel %vm286, %v262, %v302
    %v319 = vsel %vm287, %v267, %v303
    %v320 = vsel %vm288, %v270, %v304
    %v321 = vpack.c.bf16 %v306, %v305
    %v322 = vpack.c.bf16 %v308, %v307
    %v323 = vpack.c.bf16 %v310, %v309
    %v324 = vpack.c.bf16 %v312, %v311
    %v325 = vpack.c.bf16 %v314, %v313
    %v326 = vpack.c.bf16 %v316, %v315
    %v327 = vpack.c.bf16 %v318, %v317
    %v328 = vpack.c.bf16 %v320, %v319
    %v337 = vunpack.c.l.b16 %v321
    %v338 = vunpack.c.h.b16 %v321
    %v339 = vunpack.c.l.b16 %v322
    %v340 = vunpack.c.h.b16 %v322
    %v341 = vunpack.c.l.b16 %v323
    %v342 = vunpack.c.h.b16 %v323
    %v343 = vunpack.c.l.b16 %v324
    %v344 = vunpack.c.h.b16 %v324
    %v345 = vunpack.c.l.b16 %v325
    %v346 = vunpack.c.h.b16 %v325
    %v347 = vunpack.c.l.b16 %v326
    %v348 = vunpack.c.h.b16 %v326
    %v349 = vunpack.c.l.b16 %v327
    %v350 = vunpack.c.h.b16 %v327
    %v351 = vunpack.c.l.b16 %v328
    %v352 = vunpack.c.h.b16 %v328
    %v353 = vpack.c.b16 %v337, %v337
    %v354 = vpack.c.b16 %v338, %v338
    %v355 = vpack.c.b16 %v339, %v339
    %v356 = vpack.c.b16 %v340, %v340
    %v357 = vpack.c.b16 %v341, %v341
    %v358 = vpack.c.b16 %v342, %v342
    %v359 = vpack.c.b16 %v343, %v343
    %v360 = vpack.c.b16 %v344, %v344
    %v361 = vpack.c.b16 %v345, %v345
    %v362 = vpack.c.b16 %v346, %v346
    %v363 = vpack.c.b16 %v347, %v347
    %v364 = vpack.c.b16 %v348, %v348
    %v365 = vpack.c.b16 %v349, %v349
    %v366 = vpack.c.b16 %v350, %v350
    %v367 = vpack.c.b16 %v351, %v351
    %v368 = vpack.c.b16 %v352, %v352
    %385 = vst [vmem:[%s3] sm:$0xf] %v353
    %386 = vst [vmem:[%s3 + $0x4] sm:$0xf] %v354
    %387 = vst [vmem:[%s3 + $0x8] sm:$0xf] %v355
    %388 = vst [vmem:[%s3 + $0xc] sm:$0xf] %v356
    %389 = vst [vmem:[%s3 + $0x10] sm:$0xf] %v357
    %390 = vst [vmem:[%s3 + $0x14] sm:$0xf] %v358
    %391 = vst [vmem:[%s3 + $0x18] sm:$0xf] %v359
    %392 = vst [vmem:[%s3 + $0x1c] sm:$0xf] %v360
    %393 = vst [vmem:[%s3 + $0x20] sm:$0xf] %v361
    %394 = vst [vmem:[%s3 + $0x24] sm:$0xf] %v362
    %395 = vst [vmem:[%s3 + $0x28] sm:$0xf] %v363
    %396 = vst [vmem:[%s3 + $0x2c] sm:$0xf] %v364
    %397 = vst [vmem:[%s3 + $0x30] sm:$0xf] %v365
    %398 = vst [vmem:[%s3 + $0x34] sm:$0xf] %v366
    %399 = vst [vmem:[%s3 + $0x38] sm:$0xf] %v367
    %400 = vst [vmem:[%s3 + $0x3c] sm:$0xf] %v368
    // Predicated region
    $region22: #{_generator_forward_impl.8} parent=1 // pred_check
      _
    $region23: #{_generator_forward_impl.8} parent=1 // pred_check_branch
      %402 = sbr.rel (0) target = $region25
    $region24: #{_generator_forward_impl.8} parent=1 // pred_region
      _
    $region25: #{_generator_forward_impl.8} parent=1 // pred_fallthru
      _
    // Predicated region
    $region26: #{_generator_forward_impl.8} parent=1 // pred_check
      _
    $region27: #{_generator_forward_impl.8} parent=1 // pred_check_branch
      %404 = sbr.rel (0) target = $region29
    $region28: #{_generator_forward_impl.8} parent=1 // pred_region
      _
    $region29: #{_generator_forward_impl.8} parent=1 // pred_fallthru
      _
    %405 = vsyncpa [#allocation3], 1
    %406 = vsyncpa [#allocation5], 1

// kernel: _generator_forward_impl.9
$region0: #{_generator_forward_impl.9}
  #allocation0 [shape = 'u32[]', space=smem, size = 0x4, offset = 0x4, fixed_abs, tag = 'smem constant byte address 0x4 - core index']
  #allocation1 [shape = 'u32[144,128]{1,0:T(1,128)}', space=vmem, size = 0x12000, scoped, tag = 'internal scratch']
  %s0 = inlined_call_operand.vmem [shape: bf16[1,32,1024], index: 0, kind: input, shape index: {}]
  %s1 = inlined_call_operand.vmem [shape: bf16[1,1024,128], index: 1, kind: input, shape index: {}]
  %s2 = inlined_call_operand.vmem [shape: f32[1,128], index: 2, kind: input, shape index: {}]
  %s3 = inlined_call_operand.vmem [shape: bf16[1,32,128], index: 3, kind: output, shape index: {}]
  %s4 = sld [smem:[#allocation0]]
  $region22: #{_generator_forward_impl.9} parent=0
    _
  %s6 = ssub.s32 1, %s4
  %s7 = scalar_select 0, %s6, %s4
  // Predicated region
  $region2: #{_generator_forward_impl.9} parent=0 // pred_check
    _
  $region3: #{_generator_forward_impl.9} parent=0 // pred_check_branch
    %9 = sbr.rel (0) target = $region5
  $region4: #{_generator_forward_impl.9} parent=0 // pred_region
    _
  $region5: #{_generator_forward_impl.9} parent=0 // pred_fallthru
    _
  // Predicated region
  $region6: #{_generator_forward_impl.9} parent=0 // pred_check
    _
  $region7: #{_generator_forward_impl.9} parent=0 // pred_check_branch
    %11 = sbr.rel (0) target = $region9
  $region8: #{_generator_forward_impl.9} parent=0 // pred_region
    _
  $region9: #{_generator_forward_impl.9} parent=0 // pred_fallthru
    _
  // Predicated region
  $region10: #{_generator_forward_impl.9} parent=0 // pred_check
    _
  $region11: #{_generator_forward_impl.9} parent=0 // pred_check_branch
    %13 = sbr.rel (0) target = $region13
  $region12: #{_generator_forward_impl.9} parent=0 // pred_region
    _
  $region13: #{_generator_forward_impl.9} parent=0 // pred_fallthru
    _
  %v15 = vld [vmem:[%s0] sm:$0xff]
  %v16 = vld [vmem:[%s0 + $0x8] sm:$0xff]
  %v17 = vld [vmem:[%s0 + $0x10] sm:$0xff]
  %v18 = vld [vmem:[%s0 + $0x18] sm:$0xff]
  %v19 = vld [vmem:[%s0 + $0x20] sm:$0xff]
  %v20 = vld [vmem:[%s0 + $0x28] sm:$0xff]
  %v21 = vld [vmem:[%s0 + $0x30] sm:$0xff]
  %v22 = vld [vmem:[%s0 + $0x38] sm:$0xff]
  %v23 = vld [vmem:[%s0 + $0x40] sm:$0xff]
  %v24 = vld [vmem:[%s0 + $0x48] sm:$0xff]
  %v25 = vld [vmem:[%s0 + $0x50] sm:$0xff]
  %v26 = vld [vmem:[%s0 + $0x58] sm:$0xff]
  %v27 = vld [vmem:[%s0 + $0x60] sm:$0xff]
  %v28 = vld [vmem:[%s0 + $0x68] sm:$0xff]
  %v29 = vld [vmem:[%s0 + $0x70] sm:$0xff]
  %v30 = vld [vmem:[%s0 + $0x78] sm:$0xff]
  %v31 = vld [vmem:[%s1] sm:$0xf]
  %v32 = vld [vmem:[%s1 + $0x4] sm:$0xf]
  %v33 = vld [vmem:[%s1 + $0x8] sm:$0xf]
  %v34 = vld [vmem:[%s1 + $0xc] sm:$0xf]
  %v35 = vld [vmem:[%s1 + $0x10] sm:$0xf]
  %v36 = vld [vmem:[%s1 + $0x14] sm:$0xf]
  %v37 = vld [vmem:[%s1 + $0x18] sm:$0xf]
  %v38 = vld [vmem:[%s1 + $0x1c] sm:$0xf]
  %v39 = vld [vmem:[%s1 + $0x20] sm:$0xf]
  %v40 = vld [vmem:[%s1 + $0x24] sm:$0xf]
  %v41 = vld [vmem:[%s1 + $0x28] sm:$0xf]
  %v42 = vld [vmem:[%s1 + $0x2c] sm:$0xf]
  %v43 = vld [vmem:[%s1 + $0x30] sm:$0xf]
  %v44 = vld [vmem:[%s1 + $0x34] sm:$0xf]
  %v45 = vld [vmem:[%s1 + $0x38] sm:$0xf]
  %v46 = vld [vmem:[%s1 + $0x3c] sm:$0xf]
  %v47 = vld [vmem:[%s1 + $0x40] sm:$0xf]
  %v48 = vld [vmem:[%s1 + $0x44] sm:$0xf]
  %v49 = vld [vmem:[%s1 + $0x48] sm:$0xf]
  %v50 = vld [vmem:[%s1 + $0x4c] sm:$0xf]
  %v51 = vld [vmem:[%s1 + $0x50] sm:$0xf]
  %v52 = vld [vmem:[%s1 + $0x54] sm:$0xf]
  %v53 = vld [vmem:[%s1 + $0x58] sm:$0xf]
  %v54 = vld [vmem:[%s1 + $0x5c] sm:$0xf]
  %v55 = vld [vmem:[%s1 + $0x60] sm:$0xf]
  %v56 = vld [vmem:[%s1 + $0x64] sm:$0xf]
  %v57 = vld [vmem:[%s1 + $0x68] sm:$0xf]
  %v58 = vld [vmem:[%s1 + $0x6c] sm:$0xf]
  %v59 = vld [vmem:[%s1 + $0x70] sm:$0xf]
  %v60 = vld [vmem:[%s1 + $0x74] sm:$0xf]
  %v61 = vld [vmem:[%s1 + $0x78] sm:$0xf]
  %v62 = vld [vmem:[%s1 + $0x7c] sm:$0xf]
  %v63 = vld [vmem:[%s1 + $0x80] sm:$0xf]
  %v64 = vld [vmem:[%s1 + $0x84] sm:$0xf]
  %v65 = vld [vmem:[%s1 + $0x88] sm:$0xf]
  %v66 = vld [vmem:[%s1 + $0x8c] sm:$0xf]
  %v67 = vld [vmem:[%s1 + $0x90] sm:$0xf]
  %v68 = vld [vmem:[%s1 + $0x94] sm:$0xf]
  %v69 = vld [vmem:[%s1 + $0x98] sm:$0xf]
  %v70 = vld [vmem:[%s1 + $0x9c] sm:$0xf]
  %v71 = vld [vmem:[%s1 + $0xa0] sm:$0xf]
  %v72 = vld [vmem:[%s1 + $0xa4] sm:$0xf]
  %v73 = vld [vmem:[%s1 + $0xa8] sm:$0xf]
  %v74 = vld [vmem:[%s1 + $0xac] sm:$0xf]
  %v75 = vld [vmem:[%s1 + $0xb0] sm:$0xf]
  %v76 = vld [vmem:[%s1 + $0xb4] sm:$0xf]
  %v77 = vld [vmem:[%s1 + $0xb8] sm:$0xf]
  %v78 = vld [vmem:[%s1 + $0xbc] sm:$0xf]
  %v79 = vld [vmem:[%s1 + $0xc0] sm:$0xf]
  %v80 = vld [vmem:[%s1 + $0xc4] sm:$0xf]
  %v81 = vld [vmem:[%s1 + $0xc8] sm:$0xf]
  %v82 = vld [vmem:[%s1 + $0xcc] sm:$0xf]
  %v83 = vld [vmem:[%s1 + $0xd0] sm:$0xf]
  %v84 = vld [vmem:[%s1 + $0xd4] sm:$0xf]
  %v85 = vld [vmem:[%s1 + $0xd8] sm:$0xf]
  %v86 = vld [vmem:[%s1 + $0xdc] sm:$0xf]
  %v87 = vld [vmem:[%s1 + $0xe0] sm:$0xf]
  %v88 = vld [vmem:[%s1 + $0xe4] sm:$0xf]
  %v89 = vld [vmem:[%s1 + $0xe8] sm:$0xf]
  %v90 = vld [vmem:[%s1 + $0xec] sm:$0xf]
  %v91 = vld [vmem:[%s1 + $0xf0] sm:$0xf]
  %v92 = vld [vmem:[%s1 + $0xf4] sm:$0xf]
  %v93 = vld [vmem:[%s1 + $0xf8] sm:$0xf]
  %v94 = vld [vmem:[%s1 + $0xfc] sm:$0xf]
  %v95 = vld [vmem:[%s1 + $0x100] sm:$0xf]
  %v96 = vld [vmem:[%s1 + $0x104] sm:$0xf]
  %v97 = vld [vmem:[%s1 + $0x108] sm:$0xf]
  %v98 = vld [vmem:[%s1 + $0x10c] sm:$0xf]
  %v99 = vld [vmem:[%s1 + $0x110] sm:$0xf]
  %v100 = vld [vmem:[%s1 + $0x114] sm:$0xf]
  %v101 = vld [vmem:[%s1 + $0x118] sm:$0xf]
  %v102 = vld [vmem:[%s1 + $0x11c] sm:$0xf]
  %v103 = vld [vmem:[%s1 + $0x120] sm:$0xf]
  %v104 = vld [vmem:[%s1 + $0x124] sm:$0xf]
  %v105 = vld [vmem:[%s1 + $0x128] sm:$0xf]
  %v106 = vld [vmem:[%s1 + $0x12c] sm:$0xf]
  %v107 = vld [vmem:[%s1 + $0x130] sm:$0xf]
  %v108 = vld [vmem:[%s1 + $0x134] sm:$0xf]
  %v109 = vld [vmem:[%s1 + $0x138] sm:$0xf]
  %v110 = vld [vmem:[%s1 + $0x13c] sm:$0xf]
  %v111 = vld [vmem:[%s1 + $0x140] sm:$0xf]
  %v112 = vld [vmem:[%s1 + $0x144] sm:$0xf]
  %v113 = vld [vmem:[%s1 + $0x148] sm:$0xf]
  %v114 = vld [vmem:[%s1 + $0x14c] sm:$0xf]
  %v115 = vld [vmem:[%s1 + $0x150] sm:$0xf]
  %v116 = vld [vmem:[%s1 + $0x154] sm:$0xf]
  %v117 = vld [vmem:[%s1 + $0x158] sm:$0xf]
  %v118 = vld [vmem:[%s1 + $0x15c] sm:$0xf]
  %v119 = vld [vmem:[%s1 + $0x160] sm:$0xf]
  %v120 = vld [vmem:[%s1 + $0x164] sm:$0xf]
  %v121 = vld [vmem:[%s1 + $0x168] sm:$0xf]
  %v122 = vld [vmem:[%s1 + $0x16c] sm:$0xf]
  %v123 = vld [vmem:[%s1 + $0x170] sm:$0xf]
  %v124 = vld [vmem:[%s1 + $0x174] sm:$0xf]
  %v125 = vld [vmem:[%s1 + $0x178] sm:$0xf]
  %v126 = vld [vmem:[%s1 + $0x17c] sm:$0xf]
  %v127 = vld [vmem:[%s1 + $0x180] sm:$0xf]
  %v128 = vld [vmem:[%s1 + $0x184] sm:$0xf]
  %v129 = vld [vmem:[%s1 + $0x188] sm:$0xf]
  %v130 = vld [vmem:[%s1 + $0x18c] sm:$0xf]
  %v131 = vld [vmem:[%s1 + $0x190] sm:$0xf]
  %v132 = vld [vmem:[%s1 + $0x194] sm:$0xf]
  %v133 = vld [vmem:[%s1 + $0x198] sm:$0xf]
  %v134 = vld [vmem:[%s1 + $0x19c] sm:$0xf]
  %v135 = vld [vmem:[%s1 + $0x1a0] sm:$0xf]
  %v136 = vld [vmem:[%s1 + $0x1a4] sm:$0xf]
  %v137 = vld [vmem:[%s1 + $0x1a8] sm:$0xf]
  %v138 = vld [vmem:[%s1 + $0x1ac] sm:$0xf]
  %v139 = vld [vmem:[%s1 + $0x1b0] sm:$0xf]
  %v140 = vld [vmem:[%s1 + $0x1b4] sm:$0xf]
  %v141 = vld [vmem:[%s1 + $0x1b8] sm:$0xf]
  %v142 = vld [vmem:[%s1 + $0x1bc] sm:$0xf]
  %v143 = vld [vmem:[%s1 + $0x1c0] sm:$0xf]
  %v144 = vld [vmem:[%s1 + $0x1c4] sm:$0xf]
  %v145 = vld [vmem:[%s1 + $0x1c8] sm:$0xf]
  %v146 = vld [vmem:[%s1 + $0x1cc] sm:$0xf]
  %v147 = vld [vmem:[%s1 + $0x1d0] sm:$0xf]
  %v148 = vld [vmem:[%s1 + $0x1d4] sm:$0xf]
  %v149 = vld [vmem:[%s1 + $0x1d8] sm:$0xf]
  %v150 = vld [vmem:[%s1 + $0x1dc] sm:$0xf]
  %v151 = vld [vmem:[%s1 + $0x1e0] sm:$0xf]
  %v152 = vld [vmem:[%s1 + $0x1e4] sm:$0xf]
  %v153 = vld [vmem:[%s1 + $0x1e8] sm:$0xf]
  %v154 = vld [vmem:[%s1 + $0x1ec] sm:$0xf]
  %v155 = vld [vmem:[%s1 + $0x1f0] sm:$0xf]
  %v156 = vld [vmem:[%s1 + $0x1f4] sm:$0xf]
  %v157 = vld [vmem:[%s1 + $0x1f8] sm:$0xf]
  %v158 = vld [vmem:[%s1 + $0x1fc] sm:$0xf]
  %v159 = vld [vmem:[%s2] sm:$0x1]
  %v161 = vlaneseq
  %v162 = vshrl.u32 %v161, 7
  %v163 = vsub.s32 0, %v162
  %v164 = vrot.slane %v159, %v163
  %v182 = vunpack.c.l.b16 %v15
  %v183 = vunpack.c.h.b16 %v15
  %v184 = vunpack.c.l.b16 %v16
  %v185 = vunpack.c.h.b16 %v16
  %v186 = vunpack.c.l.b16 %v17
  %v187 = vunpack.c.h.b16 %v17
  %v188 = vunpack.c.l.b16 %v18
  %v189 = vunpack.c.h.b16 %v18
  %v190 = vunpack.c.l.b16 %v19
  %v191 = vunpack.c.h.b16 %v19
  %v192 = vunpack.c.l.b16 %v20
  %v193 = vunpack.c.h.b16 %v20
  %v194 = vunpack.c.l.b16 %v21
  %v195 = vunpack.c.h.b16 %v21
  %v196 = vunpack.c.l.b16 %v22
  %v197 = vunpack.c.h.b16 %v22
  %v198 = vunpack.c.l.b16 %v23
  %v199 = vunpack.c.h.b16 %v23
  %v200 = vunpack.c.l.b16 %v24
  %v201 = vunpack.c.h.b16 %v24
  %v202 = vunpack.c.l.b16 %v25
  %v203 = vunpack.c.h.b16 %v25
  %v204 = vunpack.c.l.b16 %v26
  %v205 = vunpack.c.h.b16 %v26
  %v206 = vunpack.c.l.b16 %v27
  %v207 = vunpack.c.h.b16 %v27
  %v208 = vunpack.c.l.b16 %v28
  %v209 = vunpack.c.h.b16 %v28
  %v210 = vunpack.c.l.b16 %v29
  %v211 = vunpack.c.h.b16 %v29
  %v212 = vunpack.c.l.b16 %v30
  %v213 = vunpack.c.h.b16 %v30
  %v214 = vpack.c.b16 %v190, %v182
  %v215 = vpack.c.b16 %v191, %v183
  %v216 = vpack.c.b16 %v192, %v184
  %v217 = vpack.c.b16 %v193, %v185
  %v218 = vpack.c.b16 %v194, %v186
  %v219 = vpack.c.b16 %v195, %v187
  %v220 = vpack.c.b16 %v196, %v188
  %v221 = vpack.c.b16 %v197, %v189
  %v222 = vpack.c.b16 %v206, %v198
  %v223 = vpack.c.b16 %v207, %v199
  %v224 = vpack.c.b16 %v208, %v200
  %v225 = vpack.c.b16 %v209, %v201
  %v226 = vpack.c.b16 %v210, %v202
  %v227 = vpack.c.b16 %v211, %v203
  %v228 = vpack.c.b16 %v212, %v204
  %v229 = vpack.c.b16 %v213, %v205
  %v374 = vunpack.c.l.b16 %v31
  %v375 = vunpack.c.l.b16 %v32
  %v376 = vunpack.c.l.b16 %v33
  %v377 = vunpack.c.l.b16 %v34
  %v378 = vunpack.c.l.b16 %v35
  %v379 = vunpack.c.l.b16 %v36
  %v380 = vunpack.c.l.b16 %v37
  %v381 = vunpack.c.l.b16 %v38
  %v382 = vunpack.c.l.b16 %v39
  %v383 = vunpack.c.l.b16 %v40
  %v384 = vunpack.c.l.b16 %v41
  %v385 = vunpack.c.l.b16 %v42
  %v386 = vunpack.c.l.b16 %v43
  %v387 = vunpack.c.l.b16 %v44
  %v388 = vunpack.c.l.b16 %v45
  %v389 = vunpack.c.l.b16 %v46
  %v390 = vunpack.c.l.b16 %v47
  %v391 = vunpack.c.l.b16 %v48
  %v392 = vunpack.c.l.b16 %v49
  %v393 = vunpack.c.l.b16 %v50
  %v394 = vunpack.c.l.b16 %v51
  %v395 = vunpack.c.l.b16 %v52
  %v396 = vunpack.c.l.b16 %v53
  %v397 = vunpack.c.l.b16 %v54
  %v398 = vunpack.c.l.b16 %v55
  %v399 = vunpack.c.l.b16 %v56
  %v400 = vunpack.c.l.b16 %v57
  %v401 = vunpack.c.l.b16 %v58
  %v402 = vunpack.c.l.b16 %v59
  %v403 = vunpack.c.l.b16 %v60
  %v404 = vunpack.c.l.b16 %v61
  %v405 = vunpack.c.l.b16 %v62
  %v406 = vunpack.c.l.b16 %v63
  %v407 = vunpack.c.l.b16 %v64
  %v408 = vunpack.c.l.b16 %v65
  %v409 = vunpack.c.l.b16 %v66
  %v410 = vunpack.c.l.b16 %v67
  %v411 = vunpack.c.l.b16 %v68
  %v412 = vunpack.c.l.b16 %v69
  %v413 = vunpack.c.l.b16 %v70
  %v414 = vunpack.c.l.b16 %v71
  %v415 = vunpack.c.l.b16 %v72
  %v416 = vunpack.c.l.b16 %v73
  %v417 = vunpack.c.l.b16 %v74
  %v418 = vunpack.c.l.b16 %v75
  %v419 = vunpack.c.l.b16 %v76
  %v420 = vunpack.c.l.b16 %v77
  %v421 = vunpack.c.l.b16 %v78
  %v422 = vunpack.c.l.b16 %v79
  %v423 = vunpack.c.l.b16 %v80
  %v424 = vunpack.c.l.b16 %v81
  %v425 = vunpack.c.l.b16 %v82
  %v426 = vunpack.c.l.b16 %v83
  %v427 = vunpack.c.l.b16 %v84
  %v428 = vunpack.c.l.b16 %v85
  %v429 = vunpack.c.l.b16 %v86
  %v430 = vunpack.c.l.b16 %v87
  %v431 = vunpack.c.l.b16 %v88
  %v432 = vunpack.c.l.b16 %v89
  %v433 = vunpack.c.l.b16 %v90
  %v434 = vunpack.c.l.b16 %v91
  %v435 = vunpack.c.l.b16 %v92
  %v436 = vunpack.c.l.b16 %v93
  %v437 = vunpack.c.l.b16 %v94
  %v438 = vunpack.c.l.b16 %v95
  %v439 = vunpack.c.l.b16 %v96
  %v440 = vunpack.c.l.b16 %v97
  %v441 = vunpack.c.l.b16 %v98
  %v442 = vunpack.c.l.b16 %v99
  %v443 = vunpack.c.l.b16 %v100
  %v444 = vunpack.c.l.b16 %v101
  %v445 = vunpack.c.l.b16 %v102
  %v446 = vunpack.c.l.b16 %v103
  %v447 = vunpack.c.l.b16 %v104
  %v448 = vunpack.c.l.b16 %v105
  %v449 = vunpack.c.l.b16 %v106
  %v450 = vunpack.c.l.b16 %v107
  %v451 = vunpack.c.l.b16 %v108
  %v452 = vunpack.c.l.b16 %v109
  %v453 = vunpack.c.l.b16 %v110
  %v454 = vunpack.c.l.b16 %v111
  %v455 = vunpack.c.l.b16 %v112
  %v456 = vunpack.c.l.b16 %v113
  %v457 = vunpack.c.l.b16 %v114
  %v458 = vunpack.c.l.b16 %v115
  %v459 = vunpack.c.l.b16 %v116
  %v460 = vunpack.c.l.b16 %v117
  %v461 = vunpack.c.l.b16 %v118
  %v462 = vunpack.c.l.b16 %v119
  %v463 = vunpack.c.l.b16 %v120
  %v464 = vunpack.c.l.b16 %v121
  %v465 = vunpack.c.l.b16 %v122
  %v466 = vunpack.c.l.b16 %v123
  %v467 = vunpack.c.l.b16 %v124
  %v468 = vunpack.c.l.b16 %v125
  %v469 = vunpack.c.l.b16 %v126
  %v470 = vunpack.c.l.b16 %v127
  %v471 = vunpack.c.l.b16 %v128
  %v472 = vunpack.c.l.b16 %v129
  %v473 = vunpack.c.l.b16 %v130
  %v474 = vunpack.c.l.b16 %v131
  %v475 = vunpack.c.l.b16 %v132
  %v476 = vunpack.c.l.b16 %v133
  %v477 = vunpack.c.l.b16 %v134
  %v478 = vunpack.c.l.b16 %v135
  %v479 = vunpack.c.l.b16 %v136
  %v480 = vunpack.c.l.b16 %v137
  %v481 = vunpack.c.l.b16 %v138
  %v482 = vunpack.c.l.b16 %v139
  %v483 = vunpack.c.l.b16 %v140
  %v484 = vunpack.c.l.b16 %v141
  %v485 = vunpack.c.l.b16 %v142
  %v486 = vunpack.c.l.b16 %v143
  %v487 = vunpack.c.l.b16 %v144
  %v488 = vunpack.c.l.b16 %v145
  %v489 = vunpack.c.l.b16 %v146
  %v490 = vunpack.c.l.b16 %v147
  %v491 = vunpack.c.l.b16 %v148
  %v492 = vunpack.c.l.b16 %v149
  %v493 = vunpack.c.l.b16 %v150
  %v494 = vunpack.c.l.b16 %v151
  %v495 = vunpack.c.l.b16 %v152
  %v496 = vunpack.c.l.b16 %v153
  %v497 = vunpack.c.l.b16 %v154
  %v498 = vunpack.c.l.b16 %v155
  %v499 = vunpack.c.l.b16 %v156
  %v500 = vunpack.c.l.b16 %v157
  %v501 = vunpack.c.l.b16 %v158
  %v502 = vpack.c.b16 %v375, %v374
  %v503 = vpack.c.b16 %v377, %v376
  %v504 = vpack.c.b16 %v379, %v378
  %v505 = vpack.c.b16 %v381, %v380
  %v506 = vpack.c.b16 %v383, %v382
  %v507 = vpack.c.b16 %v385, %v384
  %v508 = vpack.c.b16 %v387, %v386
  %v509 = vpack.c.b16 %v389, %v388
  %v510 = vpack.c.b16 %v391, %v390
  %v511 = vpack.c.b16 %v393, %v392
  %v512 = vpack.c.b16 %v395, %v394
  %v513 = vpack.c.b16 %v397, %v396
  %v514 = vpack.c.b16 %v399, %v398
  %v515 = vpack.c.b16 %v401, %v400
  %v516 = vpack.c.b16 %v403, %v402
  %v517 = vpack.c.b16 %v405, %v404
  %v518 = vpack.c.b16 %v407, %v406
  %v519 = vpack.c.b16 %v409, %v408
  %v520 = vpack.c.b16 %v411, %v410
  %v521 = vpack.c.b16 %v413, %v412
  %v522 = vpack.c.b16 %v415, %v414
  %v523 = vpack.c.b16 %v417, %v416
  %v524 = vpack.c.b16 %v419, %v418
  %v525 = vpack.c.b16 %v421, %v420
  %v526 = vpack.c.b16 %v423, %v422
  %v527 = vpack.c.b16 %v425, %v424
  %v528 = vpack.c.b16 %v427, %v426
  %v529 = vpack.c.b16 %v429, %v428
  %v530 = vpack.c.b16 %v431, %v430
  %v531 = vpack.c.b16 %v433, %v432
  %v532 = vpack.c.b16 %v435, %v434
  %v533 = vpack.c.b16 %v437, %v436
  %v534 = vpack.c.b16 %v439, %v438
  %v535 = vpack.c.b16 %v441, %v440
  %v536 = vpack.c.b16 %v443, %v442
  %v537 = vpack.c.b16 %v445, %v444
  %v538 = vpack.c.b16 %v447, %v446
  %v539 = vpack.c.b16 %v449, %v448
  %v540 = vpack.c.b16 %v451, %v450
  %v541 = vpack.c.b16 %v453, %v452
  %v542 = vpack.c.b16 %v455, %v454
  %v543 = vpack.c.b16 %v457, %v456
  %v544 = vpack.c.b16 %v459, %v458
  %v545 = vpack.c.b16 %v461, %v460
  %v546 = vpack.c.b16 %v463, %v462
  %v547 = vpack.c.b16 %v465, %v464
  %v548 = vpack.c.b16 %v467, %v466
  %v549 = vpack.c.b16 %v469, %v468
  %v550 = vpack.c.b16 %v471, %v470
  %v551 = vpack.c.b16 %v473, %v472
  %v552 = vpack.c.b16 %v475, %v474
  %v553 = vpack.c.b16 %v477, %v476
  %v554 = vpack.c.b16 %v479, %v478
  %v555 = vpack.c.b16 %v481, %v480
  %v556 = vpack.c.b16 %v483, %v482
  %v557 = vpack.c.b16 %v485, %v484
  %v558 = vpack.c.b16 %v487, %v486
  %v559 = vpack.c.b16 %v489, %v488
  %v560 = vpack.c.b16 %v491, %v490
  %v561 = vpack.c.b16 %v493, %v492
  %v562 = vpack.c.b16 %v495, %v494
  %v563 = vpack.c.b16 %v497, %v496
  %v564 = vpack.c.b16 %v499, %v498
  %v565 = vpack.c.b16 %v501, %v500
  %630 = vmatprep.subr.bf16.mxu0 0
  %631 = vmatpush1.bf16.msra.mxu0 %v502
  %632 = vmatprep.subr.bf16.mxu0 0
  %633 = vmatpush1.bf16.msra.mxu0 %v503
  %634 = vmatprep.subr.bf16.mxu0 0
  %635 = vmatpush1.bf16.msra.mxu0 %v504
  %636 = vmatprep.subr.bf16.mxu0 0
  %637 = vmatpush1.bf16.msra.mxu0 %v505
  %638 = vmatprep.subr.bf16.mxu0 0
  %639 = vmatpush1.bf16.msra.mxu0 %v506
  %640 = vmatprep.subr.bf16.mxu0 0
  %641 = vmatpush1.bf16.msra.mxu0 %v507
  %642 = vmatprep.subr.bf16.mxu0 0
  %643 = vmatpush1.bf16.msra.mxu0 %v508
  %644 = vmatprep.subr.bf16.mxu0 0
  %645 = vmatpush1.bf16.msra.mxu0 %v509
  %646 = vmatprep.subr.bf16.mxu0 0
  %647 = vmatpush1.bf16.msra.mxu0 %v510
  %648 = vmatprep.subr.bf16.mxu0 0
  %649 = vmatpush1.bf16.msra.mxu0 %v511
  %650 = vmatprep.subr.bf16.mxu0 0
  %651 = vmatpush1.bf16.msra.mxu0 %v512
  %652 = vmatprep.subr.bf16.mxu0 0
  %653 = vmatpush1.bf16.msra.mxu0 %v513
  %654 = vmatprep.subr.bf16.mxu0 0
  %655 = vmatpush1.bf16.msra.mxu0 %v514
  %656 = vmatprep.subr.bf16.mxu0 0
  %657 = vmatpush1.bf16.msra.mxu0 %v515
  %658 = vmatprep.subr.bf16.mxu0 0
  %659 = vmatpush1.bf16.msra.mxu0 %v516
  %660 = vmatprep.subr.bf16.mxu0 0
  %661 = vmatpush1.bf16.msra.mxu0 %v517
  %662 = vmatprep.mubr.bf16.mxu0 %v215
  %663 = vmatmul.mubr.bf16.gmra.mrb[0].mxu0 %v214
  %v664 = vpop.f32.mrb[0].mxu0
  %v665 = vadd.f32 %v164, %v664
  %v666 = vpop.f32.mrb[0].mxu0
  %v667 = vpop.f32.mrb[0].mxu0
  %v668 = vadd.f32 %v164, %v667
  %v669 = vpop.f32.mrb[0].mxu0
  %670 = vmatprep.mubr.bf16.mxu0 %v223
  %671 = vmatmul.mubr.bf16.gmra.mrb[0].mxu0 %v222
  %v672 = vpop.f32.mrb[0].mxu0
  %v673 = vadd.f32 %v164, %v672
  %v674 = vpop.f32.mrb[0].mxu0
  %v675 = vpop.f32.mrb[0].mxu0
  %v676 = vadd.f32 %v164, %v675
  %v677 = vpop.f32.mrb[0].mxu0
  %678 = vdwg.mxu0
  %679 = vmatprep.subr.bf16.mxu0 0
  %680 = vmatpush1.bf16.msra.mxu0 %v518
  %681 = vmatprep.subr.bf16.mxu0 0
  %682 = vmatpush1.bf16.msra.mxu0 %v519
  %683 = vmatprep.subr.bf16.mxu0 0
  %684 = vmatpush1.bf16.msra.mxu0 %v520
  %685 = vmatprep.subr.bf16.mxu0 0
  %686 = vmatpush1.bf16.msra.mxu0 %v521
  %687 = vmatprep.subr.bf16.mxu0 0
  %688 = vmatpush1.bf16.msra.mxu0 %v522
  %689 = vmatprep.subr.bf16.mxu0 0
  %690 = vmatpush1.bf16.msra.mxu0 %v523
  %691 = vmatprep.subr.bf16.mxu0 0
  %692 = vmatpush1.bf16.msra.mxu0 %v524
  %693 = vmatprep.subr.bf16.mxu0 0
  %694 = vmatpush1.bf16.msra.mxu0 %v525
  %695 = vmatprep.subr.bf16.mxu0 0
  %696 = vmatpush1.bf16.msra.mxu0 %v526
  %697 = vmatprep.subr.bf16.mxu0 0
  %698 = vmatpush1.bf16.msra.mxu0 %v527
  %699 = vmatprep.subr.bf16.mxu0 0
  %700 = vmatpush1.bf16.msra.mxu0 %v528
  %701 = vmatprep.subr.bf16.mxu0 0
  %702 = vmatpush1.bf16.msra.mxu0 %v529
  %703 = vmatprep.subr.bf16.mxu0 0
  %704 = vmatpush1.bf16.msra.mxu0 %v530
  %705 = vmatprep.subr.bf16.mxu0 0
  %706 = vmatpush1.bf16.msra.mxu0 %v531
  %707 = vmatprep.subr.bf16.mxu0 0
  %708 = vmatpush1.bf16.msra.mxu0 %v532
  %709 = vmatprep.subr.bf16.mxu0 0
  %710 = vmatpush1.bf16.msra.mxu0 %v533
  %711 = vmatprep.mubr.bf16.mxu0 %v217
  %712 = vmatmul.mubr.bf16.gmra.mrb[0].mxu0 %v216
  %v713 = vpop.f32.mrb[0].mxu0
  %v714 = vadd.f32 %v665, %v713
  %v715 = vpop.f32.mrb[0].mxu0
  %v716 = vpop.f32.mrb[0].mxu0
  %v717 = vadd.f32 %v668, %v716
  %v718 = vpop.f32.mrb[0].mxu0
  %719 = vmatprep.mubr.bf16.mxu0 %v225
  %720 = vmatmul.mubr.bf16.gmra.mrb[0].mxu0 %v224
  %v721 = vpop.f32.mrb[0].mxu0
  %v722 = vadd.f32 %v673, %v721
  %v723 = vpop.f32.mrb[0].mxu0
  %v724 = vpop.f32.mrb[0].mxu0
  %v725 = vadd.f32 %v676, %v724
  %v726 = vpop.f32.mrb[0].mxu0
  %727 = vdwg.mxu0
  %728 = vmatprep.subr.bf16.mxu0 0
  %729 = vmatpush1.bf16.msra.mxu0 %v534
  %730 = vmatprep.subr.bf16.mxu0 0
  %731 = vmatpush1.bf16.msra.mxu0 %v535
  %732 = vmatprep.subr.bf16.mxu0 0
  %733 = vmatpush1.bf16.msra.mxu0 %v536
  %734 = vmatprep.subr.bf16.mxu0 0
  %735 = vmatpush1.bf16.msra.mxu0 %v537
  %736 = vmatprep.subr.bf16.mxu0 0
  %737 = vmatpush1.bf16.msra.mxu0 %v538
  %738 = vmatprep.subr.bf16.mxu0 0
  %739 = vmatpush1.bf16.msra.mxu0 %v539
  %740 = vmatprep.subr.bf16.mxu0 0
  %741 = vmatpush1.bf16.msra.mxu0 %v540
  %742 = vmatprep.subr.bf16.mxu0 0
  %743 = vmatpush1.bf16.msra.mxu0 %v541
  %744 = vmatprep.subr.bf16.mxu0 0
  %745 = vmatpush1.bf16.msra.mxu0 %v542
  %746 = vmatprep.subr.bf16.mxu0 0
  %747 = vmatpush1.bf16.msra.mxu0 %v543
  %748 = vmatprep.subr.bf16.mxu0 0
  %749 = vmatpush1.bf16.msra.mxu0 %v544
  %750 = vmatprep.subr.bf16.mxu0 0
  %751 = vmatpush1.bf16.msra.mxu0 %v545
  %752 = vmatprep.subr.bf16.mxu0 0
  %753 = vmatpush1.bf16.msra.mxu0 %v546
  %754 = vmatprep.subr.bf16.mxu0 0
  %755 = vmatpush1.bf16.msra.mxu0 %v547
  %756 = vmatprep.subr.bf16.mxu0 0
  %757 = vmatpush1.bf16.msra.mxu0 %v548
  %758 = vmatprep.subr.bf16.mxu0 0
  %759 = vmatpush1.bf16.msra.mxu0 %v549
  %760 = vmatprep.mubr.bf16.mxu0 %v219
  %761 = vmatmul.mubr.bf16.gmra.mrb[0].mxu0 %v218
  %v762 = vpop.f32.mrb[0].mxu0
  %v763 = vadd.f32 %v714, %v762
  %v764 = vpop.f32.mrb[0].mxu0
  %v765 = vpop.f32.mrb[0].mxu0
  %v766 = vadd.f32 %v717, %v765
  %v767 = vpop.f32.mrb[0].mxu0
  %768 = vmatprep.mubr.bf16.mxu0 %v227
  %769 = vmatmul.mubr.bf16.gmra.mrb[0].mxu0 %v226
  %v770 = vpop.f32.mrb[0].mxu0
  %v771 = vadd.f32 %v722, %v770
  %v772 = vpop.f32.mrb[0].mxu0
  %v773 = vpop.f32.mrb[0].mxu0
  %v774 = vadd.f32 %v725, %v773
  %v775 = vpop.f32.mrb[0].mxu0
  %776 = vdwg.mxu0
  %777 = vmatprep.subr.bf16.mxu0 0
  %778 = vmatpush1.bf16.msra.mxu0 %v550
  %779 = vmatprep.subr.bf16.mxu0 0
  %780 = vmatpush1.bf16.msra.mxu0 %v551
  %781 = vmatprep.subr.bf16.mxu0 0
  %782 = vmatpush1.bf16.msra.mxu0 %v552
  %783 = vmatprep.subr.bf16.mxu0 0
  %784 = vmatpush1.bf16.msra.mxu0 %v553
  %785 = vmatprep.subr.bf16.mxu0 0
  %786 = vmatpush1.bf16.msra.mxu0 %v554
  %787 = vmatprep.subr.bf16.mxu0 0
  %788 = vmatpush1.bf16.msra.mxu0 %v555
  %789 = vmatprep.subr.bf16.mxu0 0
  %790 = vmatpush1.bf16.msra.mxu0 %v556
  %791 = vmatprep.subr.bf16.mxu0 0
  %792 = vmatpush1.bf16.msra.mxu0 %v557
  %793 = vmatprep.subr.bf16.mxu0 0
  %794 = vmatpush1.bf16.msra.mxu0 %v558
  %795 = vmatprep.subr.bf16.mxu0 0
  %796 = vmatpush1.bf16.msra.mxu0 %v559
  %797 = vmatprep.subr.bf16.mxu0 0
  %798 = vmatpush1.bf16.msra.mxu0 %v560
  %799 = vmatprep.subr.bf16.mxu0 0
  %800 = vmatpush1.bf16.msra.mxu0 %v561
  %801 = vmatprep.subr.bf16.mxu0 0
  %802 = vmatpush1.bf16.msra.mxu0 %v562
  %803 = vmatprep.subr.bf16.mxu0 0
  %804 = vmatpush1.bf16.msra.mxu0 %v563
  %805 = vmatprep.subr.bf16.mxu0 0
  %806 = vmatpush1.bf16.msra.mxu0 %v564
  %807 = vmatprep.subr.bf16.mxu0 0
  %808 = vmatpush1.bf16.msra.mxu0 %v565
  %809 = vmatprep.mubr.bf16.mxu0 %v221
  %810 = vmatmul.mubr.bf16.gmra.mrb[0].mxu0 %v220
  %v811 = vpop.f32.mrb[0].mxu0
  %v812 = vadd.f32 %v763, %v811
  %v813 = vpop.f32.mrb[0].mxu0
  %v814 = vpop.f32.mrb[0].mxu0
  %v815 = vadd.f32 %v766, %v814
  %v816 = vpop.f32.mrb[0].mxu0
  %817 = vmatprep.mubr.bf16.mxu0 %v229
  %818 = vmatmul.mubr.bf16.gmra.mrb[0].mxu0 %v228
  %v819 = vpop.f32.mrb[0].mxu0
  %v820 = vadd.f32 %v771, %v819
  %v821 = vpop.f32.mrb[0].mxu0
  %v822 = vpop.f32.mrb[0].mxu0
  %v823 = vadd.f32 %v774, %v822
  %v824 = vpop.f32.mrb[0].mxu0
  %825 = vdwg.mxu0
  %vm826 = vcmp.gt.f32.partialorder %v812, 0.0
  %vm827 = vcmp.gt.f32.partialorder %v815, 0.0
  %vm828 = vcmp.gt.f32.partialorder %v820, 0.0
  %vm829 = vcmp.gt.f32.partialorder %v823, 0.0
  %v830 = vmul.f32 %v812, 0.2
  %v831 = vmul.f32 %v815, 0.2
  %v832 = vmul.f32 %v820, 0.2
  %v833 = vmul.f32 %v823, 0.2
  %v834 = vsel %vm826, %v812, %v830
  %v835 = vsel %vm827, %v815, %v831
  %v836 = vsel %vm828, %v820, %v832
  %v837 = vsel %vm829, %v823, %v833
  %v838 = vpack.c.bf16 %v835, %v834
  %v839 = vpack.c.bf16 %v837, %v836
  %v842 = vunpack.c.l.b16 %v838
  %v843 = vunpack.c.h.b16 %v838
  %v844 = vunpack.c.l.b16 %v839
  %v845 = vunpack.c.h.b16 %v839
  %v846 = vpack.c.b16 %v842, %v842
  %v847 = vpack.c.b16 %v843, %v843
  %v848 = vpack.c.b16 %v844, %v844
  %v849 = vpack.c.b16 %v845, %v845
  %854 = vst [vmem:[%s3] sm:$0xf] %v846
  %855 = vst [vmem:[%s3 + $0x4] sm:$0xf] %v847
  %856 = vst [vmem:[%s3 + $0x8] sm:$0xf] %v848
  %857 = vst [vmem:[%s3 + $0xc] sm:$0xf] %v849
  // Predicated region
  $region14: #{_generator_forward_impl.9} parent=0 // pred_check
    _
  $region15: #{_generator_forward_impl.9} parent=0 // pred_check_branch
    %859 = sbr.rel (0) target = $region17
  $region16: #{_generator_forward_impl.9} parent=0 // pred_region
    _
  $region17: #{_generator_forward_impl.9} parent=0 // pred_fallthru
    _
  // Predicated region
  $region18: #{_generator_forward_impl.9} parent=0 // pred_check
    _
  $region19: #{_generator_forward_impl.9} parent=0 // pred_check_branch
    %861 = sbr.rel (0) target = $region21
  $region20: #{_generator_forward_impl.9} parent=0 // pred_region
    _
  $region21: #{_generator_forward_impl.9} parent=0 // pred_fallthru
    _

// kernel: squeeze.6
$region0: #{squeeze.6}
  %s0 = inlined_call_operand.vmem [shape: bf16[1,8,256], index: 0, kind: input, shape index: {}]
  %s1 = inlined_call_operand.vmem [shape: bf16[2,2,2,256], index: 1, kind: output, shape index: {}]
  $region1: #{squeeze.6} parent=0
    #allocation0 [shape = 'u8[32768]{0}', space=vmem, size = 0x8000, scoped, tag = 'scoped mem for output reshape']
    #allocation1 [shape = 'u8[8192]{0}', space=vmem, size = 0x2000, scoped, tag = 'scoped mem for input reshape']
    %s3 = smul.u32 4, 2
    %s4 = sshllo.u32 0, %s3
    %s5 = scalar_lea.vmem %s0, 4
    %s6 = sshrl.u32 %s4, 1
    %s7 = sor.u32 %s4, %s6
    %s8 = sand.u32 %s7, 85
    %s9 = sshrl.u32 %s8, 1
    %s10 = sor.u32 %s8, %s9
    %s11 = sand.u32 51, %s10
    %s12 = sshrl.u32 %s11, 2
    %s13 = sor.u32 %s11, %s12
    %s14 = sand.u32 15, %s13
    %v15 = vld [vmem:[%s5] sm:%s14]
    %v16 = vunpack.c.l.bf16 %v15
    %v17 = vunpack.c.h.bf16 %v15
    %s18 = scalar_lea.vmem [#allocation1], 8
    %19 = vst [vmem:[%s18] sm:%s4] %v16
    %s20 = sshrl.u32 %s4, 1
    %s21 = sor.u32 %s4, %s20
    %s22 = sand.u32 %s21, 85
    %s23 = sshrl.u32 %s22, 1
    %s24 = sor.u32 %s22, %s23
    %s25 = sand.u32 51, %s24
    %s26 = sshrl.u32 %s25, 2
    %s27 = sor.u32 %s25, %s26
    %s28 = sand.u32 15, %s27
    %v29 = vld [vmem:[%s0] sm:%s28]
    %v30 = vunpack.c.l.bf16 %v29
    %v31 = vunpack.c.h.bf16 %v29
    %32 = vst [vmem:[#allocation1] sm:%s4] %v30
    %v33 = vld [vmem:[#allocation1] sm:$0xff]
    %34 = vst [vmem:[#allocation0] sm:$0x3] %v33
    %s35 = scalar_lea.vmem [#allocation0], 14
    %36 = vst [vmem:[%s35] sm:$0xc] %v33
    %s37 = scalar_lea.vmem [#allocation0], 28
    %38 = vst [vmem:[%s37] sm:$0x30] %v33
    %s39 = scalar_lea.vmem [#allocation0], 42
    %40 = vst [vmem:[%s39] sm:$0xc0] %v33
    %s41 = scalar_lea.vmem [#allocation1], 8
    %v42 = vld [vmem:[%s41] sm:$0xff]
    %s43 = scalar_lea.vmem [#allocation0], 8
    %44 = vst [vmem:[%s43] sm:$0x3] %v42
    %s45 = scalar_lea.vmem [#allocation0], 22
    %46 = vst [vmem:[%s45] sm:$0xc] %v42
    %s47 = scalar_lea.vmem [#allocation0], 36
    %48 = vst [vmem:[%s47] sm:$0x30] %v42
    %s49 = scalar_lea.vmem [#allocation0], 50
    %50 = vst [vmem:[%s49] sm:$0xc0] %v42
    %s52 = smul.u32 1, 2
    %s53 = sshllo.u32 0, %s52
    %s54 = sshrl.u32 %s52, 1
    %v55 = vld [vmem:[#allocation0] sm:%s53]
    %v56 = vpack.c.bf16 0.0, %v55
    %s57 = sshllo.u32 0, %s54
    %58 = vst [vmem:[%s1] sm:%s57] %v56
    %s59 = scalar_lea.vmem [#allocation0], 8
    %v60 = vld [vmem:[%s59] sm:%s53]
    %v61 = vpack.c.bf16 0.0, %v60
    %s62 = sshllo.u32 0, %s54
    %s63 = scalar_lea.vmem %s1, 1
    %64 = vst [vmem:[%s63] sm:%s62] %v61
    %s65 = scalar_lea.vmem [#allocation0], 16
    %v66 = vld [vmem:[%s65] sm:%s53]
    %v67 = vpack.c.bf16 0.0, %v66
    %s68 = sshllo.u32 0, %s54
    %s69 = smul.addr 1, 2
    %s70 = scalar_lea.vmem %s1, %s69
    %71 = vst [vmem:[%s70] sm:%s68] %v67
    %s72 = scalar_lea.vmem [#allocation0], 24
    %v73 = vld [vmem:[%s72] sm:%s53]
    %v74 = vpack.c.bf16 0.0, %v73
    %s75 = sshllo.u32 0, %s54
    %s76 = smul.addr 1, 3
    %s77 = scalar_lea.vmem %s1, %s76
    %78 = vst [vmem:[%s77] sm:%s75] %v74
    %s79 = scalar_lea.vmem [#allocation0], 32
    %v80 = vld [vmem:[%s79] sm:%s53]
    %v81 = vpack.c.bf16 0.0, %v80
    %s82 = sshllo.u32 0, %s54
    %s83 = smul.addr 1, 4
    %s84 = scalar_lea.vmem %s1, %s83
    %85 = vst [vmem:[%s84] sm:%s82] %v81
    %s86 = scalar_lea.vmem [#allocation0], 40
    %v87 = vld [vmem:[%s86] sm:%s53]
    %v88 = vpack.c.bf16 0.0, %v87
    %s89 = sshllo.u32 0, %s54
    %s90 = smul.addr 1, 5
    %s91 = scalar_lea.vmem %s1, %s90
    %92 = vst [vmem:[%s91] sm:%s89] %v88
    %s93 = scalar_lea.vmem [#allocation0], 48
    %v94 = vld [vmem:[%s93] sm:%s53]
    %v95 = vpack.c.bf16 0.0, %v94
    %s96 = sshllo.u32 0, %s54
    %s97 = smul.addr 1, 6
    %s98 = scalar_lea.vmem %s1, %s97
    %99 = vst [vmem:[%s98] sm:%s96] %v95
    %s100 = scalar_lea.vmem [#allocation0], 56
    %v101 = vld [vmem:[%s100] sm:%s53]
    %v102 = vpack.c.bf16 0.0, %v101
    %s103 = sshllo.u32 0, %s54
    %s104 = smul.addr 1, 7
    %s105 = scalar_lea.vmem %s1, %s104
    %106 = vst [vmem:[%s105] sm:%s103] %v102

// kernel: _generator_forward_impl.10
$region0: #{_generator_forward_impl.10}
  #allocation0 [shape = 'u32[]', space=smem, size = 0x4, offset = 0x4, fixed_abs, tag = 'smem constant byte address 0x4 - core index']
  #allocation1 [shape = 'u32[144,128]{1,0:T(1,128)}', space=vmem, size = 0x12000, scoped, tag = 'internal scratch']
  %s0 = inlined_call_operand.vmem [shape: bf16[1,16,2048], index: 0, kind: input, shape index: {}]
  %s1 = inlined_call_operand.vmem [shape: bf16[1,2048,256], index: 1, kind: input, shape index: {}]
  %s2 = inlined_call_operand.vmem [shape: f32[1,256], index: 2, kind: input, shape index: {}]
  %s3 = inlined_call_operand.vmem [shape: bf16[1,16,256], index: 3, kind: output, shape index: {}]
  %s4 = sld [smem:[#allocation0]]
  $region22: #{_generator_forward_impl.10} parent=0
    _
  %s6 = ssub.s32 1, %s4
  %s7 = scalar_select 0, %s6, %s4
  // Predicated region
  $region2: #{_generator_forward_impl.10} parent=0 // pred_check
    _
  $region3: #{_generator_forward_impl.10} parent=0 // pred_check_branch
    %9 = sbr.rel (0) target = $region5
  $region4: #{_generator_forward_impl.10} parent=0 // pred_region
    _
  $region5: #{_generator_forward_impl.10} parent=0 // pred_fallthru
    _
  // Predicated region
  $region6: #{_generator_forward_impl.10} parent=0 // pred_check
    _
  $region7: #{_generator_forward_impl.10} parent=0 // pred_check_branch
    %11 = sbr.rel (0) target = $region9
  $region8: #{_generator_forward_impl.10} parent=0 // pred_region
    _
  $region9: #{_generator_forward_impl.10} parent=0 // pred_fallthru
    _
  // Predicated region
  $region10: #{_generator_forward_impl.10} parent=0 // pred_check
    _
  $region11: #{_generator_forward_impl.10} parent=0 // pred_check_branch
    %13 = sbr.rel (0) target = $region13
  $region12: #{_generator_forward_impl.10} parent=0 // pred_region
    _
  $region13: #{_generator_forward_impl.10} parent=0 // pred_fallthru
    _
  %v14 = vld [vmem:[%s0] sm:$0xff]
  %v15 = vld [vmem:[%s0 + $0x8] sm:$0xff]
  %v16 = vld [vmem:[%s0 + $0x10] sm:$0xff]
  %v17 = vld [vmem:[%s0 + $0x18] sm:$0xff]
  %v18 = vld [vmem:[%s0 + $0x20] sm:$0xff]
  %v19 = vld [vmem:[%s0 + $0x28] sm:$0xff]
  %v20 = vld [vmem:[%s0 + $0x30] sm:$0xff]
  %v21 = vld [vmem:[%s0 + $0x38] sm:$0xff]
  %v22 = vld [vmem:[%s0 + $0x40] sm:$0xff]
  %v23 = vld [vmem:[%s0 + $0x48] sm:$0xff]
  %v24 = vld [vmem:[%s0 + $0x50] sm:$0xff]
  %v25 = vld [vmem:[%s0 + $0x58] sm:$0xff]
  %v26 = vld [vmem:[%s0 + $0x60] sm:$0xff]
  %v27 = vld [vmem:[%s0 + $0x68] sm:$0xff]
  %v28 = vld [vmem:[%s0 + $0x70] sm:$0xff]
  %v29 = vld [vmem:[%s0 + $0x78] sm:$0xff]
  %v30 = vld [vmem:[%s1] sm:$0xff]
  %v31 = vld [vmem:[%s1 + $0x8] sm:$0xff]
  %v32 = vld [vmem:[%s1 + $0x10] sm:$0xff]
  %v33 = vld [vmem:[%s1 + $0x18] sm:$0xff]
  %v34 = vld [vmem:[%s1 + $0x20] sm:$0xff]
  %v35 = vld [vmem:[%s1 + $0x28] sm:$0xff]
  %v36 = vld [vmem:[%s1 + $0x30] sm:$0xff]
  %v37 = vld [vmem:[%s1 + $0x38] sm:$0xff]
  %v38 = vld [vmem:[%s1 + $0x40] sm:$0xff]
  %v39 = vld [vmem:[%s1 + $0x48] sm:$0xff]
  %v40 = vld [vmem:[%s1 + $0x50] sm:$0xff]
  %v41 = vld [vmem:[%s1 + $0x58] sm:$0xff]
  %v42 = vld [vmem:[%s1 + $0x60] sm:$0xff]
  %v43 = vld [vmem:[%s1 + $0x68] sm:$0xff]
  %v44 = vld [vmem:[%s1 + $0x70] sm:$0xff]
  %v45 = vld [vmem:[%s1 + $0x78] sm:$0xff]
  %v46 = vld [vmem:[%s1 + $0x80] sm:$0xff]
  %v47 = vld [vmem:[%s1 + $0x88] sm:$0xff]
  %v48 = vld [vmem:[%s1 + $0x90] sm:$0xff]
  %v49 = vld [vmem:[%s1 + $0x98] sm:$0xff]
  %v50 = vld [vmem:[%s1 + $0xa0] sm:$0xff]
  %v51 = vld [vmem:[%s1 + $0xa8] sm:$0xff]
  %v52 = vld [vmem:[%s1 + $0xb0] sm:$0xff]
  %v53 = vld [vmem:[%s1 + $0xb8] sm:$0xff]
  %v54 = vld [vmem:[%s1 + $0xc0] sm:$0xff]
  %v55 = vld [vmem:[%s1 + $0xc8] sm:$0xff]
  %v56 = vld [vmem:[%s1 + $0xd0] sm:$0xff]
  %v57 = vld [vmem:[%s1 + $0xd8] sm:$0xff]
  %v58 = vld [vmem:[%s1 + $0xe0] sm:$0xff]
  %v59 = vld [vmem:[%s1 + $0xe8] sm:$0xff]
  %v60 = vld [vmem:[%s1 + $0xf0] sm:$0xff]
  %v61 = vld [vmem:[%s1 + $0xf8] sm:$0xff]
  %v62 = vld [vmem:[%s1 + $0x100] sm:$0xff]
  %v63 = vld [vmem:[%s1 + $0x108] sm:$0xff]
  %v64 = vld [vmem:[%s1 + $0x110] sm:$0xff]
  %v65 = vld [vmem:[%s1 + $0x118] sm:$0xff]
  %v66 = vld [vmem:[%s1 + $0x120] sm:$0xff]
  %v67 = vld [vmem:[%s1 + $0x128] sm:$0xff]
  %v68 = vld [vmem:[%s1 + $0x130] sm:$0xff]
  %v69 = vld [vmem:[%s1 + $0x138] sm:$0xff]
  %v70 = vld [vmem:[%s1 + $0x140] sm:$0xff]
  %v71 = vld [vmem:[%s1 + $0x148] sm:$0xff]
  %v72 = vld [vmem:[%s1 + $0x150] sm:$0xff]
  %v73 = vld [vmem:[%s1 + $0x158] sm:$0xff]
  %v74 = vld [vmem:[%s1 + $0x160] sm:$0xff]
  %v75 = vld [vmem:[%s1 + $0x168] sm:$0xff]
  %v76 = vld [vmem:[%s1 + $0x170] sm:$0xff]
  %v77 = vld [vmem:[%s1 + $0x178] sm:$0xff]
  %v78 = vld [vmem:[%s1 + $0x180] sm:$0xff]
  %v79 = vld [vmem:[%s1 + $0x188] sm:$0xff]
  %v80 = vld [vmem:[%s1 + $0x190] sm:$0xff]
  %v81 = vld [vmem:[%s1 + $0x198] sm:$0xff]
  %v82 = vld [vmem:[%s1 + $0x1a0] sm:$0xff]
  %v83 = vld [vmem:[%s1 + $0x1a8] sm:$0xff]
  %v84 = vld [vmem:[%s1 + $0x1b0] sm:$0xff]
  %v85 = vld [vmem:[%s1 + $0x1b8] sm:$0xff]
  %v86 = vld [vmem:[%s1 + $0x1c0] sm:$0xff]
  %v87 = vld [vmem:[%s1 + $0x1c8] sm:$0xff]
  %v88 = vld [vmem:[%s1 + $0x1d0] sm:$0xff]
  %v89 = vld [vmem:[%s1 + $0x1d8] sm:$0xff]
  %v90 = vld [vmem:[%s1 + $0x1e0] sm:$0xff]
  %v91 = vld [vmem:[%s1 + $0x1e8] sm:$0xff]
  %v92 = vld [vmem:[%s1 + $0x1f0] sm:$0xff]
  %v93 = vld [vmem:[%s1 + $0x1f8] sm:$0xff]
  %v94 = vld [vmem:[%s1 + $0x200] sm:$0xff]
  %v95 = vld [vmem:[%s1 + $0x208] sm:$0xff]
  %v96 = vld [vmem:[%s1 + $0x210] sm:$0xff]
  %v97 = vld [vmem:[%s1 + $0x218] sm:$0xff]
  %v98 = vld [vmem:[%s1 + $0x220] sm:$0xff]
  %v99 = vld [vmem:[%s1 + $0x228] sm:$0xff]
  %v100 = vld [vmem:[%s1 + $0x230] sm:$0xff]
  %v101 = vld [vmem:[%s1 + $0x238] sm:$0xff]
  %v102 = vld [vmem:[%s1 + $0x240] sm:$0xff]
  %v103 = vld [vmem:[%s1 + $0x248] sm:$0xff]
  %v104 = vld [vmem:[%s1 + $0x250] sm:$0xff]
  %v105 = vld [vmem:[%s1 + $0x258] sm:$0xff]
  %v106 = vld [vmem:[%s1 + $0x260] sm:$0xff]
  %v107 = vld [vmem:[%s1 + $0x268] sm:$0xff]
  %v108 = vld [vmem:[%s1 + $0x270] sm:$0xff]
  %v109 = vld [vmem:[%s1 + $0x278] sm:$0xff]
  %v110 = vld [vmem:[%s1 + $0x280] sm:$0xff]
  %v111 = vld [vmem:[%s1 + $0x288] sm:$0xff]
  %v112 = vld [vmem:[%s1 + $0x290] sm:$0xff]
  %v113 = vld [vmem:[%s1 + $0x298] sm:$0xff]
  %v114 = vld [vmem:[%s1 + $0x2a0] sm:$0xff]
  %v115 = vld [vmem:[%s1 + $0x2a8] sm:$0xff]
  %v116 = vld [vmem:[%s1 + $0x2b0] sm:$0xff]
  %v117 = vld [vmem:[%s1 + $0x2b8] sm:$0xff]
  %v118 = vld [vmem:[%s1 + $0x2c0] sm:$0xff]
  %v119 = vld [vmem:[%s1 + $0x2c8] sm:$0xff]
  %v120 = vld [vmem:[%s1 + $0x2d0] sm:$0xff]
  %v121 = vld [vmem:[%s1 + $0x2d8] sm:$0xff]
  %v122 = vld [vmem:[%s1 + $0x2e0] sm:$0xff]
  %v123 = vld [vmem:[%s1 + $0x2e8] sm:$0xff]
  %v124 = vld [vmem:[%s1 + $0x2f0] sm:$0xff]
  %v125 = vld [vmem:[%s1 + $0x2f8] sm:$0xff]
  %v126 = vld [vmem:[%s1 + $0x300] sm:$0xff]
  %v127 = vld [vmem:[%s1 + $0x308] sm:$0xff]
  %v128 = vld [vmem:[%s1 + $0x310] sm:$0xff]
  %v129 = vld [vmem:[%s1 + $0x318] sm:$0xff]
  %v130 = vld [vmem:[%s1 + $0x320] sm:$0xff]
  %v131 = vld [vmem:[%s1 + $0x328] sm:$0xff]
  %v132 = vld [vmem:[%s1 + $0x330] sm:$0xff]
  %v133 = vld [vmem:[%s1 + $0x338] sm:$0xff]
  %v134 = vld [vmem:[%s1 + $0x340] sm:$0xff]
  %v135 = vld [vmem:[%s1 + $0x348] sm:$0xff]
  %v136 = vld [vmem:[%s1 + $0x350] sm:$0xff]
  %v137 = vld [vmem:[%s1 + $0x358] sm:$0xff]
  %v138 = vld [vmem:[%s1 + $0x360] sm:$0xff]
  %v139 = vld [vmem:[%s1 + $0x368] sm:$0xff]
  %v140 = vld [vmem:[%s1 + $0x370] sm:$0xff]
  %v141 = vld [vmem:[%s1 + $0x378] sm:$0xff]
  %v142 = vld [vmem:[%s1 + $0x380] sm:$0xff]
  %v143 = vld [vmem:[%s1 + $0x388] sm:$0xff]
  %v144 = vld [vmem:[%s1 + $0x390] sm:$0xff]
  %v145 = vld [vmem:[%s1 + $0x398] sm:$0xff]
  %v146 = vld [vmem:[%s1 + $0x3a0] sm:$0xff]
  %v147 = vld [vmem:[%s1 + $0x3a8] sm:$0xff]
  %v148 = vld [vmem:[%s1 + $0x3b0] sm:$0xff]
  %v149 = vld [vmem:[%s1 + $0x3b8] sm:$0xff]
  %v150 = vld [vmem:[%s1 + $0x3c0] sm:$0xff]
  %v151 = vld [vmem:[%s1 + $0x3c8] sm:$0xff]
  %v152 = vld [vmem:[%s1 + $0x3d0] sm:$0xff]
  %v153 = vld [vmem:[%s1 + $0x3d8] sm:$0xff]
  %v154 = vld [vmem:[%s1 + $0x3e0] sm:$0xff]
  %v155 = vld [vmem:[%s1 + $0x3e8] sm:$0xff]
  %v156 = vld [vmem:[%s1 + $0x3f0] sm:$0xff]
  %v157 = vld [vmem:[%s1 + $0x3f8] sm:$0xff]
  %v158 = vld [vmem:[%s1 + $0x400] sm:$0xff]
  %v159 = vld [vmem:[%s1 + $0x408] sm:$0xff]
  %v160 = vld [vmem:[%s1 + $0x410] sm:$0xff]
  %v161 = vld [vmem:[%s1 + $0x418] sm:$0xff]
  %v162 = vld [vmem:[%s1 + $0x420] sm:$0xff]
  %v163 = vld [vmem:[%s1 + $0x428] sm:$0xff]
  %v164 = vld [vmem:[%s1 + $0x430] sm:$0xff]
  %v165 = vld [vmem:[%s1 + $0x438] sm:$0xff]
  %v166 = vld [vmem:[%s1 + $0x440] sm:$0xff]
  %v167 = vld [vmem:[%s1 + $0x448] sm:$0xff]
  %v168 = vld [vmem:[%s1 + $0x450] sm:$0xff]
  %v169 = vld [vmem:[%s1 + $0x458] sm:$0xff]
  %v170 = vld [vmem:[%s1 + $0x460] sm:$0xff]
  %v171 = vld [vmem:[%s1 + $0x468] sm:$0xff]
  %v172 = vld [vmem:[%s1 + $0x470] sm:$0xff]
  %v173 = vld [vmem:[%s1 + $0x478] sm:$0xff]
  %v174 = vld [vmem:[%s1 + $0x480] sm:$0xff]
  %v175 = vld [vmem:[%s1 + $0x488] sm:$0xff]
  %v176 = vld [vmem:[%s1 + $0x490] sm:$0xff]
  %v177 = vld [vmem:[%s1 + $0x498] sm:$0xff]
  %v178 = vld [vmem:[%s1 + $0x4a0] sm:$0xff]
  %v179 = vld [vmem:[%s1 + $0x4a8] sm:$0xff]
  %v180 = vld [vmem:[%s1 + $0x4b0] sm:$0xff]
  %v181 = vld [vmem:[%s1 + $0x4b8] sm:$0xff]
  %v182 = vld [vmem:[%s1 + $0x4c0] sm:$0xff]
  %v183 = vld [vmem:[%s1 + $0x4c8] sm:$0xff]
  %v184 = vld [vmem:[%s1 + $0x4d0] sm:$0xff]
  %v185 = vld [vmem:[%s1 + $0x4d8] sm:$0xff]
  %v186 = vld [vmem:[%s1 + $0x4e0] sm:$0xff]
  %v187 = vld [vmem:[%s1 + $0x4e8] sm:$0xff]
  %v188 = vld [vmem:[%s1 + $0x4f0] sm:$0xff]
  %v189 = vld [vmem:[%s1 + $0x4f8] sm:$0xff]
  %v190 = vld [vmem:[%s1 + $0x500] sm:$0xff]
  %v191 = vld [vmem:[%s1 + $0x508] sm:$0xff]
  %v192 = vld [vmem:[%s1 + $0x510] sm:$0xff]
  %v193 = vld [vmem:[%s1 + $0x518] sm:$0xff]
  %v194 = vld [vmem:[%s1 + $0x520] sm:$0xff]
  %v195 = vld [vmem:[%s1 + $0x528] sm:$0xff]
  %v196 = vld [vmem:[%s1 + $0x530] sm:$0xff]
  %v197 = vld [vmem:[%s1 + $0x538] sm:$0xff]
  %v198 = vld [vmem:[%s1 + $0x540] sm:$0xff]
  %v199 = vld [vmem:[%s1 + $0x548] sm:$0xff]
  %v200 = vld [vmem:[%s1 + $0x550] sm:$0xff]
  %v201 = vld [vmem:[%s1 + $0x558] sm:$0xff]
  %v202 = vld [vmem:[%s1 + $0x560] sm:$0xff]
  %v203 = vld [vmem:[%s1 + $0x568] sm:$0xff]
  %v204 = vld [vmem:[%s1 + $0x570] sm:$0xff]
  %v205 = vld [vmem:[%s1 + $0x578] sm:$0xff]
  %v206 = vld [vmem:[%s1 + $0x580] sm:$0xff]
  %v207 = vld [vmem:[%s1 + $0x588] sm:$0xff]
  %v208 = vld [vmem:[%s1 + $0x590] sm:$0xff]
  %v209 = vld [vmem:[%s1 + $0x598] sm:$0xff]
  %v210 = vld [vmem:[%s1 + $0x5a0] sm:$0xff]
  %v211 = vld [vmem:[%s1 + $0x5a8] sm:$0xff]
  %v212 = vld [vmem:[%s1 + $0x5b0] sm:$0xff]
  %v213 = vld [vmem:[%s1 + $0x5b8] sm:$0xff]
  %v214 = vld [vmem:[%s1 + $0x5c0] sm:$0xff]
  %v215 = vld [vmem:[%s1 + $0x5c8] sm:$0xff]
  %v216 = vld [vmem:[%s1 + $0x5d0] sm:$0xff]
  %v217 = vld [vmem:[%s1 + $0x5d8] sm:$0xff]
  %v218 = vld [vmem:[%s1 + $0x5e0] sm:$0xff]
  %v219 = vld [vmem:[%s1 + $0x5e8] sm:$0xff]
  %v220 = vld [vmem:[%s1 + $0x5f0] sm:$0xff]
  %v221 = vld [vmem:[%s1 + $0x5f8] sm:$0xff]
  %v222 = vld [vmem:[%s1 + $0x600] sm:$0xff]
  %v223 = vld [vmem:[%s1 + $0x608] sm:$0xff]
  %v224 = vld [vmem:[%s1 + $0x610] sm:$0xff]
  %v225 = vld [vmem:[%s1 + $0x618] sm:$0xff]
  %v226 = vld [vmem:[%s1 + $0x620] sm:$0xff]
  %v227 = vld [vmem:[%s1 + $0x628] sm:$0xff]
  %v228 = vld [vmem:[%s1 + $0x630] sm:$0xff]
  %v229 = vld [vmem:[%s1 + $0x638] sm:$0xff]
  %v230 = vld [vmem:[%s1 + $0x640] sm:$0xff]
  %v231 = vld [vmem:[%s1 + $0x648] sm:$0xff]
  %v232 = vld [vmem:[%s1 + $0x650] sm:$0xff]
  %v233 = vld [vmem:[%s1 + $0x658] sm:$0xff]
  %v234 = vld [vmem:[%s1 + $0x660] sm:$0xff]
  %v235 = vld [vmem:[%s1 + $0x668] sm:$0xff]
  %v236 = vld [vmem:[%s1 + $0x670] sm:$0xff]
  %v237 = vld [vmem:[%s1 + $0x678] sm:$0xff]
  %v238 = vld [vmem:[%s1 + $0x680] sm:$0xff]
  %v239 = vld [vmem:[%s1 + $0x688] sm:$0xff]
  %v240 = vld [vmem:[%s1 + $0x690] sm:$0xff]
  %v241 = vld [vmem:[%s1 + $0x698] sm:$0xff]
  %v242 = vld [vmem:[%s1 + $0x6a0] sm:$0xff]
  %v243 = vld [vmem:[%s1 + $0x6a8] sm:$0xff]
  %v244 = vld [vmem:[%s1 + $0x6b0] sm:$0xff]
  %v245 = vld [vmem:[%s1 + $0x6b8] sm:$0xff]
  %v246 = vld [vmem:[%s1 + $0x6c0] sm:$0xff]
  %v247 = vld [vmem:[%s1 + $0x6c8] sm:$0xff]
  %v248 = vld [vmem:[%s1 + $0x6d0] sm:$0xff]
  %v249 = vld [vmem:[%s1 + $0x6d8] sm:$0xff]
  %v250 = vld [vmem:[%s1 + $0x6e0] sm:$0xff]
  %v251 = vld [vmem:[%s1 + $0x6e8] sm:$0xff]
  %v252 = vld [vmem:[%s1 + $0x6f0] sm:$0xff]
  %v253 = vld [vmem:[%s1 + $0x6f8] sm:$0xff]
  %v254 = vld [vmem:[%s1 + $0x700] sm:$0xff]
  %v255 = vld [vmem:[%s1 + $0x708] sm:$0xff]
  %v256 = vld [vmem:[%s1 + $0x710] sm:$0xff]
  %v257 = vld [vmem:[%s1 + $0x718] sm:$0xff]
  %v258 = vld [vmem:[%s1 + $0x720] sm:$0xff]
  %v259 = vld [vmem:[%s1 + $0x728] sm:$0xff]
  %v260 = vld [vmem:[%s1 + $0x730] sm:$0xff]
  %v261 = vld [vmem:[%s1 + $0x738] sm:$0xff]
  %v262 = vld [vmem:[%s1 + $0x740] sm:$0xff]
  %v263 = vld [vmem:[%s1 + $0x748] sm:$0xff]
  %v264 = vld [vmem:[%s1 + $0x750] sm:$0xff]
  %v265 = vld [vmem:[%s1 + $0x758] sm:$0xff]
  %v266 = vld [vmem:[%s1 + $0x760] sm:$0xff]
  %v267 = vld [vmem:[%s1 + $0x768] sm:$0xff]
  %v268 = vld [vmem:[%s1 + $0x770] sm:$0xff]
  %v269 = vld [vmem:[%s1 + $0x778] sm:$0xff]
  %v270 = vld [vmem:[%s1 + $0x780] sm:$0xff]
  %v271 = vld [vmem:[%s1 + $0x788] sm:$0xff]
  %v272 = vld [vmem:[%s1 + $0x790] sm:$0xff]
  %v273 = vld [vmem:[%s1 + $0x798] sm:$0xff]
  %v274 = vld [vmem:[%s1 + $0x7a0] sm:$0xff]
  %v275 = vld [vmem:[%s1 + $0x7a8] sm:$0xff]
  %v276 = vld [vmem:[%s1 + $0x7b0] sm:$0xff]
  %v277 = vld [vmem:[%s1 + $0x7b8] sm:$0xff]
  %v278 = vld [vmem:[%s1 + $0x7c0] sm:$0xff]
  %v279 = vld [vmem:[%s1 + $0x7c8] sm:$0xff]
  %v280 = vld [vmem:[%s1 + $0x7d0] sm:$0xff]
  %v281 = vld [vmem:[%s1 + $0x7d8] sm:$0xff]
  %v282 = vld [vmem:[%s1 + $0x7e0] sm:$0xff]
  %v283 = vld [vmem:[%s1 + $0x7e8] sm:$0xff]
  %v284 = vld [vmem:[%s1 + $0x7f0] sm:$0xff]
  %v285 = vld [vmem:[%s1 + $0x7f8] sm:$0xff]
  %v286 = vld [vmem:[%s2] sm:$0x3]
  %v288 = vlaneseq
  %v289 = vshrl.u32 %v288, 7
  %v290 = vsub.s32 0, %v289
  %v291 = vrot.slane %v286, %v290
  %v292 = vlaneseq
  %v293 = vshrl.u32 %v292, 7
  %v294 = vsub.s32 1, %v293
  %v295 = vrot.slane %v286, %v294
  %v314 = vunpack.c.l.b16 %v14
  %v315 = vunpack.c.h.b16 %v14
  %v316 = vunpack.c.l.b16 %v15
  %v317 = vunpack.c.h.b16 %v15
  %v318 = vunpack.c.l.b16 %v16
  %v319 = vunpack.c.h.b16 %v16
  %v320 = vunpack.c.l.b16 %v17
  %v321 = vunpack.c.h.b16 %v17
  %v322 = vunpack.c.l.b16 %v18
  %v323 = vunpack.c.h.b16 %v18
  %v324 = vunpack.c.l.b16 %v19
  %v325 = vunpack.c.h.b16 %v19
  %v326 = vunpack.c.l.b16 %v20
  %v327 = vunpack.c.h.b16 %v20
  %v328 = vunpack.c.l.b16 %v21
  %v329 = vunpack.c.h.b16 %v21
  %v330 = vunpack.c.l.b16 %v22
  %v331 = vunpack.c.h.b16 %v22
  %v332 = vunpack.c.l.b16 %v23
  %v333 = vunpack.c.h.b16 %v23
  %v334 = vunpack.c.l.b16 %v24
  %v335 = vunpack.c.h.b16 %v24
  %v336 = vunpack.c.l.b16 %v25
  %v337 = vunpack.c.h.b16 %v25
  %v338 = vunpack.c.l.b16 %v26
  %v339 = vunpack.c.h.b16 %v26
  %v340 = vunpack.c.l.b16 %v27
  %v341 = vunpack.c.h.b16 %v27
  %v342 = vunpack.c.l.b16 %v28
  %v343 = vunpack.c.h.b16 %v28
  %v344 = vunpack.c.l.b16 %v29
  %v345 = vunpack.c.h.b16 %v29
  %v346 = vpack.c.b16 %v330, %v314
  %v347 = vpack.c.b16 %v331, %v315
  %v348 = vpack.c.b16 %v332, %v316
  %v349 = vpack.c.b16 %v333, %v317
  %v350 = vpack.c.b16 %v334, %v318
  %v351 = vpack.c.b16 %v335, %v319
  %v352 = vpack.c.b16 %v336, %v320
  %v353 = vpack.c.b16 %v337, %v321
  %v354 = vpack.c.b16 %v338, %v322
  %v355 = vpack.c.b16 %v339, %v323
  %v356 = vpack.c.b16 %v340, %v324
  %v357 = vpack.c.b16 %v341, %v325
  %v358 = vpack.c.b16 %v342, %v326
  %v359 = vpack.c.b16 %v343, %v327
  %v360 = vpack.c.b16 %v344, %v328
  %v361 = vpack.c.b16 %v345, %v329
  %v634 = vunpack.c.l.b16 %v30
  %v635 = vunpack.c.h.b16 %v30
  %v636 = vunpack.c.l.b16 %v31
  %v637 = vunpack.c.h.b16 %v31
  %v638 = vunpack.c.l.b16 %v32
  %v639 = vunpack.c.h.b16 %v32
  %v640 = vunpack.c.l.b16 %v33
  %v641 = vunpack.c.h.b16 %v33
  %v642 = vunpack.c.l.b16 %v34
  %v643 = vunpack.c.h.b16 %v34
  %v644 = vunpack.c.l.b16 %v35
  %v645 = vunpack.c.h.b16 %v35
  %v646 = vunpack.c.l.b16 %v36
  %v647 = vunpack.c.h.b16 %v36
  %v648 = vunpack.c.l.b16 %v37
  %v649 = vunpack.c.h.b16 %v37
  %v650 = vunpack.c.l.b16 %v38
  %v651 = vunpack.c.h.b16 %v38
  %v652 = vunpack.c.l.b16 %v39
  %v653 = vunpack.c.h.b16 %v39
  %v654 = vunpack.c.l.b16 %v40
  %v655 = vunpack.c.h.b16 %v40
  %v656 = vunpack.c.l.b16 %v41
  %v657 = vunpack.c.h.b16 %v41
  %v658 = vunpack.c.l.b16 %v42
  %v659 = vunpack.c.h.b16 %v42
  %v660 = vunpack.c.l.b16 %v43
  %v661 = vunpack.c.h.b16 %v43
  %v662 = vunpack.c.l.b16 %v44
  %v663 = vunpack.c.h.b16 %v44
  %v664 = vunpack.c.l.b16 %v45
  %v665 = vunpack.c.h.b16 %v45
  %v666 = vunpack.c.l.b16 %v46
  %v667 = vunpack.c.h.b16 %v46
  %v668 = vunpack.c.l.b16 %v47
  %v669 = vunpack.c.h.b16 %v47
  %v670 = vunpack.c.l.b16 %v48
  %v671 = vunpack.c.h.b16 %v48
  %v672 = vunpack.c.l.b16 %v49
  %v673 = vunpack.c.h.b16 %v49
  %v674 = vunpack.c.l.b16 %v50
  %v675 = vunpack.c.h.b16 %v50
  %v676 = vunpack.c.l.b16 %v51
  %v677 = vunpack.c.h.b16 %v51
  %v678 = vunpack.c.l.b16 %v52
  %v679 = vunpack.c.h.b16 %v52
  %v680 = vunpack.c.l.b16 %v53
  %v681 = vunpack.c.h.b16 %v53
  %v682 = vunpack.c.l.b16 %v54
  %v683 = vunpack.c.h.b16 %v54
  %v684 = vunpack.c.l.b16 %v55
  %v685 = vunpack.c.h.b16 %v55
  %v686 = vunpack.c.l.b16 %v56
  %v687 = vunpack.c.h.b16 %v56
  %v688 = vunpack.c.l.b16 %v57
  %v689 = vunpack.c.h.b16 %v57
  %v690 = vunpack.c.l.b16 %v58
  %v691 = vunpack.c.h.b16 %v58
  %v692 = vunpack.c.l.b16 %v59
  %v693 = vunpack.c.h.b16 %v59
  %v694 = vunpack.c.l.b16 %v60
  %v695 = vunpack.c.h.b16 %v60
  %v696 = vunpack.c.l.b16 %v61
  %v697 = vunpack.c.h.b16 %v61
  %v698 = vunpack.c.l.b16 %v62
  %v699 = vunpack.c.h.b16 %v62
  %v700 = vunpack.c.l.b16 %v63
  %v701 = vunpack.c.h.b16 %v63
  %v702 = vunpack.c.l.b16 %v64
  %v703 = vunpack.c.h.b16 %v64
  %v704 = vunpack.c.l.b16 %v65
  %v705 = vunpack.c.h.b16 %v65
  %v706 = vunpack.c.l.b16 %v66
  %v707 = vunpack.c.h.b16 %v66
  %v708 = vunpack.c.l.b16 %v67
  %v709 = vunpack.c.h.b16 %v67
  %v710 = vunpack.c.l.b16 %v68
  %v711 = vunpack.c.h.b16 %v68
  %v712 = vunpack.c.l.b16 %v69
  %v713 = vunpack.c.h.b16 %v69
  %v714 = vunpack.c.l.b16 %v70
  %v715 = vunpack.c.h.b16 %v70
  %v716 = vunpack.c.l.b16 %v71
  %v717 = vunpack.c.h.b16 %v71
  %v718 = vunpack.c.l.b16 %v72
  %v719 = vunpack.c.h.b16 %v72
  %v720 = vunpack.c.l.b16 %v73
  %v721 = vunpack.c.h.b16 %v73
  %v722 = vunpack.c.l.b16 %v74
  %v723 = vunpack.c.h.b16 %v74
  %v724 = vunpack.c.l.b16 %v75
  %v725 = vunpack.c.h.b16 %v75
  %v726 = vunpack.c.l.b16 %v76
  %v727 = vunpack.c.h.b16 %v76
  %v728 = vunpack.c.l.b16 %v77
  %v729 = vunpack.c.h.b16 %v77
  %v730 = vunpack.c.l.b16 %v78
  %v731 = vunpack.c.h.b16 %v78
  %v732 = vunpack.c.l.b16 %v79
  %v733 = vunpack.c.h.b16 %v79
  %v734 = vunpack.c.l.b16 %v80
  %v735 = vunpack.c.h.b16 %v80
  %v736 = vunpack.c.l.b16 %v81
  %v737 = vunpack.c.h.b16 %v81
  %v738 = vunpack.c.l.b16 %v82
  %v739 = vunpack.c.h.b16 %v82
  %v740 = vunpack.c.l.b16 %v83
  %v741 = vunpack.c.h.b16 %v83
  %v742 = vunpack.c.l.b16 %v84
  %v743 = vunpack.c.h.b16 %v84
  %v744 = vunpack.c.l.b16 %v85
  %v745 = vunpack.c.h.b16 %v85
  %v746 = vunpack.c.l.b16 %v86
  %v747 = vunpack.c.h.b16 %v86
  %v748 = vunpack.c.l.b16 %v87
  %v749 = vunpack.c.h.b16 %v87
  %v750 = vunpack.c.l.b16 %v88
  %v751 = vunpack.c.h.b16 %v88
  %v752 = vunpack.c.l.b16 %v89
  %v753 = vunpack.c.h.b16 %v89
  %v754 = vunpack.c.l.b16 %v90
  %v755 = vunpack.c.h.b16 %v90
  %v756 = vunpack.c.l.b16 %v91
  %v757 = vunpack.c.h.b16 %v91
  %v758 = vunpack.c.l.b16 %v92
  %v759 = vunpack.c.h.b16 %v92
  %v760 = vunpack.c.l.b16 %v93
  %v761 = vunpack.c.h.b16 %v93
  %v762 = vunpack.c.l.b16 %v94
  %v763 = vunpack.c.h.b16 %v94
  %v764 = vunpack.c.l.b16 %v95
  %v765 = vunpack.c.h.b16 %v95
  %v766 = vunpack.c.l.b16 %v96
  %v767 = vunpack.c.h.b16 %v96
  %v768 = vunpack.c.l.b16 %v97
  %v769 = vunpack.c.h.b16 %v97
  %v770 = vunpack.c.l.b16 %v98
  %v771 = vunpack.c.h.b16 %v98
  %v772 = vunpack.c.l.b16 %v99
  %v773 = vunpack.c.h.b16 %v99
  %v774 = vunpack.c.l.b16 %v100
  %v775 = vunpack.c.h.b16 %v100
  %v776 = vunpack.c.l.b16 %v101
  %v777 = vunpack.c.h.b16 %v101
  %v778 = vunpack.c.l.b16 %v102
  %v779 = vunpack.c.h.b16 %v102
  %v780 = vunpack.c.l.b16 %v103
  %v781 = vunpack.c.h.b16 %v103
  %v782 = vunpack.c.l.b16 %v104
  %v783 = vunpack.c.h.b16 %v104
  %v784 = vunpack.c.l.b16 %v105
  %v785 = vunpack.c.h.b16 %v105
  %v786 = vunpack.c.l.b16 %v106
  %v787 = vunpack.c.h.b16 %v106
  %v788 = vunpack.c.l.b16 %v107
  %v789 = vunpack.c.h.b16 %v107
  %v790 = vunpack.c.l.b16 %v108
  %v791 = vunpack.c.h.b16 %v108
  %v792 = vunpack.c.l.b16 %v109
  %v793 = vunpack.c.h.b16 %v109
  %v794 = vunpack.c.l.b16 %v110
  %v795 = vunpack.c.h.b16 %v110
  %v796 = vunpack.c.l.b16 %v111
  %v797 = vunpack.c.h.b16 %v111
  %v798 = vunpack.c.l.b16 %v112
  %v799 = vunpack.c.h.b16 %v112
  %v800 = vunpack.c.l.b16 %v113
  %v801 = vunpack.c.h.b16 %v113
  %v802 = vunpack.c.l.b16 %v114
  %v803 = vunpack.c.h.b16 %v114
  %v804 = vunpack.c.l.b16 %v115
  %v805 = vunpack.c.h.b16 %v115
  %v806 = vunpack.c.l.b16 %v116
  %v807 = vunpack.c.h.b16 %v116
  %v808 = vunpack.c.l.b16 %v117
  %v809 = vunpack.c.h.b16 %v117
  %v810 = vunpack.c.l.b16 %v118
  %v811 = vunpack.c.h.b16 %v118
  %v812 = vunpack.c.l.b16 %v119
  %v813 = vunpack.c.h.b16 %v119
  %v814 = vunpack.c.l.b16 %v120
  %v815 = vunpack.c.h.b16 %v120
  %v816 = vunpack.c.l.b16 %v121
  %v817 = vunpack.c.h.b16 %v121
  %v818 = vunpack.c.l.b16 %v122
  %v819 = vunpack.c.h.b16 %v122
  %v820 = vunpack.c.l.b16 %v123
  %v821 = vunpack.c.h.b16 %v123
  %v822 = vunpack.c.l.b16 %v124
  %v823 = vunpack.c.h.b16 %v124
  %v824 = vunpack.c.l.b16 %v125
  %v825 = vunpack.c.h.b16 %v125
  %v826 = vunpack.c.l.b16 %v126
  %v827 = vunpack.c.h.b16 %v126
  %v828 = vunpack.c.l.b16 %v127
  %v829 = vunpack.c.h.b16 %v127
  %v830 = vunpack.c.l.b16 %v128
  %v831 = vunpack.c.h.b16 %v128
  %v832 = vunpack.c.l.b16 %v129
  %v833 = vunpack.c.h.b16 %v129
  %v834 = vunpack.c.l.b16 %v130
  %v835 = vunpack.c.h.b16 %v130
  %v836 = vunpack.c.l.b16 %v131
  %v837 = vunpack.c.h.b16 %v131
  %v838 = vunpack.c.l.b16 %v132
  %v839 = vunpack.c.h.b16 %v132
  %v840 = vunpack.c.l.b16 %v133
  %v841 = vunpack.c.h.b16 %v133
  %v842 = vunpack.c.l.b16 %v134
  %v843 = vunpack.c.h.b16 %v134
  %v844 = vunpack.c.l.b16 %v135
  %v845 = vunpack.c.h.b16 %v135
  %v846 = vunpack.c.l.b16 %v136
  %v847 = vunpack.c.h.b16 %v136
  %v848 = vunpack.c.l.b16 %v137
  %v849 = vunpack.c.h.b16 %v137
  %v850 = vunpack.c.l.b16 %v138
  %v851 = vunpack.c.h.b16 %v138
  %v852 = vunpack.c.l.b16 %v139
  %v853 = vunpack.c.h.b16 %v139
  %v854 = vunpack.c.l.b16 %v140
  %v855 = vunpack.c.h.b16 %v140
  %v856 = vunpack.c.l.b16 %v141
  %v857 = vunpack.c.h.b16 %v141
  %v858 = vunpack.c.l.b16 %v142
  %v859 = vunpack.c.h.b16 %v142
  %v860 = vunpack.c.l.b16 %v143
  %v861 = vunpack.c.h.b16 %v143
  %v862 = vunpack.c.l.b16 %v144
  %v863 = vunpack.c.h.b16 %v144
  %v864 = vunpack.c.l.b16 %v145
  %v865 = vunpack.c.h.b16 %v145
  %v866 = vunpack.c.l.b16 %v146
  %v867 = vunpack.c.h.b16 %v146
  %v868 = vunpack.c.l.b16 %v147
  %v869 = vunpack.c.h.b16 %v147
  %v870 = vunpack.c.l.b16 %v148
  %v871 = vunpack.c.h.b16 %v148
  %v872 = vunpack.c.l.b16 %v149
  %v873 = vunpack.c.h.b16 %v149
  %v874 = vunpack.c.l.b16 %v150
  %v875 = vunpack.c.h.b16 %v150
  %v876 = vunpack.c.l.b16 %v151
  %v877 = vunpack.c.h.b16 %v151
  %v878 = vunpack.c.l.b16 %v152
  %v879 = vunpack.c.h.b16 %v152
  %v880 = vunpack.c.l.b16 %v153
  %v881 = vunpack.c.h.b16 %v153
  %v882 = vunpack.c.l.b16 %v154
  %v883 = vunpack.c.h.b16 %v154
  %v884 = vunpack.c.l.b16 %v155
  %v885 = vunpack.c.h.b16 %v155
  %v886 = vunpack.c.l.b16 %v156
  %v887 = vunpack.c.h.b16 %v156
  %v888 = vunpack.c.l.b16 %v157
  %v889 = vunpack.c.h.b16 %v157
  %v890 = vunpack.c.l.b16 %v158
  %v891 = vunpack.c.h.b16 %v158
  %v892 = vunpack.c.l.b16 %v159
  %v893 = vunpack.c.h.b16 %v159
  %v894 = vunpack.c.l.b16 %v160
  %v895 = vunpack.c.h.b16 %v160
  %v896 = vunpack.c.l.b16 %v161
  %v897 = vunpack.c.h.b16 %v161
  %v898 = vunpack.c.l.b16 %v162
  %v899 = vunpack.c.h.b16 %v162
  %v900 = vunpack.c.l.b16 %v163
  %v901 = vunpack.c.h.b16 %v163
  %v902 = vunpack.c.l.b16 %v164
  %v903 = vunpack.c.h.b16 %v164
  %v904 = vunpack.c.l.b16 %v165
  %v905 = vunpack.c.h.b16 %v165
  %v906 = vunpack.c.l.b16 %v166
  %v907 = vunpack.c.h.b16 %v166
  %v908 = vunpack.c.l.b16 %v167
  %v909 = vunpack.c.h.b16 %v167
  %v910 = vunpack.c.l.b16 %v168
  %v911 = vunpack.c.h.b16 %v168
  %v912 = vunpack.c.l.b16 %v169
  %v913 = vunpack.c.h.b16 %v169
  %v914 = vunpack.c.l.b16 %v170
  %v915 = vunpack.c.h.b16 %v170
  %v916 = vunpack.c.l.b16 %v171
  %v917 = vunpack.c.h.b16 %v171
  %v918 = vunpack.c.l.b16 %v172
  %v919 = vunpack.c.h.b16 %v172
  %v920 = vunpack.c.l.b16 %v173
  %v921 = vunpack.c.h.b16 %v173
  %v922 = vunpack.c.l.b16 %v174
  %v923 = vunpack.c.h.b16 %v174
  %v924 = vunpack.c.l.b16 %v175
  %v925 = vunpack.c.h.b16 %v175
  %v926 = vunpack.c.l.b16 %v176
  %v927 = vunpack.c.h.b16 %v176
  %v928 = vunpack.c.l.b16 %v177
  %v929 = vunpack.c.h.b16 %v177
  %v930 = vunpack.c.l.b16 %v178
  %v931 = vunpack.c.h.b16 %v178
  %v932 = vunpack.c.l.b16 %v179
  %v933 = vunpack.c.h.b16 %v179
  %v934 = vunpack.c.l.b16 %v180
  %v935 = vunpack.c.h.b16 %v180
  %v936 = vunpack.c.l.b16 %v181
  %v937 = vunpack.c.h.b16 %v181
  %v938 = vunpack.c.l.b16 %v182
  %v939 = vunpack.c.h.b16 %v182
  %v940 = vunpack.c.l.b16 %v183
  %v941 = vunpack.c.h.b16 %v183
  %v942 = vunpack.c.l.b16 %v184
  %v943 = vunpack.c.h.b16 %v184
  %v944 = vunpack.c.l.b16 %v185
  %v945 = vunpack.c.h.b16 %v185
  %v946 = vunpack.c.l.b16 %v186
  %v947 = vunpack.c.h.b16 %v186
  %v948 = vunpack.c.l.b16 %v187
  %v949 = vunpack.c.h.b16 %v187
  %v950 = vunpack.c.l.b16 %v188
  %v951 = vunpack.c.h.b16 %v188
  %v952 = vunpack.c.l.b16 %v189
  %v953 = vunpack.c.h.b16 %v189
  %v954 = vunpack.c.l.b16 %v190
  %v955 = vunpack.c.h.b16 %v190
  %v956 = vunpack.c.l.b16 %v191
  %v957 = vunpack.c.h.b16 %v191
  %v958 = vunpack.c.l.b16 %v192
  %v959 = vunpack.c.h.b16 %v192
  %v960 = vunpack.c.l.b16 %v193
  %v961 = vunpack.c.h.b16 %v193
  %v962 = vunpack.c.l.b16 %v194
  %v963 = vunpack.c.h.b16 %v194
  %v964 = vunpack.c.l.b16 %v195
  %v965 = vunpack.c.h.b16 %v195
  %v966 = vunpack.c.l.b16 %v196
  %v967 = vunpack.c.h.b16 %v196
  %v968 = vunpack.c.l.b16 %v197
  %v969 = vunpack.c.h.b16 %v197
  %v970 = vunpack.c.l.b16 %v198
  %v971 = vunpack.c.h.b16 %v198
  %v972 = vunpack.c.l.b16 %v199
  %v973 = vunpack.c.h.b16 %v199
  %v974 = vunpack.c.l.b16 %v200
  %v975 = vunpack.c.h.b16 %v200
  %v976 = vunpack.c.l.b16 %v201
  %v977 = vunpack.c.h.b16 %v201
  %v978 = vunpack.c.l.b16 %v202
  %v979 = vunpack.c.h.b16 %v202
  %v980 = vunpack.c.l.b16 %v203
  %v981 = vunpack.c.h.b16 %v203
  %v982 = vunpack.c.l.b16 %v204
  %v983 = vunpack.c.h.b16 %v204
  %v984 = vunpack.c.l.b16 %v205
  %v985 = vunpack.c.h.b16 %v205
  %v986 = vunpack.c.l.b16 %v206
  %v987 = vunpack.c.h.b16 %v206
  %v988 = vunpack.c.l.b16 %v207
  %v989 = vunpack.c.h.b16 %v207
  %v990 = vunpack.c.l.b16 %v208
  %v991 = vunpack.c.h.b16 %v208
  %v992 = vunpack.c.l.b16 %v209
  %v993 = vunpack.c.h.b16 %v209
  %v994 = vunpack.c.l.b16 %v210
  %v995 = vunpack.c.h.b16 %v210
  %v996 = vunpack.c.l.b16 %v211
  %v997 = vunpack.c.h.b16 %v211
  %v998 = vunpack.c.l.b16 %v212
  %v999 = vunpack.c.h.b16 %v212
  %v1000 = vunpack.c.l.b16 %v213
  %v1001 = vunpack.c.h.b16 %v213
  %v1002 = vunpack.c.l.b16 %v214
  %v1003 = vunpack.c.h.b16 %v214
  %v1004 = vunpack.c.l.b16 %v215
  %v1005 = vunpack.c.h.b16 %v215
  %v1006 = vunpack.c.l.b16 %v216
  %v1007 = vunpack.c.h.b16 %v216
  %v1008 = vunpack.c.l.b16 %v217
  %v1009 = vunpack.c.h.b16 %v217
  %v1010 = vunpack.c.l.b16 %v218
  %v1011 = vunpack.c.h.b16 %v218
  %v1012 = vunpack.c.l.b16 %v219
  %v1013 = vunpack.c.h.b16 %v219
  %v1014 = vunpack.c.l.b16 %v220
  %v1015 = vunpack.c.h.b16 %v220
  %v1016 = vunpack.c.l.b16 %v221
  %v1017 = vunpack.c.h.b16 %v221
  %v1018 = vunpack.c.l.b16 %v222
  %v1019 = vunpack.c.h.b16 %v222
  %v1020 = vunpack.c.l.b16 %v223
  %v1021 = vunpack.c.h.b16 %v223
  %v1022 = vunpack.c.l.b16 %v224
  %v1023 = vunpack.c.h.b16 %v224
  %v1024 = vunpack.c.l.b16 %v225
  %v1025 = vunpack.c.h.b16 %v225
  %v1026 = vunpack.c.l.b16 %v226
  %v1027 = vunpack.c.h.b16 %v226
  %v1028 = vunpack.c.l.b16 %v227
  %v1029 = vunpack.c.h.b16 %v227
  %v1030 = vunpack.c.l.b16 %v228
  %v1031 = vunpack.c.h.b16 %v228
  %v1032 = vunpack.c.l.b16 %v229
  %v1033 = vunpack.c.h.b16 %v229
  %v1034 = vunpack.c.l.b16 %v230
  %v1035 = vunpack.c.h.b16 %v230
  %v1036 = vunpack.c.l.b16 %v231
  %v1037 = vunpack.c.h.b16 %v231
  %v1038 = vunpack.c.l.b16 %v232
  %v1039 = vunpack.c.h.b16 %v232
  %v1040 = vunpack.c.l.b16 %v233
  %v1041 = vunpack.c.h.b16 %v233
  %v1042 = vunpack.c.l.b16 %v234
  %v1043 = vunpack.c.h.b16 %v234
  %v1044 = vunpack.c.l.b16 %v235
  %v1045 = vunpack.c.h.b16 %v235
  %v1046 = vunpack.c.l.b16 %v236
  %v1047 = vunpack.c.h.b16 %v236
  %v1048 = vunpack.c.l.b16 %v237
  %v1049 = vunpack.c.h.b16 %v237
  %v1050 = vunpack.c.l.b16 %v238
  %v1051 = vunpack.c.h.b16 %v238
  %v1052 = vunpack.c.l.b16 %v239
  %v1053 = vunpack.c.h.b16 %v239
  %v1054 = vunpack.c.l.b16 %v240
  %v1055 = vunpack.c.h.b16 %v240
  %v1056 = vunpack.c.l.b16 %v241
  %v1057 = vunpack.c.h.b16 %v241
  %v1058 = vunpack.c.l.b16 %v242
  %v1059 = vunpack.c.h.b16 %v242
  %v1060 = vunpack.c.l.b16 %v243
  %v1061 = vunpack.c.h.b16 %v243
  %v1062 = vunpack.c.l.b16 %v244
  %v1063 = vunpack.c.h.b16 %v244
  %v1064 = vunpack.c.l.b16 %v245
  %v1065 = vunpack.c.h.b16 %v245
  %v1066 = vunpack.c.l.b16 %v246
  %v1067 = vunpack.c.h.b16 %v246
  %v1068 = vunpack.c.l.b16 %v247
  %v1069 = vunpack.c.h.b16 %v247
  %v1070 = vunpack.c.l.b16 %v248
  %v1071 = vunpack.c.h.b16 %v248
  %v1072 = vunpack.c.l.b16 %v249
  %v1073 = vunpack.c.h.b16 %v249
  %v1074 = vunpack.c.l.b16 %v250
  %v1075 = vunpack.c.h.b16 %v250
  %v1076 = vunpack.c.l.b16 %v251
  %v1077 = vunpack.c.h.b16 %v251
  %v1078 = vunpack.c.l.b16 %v252
  %v1079 = vunpack.c.h.b16 %v252
  %v1080 = vunpack.c.l.b16 %v253
  %v1081 = vunpack.c.h.b16 %v253
  %v1082 = vunpack.c.l.b16 %v254
  %v1083 = vunpack.c.h.b16 %v254
  %v1084 = vunpack.c.l.b16 %v255
  %v1085 = vunpack.c.h.b16 %v255
  %v1086 = vunpack.c.l.b16 %v256
  %v1087 = vunpack.c.h.b16 %v256
  %v1088 = vunpack.c.l.b16 %v257
  %v1089 = vunpack.c.h.b16 %v257
  %v1090 = vunpack.c.l.b16 %v258
  %v1091 = vunpack.c.h.b16 %v258
  %v1092 = vunpack.c.l.b16 %v259
  %v1093 = vunpack.c.h.b16 %v259
  %v1094 = vunpack.c.l.b16 %v260
  %v1095 = vunpack.c.h.b16 %v260
  %v1096 = vunpack.c.l.b16 %v261
  %v1097 = vunpack.c.h.b16 %v261
  %v1098 = vunpack.c.l.b16 %v262
  %v1099 = vunpack.c.h.b16 %v262
  %v1100 = vunpack.c.l.b16 %v263
  %v1101 = vunpack.c.h.b16 %v263
  %v1102 = vunpack.c.l.b16 %v264
  %v1103 = vunpack.c.h.b16 %v264
  %v1104 = vunpack.c.l.b16 %v265
  %v1105 = vunpack.c.h.b16 %v265
  %v1106 = vunpack.c.l.b16 %v266
  %v1107 = vunpack.c.h.b16 %v266
  %v1108 = vunpack.c.l.b16 %v267
  %v1109 = vunpack.c.h.b16 %v267
  %v1110 = vunpack.c.l.b16 %v268
  %v1111 = vunpack.c.h.b16 %v268
  %v1112 = vunpack.c.l.b16 %v269
  %v1113 = vunpack.c.h.b16 %v269
  %v1114 = vunpack.c.l.b16 %v270
  %v1115 = vunpack.c.h.b16 %v270
  %v1116 = vunpack.c.l.b16 %v271
  %v1117 = vunpack.c.h.b16 %v271
  %v1118 = vunpack.c.l.b16 %v272
  %v1119 = vunpack.c.h.b16 %v272
  %v1120 = vunpack.c.l.b16 %v273
  %v1121 = vunpack.c.h.b16 %v273
  %v1122 = vunpack.c.l.b16 %v274
  %v1123 = vunpack.c.h.b16 %v274
  %v1124 = vunpack.c.l.b16 %v275
  %v1125 = vunpack.c.h.b16 %v275
  %v1126 = vunpack.c.l.b16 %v276
  %v1127 = vunpack.c.h.b16 %v276
  %v1128 = vunpack.c.l.b16 %v277
  %v1129 = vunpack.c.h.b16 %v277
  %v1130 = vunpack.c.l.b16 %v278
  %v1131 = vunpack.c.h.b16 %v278
  %v1132 = vunpack.c.l.b16 %v279
  %v1133 = vunpack.c.h.b16 %v279
  %v1134 = vunpack.c.l.b16 %v280
  %v1135 = vunpack.c.h.b16 %v280
  %v1136 = vunpack.c.l.b16 %v281
  %v1137 = vunpack.c.h.b16 %v281
  %v1138 = vunpack.c.l.b16 %v282
  %v1139 = vunpack.c.h.b16 %v282
  %v1140 = vunpack.c.l.b16 %v283
  %v1141 = vunpack.c.h.b16 %v283
  %v1142 = vunpack.c.l.b16 %v284
  %v1143 = vunpack.c.h.b16 %v284
  %v1144 = vunpack.c.l.b16 %v285
  %v1145 = vunpack.c.h.b16 %v285
  %v1146 = vpack.c.b16 %v636, %v634
  %v1147 = vpack.c.b16 %v637, %v635
  %v1148 = vpack.c.b16 %v640, %v638
  %v1149 = vpack.c.b16 %v641, %v639
  %v1150 = vpack.c.b16 %v644, %v642
  %v1151 = vpack.c.b16 %v645, %v643
  %v1152 = vpack.c.b16 %v648, %v646
  %v1153 = vpack.c.b16 %v649, %v647
  %v1154 = vpack.c.b16 %v652, %v650
  %v1155 = vpack.c.b16 %v653, %v651
  %v1156 = vpack.c.b16 %v656, %v654
  %v1157 = vpack.c.b16 %v657, %v655
  %v1158 = vpack.c.b16 %v660, %v658
  %v1159 = vpack.c.b16 %v661, %v659
  %v1160 = vpack.c.b16 %v664, %v662
  %v1161 = vpack.c.b16 %v665, %v663
  %v1162 = vpack.c.b16 %v668, %v666
  %v1163 = vpack.c.b16 %v669, %v667
  %v1164 = vpack.c.b16 %v672, %v670
  %v1165 = vpack.c.b16 %v673, %v671
  %v1166 = vpack.c.b16 %v676, %v674
  %v1167 = vpack.c.b16 %v677, %v675
  %v1168 = vpack.c.b16 %v680, %v678
  %v1169 = vpack.c.b16 %v681, %v679
  %v1170 = vpack.c.b16 %v684, %v682
  %v1171 = vpack.c.b16 %v685, %v683
  %v1172 = vpack.c.b16 %v688, %v686
  %v1173 = vpack.c.b16 %v689, %v687
  %v1174 = vpack.c.b16 %v692, %v690
  %v1175 = vpack.c.b16 %v693, %v691
  %v1176 = vpack.c.b16 %v696, %v694
  %v1177 = vpack.c.b16 %v697, %v695
  %v1178 = vpack.c.b16 %v700, %v698
  %v1179 = vpack.c.b16 %v701, %v699
  %v1180 = vpack.c.b16 %v704, %v702
  %v1181 = vpack.c.b16 %v705, %v703
  %v1182 = vpack.c.b16 %v708, %v706
  %v1183 = vpack.c.b16 %v709, %v707
  %v1184 = vpack.c.b16 %v712, %v710
  %v1185 = vpack.c.b16 %v713, %v711
  %v1186 = vpack.c.b16 %v716, %v714
  %v1187 = vpack.c.b16 %v717, %v715
  %v1188 = vpack.c.b16 %v720, %v718
  %v1189 = vpack.c.b16 %v721, %v719
  %v1190 = vpack.c.b16 %v724, %v722
  %v1191 = vpack.c.b16 %v725, %v723
  %v1192 = vpack.c.b16 %v728, %v726
  %v1193 = vpack.c.b16 %v729, %v727
  %v1194 = vpack.c.b16 %v732, %v730
  %v1195 = vpack.c.b16 %v733, %v731
  %v1196 = vpack.c.b16 %v736, %v734
  %v1197 = vpack.c.b16 %v737, %v735
  %v1198 = vpack.c.b16 %v740, %v738
  %v1199 = vpack.c.b16 %v741, %v739
  %v1200 = vpack.c.b16 %v744, %v742
  %v1201 = vpack.c.b16 %v745, %v743
  %v1202 = vpack.c.b16 %v748, %v746
  %v1203 = vpack.c.b16 %v749, %v747
  %v1204 = vpack.c.b16 %v752, %v750
  %v1205 = vpack.c.b16 %v753, %v751
  %v1206 = vpack.c.b16 %v756, %v754
  %v1207 = vpack.c.b16 %v757, %v755
  %v1208 = vpack.c.b16 %v760, %v758
  %v1209 = vpack.c.b16 %v761, %v759
  %v1210 = vpack.c.b16 %v764, %v762
  %v1211 = vpack.c.b16 %v765, %v763
  %v1212 = vpack.c.b16 %v768, %v766
  %v1213 = vpack.c.b16 %v769, %v767
  %v1214 = vpack.c.b16 %v772, %v770
  %v1215 = vpack.c.b16 %v773, %v771
  %v1216 = vpack.c.b16 %v776, %v774
  %v1217 = vpack.c.b16 %v777, %v775
  %v1218 = vpack.c.b16 %v780, %v778
  %v1219 = vpack.c.b16 %v781, %v779
  %v1220 = vpack.c.b16 %v784, %v782
  %v1221 = vpack.c.b16 %v785, %v783
  %v1222 = vpack.c.b16 %v788, %v786
  %v1223 = vpack.c.b16 %v789, %v787
  %v1224 = vpack.c.b16 %v792, %v790
  %v1225 = vpack.c.b16 %v793, %v791
  %v1226 = vpack.c.b16 %v796, %v794
  %v1227 = vpack.c.b16 %v797, %v795
  %v1228 = vpack.c.b16 %v800, %v798
  %v1229 = vpack.c.b16 %v801, %v799
  %v1230 = vpack.c.b16 %v804, %v802
  %v1231 = vpack.c.b16 %v805, %v803
  %v1232 = vpack.c.b16 %v808, %v806
  %v1233 = vpack.c.b16 %v809, %v807
  %v1234 = vpack.c.b16 %v812, %v810
  %v1235 = vpack.c.b16 %v813, %v811
  %v1236 = vpack.c.b16 %v816, %v814
  %v1237 = vpack.c.b16 %v817, %v815
  %v1238 = vpack.c.b16 %v820, %v818
  %v1239 = vpack.c.b16 %v821, %v819
  %v1240 = vpack.c.b16 %v824, %v822
  %v1241 = vpack.c.b16 %v825, %v823
  %v1242 = vpack.c.b16 %v828, %v826
  %v1243 = vpack.c.b16 %v829, %v827
  %v1244 = vpack.c.b16 %v832, %v830
  %v1245 = vpack.c.b16 %v833, %v831
  %v1246 = vpack.c.b16 %v836, %v834
  %v1247 = vpack.c.b16 %v837, %v835
  %v1248 = vpack.c.b16 %v840, %v838
  %v1249 = vpack.c.b16 %v841, %v839
  %v1250 = vpack.c.b16 %v844, %v842
  %v1251 = vpack.c.b16 %v845, %v843
  %v1252 = vpack.c.b16 %v848, %v846
  %v1253 = vpack.c.b16 %v849, %v847
  %v1254 = vpack.c.b16 %v852, %v850
  %v1255 = vpack.c.b16 %v853, %v851
  %v1256 = vpack.c.b16 %v856, %v854
  %v1257 = vpack.c.b16 %v857, %v855
  %v1258 = vpack.c.b16 %v860, %v858
  %v1259 = vpack.c.b16 %v861, %v859
  %v1260 = vpack.c.b16 %v864, %v862
  %v1261 = vpack.c.b16 %v865, %v863
  %v1262 = vpack.c.b16 %v868, %v866
  %v1263 = vpack.c.b16 %v869, %v867
  %v1264 = vpack.c.b16 %v872, %v870
  %v1265 = vpack.c.b16 %v873, %v871
  %v1266 = vpack.c.b16 %v876, %v874
  %v1267 = vpack.c.b16 %v877, %v875
  %v1268 = vpack.c.b16 %v880, %v878
  %v1269 = vpack.c.b16 %v881, %v879
  %v1270 = vpack.c.b16 %v884, %v882
  %v1271 = vpack.c.b16 %v885, %v883
  %v1272 = vpack.c.b16 %v888, %v886
  %v1273 = vpack.c.b16 %v889, %v887
  %v1274 = vpack.c.b16 %v892, %v890
  %v1275 = vpack.c.b16 %v893, %v891
  %v1276 = vpack.c.b16 %v896, %v894
  %v1277 = vpack.c.b16 %v897, %v895
  %v1278 = vpack.c.b16 %v900, %v898
  %v1279 = vpack.c.b16 %v901, %v899
  %v1280 = vpack.c.b16 %v904, %v902
  %v1281 = vpack.c.b16 %v905, %v903
  %v1282 = vpack.c.b16 %v908, %v906
  %v1283 = vpack.c.b16 %v909, %v907
  %v1284 = vpack.c.b16 %v912, %v910
  %v1285 = vpack.c.b16 %v913, %v911
  %v1286 = vpack.c.b16 %v916, %v914
  %v1287 = vpack.c.b16 %v917, %v915
  %v1288 = vpack.c.b16 %v920, %v918
  %v1289 = vpack.c.b16 %v921, %v919
  %v1290 = vpack.c.b16 %v924, %v922
  %v1291 = vpack.c.b16 %v925, %v923
  %v1292 = vpack.c.b16 %v928, %v926
  %v1293 = vpack.c.b16 %v929, %v927
  %v1294 = vpack.c.b16 %v932, %v930
  %v1295 = vpack.c.b16 %v933, %v931
  %v1296 = vpack.c.b16 %v936, %v934
  %v1297 = vpack.c.b16 %v937, %v935
  %v1298 = vpack.c.b16 %v940, %v938
  %v1299 = vpack.c.b16 %v941, %v939
  %v1300 = vpack.c.b16 %v944, %v942
  %v1301 = vpack.c.b16 %v945, %v943
  %v1302 = vpack.c.b16 %v948, %v946
  %v1303 = vpack.c.b16 %v949, %v947
  %v1304 = vpack.c.b16 %v952, %v950
  %v1305 = vpack.c.b16 %v953, %v951
  %v1306 = vpack.c.b16 %v956, %v954
  %v1307 = vpack.c.b16 %v957, %v955
  %v1308 = vpack.c.b16 %v960, %v958
  %v1309 = vpack.c.b16 %v961, %v959
  %v1310 = vpack.c.b16 %v964, %v962
  %v1311 = vpack.c.b16 %v965, %v963
  %v1312 = vpack.c.b16 %v968, %v966
  %v1313 = vpack.c.b16 %v969, %v967
  %v1314 = vpack.c.b16 %v972, %v970
  %v1315 = vpack.c.b16 %v973, %v971
  %v1316 = vpack.c.b16 %v976, %v974
  %v1317 = vpack.c.b16 %v977, %v975
  %v1318 = vpack.c.b16 %v980, %v978
  %v1319 = vpack.c.b16 %v981, %v979
  %v1320 = vpack.c.b16 %v984, %v982
  %v1321 = vpack.c.b16 %v985, %v983
  %v1322 = vpack.c.b16 %v988, %v986
  %v1323 = vpack.c.b16 %v989, %v987
  %v1324 = vpack.c.b16 %v992, %v990
  %v1325 = vpack.c.b16 %v993, %v991
  %v1326 = vpack.c.b16 %v996, %v994
  %v1327 = vpack.c.b16 %v997, %v995
  %v1328 = vpack.c.b16 %v1000, %v998
  %v1329 = vpack.c.b16 %v1001, %v999
  %v1330 = vpack.c.b16 %v1004, %v1002
  %v1331 = vpack.c.b16 %v1005, %v1003
  %v1332 = vpack.c.b16 %v1008, %v1006
  %v1333 = vpack.c.b16 %v1009, %v1007
  %v1334 = vpack.c.b16 %v1012, %v1010
  %v1335 = vpack.c.b16 %v1013, %v1011
  %v1336 = vpack.c.b16 %v1016, %v1014
  %v1337 = vpack.c.b16 %v1017, %v1015
  %v1338 = vpack.c.b16 %v1020, %v1018
  %v1339 = vpack.c.b16 %v1021, %v1019
  %v1340 = vpack.c.b16 %v1024, %v1022
  %v1341 = vpack.c.b16 %v1025, %v1023
  %v1342 = vpack.c.b16 %v1028, %v1026
  %v1343 = vpack.c.b16 %v1029, %v1027
  %v1344 = vpack.c.b16 %v1032, %v1030
  %v1345 = vpack.c.b16 %v1033, %v1031
  %v1346 = vpack.c.b16 %v1036, %v1034
  %v1347 = vpack.c.b16 %v1037, %v1035
  %v1348 = vpack.c.b16 %v1040, %v1038
  %v1349 = vpack.c.b16 %v1041, %v1039
  %v1350 = vpack.c.b16 %v1044, %v1042
  %v1351 = vpack.c.b16 %v1045, %v1043
  %v1352 = vpack.c.b16 %v1048, %v1046
  %v1353 = vpack.c.b16 %v1049, %v1047
  %v1354 = vpack.c.b16 %v1052, %v1050
  %v1355 = vpack.c.b16 %v1053, %v1051
  %v1356 = vpack.c.b16 %v1056, %v1054
  %v1357 = vpack.c.b16 %v1057, %v1055
  %v1358 = vpack.c.b16 %v1060, %v1058
  %v1359 = vpack.c.b16 %v1061, %v1059
  %v1360 = vpack.c.b16 %v1064, %v1062
  %v1361 = vpack.c.b16 %v1065, %v1063
  %v1362 = vpack.c.b16 %v1068, %v1066
  %v1363 = vpack.c.b16 %v1069, %v1067
  %v1364 = vpack.c.b16 %v1072, %v1070
  %v1365 = vpack.c.b16 %v1073, %v1071
  %v1366 = vpack.c.b16 %v1076, %v1074
  %v1367 = vpack.c.b16 %v1077, %v1075
  %v1368 = vpack.c.b16 %v1080, %v1078
  %v1369 = vpack.c.b16 %v1081, %v1079
  %v1370 = vpack.c.b16 %v1084, %v1082
  %v1371 = vpack.c.b16 %v1085, %v1083
  %v1372 = vpack.c.b16 %v1088, %v1086
  %v1373 = vpack.c.b16 %v1089, %v1087
  %v1374 = vpack.c.b16 %v1092, %v1090
  %v1375 = vpack.c.b16 %v1093, %v1091
  %v1376 = vpack.c.b16 %v1096, %v1094
  %v1377 = vpack.c.b16 %v1097, %v1095
  %v1378 = vpack.c.b16 %v1100, %v1098
  %v1379 = vpack.c.b16 %v1101, %v1099
  %v1380 = vpack.c.b16 %v1104, %v1102
  %v1381 = vpack.c.b16 %v1105, %v1103
  %v1382 = vpack.c.b16 %v1108, %v1106
  %v1383 = vpack.c.b16 %v1109, %v1107
  %v1384 = vpack.c.b16 %v1112, %v1110
  %v1385 = vpack.c.b16 %v1113, %v1111
  %v1386 = vpack.c.b16 %v1116, %v1114
  %v1387 = vpack.c.b16 %v1117, %v1115
  %v1388 = vpack.c.b16 %v1120, %v1118
  %v1389 = vpack.c.b16 %v1121, %v1119
  %v1390 = vpack.c.b16 %v1124, %v1122
  %v1391 = vpack.c.b16 %v1125, %v1123
  %v1392 = vpack.c.b16 %v1128, %v1126
  %v1393 = vpack.c.b16 %v1129, %v1127
  %v1394 = vpack.c.b16 %v1132, %v1130
  %v1395 = vpack.c.b16 %v1133, %v1131
  %v1396 = vpack.c.b16 %v1136, %v1134
  %v1397 = vpack.c.b16 %v1137, %v1135
  %v1398 = vpack.c.b16 %v1140, %v1138
  %v1399 = vpack.c.b16 %v1141, %v1139
  %v1400 = vpack.c.b16 %v1144, %v1142
  %v1401 = vpack.c.b16 %v1145, %v1143
  %1658 = vmatprep.subr.bf16.mxu0 %v1147
  %1659 = vmatpush1.bf16.msra.mxu0 %v1146
  %1660 = vmatprep.subr.bf16.mxu0 %v1149
  %1661 = vmatpush1.bf16.msra.mxu0 %v1148
  %1662 = vmatprep.subr.bf16.mxu0 %v1151
  %1663 = vmatpush1.bf16.msra.mxu0 %v1150
  %1664 = vmatprep.subr.bf16.mxu0 %v1153
  %1665 = vmatpush1.bf16.msra.mxu0 %v1152
  %1666 = vmatprep.subr.bf16.mxu0 %v1155
  %1667 = vmatpush1.bf16.msra.mxu0 %v1154
  %1668 = vmatprep.subr.bf16.mxu0 %v1157
  %1669 = vmatpush1.bf16.msra.mxu0 %v1156
  %1670 = vmatprep.subr.bf16.mxu0 %v1159
  %1671 = vmatpush1.bf16.msra.mxu0 %v1158
  %1672 = vmatprep.subr.bf16.mxu0 %v1161
  %1673 = vmatpush1.bf16.msra.mxu0 %v1160
  %1674 = vmatprep.subr.bf16.mxu0 %v1163
  %1675 = vmatpush1.bf16.msra.mxu0 %v1162
  %1676 = vmatprep.subr.bf16.mxu0 %v1165
  %1677 = vmatpush1.bf16.msra.mxu0 %v1164
  %1678 = vmatprep.subr.bf16.mxu0 %v1167
  %1679 = vmatpush1.bf16.msra.mxu0 %v1166
  %1680 = vmatprep.subr.bf16.mxu0 %v1169
  %1681 = vmatpush1.bf16.msra.mxu0 %v1168
  %1682 = vmatprep.subr.bf16.mxu0 %v1171
  %1683 = vmatpush1.bf16.msra.mxu0 %v1170
  %1684 = vmatprep.subr.bf16.mxu0 %v1173
  %1685 = vmatpush1.bf16.msra.mxu0 %v1172
  %1686 = vmatprep.subr.bf16.mxu0 %v1175
  %1687 = vmatpush1.bf16.msra.mxu0 %v1174
  %1688 = vmatprep.subr.bf16.mxu0 %v1177
  %1689 = vmatpush1.bf16.msra.mxu0 %v1176
  %1690 = vmatprep.mubr.bf16.mxu0 %v347
  %1691 = vmatmul.mubr.bf16.gmra.mrb[0].mxu0 %v346
  %v1692 = vpop.f32.mrb[0].mxu0
  %v1693 = vadd.f32 %v291, %v1692
  %v1694 = vpop.f32.mrb[0].mxu0
  %v1695 = vadd.f32 %v295, %v1694
  %v1696 = vpop.f32.mrb[0].mxu0
  %v1697 = vadd.f32 %v291, %v1696
  %v1698 = vpop.f32.mrb[0].mxu0
  %v1699 = vadd.f32 %v295, %v1698
  %1700 = vdwg.mxu0
  %1701 = vmatprep.subr.bf16.mxu0 %v1179
  %1702 = vmatpush1.bf16.msra.mxu0 %v1178
  %1703 = vmatprep.subr.bf16.mxu0 %v1181
  %1704 = vmatpush1.bf16.msra.mxu0 %v1180
  %1705 = vmatprep.subr.bf16.mxu0 %v1183
  %1706 = vmatpush1.bf16.msra.mxu0 %v1182
  %1707 = vmatprep.subr.bf16.mxu0 %v1185
  %1708 = vmatpush1.bf16.msra.mxu0 %v1184
  %1709 = vmatprep.subr.bf16.mxu0 %v1187
  %1710 = vmatpush1.bf16.msra.mxu0 %v1186
  %1711 = vmatprep.subr.bf16.mxu0 %v1189
  %1712 = vmatpush1.bf16.msra.mxu0 %v1188
  %1713 = vmatprep.subr.bf16.mxu0 %v1191
  %1714 = vmatpush1.bf16.msra.mxu0 %v1190
  %1715 = vmatprep.subr.bf16.mxu0 %v1193
  %1716 = vmatpush1.bf16.msra.mxu0 %v1192
  %1717 = vmatprep.subr.bf16.mxu0 %v1195
  %1718 = vmatpush1.bf16.msra.mxu0 %v1194
  %1719 = vmatprep.subr.bf16.mxu0 %v1197
  %1720 = vmatpush1.bf16.msra.mxu0 %v1196
  %1721 = vmatprep.subr.bf16.mxu0 %v1199
  %1722 = vmatpush1.bf16.msra.mxu0 %v1198
  %1723 = vmatprep.subr.bf16.mxu0 %v1201
  %1724 = vmatpush1.bf16.msra.mxu0 %v1200
  %1725 = vmatprep.subr.bf16.mxu0 %v1203
  %1726 = vmatpush1.bf16.msra.mxu0 %v1202
  %1727 = vmatprep.subr.bf16.mxu0 %v1205
  %1728 = vmatpush1.bf16.msra.mxu0 %v1204
  %1729 = vmatprep.subr.bf16.mxu0 %v1207
  %1730 = vmatpush1.bf16.msra.mxu0 %v1206
  %1731 = vmatprep.subr.bf16.mxu0 %v1209
  %1732 = vmatpush1.bf16.msra.mxu0 %v1208
  %1733 = vmatprep.mubr.bf16.mxu0 %v349
  %1734 = vmatmul.mubr.bf16.gmra.mrb[0].mxu0 %v348
  %v1735 = vpop.f32.mrb[0].mxu0
  %v1736 = vadd.f32 %v1693, %v1735
  %v1737 = vpop.f32.mrb[0].mxu0
  %v1738 = vadd.f32 %v1695, %v1737
  %v1739 = vpop.f32.mrb[0].mxu0
  %v1740 = vadd.f32 %v1697, %v1739
  %v1741 = vpop.f32.mrb[0].mxu0
  %v1742 = vadd.f32 %v1699, %v1741
  %1743 = vdwg.mxu0
  %1744 = vmatprep.subr.bf16.mxu0 %v1211
  %1745 = vmatpush1.bf16.msra.mxu0 %v1210
  %1746 = vmatprep.subr.bf16.mxu0 %v1213
  %1747 = vmatpush1.bf16.msra.mxu0 %v1212
  %1748 = vmatprep.subr.bf16.mxu0 %v1215
  %1749 = vmatpush1.bf16.msra.mxu0 %v1214
  %1750 = vmatprep.subr.bf16.mxu0 %v1217
  %1751 = vmatpush1.bf16.msra.mxu0 %v1216
  %1752 = vmatprep.subr.bf16.mxu0 %v1219
  %1753 = vmatpush1.bf16.msra.mxu0 %v1218
  %1754 = vmatprep.subr.bf16.mxu0 %v1221
  %1755 = vmatpush1.bf16.msra.mxu0 %v1220
  %1756 = vmatprep.subr.bf16.mxu0 %v1223
  %1757 = vmatpush1.bf16.msra.mxu0 %v1222
  %1758 = vmatprep.subr.bf16.mxu0 %v1225
  %1759 = vmatpush1.bf16.msra.mxu0 %v1224
  %1760 = vmatprep.subr.bf16.mxu0 %v1227
  %1761 = vmatpush1.bf16.msra.mxu0 %v1226
  %1762 = vmatprep.subr.bf16.mxu0 %v1229
  %1763 = vmatpush1.bf16.msra.mxu0 %v1228
  %1764 = vmatprep.subr.bf16.mxu0 %v1231
  %1765 = vmatpush1.bf16.msra.mxu0 %v1230
  %1766 = vmatprep.subr.bf16.mxu0 %v1233
  %1767 = vmatpush1.bf16.msra.mxu0 %v1232
  %1768 = vmatprep.subr.bf16.mxu0 %v1235
  %1769 = vmatpush1.bf16.msra.mxu0 %v1234
  %1770 = vmatprep.subr.bf16.mxu0 %v1237
  %1771 = vmatpush1.bf16.msra.mxu0 %v1236
  %1772 = vmatprep.subr.bf16.mxu0 %v1239
  %1773 = vmatpush1.bf16.msra.mxu0 %v1238
  %1774 = vmatprep.subr.bf16.mxu0 %v1241
  %1775 = vmatpush1.bf16.msra.mxu0 %v1240
  %1776 = vmatprep.mubr.bf16.mxu0 %v351
  %1777 = vmatmul.mubr.bf16.gmra.mrb[0].mxu0 %v350
  %v1778 = vpop.f32.mrb[0].mxu0
  %v1779 = vadd.f32 %v1736, %v1778
  %v1780 = vpop.f32.mrb[0].mxu0
  %v1781 = vadd.f32 %v1738, %v1780
  %v1782 = vpop.f32.mrb[0].mxu0
  %v1783 = vadd.f32 %v1740, %v1782
  %v1784 = vpop.f32.mrb[0].mxu0
  %v1785 = vadd.f32 %v1742, %v1784
  %1786 = vdwg.mxu0
  %1787 = vmatprep.subr.bf16.mxu0 %v1243
  %1788 = vmatpush1.bf16.msra.mxu0 %v1242
  %1789 = vmatprep.subr.bf16.mxu0 %v1245
  %1790 = vmatpush1.bf16.msra.mxu0 %v1244
  %1791 = vmatprep.subr.bf16.mxu0 %v1247
  %1792 = vmatpush1.bf16.msra.mxu0 %v1246
  %1793 = vmatprep.subr.bf16.mxu0 %v1249
  %1794 = vmatpush1.bf16.msra.mxu0 %v1248
  %1795 = vmatprep.subr.bf16.mxu0 %v1251
  %1796 = vmatpush1.bf16.msra.mxu0 %v1250
  %1797 = vmatprep.subr.bf16.mxu0 %v1253
  %1798 = vmatpush1.bf16.msra.mxu0 %v1252
  %1799 = vmatprep.subr.bf16.mxu0 %v1255
  %1800 = vmatpush1.bf16.msra.mxu0 %v1254
  %1801 = vmatprep.subr.bf16.mxu0 %v1257
  %1802 = vmatpush1.bf16.msra.mxu0 %v1256
  %1803 = vmatprep.subr.bf16.mxu0 %v1259
  %1804 = vmatpush1.bf16.msra.mxu0 %v1258
  %1805 = vmatprep.subr.bf16.mxu0 %v1261
  %1806 = vmatpush1.bf16.msra.mxu0 %v1260
  %1807 = vmatprep.subr.bf16.mxu0 %v1263
  %1808 = vmatpush1.bf16.msra.mxu0 %v1262
  %1809 = vmatprep.subr.bf16.mxu0 %v1265
  %1810 = vmatpush1.bf16.msra.mxu0 %v1264
  %1811 = vmatprep.subr.bf16.mxu0 %v1267
  %1812 = vmatpush1.bf16.msra.mxu0 %v1266
  %1813 = vmatprep.subr.bf16.mxu0 %v1269
  %1814 = vmatpush1.bf16.msra.mxu0 %v1268
  %1815 = vmatprep.subr.bf16.mxu0 %v1271
  %1816 = vmatpush1.bf16.msra.mxu0 %v1270
  %1817 = vmatprep.subr.bf16.mxu0 %v1273
  %1818 = vmatpush1.bf16.msra.mxu0 %v1272
  %1819 = vmatprep.mubr.bf16.mxu0 %v353
  %1820 = vmatmul.mubr.bf16.gmra.mrb[0].mxu0 %v352
  %v1821 = vpop.f32.mrb[0].mxu0
  %v1822 = vadd.f32 %v1779, %v1821
  %v1823 = vpop.f32.mrb[0].mxu0
  %v1824 = vadd.f32 %v1781, %v1823
  %v1825 = vpop.f32.mrb[0].mxu0
  %v1826 = vadd.f32 %v1783, %v1825
  %v1827 = vpop.f32.mrb[0].mxu0
  %v1828 = vadd.f32 %v1785, %v1827
  %1829 = vdwg.mxu0
  %1830 = vmatprep.subr.bf16.mxu0 %v1275
  %1831 = vmatpush1.bf16.msra.mxu0 %v1274
  %1832 = vmatprep.subr.bf16.mxu0 %v1277
  %1833 = vmatpush1.bf16.msra.mxu0 %v1276
  %1834 = vmatprep.subr.bf16.mxu0 %v1279
  %1835 = vmatpush1.bf16.msra.mxu0 %v1278
  %1836 = vmatprep.subr.bf16.mxu0 %v1281
  %1837 = vmatpush1.bf16.msra.mxu0 %v1280
  %1838 = vmatprep.subr.bf16.mxu0 %v1283
  %1839 = vmatpush1.bf16.msra.mxu0 %v1282
  %1840 = vmatprep.subr.bf16.mxu0 %v1285
  %1841 = vmatpush1.bf16.msra.mxu0 %v1284
  %1842 = vmatprep.subr.bf16.mxu0 %v1287
  %1843 = vmatpush1.bf16.msra.mxu0 %v1286
  %1844 = vmatprep.subr.bf16.mxu0 %v1289
  %1845 = vmatpush1.bf16.msra.mxu0 %v1288
  %1846 = vmatprep.subr.bf16.mxu0 %v1291
  %1847 = vmatpush1.bf16.msra.mxu0 %v1290
  %1848 = vmatprep.subr.bf16.mxu0 %v1293
  %1849 = vmatpush1.bf16.msra.mxu0 %v1292
  %1850 = vmatprep.subr.bf16.mxu0 %v1295
  %1851 = vmatpush1.bf16.msra.mxu0 %v1294
  %1852 = vmatprep.subr.bf16.mxu0 %v1297
  %1853 = vmatpush1.bf16.msra.mxu0 %v1296
  %1854 = vmatprep.subr.bf16.mxu0 %v1299
  %1855 = vmatpush1.bf16.msra.mxu0 %v1298
  %1856 = vmatprep.subr.bf16.mxu0 %v1301
  %1857 = vmatpush1.bf16.msra.mxu0 %v1300
  %1858 = vmatprep.subr.bf16.mxu0 %v1303
  %1859 = vmatpush1.bf16.msra.mxu0 %v1302
  %1860 = vmatprep.subr.bf16.mxu0 %v1305
  %1861 = vmatpush1.bf16.msra.mxu0 %v1304
  %1862 = vmatprep.mubr.bf16.mxu0 %v355
  %1863 = vmatmul.mubr.bf16.gmra.mrb[0].mxu0 %v354
  %v1864 = vpop.f32.mrb[0].mxu0
  %v1865 = vadd.f32 %v1822, %v1864
  %v1866 = vpop.f32.mrb[0].mxu0
  %v1867 = vadd.f32 %v1824, %v1866
  %v1868 = vpop.f32.mrb[0].mxu0
  %v1869 = vadd.f32 %v1826, %v1868
  %v1870 = vpop.f32.mrb[0].mxu0
  %v1871 = vadd.f32 %v1828, %v1870
  %1872 = vdwg.mxu0
  %1873 = vmatprep.subr.bf16.mxu0 %v1307
  %1874 = vmatpush1.bf16.msra.mxu0 %v1306
  %1875 = vmatprep.subr.bf16.mxu0 %v1309
  %1876 = vmatpush1.bf16.msra.mxu0 %v1308
  %1877 = vmatprep.subr.bf16.mxu0 %v1311
  %1878 = vmatpush1.bf16.msra.mxu0 %v1310
  %1879 = vmatprep.subr.bf16.mxu0 %v1313
  %1880 = vmatpush1.bf16.msra.mxu0 %v1312
  %1881 = vmatprep.subr.bf16.mxu0 %v1315
  %1882 = vmatpush1.bf16.msra.mxu0 %v1314
  %1883 = vmatprep.subr.bf16.mxu0 %v1317
  %1884 = vmatpush1.bf16.msra.mxu0 %v1316
  %1885 = vmatprep.subr.bf16.mxu0 %v1319
  %1886 = vmatpush1.bf16.msra.mxu0 %v1318
  %1887 = vmatprep.subr.bf16.mxu0 %v1321
  %1888 = vmatpush1.bf16.msra.mxu0 %v1320
  %1889 = vmatprep.subr.bf16.mxu0 %v1323
  %1890 = vmatpush1.bf16.msra.mxu0 %v1322
  %1891 = vmatprep.subr.bf16.mxu0 %v1325
  %1892 = vmatpush1.bf16.msra.mxu0 %v1324
  %1893 = vmatprep.subr.bf16.mxu0 %v1327
  %1894 = vmatpush1.bf16.msra.mxu0 %v1326
  %1895 = vmatprep.subr.bf16.mxu0 %v1329
  %1896 = vmatpush1.bf16.msra.mxu0 %v1328
  %1897 = vmatprep.subr.bf16.mxu0 %v1331
  %1898 = vmatpush1.bf16.msra.mxu0 %v1330
  %1899 = vmatprep.subr.bf16.mxu0 %v1333
  %1900 = vmatpush1.bf16.msra.mxu0 %v1332
  %1901 = vmatprep.subr.bf16.mxu0 %v1335
  %1902 = vmatpush1.bf16.msra.mxu0 %v1334
  %1903 = vmatprep.subr.bf16.mxu0 %v1337
  %1904 = vmatpush1.bf16.msra.mxu0 %v1336
  %1905 = vmatprep.mubr.bf16.mxu0 %v357
  %1906 = vmatmul.mubr.bf16.gmra.mrb[0].mxu0 %v356
  %v1907 = vpop.f32.mrb[0].mxu0
  %v1908 = vadd.f32 %v1865, %v1907
  %v1909 = vpop.f32.mrb[0].mxu0
  %v1910 = vadd.f32 %v1867, %v1909
  %v1911 = vpop.f32.mrb[0].mxu0
  %v1912 = vadd.f32 %v1869, %v1911
  %v1913 = vpop.f32.mrb[0].mxu0
  %v1914 = vadd.f32 %v1871, %v1913
  %1915 = vdwg.mxu0
  %1916 = vmatprep.subr.bf16.mxu0 %v1339
  %1917 = vmatpush1.bf16.msra.mxu0 %v1338
  %1918 = vmatprep.subr.bf16.mxu0 %v1341
  %1919 = vmatpush1.bf16.msra.mxu0 %v1340
  %1920 = vmatprep.subr.bf16.mxu0 %v1343
  %1921 = vmatpush1.bf16.msra.mxu0 %v1342
  %1922 = vmatprep.subr.bf16.mxu0 %v1345
  %1923 = vmatpush1.bf16.msra.mxu0 %v1344
  %1924 = vmatprep.subr.bf16.mxu0 %v1347
  %1925 = vmatpush1.bf16.msra.mxu0 %v1346
  %1926 = vmatprep.subr.bf16.mxu0 %v1349
  %1927 = vmatpush1.bf16.msra.mxu0 %v1348
  %1928 = vmatprep.subr.bf16.mxu0 %v1351
  %1929 = vmatpush1.bf16.msra.mxu0 %v1350
  %1930 = vmatprep.subr.bf16.mxu0 %v1353
  %1931 = vmatpush1.bf16.msra.mxu0 %v1352
  %1932 = vmatprep.subr.bf16.mxu0 %v1355
  %1933 = vmatpush1.bf16.msra.mxu0 %v1354
  %1934 = vmatprep.subr.bf16.mxu0 %v1357
  %1935 = vmatpush1.bf16.msra.mxu0 %v1356
  %1936 = vmatprep.subr.bf16.mxu0 %v1359
  %1937 = vmatpush1.bf16.msra.mxu0 %v1358
  %1938 = vmatprep.subr.bf16.mxu0 %v1361
  %1939 = vmatpush1.bf16.msra.mxu0 %v1360
  %1940 = vmatprep.subr.bf16.mxu0 %v1363
  %1941 = vmatpush1.bf16.msra.mxu0 %v1362
  %1942 = vmatprep.subr.bf16.mxu0 %v1365
  %1943 = vmatpush1.bf16.msra.mxu0 %v1364
  %1944 = vmatprep.subr.bf16.mxu0 %v1367
  %1945 = vmatpush1.bf16.msra.mxu0 %v1366
  %1946 = vmatprep.subr.bf16.mxu0 %v1369
  %1947 = vmatpush1.bf16.msra.mxu0 %v1368
  %1948 = vmatprep.mubr.bf16.mxu0 %v359
  %1949 = vmatmul.mubr.bf16.gmra.mrb[0].mxu0 %v358
  %v1950 = vpop.f32.mrb[0].mxu0
  %v1951 = vadd.f32 %v1908, %v1950
  %v1952 = vpop.f32.mrb[0].mxu0
  %v1953 = vadd.f32 %v1910, %v1952
  %v1954 = vpop.f32.mrb[0].mxu0
  %v1955 = vadd.f32 %v1912, %v1954
  %v1956 = vpop.f32.mrb[0].mxu0
  %v1957 = vadd.f32 %v1914, %v1956
  %1958 = vdwg.mxu0
  %1959 = vmatprep.subr.bf16.mxu0 %v1371
  %1960 = vmatpush1.bf16.msra.mxu0 %v1370
  %1961 = vmatprep.subr.bf16.mxu0 %v1373
  %1962 = vmatpush1.bf16.msra.mxu0 %v1372
  %1963 = vmatprep.subr.bf16.mxu0 %v1375
  %1964 = vmatpush1.bf16.msra.mxu0 %v1374
  %1965 = vmatprep.subr.bf16.mxu0 %v1377
  %1966 = vmatpush1.bf16.msra.mxu0 %v1376
  %1967 = vmatprep.subr.bf16.mxu0 %v1379
  %1968 = vmatpush1.bf16.msra.mxu0 %v1378
  %1969 = vmatprep.subr.bf16.mxu0 %v1381
  %1970 = vmatpush1.bf16.msra.mxu0 %v1380
  %1971 = vmatprep.subr.bf16.mxu0 %v1383
  %1972 = vmatpush1.bf16.msra.mxu0 %v1382
  %1973 = vmatprep.subr.bf16.mxu0 %v1385
  %1974 = vmatpush1.bf16.msra.mxu0 %v1384
  %1975 = vmatprep.subr.bf16.mxu0 %v1387
  %1976 = vmatpush1.bf16.msra.mxu0 %v1386
  %1977 = vmatprep.subr.bf16.mxu0 %v1389
  %1978 = vmatpush1.bf16.msra.mxu0 %v1388
  %1979 = vmatprep.subr.bf16.mxu0 %v1391
  %1980 = vmatpush1.bf16.msra.mxu0 %v1390
  %1981 = vmatprep.subr.bf16.mxu0 %v1393
  %1982 = vmatpush1.bf16.msra.mxu0 %v1392
  %1983 = vmatprep.subr.bf16.mxu0 %v1395
  %1984 = vmatpush1.bf16.msra.mxu0 %v1394
  %1985 = vmatprep.subr.bf16.mxu0 %v1397
  %1986 = vmatpush1.bf16.msra.mxu0 %v1396
  %1987 = vmatprep.subr.bf16.mxu0 %v1399
  %1988 = vmatpush1.bf16.msra.mxu0 %v1398
  %1989 = vmatprep.subr.bf16.mxu0 %v1401
  %1990 = vmatpush1.bf16.msra.mxu0 %v1400
  %1991 = vmatprep.mubr.bf16.mxu0 %v361
  %1992 = vmatmul.mubr.bf16.gmra.mrb[0].mxu0 %v360
  %v1993 = vpop.f32.mrb[0].mxu0
  %v1994 = vadd.f32 %v1951, %v1993
  %v1995 = vpop.f32.mrb[0].mxu0
  %v1996 = vadd.f32 %v1953, %v1995
  %v1997 = vpop.f32.mrb[0].mxu0
  %v1998 = vadd.f32 %v1955, %v1997
  %v1999 = vpop.f32.mrb[0].mxu0
  %v2000 = vadd.f32 %v1957, %v1999
  %2001 = vdwg.mxu0
  %vm2002 = vcmp.gt.f32.partialorder %v1994, 0.0
  %vm2003 = vcmp.gt.f32.partialorder %v1996, 0.0
  %vm2004 = vcmp.gt.f32.partialorder %v1998, 0.0
  %vm2005 = vcmp.gt.f32.partialorder %v2000, 0.0
  %v2006 = vmul.f32 %v1994, 0.2
  %v2007 = vmul.f32 %v1996, 0.2
  %v2008 = vmul.f32 %v1998, 0.2
  %v2009 = vmul.f32 %v2000, 0.2
  %v2010 = vsel %vm2002, %v1994, %v2006
  %v2011 = vsel %vm2003, %v1996, %v2007
  %v2012 = vsel %vm2004, %v1998, %v2008
  %v2013 = vsel %vm2005, %v2000, %v2009
  %v2014 = vpack.c.bf16 %v2012, %v2010
  %v2015 = vpack.c.bf16 %v2013, %v2011
  %v2018 = vunpack.c.l.b16 %v2014
  %v2019 = vunpack.c.l.b16 %v2015
  %v2020 = vunpack.c.h.b16 %v2014
  %v2021 = vunpack.c.h.b16 %v2015
  %v2022 = vpack.c.b16 %v2019, %v2018
  %v2023 = vpack.c.b16 %v2021, %v2020
  %2026 = vst [vmem:[%s3] sm:$0xff] %v2022
  %2027 = vst [vmem:[%s3 + $0x8] sm:$0xff] %v2023
  // Predicated region
  $region14: #{_generator_forward_impl.10} parent=0 // pred_check
    _
  $region15: #{_generator_forward_impl.10} parent=0 // pred_check_branch
    %2029 = sbr.rel (0) target = $region17
  $region16: #{_generator_forward_impl.10} parent=0 // pred_region
    _
  $region17: #{_generator_forward_impl.10} parent=0 // pred_fallthru
    _
  // Predicated region
  $region18: #{_generator_forward_impl.10} parent=0 // pred_check
    _
  $region19: #{_generator_forward_impl.10} parent=0 // pred_check_branch
    %2031 = sbr.rel (0) target = $region21
  $region20: #{_generator_forward_impl.10} parent=0 // pred_region
    _
  $region21: #{_generator_forward_impl.10} parent=0 // pred_fallthru
    _

// kernel: _generator_forward_impl.12
$region0: #{_generator_forward_impl.12}
  #allocation0 [shape = 'u32[]', space=smem, size = 0x4, offset = 0x4, fixed_abs, tag = 'smem constant byte address 0x4 - core index']
  #allocation1 [shape = 'u32[144,128]{1,0:T(1,128)}', space=vmem, size = 0x12000, scoped, tag = 'internal scratch']
  %s0 = inlined_call_operand.vmem [shape: bf16[4,16,1024], index: 0, kind: input, shape index: {}]
  %s1 = inlined_call_operand.vmem [shape: bf16[4,1024,256], index: 1, kind: input, shape index: {}]
  %s2 = inlined_call_operand.vmem [shape: f32[1,256], index: 2, kind: input, shape index: {}]
  %s3 = inlined_call_operand.vmem [shape: bf16[4,16,256], index: 3, kind: output, shape index: {}]
  %s4 = sld [smem:[#allocation0]]
  $region45: #{_generator_forward_impl.12} parent=0
    _
  %s6 = ssub.s32 1, %s4
  %s7 = scalar_select 0, %s6, %s4
  loop: start=0, step=1, limit=6
  $region2: #{_generator_forward_impl.12} parent=0 // loop_pre_header
    _
  $region3: #{_generator_forward_impl.12} parent=0 // loop_header
    %s9 = sphi 0, %s13
    %p10 = scmp.ge.s32.totalorder %s9, 6
    %s16 = sphi 0, %s35
    %s17 = sphi 0, %s31
    %s18 = sphi 0, %s27
    %s19 = sphi 0, %s16
    %s20 = sphi 0, %s17
    %s21 = sphi 0, %s18
    %s22 = sphi 0, %s19
    %s23 = sphi 0, %s20
    %s24 = sphi 0, %s21
    %s40 = sphi 0, %s42
    %s43 = sphi 0, %s40
    %s44 = sphi 0, %s43
    %s60 = sphi 0, %s44
    %s68 = sphi 0, %s70
    %s71 = sphi 0, %s68
    %s72 = sphi 0, %s71
    %s88 = sphi 0, %s72
    %s94 = sphi 0, %s96
    %s97 = sphi 0, %s94
    %s98 = sphi 0, %s97
    %s114 = sphi 0, %s98
    %s124 = sphi 0, %s126
    %s127 = sphi 0, %s124
    %s128 = sphi 0, %s127
    %s144 = sphi 0, %s128
  $region4: #{_generator_forward_impl.12} parent=0 // loop_header_branch
    %12 = sbr.rel (%p10) target = $region8
  $region5: #{_generator_forward_impl.12} parent=0 // loop_body
    %s14 = ssub.s32 %s9, 1
    %s15 = ssub.s32 %s9, 2
    %s25 = sadd.s32 1, %s18
    %p26 = scmp.ge.s32.totalorder %s25, 1
    %s27 = scalar_select %p26, 0, %s25
    %s28 = sadd.s32 1, %s17
    %s29 = scalar_select %p26, %s28, %s17
    %p30 = scmp.ge.s32.totalorder %s29, 1
    %s31 = scalar_select %p30, 0, %s29
    %s32 = sadd.s32 1, %s16
    %s33 = scalar_select %p30, %s32, %s16
    %p34 = scmp.ge.s32.totalorder %s33, 4
    %s35 = scalar_select %p34, 0, %s33
    %s36 = ssub.s32 %s16, %s35
    %s37 = ssub.s32 %s17, %s31
    %s38 = sor.u32 %s36, %s37
    %p39 = scmp.eq.s32.totalorder %s38, 0
    %s41 = sadd.s32 %s40, 1
    %s42 = scalar_select %p39, %s40, %s41
    %p45 = pneg %p39
    %p46 = scmp.eq.s32.totalorder %s9, 3
    %p47 = por %p45, %p46
    %p48 = scmp.ne.s32.totalorder %s40, %s43
    %p49 = scmp.eq.s32.totalorder %s9, 0
    %p50 = por %p48, %p49
    %p51 = scmp.ne.s32.totalorder %s40, %s43
    %p52 = scmp.eq.s32.totalorder %s14, 3
    %p53 = por %p51, %p52
    %p54 = scmp.ne.s32.totalorder %s43, %s44
    %p55 = scmp.eq.s32.totalorder %s14, 0
    %p56 = por %p54, %p55
    %p57 = scmp.ne.s32.totalorder %s43, %s44
    %p58 = scmp.eq.s32.totalorder %s15, 3
    %p59 = por %p57, %p58
    %p61 = scmp.ne.s32.totalorder %s44, %s60
    %p62 = scmp.eq.s32.totalorder %s15, 0
    %p63 = por %p61, %p62
    %s64 = ssub.s32 %s16, %s35
    %s65 = ssub.s32 %s18, %s27
    %s66 = sor.u32 %s64, %s65
    %p67 = scmp.eq.s32.totalorder %s66, 0
    %s69 = sadd.s32 %s68, 1
    %s70 = scalar_select %p67, %s68, %s69
    %p73 = pneg %p67
    %p74 = scmp.eq.s32.totalorder %s9, 3
    %p75 = por %p73, %p74
    %p76 = scmp.ne.s32.totalorder %s68, %s71
    %p77 = scmp.eq.s32.totalorder %s9, 0
    %p78 = por %p76, %p77
    %p79 = scmp.ne.s32.totalorder %s68, %s71
    %p80 = scmp.eq.s32.totalorder %s14, 3
    %p81 = por %p79, %p80
    %p82 = scmp.ne.s32.totalorder %s71, %s72
    %p83 = scmp.eq.s32.totalorder %s14, 0
    %p84 = por %p82, %p83
    %p85 = scmp.ne.s32.totalorder %s71, %s72
    %p86 = scmp.eq.s32.totalorder %s15, 3
    %p87 = por %p85, %p86
    %p89 = scmp.ne.s32.totalorder %s72, %s88
    %p90 = scmp.eq.s32.totalorder %s15, 0
    %p91 = por %p89, %p90
    %s92 = ssub.s32 %s18, %s27
    %p93 = scmp.eq.s32.totalorder %s92, 0
    %s95 = sadd.s32 %s94, 1
    %s96 = scalar_select %p93, %s94, %s95
    %p99 = pneg %p93
    %p100 = scmp.eq.s32.totalorder %s9, 3
    %p101 = por %p99, %p100
    %p102 = scmp.ne.s32.totalorder %s94, %s97
    %p103 = scmp.eq.s32.totalorder %s9, 0
    %p104 = por %p102, %p103
    %p105 = scmp.ne.s32.totalorder %s94, %s97
    %p106 = scmp.eq.s32.totalorder %s14, 3
    %p107 = por %p105, %p106
    %p108 = scmp.ne.s32.totalorder %s97, %s98
    %p109 = scmp.eq.s32.totalorder %s14, 0
    %p110 = por %p108, %p109
    %p111 = scmp.ne.s32.totalorder %s97, %s98
    %p112 = scmp.eq.s32.totalorder %s15, 3
    %p113 = por %p111, %p112
    %p115 = scmp.ne.s32.totalorder %s98, %s114
    %p116 = scmp.eq.s32.totalorder %s15, 0
    %p117 = por %p115, %p116
    %s118 = ssub.s32 %s16, %s35
    %s119 = ssub.s32 %s17, %s31
    %s120 = sor.u32 %s118, %s119
    %s121 = ssub.s32 %s18, %s27
    %s122 = sor.u32 %s120, %s121
    %p123 = scmp.eq.s32.totalorder %s122, 0
    %s125 = sadd.s32 %s124, 1
    %s126 = scalar_select %p123, %s124, %s125
    %p129 = pneg %p123
    %p130 = scmp.eq.s32.totalorder %s9, 3
    %p131 = por %p129, %p130
    %p132 = scmp.ne.s32.totalorder %s124, %s127
    %p133 = scmp.eq.s32.totalorder %s9, 0
    %p134 = por %p132, %p133
    %p135 = scmp.ne.s32.totalorder %s124, %s127
    %p136 = scmp.eq.s32.totalorder %s14, 3
    %p137 = por %p135, %p136
    %p138 = scmp.ne.s32.totalorder %s127, %s128
    %p139 = scmp.eq.s32.totalorder %s14, 0
    %p140 = por %p138, %p139
    %p141 = scmp.ne.s32.totalorder %s127, %s128
    %p142 = scmp.eq.s32.totalorder %s15, 3
    %p143 = por %p141, %p142
    %p145 = scmp.ne.s32.totalorder %s128, %s144
    %p146 = scmp.eq.s32.totalorder %s15, 0
    %p147 = por %p145, %p146
    %p148 = scmp.le.s32.totalorder 1, %s9
    %p149 = scmp.lt.s32.totalorder %s9, 5
    %p150 = pnand %p148, %p149
    %p151 = pneg %p150
    // Predicated region
    $region9: #{_generator_forward_impl.12} parent=5 // pred_check
      _
    $region10: #{_generator_forward_impl.12} parent=5 // pred_check_branch
      %153 = sbr.rel (%p150) target = $region12
    $region11: #{_generator_forward_impl.12} parent=5 // pred_region
      %s154 = ssub.s32 %s9, 1
      // Predicated region
      $region13: #{_generator_forward_impl.12} parent=11 // pred_check
        %p155 = pneg %p110
      $region14: #{_generator_forward_impl.12} parent=11 // pred_check_branch
        %157 = sbr.rel (%p155) target = $region16
      $region15: #{_generator_forward_impl.12} parent=11 // pred_region
        %s158 = smul.u32 2, %s21
        %p159 = scmp.lt.s32.totalorder %s158, 1
        %s160 = scalar_select %p159, %s158, 1
        %s161 = scalar_lea.vmem %s2, %s160
        %s162 = smul.u32 2, %s21
      $region16: #{_generator_forward_impl.12} parent=11 // pred_fallthru
        _
    $region12: #{_generator_forward_impl.12} parent=5 // pred_fallthru
      _
    %p163 = scmp.lt.s32.totalorder %s9, 4
    // Predicated region
    $region17: #{_generator_forward_impl.12} parent=5 // pred_check
      %p164 = pneg %p163
    $region18: #{_generator_forward_impl.12} parent=5 // pred_check_branch
      %166 = sbr.rel (%p164) target = $region20
    $region19: #{_generator_forward_impl.12} parent=5 // pred_region
      // Predicated region
      $region21: #{_generator_forward_impl.12} parent=19 // pred_check
        %p167 = pneg %p50
      $region22: #{_generator_forward_impl.12} parent=19 // pred_check_branch
        %169 = sbr.rel (%p167) target = $region24
      $region23: #{_generator_forward_impl.12} parent=19 // pred_region
        %s170 = smul.u32 2, %s17
        %p171 = scmp.lt.s32.totalorder %s16, 3
        %s172 = scalar_select %p171, %s16, 3
        %p173 = scmp.lt.s32.totalorder %s170, 1
        %s174 = scalar_select %p173, %s170, 1
        %s175 = smul.addr %s174, 8
        %s176 = smul.addr %s172, 16
        %s177 = sadd.s32 %s175, %s176
        %s178 = smul.addr %s177, 4
        %s179 = scalar_lea.vmem %s0, %s178
        %s180 = smul.u32 2, %s17
      $region24: #{_generator_forward_impl.12} parent=19 // pred_fallthru
        _
      // Predicated region
      $region25: #{_generator_forward_impl.12} parent=19 // pred_check
        %p181 = pneg %p78
      $region26: #{_generator_forward_impl.12} parent=19 // pred_check_branch
        %183 = sbr.rel (%p181) target = $region28
      $region27: #{_generator_forward_impl.12} parent=19 // pred_region
        %s184 = smul.u32 2, %s18
        %p185 = scmp.lt.s32.totalorder %s16, 3
        %s186 = scalar_select %p185, %s16, 3
        %p187 = scmp.lt.s32.totalorder %s184, 1
        %s188 = scalar_select %p187, %s184, 1
        %s189 = smul.addr %s186, 256
        %s190 = sadd.s32 %s188, %s189
        %s191 = smul.addr %s190, 4
        %s192 = scalar_lea.vmem %s1, %s191
        %s193 = smul.u32 2, %s18
      $region28: #{_generator_forward_impl.12} parent=19 // pred_fallthru
        _
    $region20: #{_generator_forward_impl.12} parent=5 // pred_fallthru
      _
    %p194 = scmp.le.s32.totalorder 1, %s9
    %p195 = scmp.lt.s32.totalorder %s9, 5
    %p196 = pnand %p194, %p195
    %p197 = pneg %p196
    // Predicated region
    $region29: #{_generator_forward_impl.12} parent=5 // pred_check
      _
    $region30: #{_generator_forward_impl.12} parent=5 // pred_check_branch
      %199 = sbr.rel (%p196) target = $region32
    $region31: #{_generator_forward_impl.12} parent=5 // pred_region
      %s200 = ssub.s32 %s9, 1
      %s201 = smul.u32 2, %s20
      %p202 = scmp.lt.s32.totalorder %s19, 3
      %s203 = scalar_select %p202, %s19, 3
      %p204 = scmp.lt.s32.totalorder %s201, 1
      %s205 = scalar_select %p204, %s201, 1
      %s206 = smul.addr %s205, 8
      %s207 = smul.addr %s203, 16
      %s208 = sadd.s32 %s206, %s207
      %s209 = smul.addr %s208, 4
      %s210 = scalar_lea.vmem %s0, %s209
      %p211 = pneg %p56
      %p212 = pneg %p53
      %s213 = smul.u32 2, %s21
      %p214 = scmp.lt.s32.totalorder %s19, 3
      %s215 = scalar_select %p214, %s19, 3
      %p216 = scmp.lt.s32.totalorder %s213, 1
      %s217 = scalar_select %p216, %s213, 1
      %s218 = smul.addr %s215, 256
      %s219 = sadd.s32 %s217, %s218
      %s220 = smul.addr %s219, 4
      %s221 = scalar_lea.vmem %s1, %s220
      %p222 = pneg %p84
      %p223 = pneg %p81
      %s224 = smul.u32 2, %s21
      %p225 = scmp.lt.s32.totalorder %s224, 1
      %s226 = scalar_select %p225, %s224, 1
      %s227 = scalar_lea.vmem %s2, %s226
      %p228 = pneg %p110
      %p229 = pneg %p107
      %p230 = pneg %p140
      %p231 = pneg %p137
      %s232 = smul.u32 2, %s20
      %s233 = smul.u32 2, %s21
      %p234 = scmp.lt.s32.totalorder %s19, 3
      %s235 = scalar_select %p234, %s19, 3
      %p236 = scmp.lt.s32.totalorder %s232, 1
      %s237 = scalar_select %p236, %s232, 1
      %p238 = scmp.lt.s32.totalorder %s233, 1
      %s239 = scalar_select %p238, %s233, 1
      %s240 = smul.addr %s237, 2
      %s241 = sadd.s32 %s239, %s240
      %s242 = smul.addr %s235, 4
      %s243 = sadd.s32 %s241, %s242
      %s244 = smul.addr %s243, 4
      %s245 = scalar_lea.vmem %s3, %s244
      %s246 = smul.u32 2, %s20
      %p247 = scmp.lt.s32.totalorder %s19, 3
      %s248 = scalar_select %p247, %s19, 3
      %p249 = scmp.lt.s32.totalorder %s246, 1
      %s250 = scalar_select %p249, %s246, 1
      %s251 = smul.addr %s250, 8
      %s252 = smul.addr %s248, 16
      %s253 = sadd.s32 %s251, %s252
      %s254 = smul.addr %s253, 4
      %s255 = scalar_lea.vmem %s0, %s254
      %s256 = smul.u32 2, %s20
      %s257 = smul.u32 2, %s21
      %p258 = scmp.lt.s32.totalorder %s19, 3
      %s259 = scalar_select %p258, %s19, 3
      %p260 = scmp.lt.s32.totalorder %s257, 1
      %s261 = scalar_select %p260, %s257, 1
      %s262 = smul.addr %s259, 256
      %s263 = sadd.s32 %s261, %s262
      %s264 = smul.addr %s263, 4
      %s265 = scalar_lea.vmem %s1, %s264
      %s266 = smul.u32 2, %s21
      %s267 = smul.u32 2, %s21
      %p268 = scmp.lt.s32.totalorder %s267, 1
      %s269 = scalar_select %p268, %s267, 1
      %s270 = scalar_lea.vmem %s2, %s269
      %s271 = smul.u32 2, %s21
      %s272 = smul.u32 2, %s20
      %s273 = smul.u32 2, %s21
      %p274 = scmp.lt.s32.totalorder %s19, 3
      %s275 = scalar_select %p274, %s19, 3
      %p276 = scmp.lt.s32.totalorder %s272, 1
      %s277 = scalar_select %p276, %s272, 1
      %p278 = scmp.lt.s32.totalorder %s273, 1
      %s279 = scalar_select %p278, %s273, 1
      %s280 = smul.addr %s277, 2
      %s281 = sadd.s32 %s279, %s280
      %s282 = smul.addr %s275, 4
      %s283 = sadd.s32 %s281, %s282
      %s284 = smul.addr %s283, 4
      %s285 = scalar_lea.vmem %s3, %s284
      %s286 = smul.u32 2, %s20
      %s287 = smul.u32 2, %s21
      %v288 = vld [vmem:[%s255] sm:$0xff]
      %v289 = vld [vmem:[%s255 + $0x8] sm:$0xff]
      %v290 = vld [vmem:[%s255 + $0x10] sm:$0xff]
      %v291 = vld [vmem:[%s255 + $0x18] sm:$0xff]
      %v292 = vld [vmem:[%s255 + $0x20] sm:$0xff]
      %v293 = vld [vmem:[%s255 + $0x28] sm:$0xff]
      %v294 = vld [vmem:[%s255 + $0x30] sm:$0xff]
      %v295 = vld [vmem:[%s255 + $0x38] sm:$0xff]
      %v296 = vld [vmem:[%s265] sm:$0xff]
      %v297 = vld [vmem:[%s265 + $0x8] sm:$0xff]
      %v298 = vld [vmem:[%s265 + $0x10] sm:$0xff]
      %v299 = vld [vmem:[%s265 + $0x18] sm:$0xff]
      %v300 = vld [vmem:[%s265 + $0x20] sm:$0xff]
      %v301 = vld [vmem:[%s265 + $0x28] sm:$0xff]
      %v302 = vld [vmem:[%s265 + $0x30] sm:$0xff]
      %v303 = vld [vmem:[%s265 + $0x38] sm:$0xff]
      %v304 = vld [vmem:[%s265 + $0x40] sm:$0xff]
      %v305 = vld [vmem:[%s265 + $0x48] sm:$0xff]
      %v306 = vld [vmem:[%s265 + $0x50] sm:$0xff]
      %v307 = vld [vmem:[%s265 + $0x58] sm:$0xff]
      %v308 = vld [vmem:[%s265 + $0x60] sm:$0xff]
      %v309 = vld [vmem:[%s265 + $0x68] sm:$0xff]
      %v310 = vld [vmem:[%s265 + $0x70] sm:$0xff]
      %v311 = vld [vmem:[%s265 + $0x78] sm:$0xff]
      %v312 = vld [vmem:[%s265 + $0x80] sm:$0xff]
      %v313 = vld [vmem:[%s265 + $0x88] sm:$0xff]
      %v314 = vld [vmem:[%s265 + $0x90] sm:$0xff]
      %v315 = vld [vmem:[%s265 + $0x98] sm:$0xff]
      %v316 = vld [vmem:[%s265 + $0xa0] sm:$0xff]
      %v317 = vld [vmem:[%s265 + $0xa8] sm:$0xff]
      %v318 = vld [vmem:[%s265 + $0xb0] sm:$0xff]
      %v319 = vld [vmem:[%s265 + $0xb8] sm:$0xff]
      %v320 = vld [vmem:[%s265 + $0xc0] sm:$0xff]
      %v321 = vld [vmem:[%s265 + $0xc8] sm:$0xff]
      %v322 = vld [vmem:[%s265 + $0xd0] sm:$0xff]
      %v323 = vld [vmem:[%s265 + $0xd8] sm:$0xff]
      %v324 = vld [vmem:[%s265 + $0xe0] sm:$0xff]
      %v325 = vld [vmem:[%s265 + $0xe8] sm:$0xff]
      %v326 = vld [vmem:[%s265 + $0xf0] sm:$0xff]
      %v327 = vld [vmem:[%s265 + $0xf8] sm:$0xff]
      %v328 = vld [vmem:[%s265 + $0x100] sm:$0xff]
      %v329 = vld [vmem:[%s265 + $0x108] sm:$0xff]
      %v330 = vld [vmem:[%s265 + $0x110] sm:$0xff]
      %v331 = vld [vmem:[%s265 + $0x118] sm:$0xff]
      %v332 = vld [vmem:[%s265 + $0x120] sm:$0xff]
      %v333 = vld [vmem:[%s265 + $0x128] sm:$0xff]
      %v334 = vld [vmem:[%s265 + $0x130] sm:$0xff]
      %v335 = vld [vmem:[%s265 + $0x138] sm:$0xff]
      %v336 = vld [vmem:[%s265 + $0x140] sm:$0xff]
      %v337 = vld [vmem:[%s265 + $0x148] sm:$0xff]
      %v338 = vld [vmem:[%s265 + $0x150] sm:$0xff]
      %v339 = vld [vmem:[%s265 + $0x158] sm:$0xff]
      %v340 = vld [vmem:[%s265 + $0x160] sm:$0xff]
      %v341 = vld [vmem:[%s265 + $0x168] sm:$0xff]
      %v342 = vld [vmem:[%s265 + $0x170] sm:$0xff]
      %v343 = vld [vmem:[%s265 + $0x178] sm:$0xff]
      %v344 = vld [vmem:[%s265 + $0x180] sm:$0xff]
      %v345 = vld [vmem:[%s265 + $0x188] sm:$0xff]
      %v346 = vld [vmem:[%s265 + $0x190] sm:$0xff]
      %v347 = vld [vmem:[%s265 + $0x198] sm:$0xff]
      %v348 = vld [vmem:[%s265 + $0x1a0] sm:$0xff]
      %v349 = vld [vmem:[%s265 + $0x1a8] sm:$0xff]
      %v350 = vld [vmem:[%s265 + $0x1b0] sm:$0xff]
      %v351 = vld [vmem:[%s265 + $0x1b8] sm:$0xff]
      %v352 = vld [vmem:[%s265 + $0x1c0] sm:$0xff]
      %v353 = vld [vmem:[%s265 + $0x1c8] sm:$0xff]
      %v354 = vld [vmem:[%s265 + $0x1d0] sm:$0xff]
      %v355 = vld [vmem:[%s265 + $0x1d8] sm:$0xff]
      %v356 = vld [vmem:[%s265 + $0x1e0] sm:$0xff]
      %v357 = vld [vmem:[%s265 + $0x1e8] sm:$0xff]
      %v358 = vld [vmem:[%s265 + $0x1f0] sm:$0xff]
      %v359 = vld [vmem:[%s265 + $0x1f8] sm:$0xff]
      %v360 = vld [vmem:[%s265 + $0x200] sm:$0xff]
      %v361 = vld [vmem:[%s265 + $0x208] sm:$0xff]
      %v362 = vld [vmem:[%s265 + $0x210] sm:$0xff]
      %v363 = vld [vmem:[%s265 + $0x218] sm:$0xff]
      %v364 = vld [vmem:[%s265 + $0x220] sm:$0xff]
      %v365 = vld [vmem:[%s265 + $0x228] sm:$0xff]
      %v366 = vld [vmem:[%s265 + $0x230] sm:$0xff]
      %v367 = vld [vmem:[%s265 + $0x238] sm:$0xff]
      %v368 = vld [vmem:[%s265 + $0x240] sm:$0xff]
      %v369 = vld [vmem:[%s265 + $0x248] sm:$0xff]
      %v370 = vld [vmem:[%s265 + $0x250] sm:$0xff]
      %v371 = vld [vmem:[%s265 + $0x258] sm:$0xff]
      %v372 = vld [vmem:[%s265 + $0x260] sm:$0xff]
      %v373 = vld [vmem:[%s265 + $0x268] sm:$0xff]
      %v374 = vld [vmem:[%s265 + $0x270] sm:$0xff]
      %v375 = vld [vmem:[%s265 + $0x278] sm:$0xff]
      %v376 = vld [vmem:[%s265 + $0x280] sm:$0xff]
      %v377 = vld [vmem:[%s265 + $0x288] sm:$0xff]
      %v378 = vld [vmem:[%s265 + $0x290] sm:$0xff]
      %v379 = vld [vmem:[%s265 + $0x298] sm:$0xff]
      %v380 = vld [vmem:[%s265 + $0x2a0] sm:$0xff]
      %v381 = vld [vmem:[%s265 + $0x2a8] sm:$0xff]
      %v382 = vld [vmem:[%s265 + $0x2b0] sm:$0xff]
      %v383 = vld [vmem:[%s265 + $0x2b8] sm:$0xff]
      %v384 = vld [vmem:[%s265 + $0x2c0] sm:$0xff]
      %v385 = vld [vmem:[%s265 + $0x2c8] sm:$0xff]
      %v386 = vld [vmem:[%s265 + $0x2d0] sm:$0xff]
      %v387 = vld [vmem:[%s265 + $0x2d8] sm:$0xff]
      %v388 = vld [vmem:[%s265 + $0x2e0] sm:$0xff]
      %v389 = vld [vmem:[%s265 + $0x2e8] sm:$0xff]
      %v390 = vld [vmem:[%s265 + $0x2f0] sm:$0xff]
      %v391 = vld [vmem:[%s265 + $0x2f8] sm:$0xff]
      %v392 = vld [vmem:[%s265 + $0x300] sm:$0xff]
      %v393 = vld [vmem:[%s265 + $0x308] sm:$0xff]
      %v394 = vld [vmem:[%s265 + $0x310] sm:$0xff]
      %v395 = vld [vmem:[%s265 + $0x318] sm:$0xff]
      %v396 = vld [vmem:[%s265 + $0x320] sm:$0xff]
      %v397 = vld [vmem:[%s265 + $0x328] sm:$0xff]
      %v398 = vld [vmem:[%s265 + $0x330] sm:$0xff]
      %v399 = vld [vmem:[%s265 + $0x338] sm:$0xff]
      %v400 = vld [vmem:[%s265 + $0x340] sm:$0xff]
      %v401 = vld [vmem:[%s265 + $0x348] sm:$0xff]
      %v402 = vld [vmem:[%s265 + $0x350] sm:$0xff]
      %v403 = vld [vmem:[%s265 + $0x358] sm:$0xff]
      %v404 = vld [vmem:[%s265 + $0x360] sm:$0xff]
      %v405 = vld [vmem:[%s265 + $0x368] sm:$0xff]
      %v406 = vld [vmem:[%s265 + $0x370] sm:$0xff]
      %v407 = vld [vmem:[%s265 + $0x378] sm:$0xff]
      %v408 = vld [vmem:[%s265 + $0x380] sm:$0xff]
      %v409 = vld [vmem:[%s265 + $0x388] sm:$0xff]
      %v410 = vld [vmem:[%s265 + $0x390] sm:$0xff]
      %v411 = vld [vmem:[%s265 + $0x398] sm:$0xff]
      %v412 = vld [vmem:[%s265 + $0x3a0] sm:$0xff]
      %v413 = vld [vmem:[%s265 + $0x3a8] sm:$0xff]
      %v414 = vld [vmem:[%s265 + $0x3b0] sm:$0xff]
      %v415 = vld [vmem:[%s265 + $0x3b8] sm:$0xff]
      %v416 = vld [vmem:[%s265 + $0x3c0] sm:$0xff]
      %v417 = vld [vmem:[%s265 + $0x3c8] sm:$0xff]
      %v418 = vld [vmem:[%s265 + $0x3d0] sm:$0xff]
      %v419 = vld [vmem:[%s265 + $0x3d8] sm:$0xff]
      %v420 = vld [vmem:[%s265 + $0x3e0] sm:$0xff]
      %v421 = vld [vmem:[%s265 + $0x3e8] sm:$0xff]
      %v422 = vld [vmem:[%s265 + $0x3f0] sm:$0xff]
      %v423 = vld [vmem:[%s265 + $0x3f8] sm:$0xff]
      %v424 = vld [vmem:[%s270] sm:$0x3]
      %v426 = vlaneseq
      %v427 = vshrl.u32 %v426, 7
      %v428 = vsub.s32 0, %v427
      %v429 = vrot.slane %v424, %v428
      %v430 = vlaneseq
      %v431 = vshrl.u32 %v430, 7
      %v432 = vsub.s32 1, %v431
      %v433 = vrot.slane %v424, %v432
      %v444 = vunpack.c.l.b16 %v288
      %v445 = vunpack.c.h.b16 %v288
      %v446 = vunpack.c.l.b16 %v289
      %v447 = vunpack.c.h.b16 %v289
      %v448 = vunpack.c.l.b16 %v290
      %v449 = vunpack.c.h.b16 %v290
      %v450 = vunpack.c.l.b16 %v291
      %v451 = vunpack.c.h.b16 %v291
      %v452 = vunpack.c.l.b16 %v292
      %v453 = vunpack.c.h.b16 %v292
      %v454 = vunpack.c.l.b16 %v293
      %v455 = vunpack.c.h.b16 %v293
      %v456 = vunpack.c.l.b16 %v294
      %v457 = vunpack.c.h.b16 %v294
      %v458 = vunpack.c.l.b16 %v295
      %v459 = vunpack.c.h.b16 %v295
      %v460 = vpack.c.b16 %v452, %v444
      %v461 = vpack.c.b16 %v453, %v445
      %v462 = vpack.c.b16 %v454, %v446
      %v463 = vpack.c.b16 %v455, %v447
      %v464 = vpack.c.b16 %v456, %v448
      %v465 = vpack.c.b16 %v457, %v449
      %v466 = vpack.c.b16 %v458, %v450
      %v467 = vpack.c.b16 %v459, %v451
      %v604 = vunpack.c.l.b16 %v296
      %v605 = vunpack.c.h.b16 %v296
      %v606 = vunpack.c.l.b16 %v297
      %v607 = vunpack.c.h.b16 %v297
      %v608 = vunpack.c.l.b16 %v298
      %v609 = vunpack.c.h.b16 %v298
      %v610 = vunpack.c.l.b16 %v299
      %v611 = vunpack.c.h.b16 %v299
      %v612 = vunpack.c.l.b16 %v300
      %v613 = vunpack.c.h.b16 %v300
      %v614 = vunpack.c.l.b16 %v301
      %v615 = vunpack.c.h.b16 %v301
      %v616 = vunpack.c.l.b16 %v302
      %v617 = vunpack.c.h.b16 %v302
      %v618 = vunpack.c.l.b16 %v303
      %v619 = vunpack.c.h.b16 %v303
      %v620 = vunpack.c.l.b16 %v304
      %v621 = vunpack.c.h.b16 %v304
      %v622 = vunpack.c.l.b16 %v305
      %v623 = vunpack.c.h.b16 %v305
      %v624 = vunpack.c.l.b16 %v306
      %v625 = vunpack.c.h.b16 %v306
      %v626 = vunpack.c.l.b16 %v307
      %v627 = vunpack.c.h.b16 %v307
      %v628 = vunpack.c.l.b16 %v308
      %v629 = vunpack.c.h.b16 %v308
      %v630 = vunpack.c.l.b16 %v309
      %v631 = vunpack.c.h.b16 %v309
      %v632 = vunpack.c.l.b16 %v310
      %v633 = vunpack.c.h.b16 %v310
      %v634 = vunpack.c.l.b16 %v311
      %v635 = vunpack.c.h.b16 %v311
      %v636 = vunpack.c.l.b16 %v312
      %v637 = vunpack.c.h.b16 %v312
      %v638 = vunpack.c.l.b16 %v313
      %v639 = vunpack.c.h.b16 %v313
      %v640 = vunpack.c.l.b16 %v314
      %v641 = vunpack.c.h.b16 %v314
      %v642 = vunpack.c.l.b16 %v315
      %v643 = vunpack.c.h.b16 %v315
      %v644 = vunpack.c.l.b16 %v316
      %v645 = vunpack.c.h.b16 %v316
      %v646 = vunpack.c.l.b16 %v317
      %v647 = vunpack.c.h.b16 %v317
      %v648 = vunpack.c.l.b16 %v318
      %v649 = vunpack.c.h.b16 %v318
      %v650 = vunpack.c.l.b16 %v319
      %v651 = vunpack.c.h.b16 %v319
      %v652 = vunpack.c.l.b16 %v320
      %v653 = vunpack.c.h.b16 %v320
      %v654 = vunpack.c.l.b16 %v321
      %v655 = vunpack.c.h.b16 %v321
      %v656 = vunpack.c.l.b16 %v322
      %v657 = vunpack.c.h.b16 %v322
      %v658 = vunpack.c.l.b16 %v323
      %v659 = vunpack.c.h.b16 %v323
      %v660 = vunpack.c.l.b16 %v324
      %v661 = vunpack.c.h.b16 %v324
      %v662 = vunpack.c.l.b16 %v325
      %v663 = vunpack.c.h.b16 %v325
      %v664 = vunpack.c.l.b16 %v326
      %v665 = vunpack.c.h.b16 %v326
      %v666 = vunpack.c.l.b16 %v327
      %v667 = vunpack.c.h.b16 %v327
      %v668 = vunpack.c.l.b16 %v328
      %v669 = vunpack.c.h.b16 %v328
      %v670 = vunpack.c.l.b16 %v329
      %v671 = vunpack.c.h.b16 %v329
      %v672 = vunpack.c.l.b16 %v330
      %v673 = vunpack.c.h.b16 %v330
      %v674 = vunpack.c.l.b16 %v331
      %v675 = vunpack.c.h.b16 %v331
      %v676 = vunpack.c.l.b16 %v332
      %v677 = vunpack.c.h.b16 %v332
      %v678 = vunpack.c.l.b16 %v333
      %v679 = vunpack.c.h.b16 %v333
      %v680 = vunpack.c.l.b16 %v334
      %v681 = vunpack.c.h.b16 %v334
      %v682 = vunpack.c.l.b16 %v335
      %v683 = vunpack.c.h.b16 %v335
      %v684 = vunpack.c.l.b16 %v336
      %v685 = vunpack.c.h.b16 %v336
      %v686 = vunpack.c.l.b16 %v337
      %v687 = vunpack.c.h.b16 %v337
      %v688 = vunpack.c.l.b16 %v338
      %v689 = vunpack.c.h.b16 %v338
      %v690 = vunpack.c.l.b16 %v339
      %v691 = vunpack.c.h.b16 %v339
      %v692 = vunpack.c.l.b16 %v340
      %v693 = vunpack.c.h.b16 %v340
      %v694 = vunpack.c.l.b16 %v341
      %v695 = vunpack.c.h.b16 %v341
      %v696 = vunpack.c.l.b16 %v342
      %v697 = vunpack.c.h.b16 %v342
      %v698 = vunpack.c.l.b16 %v343
      %v699 = vunpack.c.h.b16 %v343
      %v700 = vunpack.c.l.b16 %v344
      %v701 = vunpack.c.h.b16 %v344
      %v702 = vunpack.c.l.b16 %v345
      %v703 = vunpack.c.h.b16 %v345
      %v704 = vunpack.c.l.b16 %v346
      %v705 = vunpack.c.h.b16 %v346
      %v706 = vunpack.c.l.b16 %v347
      %v707 = vunpack.c.h.b16 %v347
      %v708 = vunpack.c.l.b16 %v348
      %v709 = vunpack.c.h.b16 %v348
      %v710 = vunpack.c.l.b16 %v349
      %v711 = vunpack.c.h.b16 %v349
      %v712 = vunpack.c.l.b16 %v350
      %v713 = vunpack.c.h.b16 %v350
      %v714 = vunpack.c.l.b16 %v351
      %v715 = vunpack.c.h.b16 %v351
      %v716 = vunpack.c.l.b16 %v352
      %v717 = vunpack.c.h.b16 %v352
      %v718 = vunpack.c.l.b16 %v353
      %v719 = vunpack.c.h.b16 %v353
      %v720 = vunpack.c.l.b16 %v354
      %v721 = vunpack.c.h.b16 %v354
      %v722 = vunpack.c.l.b16 %v355
      %v723 = vunpack.c.h.b16 %v355
      %v724 = vunpack.c.l.b16 %v356
      %v725 = vunpack.c.h.b16 %v356
      %v726 = vunpack.c.l.b16 %v357
      %v727 = vunpack.c.h.b16 %v357
      %v728 = vunpack.c.l.b16 %v358
      %v729 = vunpack.c.h.b16 %v358
      %v730 = vunpack.c.l.b16 %v359
      %v731 = vunpack.c.h.b16 %v359
      %v732 = vunpack.c.l.b16 %v360
      %v733 = vunpack.c.h.b16 %v360
      %v734 = vunpack.c.l.b16 %v361
      %v735 = vunpack.c.h.b16 %v361
      %v736 = vunpack.c.l.b16 %v362
      %v737 = vunpack.c.h.b16 %v362
      %v738 = vunpack.c.l.b16 %v363
      %v739 = vunpack.c.h.b16 %v363
      %v740 = vunpack.c.l.b16 %v364
      %v741 = vunpack.c.h.b16 %v364
      %v742 = vunpack.c.l.b16 %v365
      %v743 = vunpack.c.h.b16 %v365
      %v744 = vunpack.c.l.b16 %v366
      %v745 = vunpack.c.h.b16 %v366
      %v746 = vunpack.c.l.b16 %v367
      %v747 = vunpack.c.h.b16 %v367
      %v748 = vunpack.c.l.b16 %v368
      %v749 = vunpack.c.h.b16 %v368
      %v750 = vunpack.c.l.b16 %v369
      %v751 = vunpack.c.h.b16 %v369
      %v752 = vunpack.c.l.b16 %v370
      %v753 = vunpack.c.h.b16 %v370
      %v754 = vunpack.c.l.b16 %v371
      %v755 = vunpack.c.h.b16 %v371
      %v756 = vunpack.c.l.b16 %v372
      %v757 = vunpack.c.h.b16 %v372
      %v758 = vunpack.c.l.b16 %v373
      %v759 = vunpack.c.h.b16 %v373
      %v760 = vunpack.c.l.b16 %v374
      %v761 = vunpack.c.h.b16 %v374
      %v762 = vunpack.c.l.b16 %v375
      %v763 = vunpack.c.h.b16 %v375
      %v764 = vunpack.c.l.b16 %v376
      %v765 = vunpack.c.h.b16 %v376
      %v766 = vunpack.c.l.b16 %v377
      %v767 = vunpack.c.h.b16 %v377
      %v768 = vunpack.c.l.b16 %v378
      %v769 = vunpack.c.h.b16 %v378
      %v770 = vunpack.c.l.b16 %v379
      %v771 = vunpack.c.h.b16 %v379
      %v772 = vunpack.c.l.b16 %v380
      %v773 = vunpack.c.h.b16 %v380
      %v774 = vunpack.c.l.b16 %v381
      %v775 = vunpack.c.h.b16 %v381
      %v776 = vunpack.c.l.b16 %v382
      %v777 = vunpack.c.h.b16 %v382
      %v778 = vunpack.c.l.b16 %v383
      %v779 = vunpack.c.h.b16 %v383
      %v780 = vunpack.c.l.b16 %v384
      %v781 = vunpack.c.h.b16 %v384
      %v782 = vunpack.c.l.b16 %v385
      %v783 = vunpack.c.h.b16 %v385
      %v784 = vunpack.c.l.b16 %v386
      %v785 = vunpack.c.h.b16 %v386
      %v786 = vunpack.c.l.b16 %v387
      %v787 = vunpack.c.h.b16 %v387
      %v788 = vunpack.c.l.b16 %v388
      %v789 = vunpack.c.h.b16 %v388
      %v790 = vunpack.c.l.b16 %v389
      %v791 = vunpack.c.h.b16 %v389
      %v792 = vunpack.c.l.b16 %v390
      %v793 = vunpack.c.h.b16 %v390
      %v794 = vunpack.c.l.b16 %v391
      %v795 = vunpack.c.h.b16 %v391
      %v796 = vunpack.c.l.b16 %v392
      %v797 = vunpack.c.h.b16 %v392
      %v798 = vunpack.c.l.b16 %v393
      %v799 = vunpack.c.h.b16 %v393
      %v800 = vunpack.c.l.b16 %v394
      %v801 = vunpack.c.h.b16 %v394
      %v802 = vunpack.c.l.b16 %v395
      %v803 = vunpack.c.h.b16 %v395
      %v804 = vunpack.c.l.b16 %v396
      %v805 = vunpack.c.h.b16 %v396
      %v806 = vunpack.c.l.b16 %v397
      %v807 = vunpack.c.h.b16 %v397
      %v808 = vunpack.c.l.b16 %v398
      %v809 = vunpack.c.h.b16 %v398
      %v810 = vunpack.c.l.b16 %v399
      %v811 = vunpack.c.h.b16 %v399
      %v812 = vunpack.c.l.b16 %v400
      %v813 = vunpack.c.h.b16 %v400
      %v814 = vunpack.c.l.b16 %v401
      %v815 = vunpack.c.h.b16 %v401
      %v816 = vunpack.c.l.b16 %v402
      %v817 = vunpack.c.h.b16 %v402
      %v818 = vunpack.c.l.b16 %v403
      %v819 = vunpack.c.h.b16 %v403
      %v820 = vunpack.c.l.b16 %v404
      %v821 = vunpack.c.h.b16 %v404
      %v822 = vunpack.c.l.b16 %v405
      %v823 = vunpack.c.h.b16 %v405
      %v824 = vunpack.c.l.b16 %v406
      %v825 = vunpack.c.h.b16 %v406
      %v826 = vunpack.c.l.b16 %v407
      %v827 = vunpack.c.h.b16 %v407
      %v828 = vunpack.c.l.b16 %v408
      %v829 = vunpack.c.h.b16 %v408
      %v830 = vunpack.c.l.b16 %v409
      %v831 = vunpack.c.h.b16 %v409
      %v832 = vunpack.c.l.b16 %v410
      %v833 = vunpack.c.h.b16 %v410
      %v834 = vunpack.c.l.b16 %v411
      %v835 = vunpack.c.h.b16 %v411
      %v836 = vunpack.c.l.b16 %v412
      %v837 = vunpack.c.h.b16 %v412
      %v838 = vunpack.c.l.b16 %v413
      %v839 = vunpack.c.h.b16 %v413
      %v840 = vunpack.c.l.b16 %v414
      %v841 = vunpack.c.h.b16 %v414
      %v842 = vunpack.c.l.b16 %v415
      %v843 = vunpack.c.h.b16 %v415
      %v844 = vunpack.c.l.b16 %v416
      %v845 = vunpack.c.h.b16 %v416
      %v846 = vunpack.c.l.b16 %v417
      %v847 = vunpack.c.h.b16 %v417
      %v848 = vunpack.c.l.b16 %v418
      %v849 = vunpack.c.h.b16 %v418
      %v850 = vunpack.c.l.b16 %v419
      %v851 = vunpack.c.h.b16 %v419
      %v852 = vunpack.c.l.b16 %v420
      %v853 = vunpack.c.h.b16 %v420
      %v854 = vunpack.c.l.b16 %v421
      %v855 = vunpack.c.h.b16 %v421
      %v856 = vunpack.c.l.b16 %v422
      %v857 = vunpack.c.h.b16 %v422
      %v858 = vunpack.c.l.b16 %v423
      %v859 = vunpack.c.h.b16 %v423
      %v860 = vpack.c.b16 %v606, %v604
      %v861 = vpack.c.b16 %v607, %v605
      %v862 = vpack.c.b16 %v610, %v608
      %v863 = vpack.c.b16 %v611, %v609
      %v864 = vpack.c.b16 %v614, %v612
      %v865 = vpack.c.b16 %v615, %v613
      %v866 = vpack.c.b16 %v618, %v616
      %v867 = vpack.c.b16 %v619, %v617
      %v868 = vpack.c.b16 %v622, %v620
      %v869 = vpack.c.b16 %v623, %v621
      %v870 = vpack.c.b16 %v626, %v624
      %v871 = vpack.c.b16 %v627, %v625
      %v872 = vpack.c.b16 %v630, %v628
      %v873 = vpack.c.b16 %v631, %v629
      %v874 = vpack.c.b16 %v634, %v632
      %v875 = vpack.c.b16 %v635, %v633
      %v876 = vpack.c.b16 %v638, %v636
      %v877 = vpack.c.b16 %v639, %v637
      %v878 = vpack.c.b16 %v642, %v640
      %v879 = vpack.c.b16 %v643, %v641
      %v880 = vpack.c.b16 %v646, %v644
      %v881 = vpack.c.b16 %v647, %v645
      %v882 = vpack.c.b16 %v650, %v648
      %v883 = vpack.c.b16 %v651, %v649
      %v884 = vpack.c.b16 %v654, %v652
      %v885 = vpack.c.b16 %v655, %v653
      %v886 = vpack.c.b16 %v658, %v656
      %v887 = vpack.c.b16 %v659, %v657
      %v888 = vpack.c.b16 %v662, %v660
      %v889 = vpack.c.b16 %v663, %v661
      %v890 = vpack.c.b16 %v666, %v664
      %v891 = vpack.c.b16 %v667, %v665
      %v892 = vpack.c.b16 %v670, %v668
      %v893 = vpack.c.b16 %v671, %v669
      %v894 = vpack.c.b16 %v674, %v672
      %v895 = vpack.c.b16 %v675, %v673
      %v896 = vpack.c.b16 %v678, %v676
      %v897 = vpack.c.b16 %v679, %v677
      %v898 = vpack.c.b16 %v682, %v680
      %v899 = vpack.c.b16 %v683, %v681
      %v900 = vpack.c.b16 %v686, %v684
      %v901 = vpack.c.b16 %v687, %v685
      %v902 = vpack.c.b16 %v690, %v688
      %v903 = vpack.c.b16 %v691, %v689
      %v904 = vpack.c.b16 %v694, %v692
      %v905 = vpack.c.b16 %v695, %v693
      %v906 = vpack.c.b16 %v698, %v696
      %v907 = vpack.c.b16 %v699, %v697
      %v908 = vpack.c.b16 %v702, %v700
      %v909 = vpack.c.b16 %v703, %v701
      %v910 = vpack.c.b16 %v706, %v704
      %v911 = vpack.c.b16 %v707, %v705
      %v912 = vpack.c.b16 %v710, %v708
      %v913 = vpack.c.b16 %v711, %v709
      %v914 = vpack.c.b16 %v714, %v712
      %v915 = vpack.c.b16 %v715, %v713
      %v916 = vpack.c.b16 %v718, %v716
      %v917 = vpack.c.b16 %v719, %v717
      %v918 = vpack.c.b16 %v722, %v720
      %v919 = vpack.c.b16 %v723, %v721
      %v920 = vpack.c.b16 %v726, %v724
      %v921 = vpack.c.b16 %v727, %v725
      %v922 = vpack.c.b16 %v730, %v728
      %v923 = vpack.c.b16 %v731, %v729
      %v924 = vpack.c.b16 %v734, %v732
      %v925 = vpack.c.b16 %v735, %v733
      %v926 = vpack.c.b16 %v738, %v736
      %v927 = vpack.c.b16 %v739, %v737
      %v928 = vpack.c.b16 %v742, %v740
      %v929 = vpack.c.b16 %v743, %v741
      %v930 = vpack.c.b16 %v746, %v744
      %v931 = vpack.c.b16 %v747, %v745
      %v932 = vpack.c.b16 %v750, %v748
      %v933 = vpack.c.b16 %v751, %v749
      %v934 = vpack.c.b16 %v754, %v752
      %v935 = vpack.c.b16 %v755, %v753
      %v936 = vpack.c.b16 %v758, %v756
      %v937 = vpack.c.b16 %v759, %v757
      %v938 = vpack.c.b16 %v762, %v760
      %v939 = vpack.c.b16 %v763, %v761
      %v940 = vpack.c.b16 %v766, %v764
      %v941 = vpack.c.b16 %v767, %v765
      %v942 = vpack.c.b16 %v770, %v768
      %v943 = vpack.c.b16 %v771, %v769
      %v944 = vpack.c.b16 %v774, %v772
      %v945 = vpack.c.b16 %v775, %v773
      %v946 = vpack.c.b16 %v778, %v776
      %v947 = vpack.c.b16 %v779, %v777
      %v948 = vpack.c.b16 %v782, %v780
      %v949 = vpack.c.b16 %v783, %v781
      %v950 = vpack.c.b16 %v786, %v784
      %v951 = vpack.c.b16 %v787, %v785
      %v952 = vpack.c.b16 %v790, %v788
      %v953 = vpack.c.b16 %v791, %v789
      %v954 = vpack.c.b16 %v794, %v792
      %v955 = vpack.c.b16 %v795, %v793
      %v956 = vpack.c.b16 %v798, %v796
      %v957 = vpack.c.b16 %v799, %v797
      %v958 = vpack.c.b16 %v802, %v800
      %v959 = vpack.c.b16 %v803, %v801
      %v960 = vpack.c.b16 %v806, %v804
      %v961 = vpack.c.b16 %v807, %v805
      %v962 = vpack.c.b16 %v810, %v808
      %v963 = vpack.c.b16 %v811, %v809
      %v964 = vpack.c.b16 %v814, %v812
      %v965 = vpack.c.b16 %v815, %v813
      %v966 = vpack.c.b16 %v818, %v816
      %v967 = vpack.c.b16 %v819, %v817
      %v968 = vpack.c.b16 %v822, %v820
      %v969 = vpack.c.b16 %v823, %v821
      %v970 = vpack.c.b16 %v826, %v824
      %v971 = vpack.c.b16 %v827, %v825
      %v972 = vpack.c.b16 %v830, %v828
      %v973 = vpack.c.b16 %v831, %v829
      %v974 = vpack.c.b16 %v834, %v832
      %v975 = vpack.c.b16 %v835, %v833
      %v976 = vpack.c.b16 %v838, %v836
      %v977 = vpack.c.b16 %v839, %v837
      %v978 = vpack.c.b16 %v842, %v840
      %v979 = vpack.c.b16 %v843, %v841
      %v980 = vpack.c.b16 %v846, %v844
      %v981 = vpack.c.b16 %v847, %v845
      %v982 = vpack.c.b16 %v850, %v848
      %v983 = vpack.c.b16 %v851, %v849
      %v984 = vpack.c.b16 %v854, %v852
      %v985 = vpack.c.b16 %v855, %v853
      %v986 = vpack.c.b16 %v858, %v856
      %v987 = vpack.c.b16 %v859, %v857
      %1116 = vmatprep.subr.bf16.mxu0 %v861
      %1117 = vmatpush1.bf16.msra.mxu0 %v860
      %1118 = vmatprep.subr.bf16.mxu0 %v863
      %1119 = vmatpush1.bf16.msra.mxu0 %v862
      %1120 = vmatprep.subr.bf16.mxu0 %v865
      %1121 = vmatpush1.bf16.msra.mxu0 %v864
      %1122 = vmatprep.subr.bf16.mxu0 %v867
      %1123 = vmatpush1.bf16.msra.mxu0 %v866
      %1124 = vmatprep.subr.bf16.mxu0 %v869
      %1125 = vmatpush1.bf16.msra.mxu0 %v868
      %1126 = vmatprep.subr.bf16.mxu0 %v871
      %1127 = vmatpush1.bf16.msra.mxu0 %v870
      %1128 = vmatprep.subr.bf16.mxu0 %v873
      %1129 = vmatpush1.bf16.msra.mxu0 %v872
      %1130 = vmatprep.subr.bf16.mxu0 %v875
      %1131 = vmatpush1.bf16.msra.mxu0 %v874
      %1132 = vmatprep.subr.bf16.mxu0 %v877
      %1133 = vmatpush1.bf16.msra.mxu0 %v876
      %1134 = vmatprep.subr.bf16.mxu0 %v879
      %1135 = vmatpush1.bf16.msra.mxu0 %v878
      %1136 = vmatprep.subr.bf16.mxu0 %v881
      %1137 = vmatpush1.bf16.msra.mxu0 %v880
      %1138 = vmatprep.subr.bf16.mxu0 %v883
      %1139 = vmatpush1.bf16.msra.mxu0 %v882
      %1140 = vmatprep.subr.bf16.mxu0 %v885
      %1141 = vmatpush1.bf16.msra.mxu0 %v884
      %1142 = vmatprep.subr.bf16.mxu0 %v887
      %1143 = vmatpush1.bf16.msra.mxu0 %v886
      %1144 = vmatprep.subr.bf16.mxu0 %v889
      %1145 = vmatpush1.bf16.msra.mxu0 %v888
      %1146 = vmatprep.subr.bf16.mxu0 %v891
      %1147 = vmatpush1.bf16.msra.mxu0 %v890
      %1148 = vmatprep.mubr.bf16.mxu0 %v461
      %1149 = vmatmul.mubr.bf16.gmra.mrb[0].mxu0 %v460
      %v1150 = vpop.f32.mrb[0].mxu0
      %v1151 = vadd.f32 %v429, %v1150
      %v1152 = vpop.f32.mrb[0].mxu0
      %v1153 = vadd.f32 %v433, %v1152
      %v1154 = vpop.f32.mrb[0].mxu0
      %v1155 = vadd.f32 %v429, %v1154
      %v1156 = vpop.f32.mrb[0].mxu0
      %v1157 = vadd.f32 %v433, %v1156
      %1158 = vdwg.mxu0
      %1159 = vmatprep.subr.bf16.mxu0 %v893
      %1160 = vmatpush1.bf16.msra.mxu0 %v892
      %1161 = vmatprep.subr.bf16.mxu0 %v895
      %1162 = vmatpush1.bf16.msra.mxu0 %v894
      %1163 = vmatprep.subr.bf16.mxu0 %v897
      %1164 = vmatpush1.bf16.msra.mxu0 %v896
      %1165 = vmatprep.subr.bf16.mxu0 %v899
      %1166 = vmatpush1.bf16.msra.mxu0 %v898
      %1167 = vmatprep.subr.bf16.mxu0 %v901
      %1168 = vmatpush1.bf16.msra.mxu0 %v900
      %1169 = vmatprep.subr.bf16.mxu0 %v903
      %1170 = vmatpush1.bf16.msra.mxu0 %v902
      %1171 = vmatprep.subr.bf16.mxu0 %v905
      %1172 = vmatpush1.bf16.msra.mxu0 %v904
      %1173 = vmatprep.subr.bf16.mxu0 %v907
      %1174 = vmatpush1.bf16.msra.mxu0 %v906
      %1175 = vmatprep.subr.bf16.mxu0 %v909
      %1176 = vmatpush1.bf16.msra.mxu0 %v908
      %1177 = vmatprep.subr.bf16.mxu0 %v911
      %1178 = vmatpush1.bf16.msra.mxu0 %v910
      %1179 = vmatprep.subr.bf16.mxu0 %v913
      %1180 = vmatpush1.bf16.msra.mxu0 %v912
      %1181 = vmatprep.subr.bf16.mxu0 %v915
      %1182 = vmatpush1.bf16.msra.mxu0 %v914
      %1183 = vmatprep.subr.bf16.mxu0 %v917
      %1184 = vmatpush1.bf16.msra.mxu0 %v916
      %1185 = vmatprep.subr.bf16.mxu0 %v919
      %1186 = vmatpush1.bf16.msra.mxu0 %v918
      %1187 = vmatprep.subr.bf16.mxu0 %v921
      %1188 = vmatpush1.bf16.msra.mxu0 %v920
      %1189 = vmatprep.subr.bf16.mxu0 %v923
      %1190 = vmatpush1.bf16.msra.mxu0 %v922
      %1191 = vmatprep.mubr.bf16.mxu0 %v463
      %1192 = vmatmul.mubr.bf16.gmra.mrb[0].mxu0 %v462
      %v1193 = vpop.f32.mrb[0].mxu0
      %v1194 = vadd.f32 %v1151, %v1193
      %v1195 = vpop.f32.mrb[0].mxu0
      %v1196 = vadd.f32 %v1153, %v1195
      %v1197 = vpop.f32.mrb[0].mxu0
      %v1198 = vadd.f32 %v1155, %v1197
      %v1199 = vpop.f32.mrb[0].mxu0
      %v1200 = vadd.f32 %v1157, %v1199
      %1201 = vdwg.mxu0
      %1202 = vmatprep.subr.bf16.mxu0 %v925
      %1203 = vmatpush1.bf16.msra.mxu0 %v924
      %1204 = vmatprep.subr.bf16.mxu0 %v927
      %1205 = vmatpush1.bf16.msra.mxu0 %v926
      %1206 = vmatprep.subr.bf16.mxu0 %v929
      %1207 = vmatpush1.bf16.msra.mxu0 %v928
      %1208 = vmatprep.subr.bf16.mxu0 %v931
      %1209 = vmatpush1.bf16.msra.mxu0 %v930
      %1210 = vmatprep.subr.bf16.mxu0 %v933
      %1211 = vmatpush1.bf16.msra.mxu0 %v932
      %1212 = vmatprep.subr.bf16.mxu0 %v935
      %1213 = vmatpush1.bf16.msra.mxu0 %v934
      %1214 = vmatprep.subr.bf16.mxu0 %v937
      %1215 = vmatpush1.bf16.msra.mxu0 %v936
      %1216 = vmatprep.subr.bf16.mxu0 %v939
      %1217 = vmatpush1.bf16.msra.mxu0 %v938
      %1218 = vmatprep.subr.bf16.mxu0 %v941
      %1219 = vmatpush1.bf16.msra.mxu0 %v940
      %1220 = vmatprep.subr.bf16.mxu0 %v943
      %1221 = vmatpush1.bf16.msra.mxu0 %v942
      %1222 = vmatprep.subr.bf16.mxu0 %v945
      %1223 = vmatpush1.bf16.msra.mxu0 %v944
      %1224 = vmatprep.subr.bf16.mxu0 %v947
      %1225 = vmatpush1.bf16.msra.mxu0 %v946
      %1226 = vmatprep.subr.bf16.mxu0 %v949
      %1227 = vmatpush1.bf16.msra.mxu0 %v948
      %1228 = vmatprep.subr.bf16.mxu0 %v951
      %1229 = vmatpush1.bf16.msra.mxu0 %v950
      %1230 = vmatprep.subr.bf16.mxu0 %v953
      %1231 = vmatpush1.bf16.msra.mxu0 %v952
      %1232 = vmatprep.subr.bf16.mxu0 %v955
      %1233 = vmatpush1.bf16.msra.mxu0 %v954
      %1234 = vmatprep.mubr.bf16.mxu0 %v465
      %1235 = vmatmul.mubr.bf16.gmra.mrb[0].mxu0 %v464
      %v1236 = vpop.f32.mrb[0].mxu0
      %v1237 = vadd.f32 %v1194, %v1236
      %v1238 = vpop.f32.mrb[0].mxu0
      %v1239 = vadd.f32 %v1196, %v1238
      %v1240 = vpop.f32.mrb[0].mxu0
      %v1241 = vadd.f32 %v1198, %v1240
      %v1242 = vpop.f32.mrb[0].mxu0
      %v1243 = vadd.f32 %v1200, %v1242
      %1244 = vdwg.mxu0
      %1245 = vmatprep.subr.bf16.mxu0 %v957
      %1246 = vmatpush1.bf16.msra.mxu0 %v956
      %1247 = vmatprep.subr.bf16.mxu0 %v959
      %1248 = vmatpush1.bf16.msra.mxu0 %v958
      %1249 = vmatprep.subr.bf16.mxu0 %v961
      %1250 = vmatpush1.bf16.msra.mxu0 %v960
      %1251 = vmatprep.subr.bf16.mxu0 %v963
      %1252 = vmatpush1.bf16.msra.mxu0 %v962
      %1253 = vmatprep.subr.bf16.mxu0 %v965
      %1254 = vmatpush1.bf16.msra.mxu0 %v964
      %1255 = vmatprep.subr.bf16.mxu0 %v967
      %1256 = vmatpush1.bf16.msra.mxu0 %v966
      %1257 = vmatprep.subr.bf16.mxu0 %v969
      %1258 = vmatpush1.bf16.msra.mxu0 %v968
      %1259 = vmatprep.subr.bf16.mxu0 %v971
      %1260 = vmatpush1.bf16.msra.mxu0 %v970
      %1261 = vmatprep.subr.bf16.mxu0 %v973
      %1262 = vmatpush1.bf16.msra.mxu0 %v972
      %1263 = vmatprep.subr.bf16.mxu0 %v975
      %1264 = vmatpush1.bf16.msra.mxu0 %v974
      %1265 = vmatprep.subr.bf16.mxu0 %v977
      %1266 = vmatpush1.bf16.msra.mxu0 %v976
      %1267 = vmatprep.subr.bf16.mxu0 %v979
      %1268 = vmatpush1.bf16.msra.mxu0 %v978
      %1269 = vmatprep.subr.bf16.mxu0 %v981
      %1270 = vmatpush1.bf16.msra.mxu0 %v980
      %1271 = vmatprep.subr.bf16.mxu0 %v983
      %1272 = vmatpush1.bf16.msra.mxu0 %v982
      %1273 = vmatprep.subr.bf16.mxu0 %v985
      %1274 = vmatpush1.bf16.msra.mxu0 %v984
      %1275 = vmatprep.subr.bf16.mxu0 %v987
      %1276 = vmatpush1.bf16.msra.mxu0 %v986
      %1277 = vmatprep.mubr.bf16.mxu0 %v467
      %1278 = vmatmul.mubr.bf16.gmra.mrb[0].mxu0 %v466
      %v1279 = vpop.f32.mrb[0].mxu0
      %v1280 = vadd.f32 %v1237, %v1279
      %v1281 = vpop.f32.mrb[0].mxu0
      %v1282 = vadd.f32 %v1239, %v1281
      %v1283 = vpop.f32.mrb[0].mxu0
      %v1284 = vadd.f32 %v1241, %v1283
      %v1285 = vpop.f32.mrb[0].mxu0
      %v1286 = vadd.f32 %v1243, %v1285
      %1287 = vdwg.mxu0
      %v1288 = vmax.f32 %v1280, 0.0
      %v1289 = vmax.f32 %v1282, 0.0
      %v1290 = vmax.f32 %v1284, 0.0
      %v1291 = vmax.f32 %v1286, 0.0
      %v1292 = vpack.c.bf16 %v1290, %v1288
      %v1293 = vpack.c.bf16 %v1291, %v1289
      %v1296 = vunpack.c.l.b16 %v1292
      %v1297 = vunpack.c.l.b16 %v1293
      %v1298 = vunpack.c.h.b16 %v1292
      %v1299 = vunpack.c.h.b16 %v1293
      %v1300 = vpack.c.b16 %v1297, %v1296
      %v1301 = vpack.c.b16 %v1299, %v1298
      %1304 = vst [vmem:[%s285] sm:$0xff] %v1300
      %1305 = vst [vmem:[%s285 + $0x8] sm:$0xff] %v1301
      %s1306 = smul.u32 2, %s20
      %s1307 = smul.u32 2, %s21
      %p1308 = scmp.lt.s32.totalorder %s19, 3
      %s1309 = scalar_select %p1308, %s19, 3
      %p1310 = scmp.lt.s32.totalorder %s1306, 1
      %s1311 = scalar_select %p1310, %s1306, 1
      %p1312 = scmp.lt.s32.totalorder %s1307, 1
      %s1313 = scalar_select %p1312, %s1307, 1
      %s1314 = smul.addr %s1311, 2
      %s1315 = sadd.s32 %s1313, %s1314
      %s1316 = smul.addr %s1309, 4
      %s1317 = sadd.s32 %s1315, %s1316
      %s1318 = smul.addr %s1317, 4
      %s1319 = scalar_lea.vmem %s3, %s1318
      // Predicated region
      $region33: #{_generator_forward_impl.12} parent=31 // pred_check
        %p1320 = pneg %p137
      $region34: #{_generator_forward_impl.12} parent=31 // pred_check_branch
        %1322 = sbr.rel (%p1320) target = $region36
      $region35: #{_generator_forward_impl.12} parent=31 // pred_region
        %s1323 = smul.u32 2, %s20
        %s1324 = smul.u32 2, %s21
      $region36: #{_generator_forward_impl.12} parent=31 // pred_fallthru
        _
    $region32: #{_generator_forward_impl.12} parent=5 // pred_fallthru
      _
    %p1325 = scmp.le.s32.totalorder 2, %s9
    // Predicated region
    $region37: #{_generator_forward_impl.12} parent=5 // pred_check
      %p1326 = pneg %p1325
    $region38: #{_generator_forward_impl.12} parent=5 // pred_check_branch
      %1328 = sbr.rel (%p1326) target = $region40
    $region39: #{_generator_forward_impl.12} parent=5 // pred_region
      %s1329 = ssub.s32 %s9, 2
      // Predicated region
      $region41: #{_generator_forward_impl.12} parent=39 // pred_check
        %p1330 = pneg %p143
      $region42: #{_generator_forward_impl.12} parent=39 // pred_check_branch
        %1332 = sbr.rel (%p1330) target = $region44
      $region43: #{_generator_forward_impl.12} parent=39 // pred_region
        %s1333 = smul.u32 2, %s23
        %s1334 = smul.u32 2, %s24
        %p1335 = scmp.lt.s32.totalorder %s22, 3
        %s1336 = scalar_select %p1335, %s22, 3
        %p1337 = scmp.lt.s32.totalorder %s1333, 1
        %s1338 = scalar_select %p1337, %s1333, 1
        %p1339 = scmp.lt.s32.totalorder %s1334, 1
        %s1340 = scalar_select %p1339, %s1334, 1
        %s1341 = smul.addr %s1338, 2
        %s1342 = sadd.s32 %s1340, %s1341
        %s1343 = smul.addr %s1336, 4
        %s1344 = sadd.s32 %s1342, %s1343
        %s1345 = smul.addr %s1344, 4
        %s1346 = scalar_lea.vmem %s3, %s1345
      $region44: #{_generator_forward_impl.12} parent=39 // pred_fallthru
        _
    $region40: #{_generator_forward_impl.12} parent=5 // pred_fallthru
      _
  $region6: #{_generator_forward_impl.12} parent=0 // loop_footer
    %s13 = sadd.s32 1, %s9
  $region7: #{_generator_forward_impl.12} parent=0 // loop_footer_branch
    %8 = sbr.rel target = $region3
  $region8: #{_generator_forward_impl.12} parent=0 // loop_exit
    _

// kernel: _generator_forward_impl.11
$region0: #{_generator_forward_impl.11}
  #allocation0 [shape = 'u32[]', space=smem, size = 0x4, offset = 0x4, fixed_abs, tag = 'smem constant byte address 0x4 - core index']
  #allocation1 [shape = 'u32[144,128]{1,0:T(1,128)}', space=vmem, size = 0x12000, scoped, tag = 'internal scratch']
  %s0 = inlined_call_operand.vmem [shape: bf16[1,16,4096], index: 0, kind: input, shape index: {}]
  %s1 = inlined_call_operand.vmem [shape: bf16[1,4096,256], index: 1, kind: input, shape index: {}]
  %s2 = inlined_call_operand.vmem [shape: f32[1,256], index: 2, kind: input, shape index: {}]
  %s3 = inlined_call_operand.vmem [shape: bf16[1,16,256], index: 3, kind: output, shape index: {}]
  %s4 = sld [smem:[#allocation0]]
  $region22: #{_generator_forward_impl.11} parent=0
    _
  %s6 = ssub.s32 1, %s4
  %s7 = scalar_select 0, %s6, %s4
  // Predicated region
  $region2: #{_generator_forward_impl.11} parent=0 // pred_check
    _
  $region3: #{_generator_forward_impl.11} parent=0 // pred_check_branch
    %9 = sbr.rel (0) target = $region5
  $region4: #{_generator_forward_impl.11} parent=0 // pred_region
    _
  $region5: #{_generator_forward_impl.11} parent=0 // pred_fallthru
    _
  // Predicated region
  $region6: #{_generator_forward_impl.11} parent=0 // pred_check
    _
  $region7: #{_generator_forward_impl.11} parent=0 // pred_check_branch
    %11 = sbr.rel (0) target = $region9
  $region8: #{_generator_forward_impl.11} parent=0 // pred_region
    _
  $region9: #{_generator_forward_impl.11} parent=0 // pred_fallthru
    _
  // Predicated region
  $region10: #{_generator_forward_impl.11} parent=0 // pred_check
    _
  $region11: #{_generator_forward_impl.11} parent=0 // pred_check_branch
    %13 = sbr.rel (0) target = $region13
  $region12: #{_generator_forward_impl.11} parent=0 // pred_region
    _
  $region13: #{_generator_forward_impl.11} parent=0 // pred_fallthru
    _
  %v14 = vld [vmem:[%s0] sm:$0xff]
  %v15 = vld [vmem:[%s0 + $0x8] sm:$0xff]
  %v16 = vld [vmem:[%s0 + $0x10] sm:$0xff]
  %v17 = vld [vmem:[%s0 + $0x18] sm:$0xff]
  %v18 = vld [vmem:[%s0 + $0x20] sm:$0xff]
  %v19 = vld [vmem:[%s0 + $0x28] sm:$0xff]
  %v20 = vld [vmem:[%s0 + $0x30] sm:$0xff]
  %v21 = vld [vmem:[%s0 + $0x38] sm:$0xff]
  %v22 = vld [vmem:[%s0 + $0x40] sm:$0xff]
  %v23 = vld [vmem:[%s0 + $0x48] sm:$0xff]
  %v24 = vld [vmem:[%s0 + $0x50] sm:$0xff]
  %v25 = vld [vmem:[%s0 + $0x58] sm:$0xff]
  %v26 = vld [vmem:[%s0 + $0x60] sm:$0xff]
  %v27 = vld [vmem:[%s0 + $0x68] sm:$0xff]
  %v28 = vld [vmem:[%s0 + $0x70] sm:$0xff]
  %v29 = vld [vmem:[%s0 + $0x78] sm:$0xff]
  %v30 = vld [vmem:[%s0 + $0x80] sm:$0xff]
  %v31 = vld [vmem:[%s0 + $0x88] sm:$0xff]
  %v32 = vld [vmem:[%s0 + $0x90] sm:$0xff]
  %v33 = vld [vmem:[%s0 + $0x98] sm:$0xff]
  %v34 = vld [vmem:[%s0 + $0xa0] sm:$0xff]
  %v35 = vld [vmem:[%s0 + $0xa8] sm:$0xff]
  %v36 = vld [vmem:[%s0 + $0xb0] sm:$0xff]
  %v37 = vld [vmem:[%s0 + $0xb8] sm:$0xff]
  %v38 = vld [vmem:[%s0 + $0xc0] sm:$0xff]
  %v39 = vld [vmem:[%s0 + $0xc8] sm:$0xff]
  %v40 = vld [vmem:[%s0 + $0xd0] sm:$0xff]
  %v41 = vld [vmem:[%s0 + $0xd8] sm:$0xff]
  %v42 = vld [vmem:[%s0 + $0xe0] sm:$0xff]
  %v43 = vld [vmem:[%s0 + $0xe8] sm:$0xff]
  %v44 = vld [vmem:[%s0 + $0xf0] sm:$0xff]
  %v45 = vld [vmem:[%s0 + $0xf8] sm:$0xff]
  %v46 = vld [vmem:[%s1] sm:$0xff]
  %v47 = vld [vmem:[%s1 + $0x8] sm:$0xff]
  %v48 = vld [vmem:[%s1 + $0x10] sm:$0xff]
  %v49 = vld [vmem:[%s1 + $0x18] sm:$0xff]
  %v50 = vld [vmem:[%s1 + $0x20] sm:$0xff]
  %v51 = vld [vmem:[%s1 + $0x28] sm:$0xff]
  %v52 = vld [vmem:[%s1 + $0x30] sm:$0xff]
  %v53 = vld [vmem:[%s1 + $0x38] sm:$0xff]
  %v54 = vld [vmem:[%s1 + $0x40] sm:$0xff]
  %v55 = vld [vmem:[%s1 + $0x48] sm:$0xff]
  %v56 = vld [vmem:[%s1 + $0x50] sm:$0xff]
  %v57 = vld [vmem:[%s1 + $0x58] sm:$0xff]
  %v58 = vld [vmem:[%s1 + $0x60] sm:$0xff]
  %v59 = vld [vmem:[%s1 + $0x68] sm:$0xff]
  %v60 = vld [vmem:[%s1 + $0x70] sm:$0xff]
  %v61 = vld [vmem:[%s1 + $0x78] sm:$0xff]
  %v62 = vld [vmem:[%s1 + $0x80] sm:$0xff]
  %v63 = vld [vmem:[%s1 + $0x88] sm:$0xff]
  %v64 = vld [vmem:[%s1 + $0x90] sm:$0xff]
  %v65 = vld [vmem:[%s1 + $0x98] sm:$0xff]
  %v66 = vld [vmem:[%s1 + $0xa0] sm:$0xff]
  %v67 = vld [vmem:[%s1 + $0xa8] sm:$0xff]
  %v68 = vld [vmem:[%s1 + $0xb0] sm:$0xff]
  %v69 = vld [vmem:[%s1 + $0xb8] sm:$0xff]
  %v70 = vld [vmem:[%s1 + $0xc0] sm:$0xff]
  %v71 = vld [vmem:[%s1 + $0xc8] sm:$0xff]
  %v72 = vld [vmem:[%s1 + $0xd0] sm:$0xff]
  %v73 = vld [vmem:[%s1 + $0xd8] sm:$0xff]
  %v74 = vld [vmem:[%s1 + $0xe0] sm:$0xff]
  %v75 = vld [vmem:[%s1 + $0xe8] sm:$0xff]
  %v76 = vld [vmem:[%s1 + $0xf0] sm:$0xff]
  %v77 = vld [vmem:[%s1 + $0xf8] sm:$0xff]
  %v78 = vld [vmem:[%s1 + $0x100] sm:$0xff]
  %v79 = vld [vmem:[%s1 + $0x108] sm:$0xff]
  %v80 = vld [vmem:[%s1 + $0x110] sm:$0xff]
  %v81 = vld [vmem:[%s1 + $0x118] sm:$0xff]
  %v82 = vld [vmem:[%s1 + $0x120] sm:$0xff]
  %v83 = vld [vmem:[%s1 + $0x128] sm:$0xff]
  %v84 = vld [vmem:[%s1 + $0x130] sm:$0xff]
  %v85 = vld [vmem:[%s1 + $0x138] sm:$0xff]
  %v86 = vld [vmem:[%s1 + $0x140] sm:$0xff]
  %v87 = vld [vmem:[%s1 + $0x148] sm:$0xff]
  %v88 = vld [vmem:[%s1 + $0x150] sm:$0xff]
  %v89 = vld [vmem:[%s1 + $0x158] sm:$0xff]
  %v90 = vld [vmem:[%s1 + $0x160] sm:$0xff]
  %v91 = vld [vmem:[%s1 + $0x168] sm:$0xff]
  %v92 = vld [vmem:[%s1 + $0x170] sm:$0xff]
  %v93 = vld [vmem:[%s1 + $0x178] sm:$0xff]
  %v94 = vld [vmem:[%s1 + $0x180] sm:$0xff]
  %v95 = vld [vmem:[%s1 + $0x188] sm:$0xff]
  %v96 = vld [vmem:[%s1 + $0x190] sm:$0xff]
  %v97 = vld [vmem:[%s1 + $0x198] sm:$0xff]
  %v98 = vld [vmem:[%s1 + $0x1a0] sm:$0xff]
  %v99 = vld [vmem:[%s1 + $0x1a8] sm:$0xff]
  %v100 = vld [vmem:[%s1 + $0x1b0] sm:$0xff]
  %v101 = vld [vmem:[%s1 + $0x1b8] sm:$0xff]
  %v102 = vld [vmem:[%s1 + $0x1c0] sm:$0xff]
  %v103 = vld [vmem:[%s1 + $0x1c8] sm:$0xff]
  %v104 = vld [vmem:[%s1 + $0x1d0] sm:$0xff]
  %v105 = vld [vmem:[%s1 + $0x1d8] sm:$0xff]
  %v106 = vld [vmem:[%s1 + $0x1e0] sm:$0xff]
  %v107 = vld [vmem:[%s1 + $0x1e8] sm:$0xff]
  %v108 = vld [vmem:[%s1 + $0x1f0] sm:$0xff]
  %v109 = vld [vmem:[%s1 + $0x1f8] sm:$0xff]
  %v110 = vld [vmem:[%s1 + $0x200] sm:$0xff]
  %v111 = vld [vmem:[%s1 + $0x208] sm:$0xff]
  %v112 = vld [vmem:[%s1 + $0x210] sm:$0xff]
  %v113 = vld [vmem:[%s1 + $0x218] sm:$0xff]
  %v114 = vld [vmem:[%s1 + $0x220] sm:$0xff]
  %v115 = vld [vmem:[%s1 + $0x228] sm:$0xff]
  %v116 = vld [vmem:[%s1 + $0x230] sm:$0xff]
  %v117 = vld [vmem:[%s1 + $0x238] sm:$0xff]
  %v118 = vld [vmem:[%s1 + $0x240] sm:$0xff]
  %v119 = vld [vmem:[%s1 + $0x248] sm:$0xff]
  %v120 = vld [vmem:[%s1 + $0x250] sm:$0xff]
  %v121 = vld [vmem:[%s1 + $0x258] sm:$0xff]
  %v122 = vld [vmem:[%s1 + $0x260] sm:$0xff]
  %v123 = vld [vmem:[%s1 + $0x268] sm:$0xff]
  %v124 = vld [vmem:[%s1 + $0x270] sm:$0xff]
  %v125 = vld [vmem:[%s1 + $0x278] sm:$0xff]
  %v126 = vld [vmem:[%s1 + $0x280] sm:$0xff]
  %v127 = vld [vmem:[%s1 + $0x288] sm:$0xff]
  %v128 = vld [vmem:[%s1 + $0x290] sm:$0xff]
  %v129 = vld [vmem:[%s1 + $0x298] sm:$0xff]
  %v130 = vld [vmem:[%s1 + $0x2a0] sm:$0xff]
  %v131 = vld [vmem:[%s1 + $0x2a8] sm:$0xff]
  %v132 = vld [vmem:[%s1 + $0x2b0] sm:$0xff]
  %v133 = vld [vmem:[%s1 + $0x2b8] sm:$0xff]
  %v134 = vld [vmem:[%s1 + $0x2c0] sm:$0xff]
  %v135 = vld [vmem:[%s1 + $0x2c8] sm:$0xff]
  %v136 = vld [vmem:[%s1 + $0x2d0] sm:$0xff]
  %v137 = vld [vmem:[%s1 + $0x2d8] sm:$0xff]
  %v138 = vld [vmem:[%s1 + $0x2e0] sm:$0xff]
  %v139 = vld [vmem:[%s1 + $0x2e8] sm:$0xff]
  %v140 = vld [vmem:[%s1 + $0x2f0] sm:$0xff]
  %v141 = vld [vmem:[%s1 + $0x2f8] sm:$0xff]
  %v142 = vld [vmem:[%s1 + $0x300] sm:$0xff]
  %v143 = vld [vmem:[%s1 + $0x308] sm:$0xff]
  %v144 = vld [vmem:[%s1 + $0x310] sm:$0xff]
  %v145 = vld [vmem:[%s1 + $0x318] sm:$0xff]
  %v146 = vld [vmem:[%s1 + $0x320] sm:$0xff]
  %v147 = vld [vmem:[%s1 + $0x328] sm:$0xff]
  %v148 = vld [vmem:[%s1 + $0x330] sm:$0xff]
  %v149 = vld [vmem:[%s1 + $0x338] sm:$0xff]
  %v150 = vld [vmem:[%s1 + $0x340] sm:$0xff]
  %v151 = vld [vmem:[%s1 + $0x348] sm:$0xff]
  %v152 = vld [vmem:[%s1 + $0x350] sm:$0xff]
  %v153 = vld [vmem:[%s1 + $0x358] sm:$0xff]
  %v154 = vld [vmem:[%s1 + $0x360] sm:$0xff]
  %v155 = vld [vmem:[%s1 + $0x368] sm:$0xff]
  %v156 = vld [vmem:[%s1 + $0x370] sm:$0xff]
  %v157 = vld [vmem:[%s1 + $0x378] sm:$0xff]
  %v158 = vld [vmem:[%s1 + $0x380] sm:$0xff]
  %v159 = vld [vmem:[%s1 + $0x388] sm:$0xff]
  %v160 = vld [vmem:[%s1 + $0x390] sm:$0xff]
  %v161 = vld [vmem:[%s1 + $0x398] sm:$0xff]
  %v162 = vld [vmem:[%s1 + $0x3a0] sm:$0xff]
  %v163 = vld [vmem:[%s1 + $0x3a8] sm:$0xff]
  %v164 = vld [vmem:[%s1 + $0x3b0] sm:$0xff]
  %v165 = vld [vmem:[%s1 + $0x3b8] sm:$0xff]
  %v166 = vld [vmem:[%s1 + $0x3c0] sm:$0xff]
  %v167 = vld [vmem:[%s1 + $0x3c8] sm:$0xff]
  %v168 = vld [vmem:[%s1 + $0x3d0] sm:$0xff]
  %v169 = vld [vmem:[%s1 + $0x3d8] sm:$0xff]
  %v170 = vld [vmem:[%s1 + $0x3e0] sm:$0xff]
  %v171 = vld [vmem:[%s1 + $0x3e8] sm:$0xff]
  %v172 = vld [vmem:[%s1 + $0x3f0] sm:$0xff]
  %v173 = vld [vmem:[%s1 + $0x3f8] sm:$0xff]
  %v174 = vld [vmem:[%s1 + $0x400] sm:$0xff]
  %v175 = vld [vmem:[%s1 + $0x408] sm:$0xff]
  %v176 = vld [vmem:[%s1 + $0x410] sm:$0xff]
  %v177 = vld [vmem:[%s1 + $0x418] sm:$0xff]
  %v178 = vld [vmem:[%s1 + $0x420] sm:$0xff]
  %v179 = vld [vmem:[%s1 + $0x428] sm:$0xff]
  %v180 = vld [vmem:[%s1 + $0x430] sm:$0xff]
  %v181 = vld [vmem:[%s1 + $0x438] sm:$0xff]
  %v182 = vld [vmem:[%s1 + $0x440] sm:$0xff]
  %v183 = vld [vmem:[%s1 + $0x448] sm:$0xff]
  %v184 = vld [vmem:[%s1 + $0x450] sm:$0xff]
  %v185 = vld [vmem:[%s1 + $0x458] sm:$0xff]
  %v186 = vld [vmem:[%s1 + $0x460] sm:$0xff]
  %v187 = vld [vmem:[%s1 + $0x468] sm:$0xff]
  %v188 = vld [vmem:[%s1 + $0x470] sm:$0xff]
  %v189 = vld [vmem:[%s1 + $0x478] sm:$0xff]
  %v190 = vld [vmem:[%s1 + $0x480] sm:$0xff]
  %v191 = vld [vmem:[%s1 + $0x488] sm:$0xff]
  %v192 = vld [vmem:[%s1 + $0x490] sm:$0xff]
  %v193 = vld [vmem:[%s1 + $0x498] sm:$0xff]
  %v194 = vld [vmem:[%s1 + $0x4a0] sm:$0xff]
  %v195 = vld [vmem:[%s1 + $0x4a8] sm:$0xff]
  %v196 = vld [vmem:[%s1 + $0x4b0] sm:$0xff]
  %v197 = vld [vmem:[%s1 + $0x4b8] sm:$0xff]
  %v198 = vld [vmem:[%s1 + $0x4c0] sm:$0xff]
  %v199 = vld [vmem:[%s1 + $0x4c8] sm:$0xff]
  %v200 = vld [vmem:[%s1 + $0x4d0] sm:$0xff]
  %v201 = vld [vmem:[%s1 + $0x4d8] sm:$0xff]
  %v202 = vld [vmem:[%s1 + $0x4e0] sm:$0xff]
  %v203 = vld [vmem:[%s1 + $0x4e8] sm:$0xff]
  %v204 = vld [vmem:[%s1 + $0x4f0] sm:$0xff]
  %v205 = vld [vmem:[%s1 + $0x4f8] sm:$0xff]
  %v206 = vld [vmem:[%s1 + $0x500] sm:$0xff]
  %v207 = vld [vmem:[%s1 + $0x508] sm:$0xff]
  %v208 = vld [vmem:[%s1 + $0x510] sm:$0xff]
  %v209 = vld [vmem:[%s1 + $0x518] sm:$0xff]
  %v210 = vld [vmem:[%s1 + $0x520] sm:$0xff]
  %v211 = vld [vmem:[%s1 + $0x528] sm:$0xff]
  %v212 = vld [vmem:[%s1 + $0x530] sm:$0xff]
  %v213 = vld [vmem:[%s1 + $0x538] sm:$0xff]
  %v214 = vld [vmem:[%s1 + $0x540] sm:$0xff]
  %v215 = vld [vmem:[%s1 + $0x548] sm:$0xff]
  %v216 = vld [vmem:[%s1 + $0x550] sm:$0xff]
  %v217 = vld [vmem:[%s1 + $0x558] sm:$0xff]
  %v218 = vld [vmem:[%s1 + $0x560] sm:$0xff]
  %v219 = vld [vmem:[%s1 + $0x568] sm:$0xff]
  %v220 = vld [vmem:[%s1 + $0x570] sm:$0xff]
  %v221 = vld [vmem:[%s1 + $0x578] sm:$0xff]
  %v222 = vld [vmem:[%s1 + $0x580] sm:$0xff]
  %v223 = vld [vmem:[%s1 + $0x588] sm:$0xff]
  %v224 = vld [vmem:[%s1 + $0x590] sm:$0xff]
  %v225 = vld [vmem:[%s1 + $0x598] sm:$0xff]
  %v226 = vld [vmem:[%s1 + $0x5a0] sm:$0xff]
  %v227 = vld [vmem:[%s1 + $0x5a8] sm:$0xff]
  %v228 = vld [vmem:[%s1 + $0x5b0] sm:$0xff]
  %v229 = vld [vmem:[%s1 + $0x5b8] sm:$0xff]
  %v230 = vld [vmem:[%s1 + $0x5c0] sm:$0xff]
  %v231 = vld [vmem:[%s1 + $0x5c8] sm:$0xff]
  %v232 = vld [vmem:[%s1 + $0x5d0] sm:$0xff]
  %v233 = vld [vmem:[%s1 + $0x5d8] sm:$0xff]
  %v234 = vld [vmem:[%s1 + $0x5e0] sm:$0xff]
  %v235 = vld [vmem:[%s1 + $0x5e8] sm:$0xff]
  %v236 = vld [vmem:[%s1 + $0x5f0] sm:$0xff]
  %v237 = vld [vmem:[%s1 + $0x5f8] sm:$0xff]
  %v238 = vld [vmem:[%s1 + $0x600] sm:$0xff]
  %v239 = vld [vmem:[%s1 + $0x608] sm:$0xff]
  %v240 = vld [vmem:[%s1 + $0x610] sm:$0xff]
  %v241 = vld [vmem:[%s1 + $0x618] sm:$0xff]
  %v242 = vld [vmem:[%s1 + $0x620] sm:$0xff]
  %v243 = vld [vmem:[%s1 + $0x628] sm:$0xff]
  %v244 = vld [vmem:[%s1 + $0x630] sm:$0xff]
  %v245 = vld [vmem:[%s1 + $0x638] sm:$0xff]
  %v246 = vld [vmem:[%s1 + $0x640] sm:$0xff]
  %v247 = vld [vmem:[%s1 + $0x648] sm:$0xff]
  %v248 = vld [vmem:[%s1 + $0x650] sm:$0xff]
  %v249 = vld [vmem:[%s1 + $0x658] sm:$0xff]
  %v250 = vld [vmem:[%s1 + $0x660] sm:$0xff]
  %v251 = vld [vmem:[%s1 + $0x668] sm:$0xff]
  %v252 = vld [vmem:[%s1 + $0x670] sm:$0xff]
  %v253 = vld [vmem:[%s1 + $0x678] sm:$0xff]
  %v254 = vld [vmem:[%s1 + $0x680] sm:$0xff]
  %v255 = vld [vmem:[%s1 + $0x688] sm:$0xff]
  %v256 = vld [vmem:[%s1 + $0x690] sm:$0xff]
  %v257 = vld [vmem:[%s1 + $0x698] sm:$0xff]
  %v258 = vld [vmem:[%s1 + $0x6a0] sm:$0xff]
  %v259 = vld [vmem:[%s1 + $0x6a8] sm:$0xff]
  %v260 = vld [vmem:[%s1 + $0x6b0] sm:$0xff]
  %v261 = vld [vmem:[%s1 + $0x6b8] sm:$0xff]
  %v262 = vld [vmem:[%s1 + $0x6c0] sm:$0xff]
  %v263 = vld [vmem:[%s1 + $0x6c8] sm:$0xff]
  %v264 = vld [vmem:[%s1 + $0x6d0] sm:$0xff]
  %v265 = vld [vmem:[%s1 + $0x6d8] sm:$0xff]
  %v266 = vld [vmem:[%s1 + $0x6e0] sm:$0xff]
  %v267 = vld [vmem:[%s1 + $0x6e8] sm:$0xff]
  %v268 = vld [vmem:[%s1 + $0x6f0] sm:$0xff]
  %v269 = vld [vmem:[%s1 + $0x6f8] sm:$0xff]
  %v270 = vld [vmem:[%s1 + $0x700] sm:$0xff]
  %v271 = vld [vmem:[%s1 + $0x708] sm:$0xff]
  %v272 = vld [vmem:[%s1 + $0x710] sm:$0xff]
  %v273 = vld [vmem:[%s1 + $0x718] sm:$0xff]
  %v274 = vld [vmem:[%s1 + $0x720] sm:$0xff]
  %v275 = vld [vmem:[%s1 + $0x728] sm:$0xff]
  %v276 = vld [vmem:[%s1 + $0x730] sm:$0xff]
  %v277 = vld [vmem:[%s1 + $0x738] sm:$0xff]
  %v278 = vld [vmem:[%s1 + $0x740] sm:$0xff]
  %v279 = vld [vmem:[%s1 + $0x748] sm:$0xff]
  %v280 = vld [vmem:[%s1 + $0x750] sm:$0xff]
  %v281 = vld [vmem:[%s1 + $0x758] sm:$0xff]
  %v282 = vld [vmem:[%s1 + $0x760] sm:$0xff]
  %v283 = vld [vmem:[%s1 + $0x768] sm:$0xff]
  %v284 = vld [vmem:[%s1 + $0x770] sm:$0xff]
  %v285 = vld [vmem:[%s1 + $0x778] sm:$0xff]
  %v286 = vld [vmem:[%s1 + $0x780] sm:$0xff]
  %v287 = vld [vmem:[%s1 + $0x788] sm:$0xff]
  %v288 = vld [vmem:[%s1 + $0x790] sm:$0xff]
  %v289 = vld [vmem:[%s1 + $0x798] sm:$0xff]
  %v290 = vld [vmem:[%s1 + $0x7a0] sm:$0xff]
  %v291 = vld [vmem:[%s1 + $0x7a8] sm:$0xff]
  %v292 = vld [vmem:[%s1 + $0x7b0] sm:$0xff]
  %v293 = vld [vmem:[%s1 + $0x7b8] sm:$0xff]
  %v294 = vld [vmem:[%s1 + $0x7c0] sm:$0xff]
  %v295 = vld [vmem:[%s1 + $0x7c8] sm:$0xff]
  %v296 = vld [vmem:[%s1 + $0x7d0] sm:$0xff]
  %v297 = vld [vmem:[%s1 + $0x7d8] sm:$0xff]
  %v298 = vld [vmem:[%s1 + $0x7e0] sm:$0xff]
  %v299 = vld [vmem:[%s1 + $0x7e8] sm:$0xff]
  %v300 = vld [vmem:[%s1 + $0x7f0] sm:$0xff]
  %v301 = vld [vmem:[%s1 + $0x7f8] sm:$0xff]
  %v302 = vld [vmem:[%s1 + $0x800] sm:$0xff]
  %v303 = vld [vmem:[%s1 + $0x808] sm:$0xff]
  %v304 = vld [vmem:[%s1 + $0x810] sm:$0xff]
  %v305 = vld [vmem:[%s1 + $0x818] sm:$0xff]
  %v306 = vld [vmem:[%s1 + $0x820] sm:$0xff]
  %v307 = vld [vmem:[%s1 + $0x828] sm:$0xff]
  %v308 = vld [vmem:[%s1 + $0x830] sm:$0xff]
  %v309 = vld [vmem:[%s1 + $0x838] sm:$0xff]
  %v310 = vld [vmem:[%s1 + $0x840] sm:$0xff]
  %v311 = vld [vmem:[%s1 + $0x848] sm:$0xff]
  %v312 = vld [vmem:[%s1 + $0x850] sm:$0xff]
  %v313 = vld [vmem:[%s1 + $0x858] sm:$0xff]
  %v314 = vld [vmem:[%s1 + $0x860] sm:$0xff]
  %v315 = vld [vmem:[%s1 + $0x868] sm:$0xff]
  %v316 = vld [vmem:[%s1 + $0x870] sm:$0xff]
  %v317 = vld [vmem:[%s1 + $0x878] sm:$0xff]
  %v318 = vld [vmem:[%s1 + $0x880] sm:$0xff]
  %v319 = vld [vmem:[%s1 + $0x888] sm:$0xff]
  %v320 = vld [vmem:[%s1 + $0x890] sm:$0xff]
  %v321 = vld [vmem:[%s1 + $0x898] sm:$0xff]
  %v322 = vld [vmem:[%s1 + $0x8a0] sm:$0xff]
  %v323 = vld [vmem:[%s1 + $0x8a8] sm:$0xff]
  %v324 = vld [vmem:[%s1 + $0x8b0] sm:$0xff]
  %v325 = vld [vmem:[%s1 + $0x8b8] sm:$0xff]
  %v326 = vld [vmem:[%s1 + $0x8c0] sm:$0xff]
  %v327 = vld [vmem:[%s1 + $0x8c8] sm:$0xff]
  %v328 = vld [vmem:[%s1 + $0x8d0] sm:$0xff]
  %v329 = vld [vmem:[%s1 + $0x8d8] sm:$0xff]
  %v330 = vld [vmem:[%s1 + $0x8e0] sm:$0xff]
  %v331 = vld [vmem:[%s1 + $0x8e8] sm:$0xff]
  %v332 = vld [vmem:[%s1 + $0x8f0] sm:$0xff]
  %v333 = vld [vmem:[%s1 + $0x8f8] sm:$0xff]
  %v334 = vld [vmem:[%s1 + $0x900] sm:$0xff]
  %v335 = vld [vmem:[%s1 + $0x908] sm:$0xff]
  %v336 = vld [vmem:[%s1 + $0x910] sm:$0xff]
  %v337 = vld [vmem:[%s1 + $0x918] sm:$0xff]
  %v338 = vld [vmem:[%s1 + $0x920] sm:$0xff]
  %v339 = vld [vmem:[%s1 + $0x928] sm:$0xff]
  %v340 = vld [vmem:[%s1 + $0x930] sm:$0xff]
  %v341 = vld [vmem:[%s1 + $0x938] sm:$0xff]
  %v342 = vld [vmem:[%s1 + $0x940] sm:$0xff]
  %v343 = vld [vmem:[%s1 + $0x948] sm:$0xff]
  %v344 = vld [vmem:[%s1 + $0x950] sm:$0xff]
  %v345 = vld [vmem:[%s1 + $0x958] sm:$0xff]
  %v346 = vld [vmem:[%s1 + $0x960] sm:$0xff]
  %v347 = vld [vmem:[%s1 + $0x968] sm:$0xff]
  %v348 = vld [vmem:[%s1 + $0x970] sm:$0xff]
  %v349 = vld [vmem:[%s1 + $0x978] sm:$0xff]
  %v350 = vld [vmem:[%s1 + $0x980] sm:$0xff]
  %v351 = vld [vmem:[%s1 + $0x988] sm:$0xff]
  %v352 = vld [vmem:[%s1 + $0x990] sm:$0xff]
  %v353 = vld [vmem:[%s1 + $0x998] sm:$0xff]
  %v354 = vld [vmem:[%s1 + $0x9a0] sm:$0xff]
  %v355 = vld [vmem:[%s1 + $0x9a8] sm:$0xff]
  %v356 = vld [vmem:[%s1 + $0x9b0] sm:$0xff]
  %v357 = vld [vmem:[%s1 + $0x9b8] sm:$0xff]
  %v358 = vld [vmem:[%s1 + $0x9c0] sm:$0xff]
  %v359 = vld [vmem:[%s1 + $0x9c8] sm:$0xff]
  %v360 = vld [vmem:[%s1 + $0x9d0] sm:$0xff]
  %v361 = vld [vmem:[%s1 + $0x9d8] sm:$0xff]
  %v362 = vld [vmem:[%s1 + $0x9e0] sm:$0xff]
  %v363 = vld [vmem:[%s1 + $0x9e8] sm:$0xff]
  %v364 = vld [vmem:[%s1 + $0x9f0] sm:$0xff]
  %v365 = vld [vmem:[%s1 + $0x9f8] sm:$0xff]
  %v366 = vld [vmem:[%s1 + $0xa00] sm:$0xff]
  %v367 = vld [vmem:[%s1 + $0xa08] sm:$0xff]
  %v368 = vld [vmem:[%s1 + $0xa10] sm:$0xff]
  %v369 = vld [vmem:[%s1 + $0xa18] sm:$0xff]
  %v370 = vld [vmem:[%s1 + $0xa20] sm:$0xff]
  %v371 = vld [vmem:[%s1 + $0xa28] sm:$0xff]
  %v372 = vld [vmem:[%s1 + $0xa30] sm:$0xff]
  %v373 = vld [vmem:[%s1 + $0xa38] sm:$0xff]
  %v374 = vld [vmem:[%s1 + $0xa40] sm:$0xff]
  %v375 = vld [vmem:[%s1 + $0xa48] sm:$0xff]
  %v376 = vld [vmem:[%s1 + $0xa50] sm:$0xff]
  %v377 = vld [vmem:[%s1 + $0xa58] sm:$0xff]
  %v378 = vld [vmem:[%s1 + $0xa60] sm:$0xff]
  %v379 = vld [vmem:[%s1 + $0xa68] sm:$0xff]
  %v380 = vld [vmem:[%s1 + $0xa70] sm:$0xff]
  %v381 = vld [vmem:[%s1 + $0xa78] sm:$0xff]
  %v382 = vld [vmem:[%s1 + $0xa80] sm:$0xff]
  %v383 = vld [vmem:[%s1 + $0xa88] sm:$0xff]
  %v384 = vld [vmem:[%s1 + $0xa90] sm:$0xff]
  %v385 = vld [vmem:[%s1 + $0xa98] sm:$0xff]
  %v386 = vld [vmem:[%s1 + $0xaa0] sm:$0xff]
  %v387 = vld [vmem:[%s1 + $0xaa8] sm:$0xff]
  %v388 = vld [vmem:[%s1 + $0xab0] sm:$0xff]
  %v389 = vld [vmem:[%s1 + $0xab8] sm:$0xff]
  %v390 = vld [vmem:[%s1 + $0xac0] sm:$0xff]
  %v391 = vld [vmem:[%s1 + $0xac8] sm:$0xff]
  %v392 = vld [vmem:[%s1 + $0xad0] sm:$0xff]
  %v393 = vld [vmem:[%s1 + $0xad8] sm:$0xff]
  %v394 = vld [vmem:[%s1 + $0xae0] sm:$0xff]
  %v395 = vld [vmem:[%s1 + $0xae8] sm:$0xff]
  %v396 = vld [vmem:[%s1 + $0xaf0] sm:$0xff]
  %v397 = vld [vmem:[%s1 + $0xaf8] sm:$0xff]
  %v398 = vld [vmem:[%s1 + $0xb00] sm:$0xff]
  %v399 = vld [vmem:[%s1 + $0xb08] sm:$0xff]
  %v400 = vld [vmem:[%s1 + $0xb10] sm:$0xff]
  %v401 = vld [vmem:[%s1 + $0xb18] sm:$0xff]
  %v402 = vld [vmem:[%s1 + $0xb20] sm:$0xff]
  %v403 = vld [vmem:[%s1 + $0xb28] sm:$0xff]
  %v404 = vld [vmem:[%s1 + $0xb30] sm:$0xff]
  %v405 = vld [vmem:[%s1 + $0xb38] sm:$0xff]
  %v406 = vld [vmem:[%s1 + $0xb40] sm:$0xff]
  %v407 = vld [vmem:[%s1 + $0xb48] sm:$0xff]
  %v408 = vld [vmem:[%s1 + $0xb50] sm:$0xff]
  %v409 = vld [vmem:[%s1 + $0xb58] sm:$0xff]
  %v410 = vld [vmem:[%s1 + $0xb60] sm:$0xff]
  %v411 = vld [vmem:[%s1 + $0xb68] sm:$0xff]
  %v412 = vld [vmem:[%s1 + $0xb70] sm:$0xff]
  %v413 = vld [vmem:[%s1 + $0xb78] sm:$0xff]
  %v414 = vld [vmem:[%s1 + $0xb80] sm:$0xff]
  %v415 = vld [vmem:[%s1 + $0xb88] sm:$0xff]
  %v416 = vld [vmem:[%s1 + $0xb90] sm:$0xff]
  %v417 = vld [vmem:[%s1 + $0xb98] sm:$0xff]
  %v418 = vld [vmem:[%s1 + $0xba0] sm:$0xff]
  %v419 = vld [vmem:[%s1 + $0xba8] sm:$0xff]
  %v420 = vld [vmem:[%s1 + $0xbb0] sm:$0xff]
  %v421 = vld [vmem:[%s1 + $0xbb8] sm:$0xff]
  %v422 = vld [vmem:[%s1 + $0xbc0] sm:$0xff]
  %v423 = vld [vmem:[%s1 + $0xbc8] sm:$0xff]
  %v424 = vld [vmem:[%s1 + $0xbd0] sm:$0xff]
  %v425 = vld [vmem:[%s1 + $0xbd8] sm:$0xff]
  %v426 = vld [vmem:[%s1 + $0xbe0] sm:$0xff]
  %v427 = vld [vmem:[%s1 + $0xbe8] sm:$0xff]
  %v428 = vld [vmem:[%s1 + $0xbf0] sm:$0xff]
  %v429 = vld [vmem:[%s1 + $0xbf8] sm:$0xff]
  %v430 = vld [vmem:[%s1 + $0xc00] sm:$0xff]
  %v431 = vld [vmem:[%s1 + $0xc08] sm:$0xff]
  %v432 = vld [vmem:[%s1 + $0xc10] sm:$0xff]
  %v433 = vld [vmem:[%s1 + $0xc18] sm:$0xff]
  %v434 = vld [vmem:[%s1 + $0xc20] sm:$0xff]
  %v435 = vld [vmem:[%s1 + $0xc28] sm:$0xff]
  %v436 = vld [vmem:[%s1 + $0xc30] sm:$0xff]
  %v437 = vld [vmem:[%s1 + $0xc38] sm:$0xff]
  %v438 = vld [vmem:[%s1 + $0xc40] sm:$0xff]
  %v439 = vld [vmem:[%s1 + $0xc48] sm:$0xff]
  %v440 = vld [vmem:[%s1 + $0xc50] sm:$0xff]
  %v441 = vld [vmem:[%s1 + $0xc58] sm:$0xff]
  %v442 = vld [vmem:[%s1 + $0xc60] sm:$0xff]
  %v443 = vld [vmem:[%s1 + $0xc68] sm:$0xff]
  %v444 = vld [vmem:[%s1 + $0xc70] sm:$0xff]
  %v445 = vld [vmem:[%s1 + $0xc78] sm:$0xff]
  %v446 = vld [vmem:[%s1 + $0xc80] sm:$0xff]
  %v447 = vld [vmem:[%s1 + $0xc88] sm:$0xff]
  %v448 = vld [vmem:[%s1 + $0xc90] sm:$0xff]
  %v449 = vld [vmem:[%s1 + $0xc98] sm:$0xff]
  %v450 = vld [vmem:[%s1 + $0xca0] sm:$0xff]
  %v451 = vld [vmem:[%s1 + $0xca8] sm:$0xff]
  %v452 = vld [vmem:[%s1 + $0xcb0] sm:$0xff]
  %v453 = vld [vmem:[%s1 + $0xcb8] sm:$0xff]
  %v454 = vld [vmem:[%s1 + $0xcc0] sm:$0xff]
  %v455 = vld [vmem:[%s1 + $0xcc8] sm:$0xff]
  %v456 = vld [vmem:[%s1 + $0xcd0] sm:$0xff]
  %v457 = vld [vmem:[%s1 + $0xcd8] sm:$0xff]
  %v458 = vld [vmem:[%s1 + $0xce0] sm:$0xff]
  %v459 = vld [vmem:[%s1 + $0xce8] sm:$0xff]
  %v460 = vld [vmem:[%s1 + $0xcf0] sm:$0xff]
  %v461 = vld [vmem:[%s1 + $0xcf8] sm:$0xff]
  %v462 = vld [vmem:[%s1 + $0xd00] sm:$0xff]
  %v463 = vld [vmem:[%s1 + $0xd08] sm:$0xff]
  %v464 = vld [vmem:[%s1 + $0xd10] sm:$0xff]
  %v465 = vld [vmem:[%s1 + $0xd18] sm:$0xff]
  %v466 = vld [vmem:[%s1 + $0xd20] sm:$0xff]
  %v467 = vld [vmem:[%s1 + $0xd28] sm:$0xff]
  %v468 = vld [vmem:[%s1 + $0xd30] sm:$0xff]
  %v469 = vld [vmem:[%s1 + $0xd38] sm:$0xff]
  %v470 = vld [vmem:[%s1 + $0xd40] sm:$0xff]
  %v471 = vld [vmem:[%s1 + $0xd48] sm:$0xff]
  %v472 = vld [vmem:[%s1 + $0xd50] sm:$0xff]
  %v473 = vld [vmem:[%s1 + $0xd58] sm:$0xff]
  %v474 = vld [vmem:[%s1 + $0xd60] sm:$0xff]
  %v475 = vld [vmem:[%s1 + $0xd68] sm:$0xff]
  %v476 = vld [vmem:[%s1 + $0xd70] sm:$0xff]
  %v477 = vld [vmem:[%s1 + $0xd78] sm:$0xff]
  %v478 = vld [vmem:[%s1 + $0xd80] sm:$0xff]
  %v479 = vld [vmem:[%s1 + $0xd88] sm:$0xff]
  %v480 = vld [vmem:[%s1 + $0xd90] sm:$0xff]
  %v481 = vld [vmem:[%s1 + $0xd98] sm:$0xff]
  %v482 = vld [vmem:[%s1 + $0xda0] sm:$0xff]
  %v483 = vld [vmem:[%s1 + $0xda8] sm:$0xff]
  %v484 = vld [vmem:[%s1 + $0xdb0] sm:$0xff]
  %v485 = vld [vmem:[%s1 + $0xdb8] sm:$0xff]
  %v486 = vld [vmem:[%s1 + $0xdc0] sm:$0xff]
  %v487 = vld [vmem:[%s1 + $0xdc8] sm:$0xff]
  %v488 = vld [vmem:[%s1 + $0xdd0] sm:$0xff]
  %v489 = vld [vmem:[%s1 + $0xdd8] sm:$0xff]
  %v490 = vld [vmem:[%s1 + $0xde0] sm:$0xff]
  %v491 = vld [vmem:[%s1 + $0xde8] sm:$0xff]
  %v492 = vld [vmem:[%s1 + $0xdf0] sm:$0xff]
  %v493 = vld [vmem:[%s1 + $0xdf8] sm:$0xff]
  %v494 = vld [vmem:[%s1 + $0xe00] sm:$0xff]
  %v495 = vld [vmem:[%s1 + $0xe08] sm:$0xff]
  %v496 = vld [vmem:[%s1 + $0xe10] sm:$0xff]
  %v497 = vld [vmem:[%s1 + $0xe18] sm:$0xff]
  %v498 = vld [vmem:[%s1 + $0xe20] sm:$0xff]
  %v499 = vld [vmem:[%s1 + $0xe28] sm:$0xff]
  %v500 = vld [vmem:[%s1 + $0xe30] sm:$0xff]
  %v501 = vld [vmem:[%s1 + $0xe38] sm:$0xff]
  %v502 = vld [vmem:[%s1 + $0xe40] sm:$0xff]
  %v503 = vld [vmem:[%s1 + $0xe48] sm:$0xff]
  %v504 = vld [vmem:[%s1 + $0xe50] sm:$0xff]
  %v505 = vld [vmem:[%s1 + $0xe58] sm:$0xff]
  %v506 = vld [vmem:[%s1 + $0xe60] sm:$0xff]
  %v507 = vld [vmem:[%s1 + $0xe68] sm:$0xff]
  %v508 = vld [vmem:[%s1 + $0xe70] sm:$0xff]
  %v509 = vld [vmem:[%s1 + $0xe78] sm:$0xff]
  %v510 = vld [vmem:[%s1 + $0xe80] sm:$0xff]
  %v511 = vld [vmem:[%s1 + $0xe88] sm:$0xff]
  %v512 = vld [vmem:[%s1 + $0xe90] sm:$0xff]
  %v513 = vld [vmem:[%s1 + $0xe98] sm:$0xff]
  %v514 = vld [vmem:[%s1 + $0xea0] sm:$0xff]
  %v515 = vld [vmem:[%s1 + $0xea8] sm:$0xff]
  %v516 = vld [vmem:[%s1 + $0xeb0] sm:$0xff]
  %v517 = vld [vmem:[%s1 + $0xeb8] sm:$0xff]
  %v518 = vld [vmem:[%s1 + $0xec0] sm:$0xff]
  %v519 = vld [vmem:[%s1 + $0xec8] sm:$0xff]
  %v520 = vld [vmem:[%s1 + $0xed0] sm:$0xff]
  %v521 = vld [vmem:[%s1 + $0xed8] sm:$0xff]
  %v522 = vld [vmem:[%s1 + $0xee0] sm:$0xff]
  %v523 = vld [vmem:[%s1 + $0xee8] sm:$0xff]
  %v524 = vld [vmem:[%s1 + $0xef0] sm:$0xff]
  %v525 = vld [vmem:[%s1 + $0xef8] sm:$0xff]
  %v526 = vld [vmem:[%s1 + $0xf00] sm:$0xff]
  %v527 = vld [vmem:[%s1 + $0xf08] sm:$0xff]
  %v528 = vld [vmem:[%s1 + $0xf10] sm:$0xff]
  %v529 = vld [vmem:[%s1 + $0xf18] sm:$0xff]
  %v530 = vld [vmem:[%s1 + $0xf20] sm:$0xff]
  %v531 = vld [vmem:[%s1 + $0xf28] sm:$0xff]
  %v532 = vld [vmem:[%s1 + $0xf30] sm:$0xff]
  %v533 = vld [vmem:[%s1 + $0xf38] sm:$0xff]
  %v534 = vld [vmem:[%s1 + $0xf40] sm:$0xff]
  %v535 = vld [vmem:[%s1 + $0xf48] sm:$0xff]
  %v536 = vld [vmem:[%s1 + $0xf50] sm:$0xff]
  %v537 = vld [vmem:[%s1 + $0xf58] sm:$0xff]
  %v538 = vld [vmem:[%s1 + $0xf60] sm:$0xff]
  %v539 = vld [vmem:[%s1 + $0xf68] sm:$0xff]
  %v540 = vld [vmem:[%s1 + $0xf70] sm:$0xff]
  %v541 = vld [vmem:[%s1 + $0xf78] sm:$0xff]
  %v542 = vld [vmem:[%s1 + $0xf80] sm:$0xff]
  %v543 = vld [vmem:[%s1 + $0xf88] sm:$0xff]
  %v544 = vld [vmem:[%s1 + $0xf90] sm:$0xff]
  %v545 = vld [vmem:[%s1 + $0xf98] sm:$0xff]
  %v546 = vld [vmem:[%s1 + $0xfa0] sm:$0xff]
  %v547 = vld [vmem:[%s1 + $0xfa8] sm:$0xff]
  %v548 = vld [vmem:[%s1 + $0xfb0] sm:$0xff]
  %v549 = vld [vmem:[%s1 + $0xfb8] sm:$0xff]
  %v550 = vld [vmem:[%s1 + $0xfc0] sm:$0xff]
  %v551 = vld [vmem:[%s1 + $0xfc8] sm:$0xff]
  %v552 = vld [vmem:[%s1 + $0xfd0] sm:$0xff]
  %v553 = vld [vmem:[%s1 + $0xfd8] sm:$0xff]
  %v554 = vld [vmem:[%s1 + $0xfe0] sm:$0xff]
  %v555 = vld [vmem:[%s1 + $0xfe8] sm:$0xff]
  %v556 = vld [vmem:[%s1 + $0xff0] sm:$0xff]
  %v557 = vld [vmem:[%s1 + $0xff8] sm:$0xff]
  %v558 = vld [vmem:[%s2] sm:$0x3]
  %v560 = vlaneseq
  %v561 = vshrl.u32 %v560, 7
  %v562 = vsub.s32 0, %v561
  %v563 = vrot.slane %v558, %v562
  %v564 = vlaneseq
  %v565 = vshrl.u32 %v564, 7
  %v566 = vsub.s32 1, %v565
  %v567 = vrot.slane %v558, %v566
  %v602 = vunpack.c.l.b16 %v14
  %v603 = vunpack.c.h.b16 %v14
  %v604 = vunpack.c.l.b16 %v15
  %v605 = vunpack.c.h.b16 %v15
  %v606 = vunpack.c.l.b16 %v16
  %v607 = vunpack.c.h.b16 %v16
  %v608 = vunpack.c.l.b16 %v17
  %v609 = vunpack.c.h.b16 %v17
  %v610 = vunpack.c.l.b16 %v18
  %v611 = vunpack.c.h.b16 %v18
  %v612 = vunpack.c.l.b16 %v19
  %v613 = vunpack.c.h.b16 %v19
  %v614 = vunpack.c.l.b16 %v20
  %v615 = vunpack.c.h.b16 %v20
  %v616 = vunpack.c.l.b16 %v21
  %v617 = vunpack.c.h.b16 %v21
  %v618 = vunpack.c.l.b16 %v22
  %v619 = vunpack.c.h.b16 %v22
  %v620 = vunpack.c.l.b16 %v23
  %v621 = vunpack.c.h.b16 %v23
  %v622 = vunpack.c.l.b16 %v24
  %v623 = vunpack.c.h.b16 %v24
  %v624 = vunpack.c.l.b16 %v25
  %v625 = vunpack.c.h.b16 %v25
  %v626 = vunpack.c.l.b16 %v26
  %v627 = vunpack.c.h.b16 %v26
  %v628 = vunpack.c.l.b16 %v27
  %v629 = vunpack.c.h.b16 %v27
  %v630 = vunpack.c.l.b16 %v28
  %v631 = vunpack.c.h.b16 %v28
  %v632 = vunpack.c.l.b16 %v29
  %v633 = vunpack.c.h.b16 %v29
  %v634 = vunpack.c.l.b16 %v30
  %v635 = vunpack.c.h.b16 %v30
  %v636 = vunpack.c.l.b16 %v31
  %v637 = vunpack.c.h.b16 %v31
  %v638 = vunpack.c.l.b16 %v32
  %v639 = vunpack.c.h.b16 %v32
  %v640 = vunpack.c.l.b16 %v33
  %v641 = vunpack.c.h.b16 %v33
  %v642 = vunpack.c.l.b16 %v34
  %v643 = vunpack.c.h.b16 %v34
  %v644 = vunpack.c.l.b16 %v35
  %v645 = vunpack.c.h.b16 %v35
  %v646 = vunpack.c.l.b16 %v36
  %v647 = vunpack.c.h.b16 %v36
  %v648 = vunpack.c.l.b16 %v37
  %v649 = vunpack.c.h.b16 %v37
  %v650 = vunpack.c.l.b16 %v38
  %v651 = vunpack.c.h.b16 %v38
  %v652 = vunpack.c.l.b16 %v39
  %v653 = vunpack.c.h.b16 %v39
  %v654 = vunpack.c.l.b16 %v40
  %v655 = vunpack.c.h.b16 %v40
  %v656 = vunpack.c.l.b16 %v41
  %v657 = vunpack.c.h.b16 %v41
  %v658 = vunpack.c.l.b16 %v42
  %v659 = vunpack.c.h.b16 %v42
  %v660 = vunpack.c.l.b16 %v43
  %v661 = vunpack.c.h.b16 %v43
  %v662 = vunpack.c.l.b16 %v44
  %v663 = vunpack.c.h.b16 %v44
  %v664 = vunpack.c.l.b16 %v45
  %v665 = vunpack.c.h.b16 %v45
  %v666 = vpack.c.b16 %v634, %v602
  %v667 = vpack.c.b16 %v635, %v603
  %v668 = vpack.c.b16 %v636, %v604
  %v669 = vpack.c.b16 %v637, %v605
  %v670 = vpack.c.b16 %v638, %v606
  %v671 = vpack.c.b16 %v639, %v607
  %v672 = vpack.c.b16 %v640, %v608
  %v673 = vpack.c.b16 %v641, %v609
  %v674 = vpack.c.b16 %v642, %v610
  %v675 = vpack.c.b16 %v643, %v611
  %v676 = vpack.c.b16 %v644, %v612
  %v677 = vpack.c.b16 %v645, %v613
  %v678 = vpack.c.b16 %v646, %v614
  %v679 = vpack.c.b16 %v647, %v615
  %v680 = vpack.c.b16 %v648, %v616
  %v681 = vpack.c.b16 %v649, %v617
  %v682 = vpack.c.b16 %v650, %v618
  %v683 = vpack.c.b16 %v651, %v619
  %v684 = vpack.c.b16 %v652, %v620
  %v685 = vpack.c.b16 %v653, %v621
  %v686 = vpack.c.b16 %v654, %v622
  %v687 = vpack.c.b16 %v655, %v623
  %v688 = vpack.c.b16 %v656, %v624
  %v689 = vpack.c.b16 %v657, %v625
  %v690 = vpack.c.b16 %v658, %v626
  %v691 = vpack.c.b16 %v659, %v627
  %v692 = vpack.c.b16 %v660, %v628
  %v693 = vpack.c.b16 %v661, %v629
  %v694 = vpack.c.b16 %v662, %v630
  %v695 = vpack.c.b16 %v663, %v631
  %v696 = vpack.c.b16 %v664, %v632
  %v697 = vpack.c.b16 %v665, %v633
  %v1242 = vunpack.c.l.b16 %v46
  %v1243 = vunpack.c.h.b16 %v46
  %v1244 = vunpack.c.l.b16 %v47
  %v1245 = vunpack.c.h.b16 %v47
  %v1246 = vunpack.c.l.b16 %v48
  %v1247 = vunpack.c.h.b16 %v48
  %v1248 = vunpack.c.l.b16 %v49
  %v1249 = vunpack.c.h.b16 %v49
  %v1250 = vunpack.c.l.b16 %v50
  %v1251 = vunpack.c.h.b16 %v50
  %v1252 = vunpack.c.l.b16 %v51
  %v1253 = vunpack.c.h.b16 %v51
  %v1254 = vunpack.c.l.b16 %v52
  %v1255 = vunpack.c.h.b16 %v52
  %v1256 = vunpack.c.l.b16 %v53
  %v1257 = vunpack.c.h.b16 %v53
  %v1258 = vunpack.c.l.b16 %v54
  %v1259 = vunpack.c.h.b16 %v54
  %v1260 = vunpack.c.l.b16 %v55
  %v1261 = vunpack.c.h.b16 %v55
  %v1262 = vunpack.c.l.b16 %v56
  %v1263 = vunpack.c.h.b16 %v56
  %v1264 = vunpack.c.l.b16 %v57
  %v1265 = vunpack.c.h.b16 %v57
  %v1266 = vunpack.c.l.b16 %v58
  %v1267 = vunpack.c.h.b16 %v58
  %v1268 = vunpack.c.l.b16 %v59
  %v1269 = vunpack.c.h.b16 %v59
  %v1270 = vunpack.c.l.b16 %v60
  %v1271 = vunpack.c.h.b16 %v60
  %v1272 = vunpack.c.l.b16 %v61
  %v1273 = vunpack.c.h.b16 %v61
  %v1274 = vunpack.c.l.b16 %v62
  %v1275 = vunpack.c.h.b16 %v62
  %v1276 = vunpack.c.l.b16 %v63
  %v1277 = vunpack.c.h.b16 %v63
  %v1278 = vunpack.c.l.b16 %v64
  %v1279 = vunpack.c.h.b16 %v64
  %v1280 = vunpack.c.l.b16 %v65
  %v1281 = vunpack.c.h.b16 %v65
  %v1282 = vunpack.c.l.b16 %v66
  %v1283 = vunpack.c.h.b16 %v66
  %v1284 = vunpack.c.l.b16 %v67
  %v1285 = vunpack.c.h.b16 %v67
  %v1286 = vunpack.c.l.b16 %v68
  %v1287 = vunpack.c.h.b16 %v68
  %v1288 = vunpack.c.l.b16 %v69
  %v1289 = vunpack.c.h.b16 %v69
  %v1290 = vunpack.c.l.b16 %v70
  %v1291 = vunpack.c.h.b16 %v70
  %v1292 = vunpack.c.l.b16 %v71
  %v1293 = vunpack.c.h.b16 %v71
  %v1294 = vunpack.c.l.b16 %v72
  %v1295 = vunpack.c.h.b16 %v72
  %v1296 = vunpack.c.l.b16 %v73
  %v1297 = vunpack.c.h.b16 %v73
  %v1298 = vunpack.c.l.b16 %v74
  %v1299 = vunpack.c.h.b16 %v74
  %v1300 = vunpack.c.l.b16 %v75
  %v1301 = vunpack.c.h.b16 %v75
  %v1302 = vunpack.c.l.b16 %v76
  %v1303 = vunpack.c.h.b16 %v76
  %v1304 = vunpack.c.l.b16 %v77
  %v1305 = vunpack.c.h.b16 %v77
  %v1306 = vunpack.c.l.b16 %v78
  %v1307 = vunpack.c.h.b16 %v78
  %v1308 = vunpack.c.l.b16 %v79
  %v1309 = vunpack.c.h.b16 %v79
  %v1310 = vunpack.c.l.b16 %v80
  %v1311 = vunpack.c.h.b16 %v80
  %v1312 = vunpack.c.l.b16 %v81
  %v1313 = vunpack.c.h.b16 %v81
  %v1314 = vunpack.c.l.b16 %v82
  %v1315 = vunpack.c.h.b16 %v82
  %v1316 = vunpack.c.l.b16 %v83
  %v1317 = vunpack.c.h.b16 %v83
  %v1318 = vunpack.c.l.b16 %v84
  %v1319 = vunpack.c.h.b16 %v84
  %v1320 = vunpack.c.l.b16 %v85
  %v1321 = vunpack.c.h.b16 %v85
  %v1322 = vunpack.c.l.b16 %v86
  %v1323 = vunpack.c.h.b16 %v86
  %v1324 = vunpack.c.l.b16 %v87
  %v1325 = vunpack.c.h.b16 %v87
  %v1326 = vunpack.c.l.b16 %v88
  %v1327 = vunpack.c.h.b16 %v88
  %v1328 = vunpack.c.l.b16 %v89
  %v1329 = vunpack.c.h.b16 %v89
  %v1330 = vunpack.c.l.b16 %v90
  %v1331 = vunpack.c.h.b16 %v90
  %v1332 = vunpack.c.l.b16 %v91
  %v1333 = vunpack.c.h.b16 %v91
  %v1334 = vunpack.c.l.b16 %v92
  %v1335 = vunpack.c.h.b16 %v92
  %v1336 = vunpack.c.l.b16 %v93
  %v1337 = vunpack.c.h.b16 %v93
  %v1338 = vunpack.c.l.b16 %v94
  %v1339 = vunpack.c.h.b16 %v94
  %v1340 = vunpack.c.l.b16 %v95
  %v1341 = vunpack.c.h.b16 %v95
  %v1342 = vunpack.c.l.b16 %v96
  %v1343 = vunpack.c.h.b16 %v96
  %v1344 = vunpack.c.l.b16 %v97
  %v1345 = vunpack.c.h.b16 %v97
  %v1346 = vunpack.c.l.b16 %v98
  %v1347 = vunpack.c.h.b16 %v98
  %v1348 = vunpack.c.l.b16 %v99
  %v1349 = vunpack.c.h.b16 %v99
  %v1350 = vunpack.c.l.b16 %v100
  %v1351 = vunpack.c.h.b16 %v100
  %v1352 = vunpack.c.l.b16 %v101
  %v1353 = vunpack.c.h.b16 %v101
  %v1354 = vunpack.c.l.b16 %v102
  %v1355 = vunpack.c.h.b16 %v102
  %v1356 = vunpack.c.l.b16 %v103
  %v1357 = vunpack.c.h.b16 %v103
  %v1358 = vunpack.c.l.b16 %v104
  %v1359 = vunpack.c.h.b16 %v104
  %v1360 = vunpack.c.l.b16 %v105
  %v1361 = vunpack.c.h.b16 %v105
  %v1362 = vunpack.c.l.b16 %v106
  %v1363 = vunpack.c.h.b16 %v106
  %v1364 = vunpack.c.l.b16 %v107
  %v1365 = vunpack.c.h.b16 %v107
  %v1366 = vunpack.c.l.b16 %v108
  %v1367 = vunpack.c.h.b16 %v108
  %v1368 = vunpack.c.l.b16 %v109
  %v1369 = vunpack.c.h.b16 %v109
  %v1370 = vunpack.c.l.b16 %v110
  %v1371 = vunpack.c.h.b16 %v110
  %v1372 = vunpack.c.l.b16 %v111
  %v1373 = vunpack.c.h.b16 %v111
  %v1374 = vunpack.c.l.b16 %v112
  %v1375 = vunpack.c.h.b16 %v112
  %v1376 = vunpack.c.l.b16 %v113
  %v1377 = vunpack.c.h.b16 %v113
  %v1378 = vunpack.c.l.b16 %v114
  %v1379 = vunpack.c.h.b16 %v114
  %v1380 = vunpack.c.l.b16 %v115
  %v1381 = vunpack.c.h.b16 %v115
  %v1382 = vunpack.c.l.b16 %v116
  %v1383 = vunpack.c.h.b16 %v116
  %v1384 = vunpack.c.l.b16 %v117
  %v1385 = vunpack.c.h.b16 %v117
  %v1386 = vunpack.c.l.b16 %v118
  %v1387 = vunpack.c.h.b16 %v118
  %v1388 = vunpack.c.l.b16 %v119
  %v1389 = vunpack.c.h.b16 %v119
  %v1390 = vunpack.c.l.b16 %v120
  %v1391 = vunpack.c.h.b16 %v120
  %v1392 = vunpack.c.l.b16 %v121
  %v1393 = vunpack.c.h.b16 %v121
  %v1394 = vunpack.c.l.b16 %v122
  %v1395 = vunpack.c.h.b16 %v122
  %v1396 = vunpack.c.l.b16 %v123
  %v1397 = vunpack.c.h.b16 %v123
  %v1398 = vunpack.c.l.b16 %v124
  %v1399 = vunpack.c.h.b16 %v124
  %v1400 = vunpack.c.l.b16 %v125
  %v1401 = vunpack.c.h.b16 %v125
  %v1402 = vunpack.c.l.b16 %v126
  %v1403 = vunpack.c.h.b16 %v126
  %v1404 = vunpack.c.l.b16 %v127
  %v1405 = vunpack.c.h.b16 %v127
  %v1406 = vunpack.c.l.b16 %v128
  %v1407 = vunpack.c.h.b16 %v128
  %v1408 = vunpack.c.l.b16 %v129
  %v1409 = vunpack.c.h.b16 %v129
  %v1410 = vunpack.c.l.b16 %v130
  %v1411 = vunpack.c.h.b16 %v130
  %v1412 = vunpack.c.l.b16 %v131
  %v1413 = vunpack.c.h.b16 %v131
  %v1414 = vunpack.c.l.b16 %v132
  %v1415 = vunpack.c.h.b16 %v132
  %v1416 = vunpack.c.l.b16 %v133
  %v1417 = vunpack.c.h.b16 %v133
  %v1418 = vunpack.c.l.b16 %v134
  %v1419 = vunpack.c.h.b16 %v134
  %v1420 = vunpack.c.l.b16 %v135
  %v1421 = vunpack.c.h.b16 %v135
  %v1422 = vunpack.c.l.b16 %v136
  %v1423 = vunpack.c.h.b16 %v136
  %v1424 = vunpack.c.l.b16 %v137
  %v1425 = vunpack.c.h.b16 %v137
  %v1426 = vunpack.c.l.b16 %v138
  %v1427 = vunpack.c.h.b16 %v138
  %v1428 = vunpack.c.l.b16 %v139
  %v1429 = vunpack.c.h.b16 %v139
  %v1430 = vunpack.c.l.b16 %v140
  %v1431 = vunpack.c.h.b16 %v140
  %v1432 = vunpack.c.l.b16 %v141
  %v1433 = vunpack.c.h.b16 %v141
  %v1434 = vunpack.c.l.b16 %v142
  %v1435 = vunpack.c.h.b16 %v142
  %v1436 = vunpack.c.l.b16 %v143
  %v1437 = vunpack.c.h.b16 %v143
  %v1438 = vunpack.c.l.b16 %v144
  %v1439 = vunpack.c.h.b16 %v144
  %v1440 = vunpack.c.l.b16 %v145
  %v1441 = vunpack.c.h.b16 %v145
  %v1442 = vunpack.c.l.b16 %v146
  %v1443 = vunpack.c.h.b16 %v146
  %v1444 = vunpack.c.l.b16 %v147
  %v1445 = vunpack.c.h.b16 %v147
  %v1446 = vunpack.c.l.b16 %v148
  %v1447 = vunpack.c.h.b16 %v148
  %v1448 = vunpack.c.l.b16 %v149
  %v1449 = vunpack.c.h.b16 %v149
  %v1450 = vunpack.c.l.b16 %v150
  %v1451 = vunpack.c.h.b16 %v150
  %v1452 = vunpack.c.l.b16 %v151
  %v1453 = vunpack.c.h.b16 %v151
  %v1454 = vunpack.c.l.b16 %v152
  %v1455 = vunpack.c.h.b16 %v152
  %v1456 = vunpack.c.l.b16 %v153
  %v1457 = vunpack.c.h.b16 %v153
  %v1458 = vunpack.c.l.b16 %v154
  %v1459 = vunpack.c.h.b16 %v154
  %v1460 = vunpack.c.l.b16 %v155
  %v1461 = vunpack.c.h.b16 %v155
  %v1462 = vunpack.c.l.b16 %v156
  %v1463 = vunpack.c.h.b16 %v156
  %v1464 = vunpack.c.l.b16 %v157
  %v1465 = vunpack.c.h.b16 %v157
  %v1466 = vunpack.c.l.b16 %v158
  %v1467 = vunpack.c.h.b16 %v158
  %v1468 = vunpack.c.l.b16 %v159
  %v1469 = vunpack.c.h.b16 %v159
  %v1470 = vunpack.c.l.b16 %v160
  %v1471 = vunpack.c.h.b16 %v160
  %v1472 = vunpack.c.l.b16 %v161
  %v1473 = vunpack.c.h.b16 %v161
  %v1474 = vunpack.c.l.b16 %v162
  %v1475 = vunpack.c.h.b16 %v162
  %v1476 = vunpack.c.l.b16 %v163
  %v1477 = vunpack.c.h.b16 %v163
  %v1478 = vunpack.c.l.b16 %v164
  %v1479 = vunpack.c.h.b16 %v164
  %v1480 = vunpack.c.l.b16 %v165
  %v1481 = vunpack.c.h.b16 %v165
  %v1482 = vunpack.c.l.b16 %v166
  %v1483 = vunpack.c.h.b16 %v166
  %v1484 = vunpack.c.l.b16 %v167
  %v1485 = vunpack.c.h.b16 %v167
  %v1486 = vunpack.c.l.b16 %v168
  %v1487 = vunpack.c.h.b16 %v168
  %v1488 = vunpack.c.l.b16 %v169
  %v1489 = vunpack.c.h.b16 %v169
  %v1490 = vunpack.c.l.b16 %v170
  %v1491 = vunpack.c.h.b16 %v170
  %v1492 = vunpack.c.l.b16 %v171
  %v1493 = vunpack.c.h.b16 %v171
  %v1494 = vunpack.c.l.b16 %v172
  %v1495 = vunpack.c.h.b16 %v172
  %v1496 = vunpack.c.l.b16 %v173
  %v1497 = vunpack.c.h.b16 %v173
  %v1498 = vunpack.c.l.b16 %v174
  %v1499 = vunpack.c.h.b16 %v174
  %v1500 = vunpack.c.l.b16 %v175
  %v1501 = vunpack.c.h.b16 %v175
  %v1502 = vunpack.c.l.b16 %v176
  %v1503 = vunpack.c.h.b16 %v176
  %v1504 = vunpack.c.l.b16 %v177
  %v1505 = vunpack.c.h.b16 %v177
  %v1506 = vunpack.c.l.b16 %v178
  %v1507 = vunpack.c.h.b16 %v178
  %v1508 = vunpack.c.l.b16 %v179
  %v1509 = vunpack.c.h.b16 %v179
  %v1510 = vunpack.c.l.b16 %v180
  %v1511 = vunpack.c.h.b16 %v180
  %v1512 = vunpack.c.l.b16 %v181
  %v1513 = vunpack.c.h.b16 %v181
  %v1514 = vunpack.c.l.b16 %v182
  %v1515 = vunpack.c.h.b16 %v182
  %v1516 = vunpack.c.l.b16 %v183
  %v1517 = vunpack.c.h.b16 %v183
  %v1518 = vunpack.c.l.b16 %v184
  %v1519 = vunpack.c.h.b16 %v184
  %v1520 = vunpack.c.l.b16 %v185
  %v1521 = vunpack.c.h.b16 %v185
  %v1522 = vunpack.c.l.b16 %v186
  %v1523 = vunpack.c.h.b16 %v186
  %v1524 = vunpack.c.l.b16 %v187
  %v1525 = vunpack.c.h.b16 %v187
  %v1526 = vunpack.c.l.b16 %v188
  %v1527 = vunpack.c.h.b16 %v188
  %v1528 = vunpack.c.l.b16 %v189
  %v1529 = vunpack.c.h.b16 %v189
  %v1530 = vunpack.c.l.b16 %v190
  %v1531 = vunpack.c.h.b16 %v190
  %v1532 = vunpack.c.l.b16 %v191
  %v1533 = vunpack.c.h.b16 %v191
  %v1534 = vunpack.c.l.b16 %v192
  %v1535 = vunpack.c.h.b16 %v192
  %v1536 = vunpack.c.l.b16 %v193
  %v1537 = vunpack.c.h.b16 %v193
  %v1538 = vunpack.c.l.b16 %v194
  %v1539 = vunpack.c.h.b16 %v194
  %v1540 = vunpack.c.l.b16 %v195
  %v1541 = vunpack.c.h.b16 %v195
  %v1542 = vunpack.c.l.b16 %v196
  %v1543 = vunpack.c.h.b16 %v196
  %v1544 = vunpack.c.l.b16 %v197
  %v1545 = vunpack.c.h.b16 %v197
  %v1546 = vunpack.c.l.b16 %v198
  %v1547 = vunpack.c.h.b16 %v198
  %v1548 = vunpack.c.l.b16 %v199
  %v1549 = vunpack.c.h.b16 %v199
  %v1550 = vunpack.c.l.b16 %v200
  %v1551 = vunpack.c.h.b16 %v200
  %v1552 = vunpack.c.l.b16 %v201
  %v1553 = vunpack.c.h.b16 %v201
  %v1554 = vunpack.c.l.b16 %v202
  %v1555 = vunpack.c.h.b16 %v202
  %v1556 = vunpack.c.l.b16 %v203
  %v1557 = vunpack.c.h.b16 %v203
  %v1558 = vunpack.c.l.b16 %v204
  %v1559 = vunpack.c.h.b16 %v204
  %v1560 = vunpack.c.l.b16 %v205
  %v1561 = vunpack.c.h.b16 %v205
  %v1562 = vunpack.c.l.b16 %v206
  %v1563 = vunpack.c.h.b16 %v206
  %v1564 = vunpack.c.l.b16 %v207
  %v1565 = vunpack.c.h.b16 %v207
  %v1566 = vunpack.c.l.b16 %v208
  %v1567 = vunpack.c.h.b16 %v208
  %v1568 = vunpack.c.l.b16 %v209
  %v1569 = vunpack.c.h.b16 %v209
  %v1570 = vunpack.c.l.b16 %v210
  %v1571 = vunpack.c.h.b16 %v210
  %v1572 = vunpack.c.l.b16 %v211
  %v1573 = vunpack.c.h.b16 %v211
  %v1574 = vunpack.c.l.b16 %v212
  %v1575 = vunpack.c.h.b16 %v212
  %v1576 = vunpack.c.l.b16 %v213
  %v1577 = vunpack.c.h.b16 %v213
  %v1578 = vunpack.c.l.b16 %v214
  %v1579 = vunpack.c.h.b16 %v214
  %v1580 = vunpack.c.l.b16 %v215
  %v1581 = vunpack.c.h.b16 %v215
  %v1582 = vunpack.c.l.b16 %v216
  %v1583 = vunpack.c.h.b16 %v216
  %v1584 = vunpack.c.l.b16 %v217
  %v1585 = vunpack.c.h.b16 %v217
  %v1586 = vunpack.c.l.b16 %v218
  %v1587 = vunpack.c.h.b16 %v218
  %v1588 = vunpack.c.l.b16 %v219
  %v1589 = vunpack.c.h.b16 %v219
  %v1590 = vunpack.c.l.b16 %v220
  %v1591 = vunpack.c.h.b16 %v220
  %v1592 = vunpack.c.l.b16 %v221
  %v1593 = vunpack.c.h.b16 %v221
  %v1594 = vunpack.c.l.b16 %v222
  %v1595 = vunpack.c.h.b16 %v222
  %v1596 = vunpack.c.l.b16 %v223
  %v1597 = vunpack.c.h.b16 %v223
  %v1598 = vunpack.c.l.b16 %v224
  %v1599 = vunpack.c.h.b16 %v224
  %v1600 = vunpack.c.l.b16 %v225
  %v1601 = vunpack.c.h.b16 %v225
  %v1602 = vunpack.c.l.b16 %v226
  %v1603 = vunpack.c.h.b16 %v226
  %v1604 = vunpack.c.l.b16 %v227
  %v1605 = vunpack.c.h.b16 %v227
  %v1606 = vunpack.c.l.b16 %v228
  %v1607 = vunpack.c.h.b16 %v228
  %v1608 = vunpack.c.l.b16 %v229
  %v1609 = vunpack.c.h.b16 %v229
  %v1610 = vunpack.c.l.b16 %v230
  %v1611 = vunpack.c.h.b16 %v230
  %v1612 = vunpack.c.l.b16 %v231
  %v1613 = vunpack.c.h.b16 %v231
  %v1614 = vunpack.c.l.b16 %v232
  %v1615 = vunpack.c.h.b16 %v232
  %v1616 = vunpack.c.l.b16 %v233
  %v1617 = vunpack.c.h.b16 %v233
  %v1618 = vunpack.c.l.b16 %v234
  %v1619 = vunpack.c.h.b16 %v234
  %v1620 = vunpack.c.l.b16 %v235
  %v1621 = vunpack.c.h.b16 %v235
  %v1622 = vunpack.c.l.b16 %v236
  %v1623 = vunpack.c.h.b16 %v236
  %v1624 = vunpack.c.l.b16 %v237
  %v1625 = vunpack.c.h.b16 %v237
  %v1626 = vunpack.c.l.b16 %v238
  %v1627 = vunpack.c.h.b16 %v238
  %v1628 = vunpack.c.l.b16 %v239
  %v1629 = vunpack.c.h.b16 %v239
  %v1630 = vunpack.c.l.b16 %v240
  %v1631 = vunpack.c.h.b16 %v240
  %v1632 = vunpack.c.l.b16 %v241
  %v1633 = vunpack.c.h.b16 %v241
  %v1634 = vunpack.c.l.b16 %v242
  %v1635 = vunpack.c.h.b16 %v242
  %v1636 = vunpack.c.l.b16 %v243
  %v1637 = vunpack.c.h.b16 %v243
  %v1638 = vunpack.c.l.b16 %v244
  %v1639 = vunpack.c.h.b16 %v244
  %v1640 = vunpack.c.l.b16 %v245
  %v1641 = vunpack.c.h.b16 %v245
  %v1642 = vunpack.c.l.b16 %v246
  %v1643 = vunpack.c.h.b16 %v246
  %v1644 = vunpack.c.l.b16 %v247
  %v1645 = vunpack.c.h.b16 %v247
  %v1646 = vunpack.c.l.b16 %v248
  %v1647 = vunpack.c.h.b16 %v248
  %v1648 = vunpack.c.l.b16 %v249
  %v1649 = vunpack.c.h.b16 %v249
  %v1650 = vunpack.c.l.b16 %v250
  %v1651 = vunpack.c.h.b16 %v250
  %v1652 = vunpack.c.l.b16 %v251
  %v1653 = vunpack.c.h.b16 %v251
  %v1654 = vunpack.c.l.b16 %v252
  %v1655 = vunpack.c.h.b16 %v252
  %v1656 = vunpack.c.l.b16 %v253
  %v1657 = vunpack.c.h.b16 %v253
  %v1658 = vunpack.c.l.b16 %v254
  %v1659 = vunpack.c.h.b16 %v254
  %v1660 = vunpack.c.l.b16 %v255
  %v1661 = vunpack.c.h.b16 %v255
  %v1662 = vunpack.c.l.b16 %v256
  %v1663 = vunpack.c.h.b16 %v256
  %v1664 = vunpack.c.l.b16 %v257
  %v1665 = vunpack.c.h.b16 %v257
  %v1666 = vunpack.c.l.b16 %v258
  %v1667 = vunpack.c.h.b16 %v258
  %v1668 = vunpack.c.l.b16 %v259
  %v1669 = vunpack.c.h.b16 %v259
  %v1670 = vunpack.c.l.b16 %v260
  %v1671 = vunpack.c.h.b16 %v260
  %v1672 = vunpack.c.l.b16 %v261
  %v1673 = vunpack.c.h.b16 %v261
  %v1674 = vunpack.c.l.b16 %v262
  %v1675 = vunpack.c.h.b16 %v262
  %v1676 = vunpack.c.l.b16 %v263
  %v1677 = vunpack.c.h.b16 %v263
  %v1678 = vunpack.c.l.b16 %v264
  %v1679 = vunpack.c.h.b16 %v264
  %v1680 = vunpack.c.l.b16 %v265
  %v1681 = vunpack.c.h.b16 %v265
  %v1682 = vunpack.c.l.b16 %v266
  %v1683 = vunpack.c.h.b16 %v266
  %v1684 = vunpack.c.l.b16 %v267
  %v1685 = vunpack.c.h.b16 %v267
  %v1686 = vunpack.c.l.b16 %v268
  %v1687 = vunpack.c.h.b16 %v268
  %v1688 = vunpack.c.l.b16 %v269
  %v1689 = vunpack.c.h.b16 %v269
  %v1690 = vunpack.c.l.b16 %v270
  %v1691 = vunpack.c.h.b16 %v270
  %v1692 = vunpack.c.l.b16 %v271
  %v1693 = vunpack.c.h.b16 %v271
  %v1694 = vunpack.c.l.b16 %v272
  %v1695 = vunpack.c.h.b16 %v272
  %v1696 = vunpack.c.l.b16 %v273
  %v1697 = vunpack.c.h.b16 %v273
  %v1698 = vunpack.c.l.b16 %v274
  %v1699 = vunpack.c.h.b16 %v274
  %v1700 = vunpack.c.l.b16 %v275
  %v1701 = vunpack.c.h.b16 %v275
  %v1702 = vunpack.c.l.b16 %v276
  %v1703 = vunpack.c.h.b16 %v276
  %v1704 = vunpack.c.l.b16 %v277
  %v1705 = vunpack.c.h.b16 %v277
  %v1706 = vunpack.c.l.b16 %v278
  %v1707 = vunpack.c.h.b16 %v278
  %v1708 = vunpack.c.l.b16 %v279
  %v1709 = vunpack.c.h.b16 %v279
  %v1710 = vunpack.c.l.b16 %v280
  %v1711 = vunpack.c.h.b16 %v280
  %v1712 = vunpack.c.l.b16 %v281
  %v1713 = vunpack.c.h.b16 %v281
  %v1714 = vunpack.c.l.b16 %v282
  %v1715 = vunpack.c.h.b16 %v282
  %v1716 = vunpack.c.l.b16 %v283
  %v1717 = vunpack.c.h.b16 %v283
  %v1718 = vunpack.c.l.b16 %v284
  %v1719 = vunpack.c.h.b16 %v284
  %v1720 = vunpack.c.l.b16 %v285
  %v1721 = vunpack.c.h.b16 %v285
  %v1722 = vunpack.c.l.b16 %v286
  %v1723 = vunpack.c.h.b16 %v286
  %v1724 = vunpack.c.l.b16 %v287
  %v1725 = vunpack.c.h.b16 %v287
  %v1726 = vunpack.c.l.b16 %v288
  %v1727 = vunpack.c.h.b16 %v288
  %v1728 = vunpack.c.l.b16 %v289
  %v1729 = vunpack.c.h.b16 %v289
  %v1730 = vunpack.c.l.b16 %v290
  %v1731 = vunpack.c.h.b16 %v290
  %v1732 = vunpack.c.l.b16 %v291
  %v1733 = vunpack.c.h.b16 %v291
  %v1734 = vunpack.c.l.b16 %v292
  %v1735 = vunpack.c.h.b16 %v292
  %v1736 = vunpack.c.l.b16 %v293
  %v1737 = vunpack.c.h.b16 %v293
  %v1738 = vunpack.c.l.b16 %v294
  %v1739 = vunpack.c.h.b16 %v294
  %v1740 = vunpack.c.l.b16 %v295
  %v1741 = vunpack.c.h.b16 %v295
  %v1742 = vunpack.c.l.b16 %v296
  %v1743 = vunpack.c.h.b16 %v296
  %v1744 = vunpack.c.l.b16 %v297
  %v1745 = vunpack.c.h.b16 %v297
  %v1746 = vunpack.c.l.b16 %v298
  %v1747 = vunpack.c.h.b16 %v298
  %v1748 = vunpack.c.l.b16 %v299
  %v1749 = vunpack.c.h.b16 %v299
  %v1750 = vunpack.c.l.b16 %v300
  %v1751 = vunpack.c.h.b16 %v300
  %v1752 = vunpack.c.l.b16 %v301
  %v1753 = vunpack.c.h.b16 %v301
  %v1754 = vunpack.c.l.b16 %v302
  %v1755 = vunpack.c.h.b16 %v302
  %v1756 = vunpack.c.l.b16 %v303
  %v1757 = vunpack.c.h.b16 %v303
  %v1758 = vunpack.c.l.b16 %v304
  %v1759 = vunpack.c.h.b16 %v304
  %v1760 = vunpack.c.l.b16 %v305
  %v1761 = vunpack.c.h.b16 %v305
  %v1762 = vunpack.c.l.b16 %v306
  %v1763 = vunpack.c.h.b16 %v306
  %v1764 = vunpack.c.l.b16 %v307
  %v1765 = vunpack.c.h.b16 %v307
  %v1766 = vunpack.c.l.b16 %v308
  %v1767 = vunpack.c.h.b16 %v308
  %v1768 = vunpack.c.l.b16 %v309
  %v1769 = vunpack.c.h.b16 %v309
  %v1770 = vunpack.c.l.b16 %v310
  %v1771 = vunpack.c.h.b16 %v310
  %v1772 = vunpack.c.l.b16 %v311
  %v1773 = vunpack.c.h.b16 %v311
  %v1774 = vunpack.c.l.b16 %v312
  %v1775 = vunpack.c.h.b16 %v312
  %v1776 = vunpack.c.l.b16 %v313
  %v1777 = vunpack.c.h.b16 %v313
  %v1778 = vunpack.c.l.b16 %v314
  %v1779 = vunpack.c.h.b16 %v314
  %v1780 = vunpack.c.l.b16 %v315
  %v1781 = vunpack.c.h.b16 %v315
  %v1782 = vunpack.c.l.b16 %v316
  %v1783 = vunpack.c.h.b16 %v316
  %v1784 = vunpack.c.l.b16 %v317
  %v1785 = vunpack.c.h.b16 %v317
  %v1786 = vunpack.c.l.b16 %v318
  %v1787 = vunpack.c.h.b16 %v318
  %v1788 = vunpack.c.l.b16 %v319
  %v1789 = vunpack.c.h.b16 %v319
  %v1790 = vunpack.c.l.b16 %v320
  %v1791 = vunpack.c.h.b16 %v320
  %v1792 = vunpack.c.l.b16 %v321
  %v1793 = vunpack.c.h.b16 %v321
  %v1794 = vunpack.c.l.b16 %v322
  %v1795 = vunpack.c.h.b16 %v322
  %v1796 = vunpack.c.l.b16 %v323
  %v1797 = vunpack.c.h.b16 %v323
  %v1798 = vunpack.c.l.b16 %v324
  %v1799 = vunpack.c.h.b16 %v324
  %v1800 = vunpack.c.l.b16 %v325
  %v1801 = vunpack.c.h.b16 %v325
  %v1802 = vunpack.c.l.b16 %v326
  %v1803 = vunpack.c.h.b16 %v326
  %v1804 = vunpack.c.l.b16 %v327
  %v1805 = vunpack.c.h.b16 %v327
  %v1806 = vunpack.c.l.b16 %v328
  %v1807 = vunpack.c.h.b16 %v328
  %v1808 = vunpack.c.l.b16 %v329
  %v1809 = vunpack.c.h.b16 %v329
  %v1810 = vunpack.c.l.b16 %v330
  %v1811 = vunpack.c.h.b16 %v330
  %v1812 = vunpack.c.l.b16 %v331
  %v1813 = vunpack.c.h.b16 %v331
  %v1814 = vunpack.c.l.b16 %v332
  %v1815 = vunpack.c.h.b16 %v332
  %v1816 = vunpack.c.l.b16 %v333
  %v1817 = vunpack.c.h.b16 %v333
  %v1818 = vunpack.c.l.b16 %v334
  %v1819 = vunpack.c.h.b16 %v334
  %v1820 = vunpack.c.l.b16 %v335
  %v1821 = vunpack.c.h.b16 %v335
  %v1822 = vunpack.c.l.b16 %v336
  %v1823 = vunpack.c.h.b16 %v336
  %v1824 = vunpack.c.l.b16 %v337
  %v1825 = vunpack.c.h.b16 %v337
  %v1826 = vunpack.c.l.b16 %v338
  %v1827 = vunpack.c.h.b16 %v338
  %v1828 = vunpack.c.l.b16 %v339
  %v1829 = vunpack.c.h.b16 %v339
  %v1830 = vunpack.c.l.b16 %v340
  %v1831 = vunpack.c.h.b16 %v340
  %v1832 = vunpack.c.l.b16 %v341
  %v1833 = vunpack.c.h.b16 %v341
  %v1834 = vunpack.c.l.b16 %v342
  %v1835 = vunpack.c.h.b16 %v342
  %v1836 = vunpack.c.l.b16 %v343
  %v1837 = vunpack.c.h.b16 %v343
  %v1838 = vunpack.c.l.b16 %v344
  %v1839 = vunpack.c.h.b16 %v344
  %v1840 = vunpack.c.l.b16 %v345
  %v1841 = vunpack.c.h.b16 %v345
  %v1842 = vunpack.c.l.b16 %v346
  %v1843 = vunpack.c.h.b16 %v346
  %v1844 = vunpack.c.l.b16 %v347
  %v1845 = vunpack.c.h.b16 %v347
  %v1846 = vunpack.c.l.b16 %v348
  %v1847 = vunpack.c.h.b16 %v348
  %v1848 = vunpack.c.l.b16 %v349
  %v1849 = vunpack.c.h.b16 %v349
  %v1850 = vunpack.c.l.b16 %v350
  %v1851 = vunpack.c.h.b16 %v350
  %v1852 = vunpack.c.l.b16 %v351
  %v1853 = vunpack.c.h.b16 %v351
  %v1854 = vunpack.c.l.b16 %v352
  %v1855 = vunpack.c.h.b16 %v352
  %v1856 = vunpack.c.l.b16 %v353
  %v1857 = vunpack.c.h.b16 %v353
  %v1858 = vunpack.c.l.b16 %v354
  %v1859 = vunpack.c.h.b16 %v354
  %v1860 = vunpack.c.l.b16 %v355
  %v1861 = vunpack.c.h.b16 %v355
  %v1862 = vunpack.c.l.b16 %v356
  %v1863 = vunpack.c.h.b16 %v356
  %v1864 = vunpack.c.l.b16 %v357
  %v1865 = vunpack.c.h.b16 %v357
  %v1866 = vunpack.c.l.b16 %v358
  %v1867 = vunpack.c.h.b16 %v358
  %v1868 = vunpack.c.l.b16 %v359
  %v1869 = vunpack.c.h.b16 %v359
  %v1870 = vunpack.c.l.b16 %v360
  %v1871 = vunpack.c.h.b16 %v360
  %v1872 = vunpack.c.l.b16 %v361
  %v1873 = vunpack.c.h.b16 %v361
  %v1874 = vunpack.c.l.b16 %v362
  %v1875 = vunpack.c.h.b16 %v362
  %v1876 = vunpack.c.l.b16 %v363
  %v1877 = vunpack.c.h.b16 %v363
  %v1878 = vunpack.c.l.b16 %v364
  %v1879 = vunpack.c.h.b16 %v364
  %v1880 = vunpack.c.l.b16 %v365
  %v1881 = vunpack.c.h.b16 %v365
  %v1882 = vunpack.c.l.b16 %v366
  %v1883 = vunpack.c.h.b16 %v366
  %v1884 = vunpack.c.l.b16 %v367
  %v1885 = vunpack.c.h.b16 %v367
  %v1886 = vunpack.c.l.b16 %v368
  %v1887 = vunpack.c.h.b16 %v368
  %v1888 = vunpack.c.l.b16 %v369
  %v1889 = vunpack.c.h.b16 %v369
  %v1890 = vunpack.c.l.b16 %v370
  %v1891 = vunpack.c.h.b16 %v370
  %v1892 = vunpack.c.l.b16 %v371
  %v1893 = vunpack.c.h.b16 %v371
  %v1894 = vunpack.c.l.b16 %v372
  %v1895 = vunpack.c.h.b16 %v372
  %v1896 = vunpack.c.l.b16 %v373
  %v1897 = vunpack.c.h.b16 %v373
  %v1898 = vunpack.c.l.b16 %v374
  %v1899 = vunpack.c.h.b16 %v374
  %v1900 = vunpack.c.l.b16 %v375
  %v1901 = vunpack.c.h.b16 %v375
  %v1902 = vunpack.c.l.b16 %v376
  %v1903 = vunpack.c.h.b16 %v376
  %v1904 = vunpack.c.l.b16 %v377
  %v1905 = vunpack.c.h.b16 %v377
  %v1906 = vunpack.c.l.b16 %v378
  %v1907 = vunpack.c.h.b16 %v378
  %v1908 = vunpack.c.l.b16 %v379
  %v1909 = vunpack.c.h.b16 %v379
  %v1910 = vunpack.c.l.b16 %v380
  %v1911 = vunpack.c.h.b16 %v380
  %v1912 = vunpack.c.l.b16 %v381
  %v1913 = vunpack.c.h.b16 %v381
  %v1914 = vunpack.c.l.b16 %v382
  %v1915 = vunpack.c.h.b16 %v382
  %v1916 = vunpack.c.l.b16 %v383
  %v1917 = vunpack.c.h.b16 %v383
  %v1918 = vunpack.c.l.b16 %v384
  %v1919 = vunpack.c.h.b16 %v384
  %v1920 = vunpack.c.l.b16 %v385
  %v1921 = vunpack.c.h.b16 %v385
  %v1922 = vunpack.c.l.b16 %v386
  %v1923 = vunpack.c.h.b16 %v386
  %v1924 = vunpack.c.l.b16 %v387
  %v1925 = vunpack.c.h.b16 %v387
  %v1926 = vunpack.c.l.b16 %v388
  %v1927 = vunpack.c.h.b16 %v388
  %v1928 = vunpack.c.l.b16 %v389
  %v1929 = vunpack.c.h.b16 %v389
  %v1930 = vunpack.c.l.b16 %v390
  %v1931 = vunpack.c.h.b16 %v390
  %v1932 = vunpack.c.l.b16 %v391
  %v1933 = vunpack.c.h.b16 %v391
  %v1934 = vunpack.c.l.b16 %v392
  %v1935 = vunpack.c.h.b16 %v392
  %v1936 = vunpack.c.l.b16 %v393
  %v1937 = vunpack.c.h.b16 %v393
  %v1938 = vunpack.c.l.b16 %v394
  %v1939 = vunpack.c.h.b16 %v394
  %v1940 = vunpack.c.l.b16 %v395
  %v1941 = vunpack.c.h.b16 %v395
  %v1942 = vunpack.c.l.b16 %v396
  %v1943 = vunpack.c.h.b16 %v396
  %v1944 = vunpack.c.l.b16 %v397
  %v1945 = vunpack.c.h.b16 %v397
  %v1946 = vunpack.c.l.b16 %v398
  %v1947 = vunpack.c.h.b16 %v398
  %v1948 = vunpack.c.l.b16 %v399
  %v1949 = vunpack.c.h.b16 %v399
  %v1950 = vunpack.c.l.b16 %v400
  %v1951 = vunpack.c.h.b16 %v400
  %v1952 = vunpack.c.l.b16 %v401
  %v1953 = vunpack.c.h.b16 %v401
  %v1954 = vunpack.c.l.b16 %v402
  %v1955 = vunpack.c.h.b16 %v402
  %v1956 = vunpack.c.l.b16 %v403
  %v1957 = vunpack.c.h.b16 %v403
  %v1958 = vunpack.c.l.b16 %v404
  %v1959 = vunpack.c.h.b16 %v404
  %v1960 = vunpack.c.l.b16 %v405
  %v1961 = vunpack.c.h.b16 %v405
  %v1962 = vunpack.c.l.b16 %v406
  %v1963 = vunpack.c.h.b16 %v406
  %v1964 = vunpack.c.l.b16 %v407
  %v1965 = vunpack.c.h.b16 %v407
  %v1966 = vunpack.c.l.b16 %v408
  %v1967 = vunpack.c.h.b16 %v408
  %v1968 = vunpack.c.l.b16 %v409
  %v1969 = vunpack.c.h.b16 %v409
  %v1970 = vunpack.c.l.b16 %v410
  %v1971 = vunpack.c.h.b16 %v410
  %v1972 = vunpack.c.l.b16 %v411
  %v1973 = vunpack.c.h.b16 %v411
  %v1974 = vunpack.c.l.b16 %v412
  %v1975 = vunpack.c.h.b16 %v412
  %v1976 = vunpack.c.l.b16 %v413
  %v1977 = vunpack.c.h.b16 %v413
  %v1978 = vunpack.c.l.b16 %v414
  %v1979 = vunpack.c.h.b16 %v414
  %v1980 = vunpack.c.l.b16 %v415
  %v1981 = vunpack.c.h.b16 %v415
  %v1982 = vunpack.c.l.b16 %v416
  %v1983 = vunpack.c.h.b16 %v416
  %v1984 = vunpack.c.l.b16 %v417
  %v1985 = vunpack.c.h.b16 %v417
  %v1986 = vunpack.c.l.b16 %v418
  %v1987 = vunpack.c.h.b16 %v418
  %v1988 = vunpack.c.l.b16 %v419
  %v1989 = vunpack.c.h.b16 %v419
  %v1990 = vunpack.c.l.b16 %v420
  %v1991 = vunpack.c.h.b16 %v420
  %v1992 = vunpack.c.l.b16 %v421
  %v1993 = vunpack.c.h.b16 %v421
  %v1994 = vunpack.c.l.b16 %v422
  %v1995 = vunpack.c.h.b16 %v422
  %v1996 = vunpack.c.l.b16 %v423
  %v1997 = vunpack.c.h.b16 %v423
  %v1998 = vunpack.c.l.b16 %v424
  %v1999 = vunpack.c.h.b16 %v424
  %v2000 = vunpack.c.l.b16 %v425
  %v2001 = vunpack.c.h.b16 %v425
  %v2002 = vunpack.c.l.b16 %v426
  %v2003 = vunpack.c.h.b16 %v426
  %v2004 = vunpack.c.l.b16 %v427
  %v2005 = vunpack.c.h.b16 %v427
  %v2006 = vunpack.c.l.b16 %v428
  %v2007 = vunpack.c.h.b16 %v428
  %v2008 = vunpack.c.l.b16 %v429
  %v2009 = vunpack.c.h.b16 %v429
  %v2010 = vunpack.c.l.b16 %v430
  %v2011 = vunpack.c.h.b16 %v430
  %v2012 = vunpack.c.l.b16 %v431
  %v2013 = vunpack.c.h.b16 %v431
  %v2014 = vunpack.c.l.b16 %v432
  %v2015 = vunpack.c.h.b16 %v432
  %v2016 = vunpack.c.l.b16 %v433
  %v2017 = vunpack.c.h.b16 %v433
  %v2018 = vunpack.c.l.b16 %v434
  %v2019 = vunpack.c.h.b16 %v434
  %v2020 = vunpack.c.l.b16 %v435
  %v2021 = vunpack.c.h.b16 %v435
  %v2022 = vunpack.c.l.b16 %v436
  %v2023 = vunpack.c.h.b16 %v436
  %v2024 = vunpack.c.l.b16 %v437
  %v2025 = vunpack.c.h.b16 %v437
  %v2026 = vunpack.c.l.b16 %v438
  %v2027 = vunpack.c.h.b16 %v438
  %v2028 = vunpack.c.l.b16 %v439
  %v2029 = vunpack.c.h.b16 %v439
  %v2030 = vunpack.c.l.b16 %v440
  %v2031 = vunpack.c.h.b16 %v440
  %v2032 = vunpack.c.l.b16 %v441
  %v2033 = vunpack.c.h.b16 %v441
  %v2034 = vunpack.c.l.b16 %v442
  %v2035 = vunpack.c.h.b16 %v442
  %v2036 = vunpack.c.l.b16 %v443
  %v2037 = vunpack.c.h.b16 %v443
  %v2038 = vunpack.c.l.b16 %v444
  %v2039 = vunpack.c.h.b16 %v444
  %v2040 = vunpack.c.l.b16 %v445
  %v2041 = vunpack.c.h.b16 %v445
  %v2042 = vunpack.c.l.b16 %v446
  %v2043 = vunpack.c.h.b16 %v446
  %v2044 = vunpack.c.l.b16 %v447
  %v2045 = vunpack.c.h.b16 %v447
  %v2046 = vunpack.c.l.b16 %v448
  %v2047 = vunpack.c.h.b16 %v448
  %v2048 = vunpack.c.l.b16 %v449
  %v2049 = vunpack.c.h.b16 %v449
  %v2050 = vunpack.c.l.b16 %v450
  %v2051 = vunpack.c.h.b16 %v450
  %v2052 = vunpack.c.l.b16 %v451
  %v2053 = vunpack.c.h.b16 %v451
  %v2054 = vunpack.c.l.b16 %v452
  %v2055 = vunpack.c.h.b16 %v452
  %v2056 = vunpack.c.l.b16 %v453
  %v2057 = vunpack.c.h.b16 %v453
  %v2058 = vunpack.c.l.b16 %v454
  %v2059 = vunpack.c.h.b16 %v454
  %v2060 = vunpack.c.l.b16 %v455
  %v2061 = vunpack.c.h.b16 %v455
  %v2062 = vunpack.c.l.b16 %v456
  %v2063 = vunpack.c.h.b16 %v456
  %v2064 = vunpack.c.l.b16 %v457
  %v2065 = vunpack.c.h.b16 %v457
  %v2066 = vunpack.c.l.b16 %v458
  %v2067 = vunpack.c.h.b16 %v458
  %v2068 = vunpack.c.l.b16 %v459
  %v2069 = vunpack.c.h.b16 %v459
  %v2070 = vunpack.c.l.b16 %v460
  %v2071 = vunpack.c.h.b16 %v460
  %v2072 = vunpack.c.l.b16 %v461
  %v2073 = vunpack.c.h.b16 %v461
  %v2074 = vunpack.c.l.b16 %v462
  %v2075 = vunpack.c.h.b16 %v462
  %v2076 = vunpack.c.l.b16 %v463
  %v2077 = vunpack.c.h.b16 %v463
  %v2078 = vunpack.c.l.b16 %v464
  %v2079 = vunpack.c.h.b16 %v464
  %v2080 = vunpack.c.l.b16 %v465
  %v2081 = vunpack.c.h.b16 %v465
  %v2082 = vunpack.c.l.b16 %v466
  %v2083 = vunpack.c.h.b16 %v466
  %v2084 = vunpack.c.l.b16 %v467
  %v2085 = vunpack.c.h.b16 %v467
  %v2086 = vunpack.c.l.b16 %v468
  %v2087 = vunpack.c.h.b16 %v468
  %v2088 = vunpack.c.l.b16 %v469
  %v2089 = vunpack.c.h.b16 %v469
  %v2090 = vunpack.c.l.b16 %v470
  %v2091 = vunpack.c.h.b16 %v470
  %v2092 = vunpack.c.l.b16 %v471
  %v2093 = vunpack.c.h.b16 %v471
  %v2094 = vunpack.c.l.b16 %v472
  %v2095 = vunpack.c.h.b16 %v472
  %v2096 = vunpack.c.l.b16 %v473
  %v2097 = vunpack.c.h.b16 %v473
  %v2098 = vunpack.c.l.b16 %v474
  %v2099 = vunpack.c.h.b16 %v474
  %v2100 = vunpack.c.l.b16 %v475
  %v2101 = vunpack.c.h.b16 %v475
  %v2102 = vunpack.c.l.b16 %v476
  %v2103 = vunpack.c.h.b16 %v476
  %v2104 = vunpack.c.l.b16 %v477
  %v2105 = vunpack.c.h.b16 %v477
  %v2106 = vunpack.c.l.b16 %v478
  %v2107 = vunpack.c.h.b16 %v478
  %v2108 = vunpack.c.l.b16 %v479
  %v2109 = vunpack.c.h.b16 %v479
  %v2110 = vunpack.c.l.b16 %v480
  %v2111 = vunpack.c.h.b16 %v480
  %v2112 = vunpack.c.l.b16 %v481
  %v2113 = vunpack.c.h.b16 %v481
  %v2114 = vunpack.c.l.b16 %v482
  %v2115 = vunpack.c.h.b16 %v482
  %v2116 = vunpack.c.l.b16 %v483
  %v2117 = vunpack.c.h.b16 %v483
  %v2118 = vunpack.c.l.b16 %v484
  %v2119 = vunpack.c.h.b16 %v484
  %v2120 = vunpack.c.l.b16 %v485
  %v2121 = vunpack.c.h.b16 %v485
  %v2122 = vunpack.c.l.b16 %v486
  %v2123 = vunpack.c.h.b16 %v486
  %v2124 = vunpack.c.l.b16 %v487
  %v2125 = vunpack.c.h.b16 %v487
  %v2126 = vunpack.c.l.b16 %v488
  %v2127 = vunpack.c.h.b16 %v488
  %v2128 = vunpack.c.l.b16 %v489
  %v2129 = vunpack.c.h.b16 %v489
  %v2130 = vunpack.c.l.b16 %v490
  %v2131 = vunpack.c.h.b16 %v490
  %v2132 = vunpack.c.l.b16 %v491
  %v2133 = vunpack.c.h.b16 %v491
  %v2134 = vunpack.c.l.b16 %v492
  %v2135 = vunpack.c.h.b16 %v492
  %v2136 = vunpack.c.l.b16 %v493
  %v2137 = vunpack.c.h.b16 %v493
  %v2138 = vunpack.c.l.b16 %v494
  %v2139 = vunpack.c.h.b16 %v494
  %v2140 = vunpack.c.l.b16 %v495
  %v2141 = vunpack.c.h.b16 %v495
  %v2142 = vunpack.c.l.b16 %v496
  %v2143 = vunpack.c.h.b16 %v496
  %v2144 = vunpack.c.l.b16 %v497
  %v2145 = vunpack.c.h.b16 %v497
  %v2146 = vunpack.c.l.b16 %v498
  %v2147 = vunpack.c.h.b16 %v498
  %v2148 = vunpack.c.l.b16 %v499
  %v2149 = vunpack.c.h.b16 %v499
  %v2150 = vunpack.c.l.b16 %v500
  %v2151 = vunpack.c.h.b16 %v500
  %v2152 = vunpack.c.l.b16 %v501
  %v2153 = vunpack.c.h.b16 %v501
  %v2154 = vunpack.c.l.b16 %v502
  %v2155 = vunpack.c.h.b16 %v502
  %v2156 = vunpack.c.l.b16 %v503
  %v2157 = vunpack.c.h.b16 %v503
  %v2158 = vunpack.c.l.b16 %v504
  %v2159 = vunpack.c.h.b16 %v504
  %v2160 = vunpack.c.l.b16 %v505
  %v2161 = vunpack.c.h.b16 %v505
  %v2162 = vunpack.c.l.b16 %v506
  %v2163 = vunpack.c.h.b16 %v506
  %v2164 = vunpack.c.l.b16 %v507
  %v2165 = vunpack.c.h.b16 %v507
  %v2166 = vunpack.c.l.b16 %v508
  %v2167 = vunpack.c.h.b16 %v508
  %v2168 = vunpack.c.l.b16 %v509
  %v2169 = vunpack.c.h.b16 %v509
  %v2170 = vunpack.c.l.b16 %v510
  %v2171 = vunpack.c.h.b16 %v510
  %v2172 = vunpack.c.l.b16 %v511
  %v2173 = vunpack.c.h.b16 %v511
  %v2174 = vunpack.c.l.b16 %v512
  %v2175 = vunpack.c.h.b16 %v512
  %v2176 = vunpack.c.l.b16 %v513
  %v2177 = vunpack.c.h.b16 %v513
  %v2178 = vunpack.c.l.b16 %v514
  %v2179 = vunpack.c.h.b16 %v514
  %v2180 = vunpack.c.l.b16 %v515
  %v2181 = vunpack.c.h.b16 %v515
  %v2182 = vunpack.c.l.b16 %v516
  %v2183 = vunpack.c.h.b16 %v516
  %v2184 = vunpack.c.l.b16 %v517
  %v2185 = vunpack.c.h.b16 %v517
  %v2186 = vunpack.c.l.b16 %v518
  %v2187 = vunpack.c.h.b16 %v518
  %v2188 = vunpack.c.l.b16 %v519
  %v2189 = vunpack.c.h.b16 %v519
  %v2190 = vunpack.c.l.b16 %v520
  %v2191 = vunpack.c.h.b16 %v520
  %v2192 = vunpack.c.l.b16 %v521
  %v2193 = vunpack.c.h.b16 %v521
  %v2194 = vunpack.c.l.b16 %v522
  %v2195 = vunpack.c.h.b16 %v522
  %v2196 = vunpack.c.l.b16 %v523
  %v2197 = vunpack.c.h.b16 %v523
  %v2198 = vunpack.c.l.b16 %v524
  %v2199 = vunpack.c.h.b16 %v524
  %v2200 = vunpack.c.l.b16 %v525
  %v2201 = vunpack.c.h.b16 %v525
  %v2202 = vunpack.c.l.b16 %v526
  %v2203 = vunpack.c.h.b16 %v526
  %v2204 = vunpack.c.l.b16 %v527
  %v2205 = vunpack.c.h.b16 %v527
  %v2206 = vunpack.c.l.b16 %v528
  %v2207 = vunpack.c.h.b16 %v528
  %v2208 = vunpack.c.l.b16 %v529
  %v2209 = vunpack.c.h.b16 %v529
  %v2210 = vunpack.c.l.b16 %v530
  %v2211 = vunpack.c.h.b16 %v530
  %v2212 = vunpack.c.l.b16 %v531
  %v2213 = vunpack.c.h.b16 %v531
  %v2214 = vunpack.c.l.b16 %v532
  %v2215 = vunpack.c.h.b16 %v532
  %v2216 = vunpack.c.l.b16 %v533
  %v2217 = vunpack.c.h.b16 %v533
  %v2218 = vunpack.c.l.b16 %v534
  %v2219 = vunpack.c.h.b16 %v534
  %v2220 = vunpack.c.l.b16 %v535
  %v2221 = vunpack.c.h.b16 %v535
  %v2222 = vunpack.c.l.b16 %v536
  %v2223 = vunpack.c.h.b16 %v536
  %v2224 = vunpack.c.l.b16 %v537
  %v2225 = vunpack.c.h.b16 %v537
  %v2226 = vunpack.c.l.b16 %v538
  %v2227 = vunpack.c.h.b16 %v538
  %v2228 = vunpack.c.l.b16 %v539
  %v2229 = vunpack.c.h.b16 %v539
  %v2230 = vunpack.c.l.b16 %v540
  %v2231 = vunpack.c.h.b16 %v540
  %v2232 = vunpack.c.l.b16 %v541
  %v2233 = vunpack.c.h.b16 %v541
  %v2234 = vunpack.c.l.b16 %v542
  %v2235 = vunpack.c.h.b16 %v542
  %v2236 = vunpack.c.l.b16 %v543
  %v2237 = vunpack.c.h.b16 %v543
  %v2238 = vunpack.c.l.b16 %v544
  %v2239 = vunpack.c.h.b16 %v544
  %v2240 = vunpack.c.l.b16 %v545
  %v2241 = vunpack.c.h.b16 %v545
  %v2242 = vunpack.c.l.b16 %v546
  %v2243 = vunpack.c.h.b16 %v546
  %v2244 = vunpack.c.l.b16 %v547
  %v2245 = vunpack.c.h.b16 %v547
  %v2246 = vunpack.c.l.b16 %v548
  %v2247 = vunpack.c.h.b16 %v548
  %v2248 = vunpack.c.l.b16 %v549
  %v2249 = vunpack.c.h.b16 %v549
  %v2250 = vunpack.c.l.b16 %v550
  %v2251 = vunpack.c.h.b16 %v550
  %v2252 = vunpack.c.l.b16 %v551
  %v2253 = vunpack.c.h.b16 %v551
  %v2254 = vunpack.c.l.b16 %v552
  %v2255 = vunpack.c.h.b16 %v552
  %v2256 = vunpack.c.l.b16 %v553
  %v2257 = vunpack.c.h.b16 %v553
  %v2258 = vunpack.c.l.b16 %v554
  %v2259 = vunpack.c.h.b16 %v554
  %v2260 = vunpack.c.l.b16 %v555
  %v2261 = vunpack.c.h.b16 %v555
  %v2262 = vunpack.c.l.b16 %v556
  %v2263 = vunpack.c.h.b16 %v556
  %v2264 = vunpack.c.l.b16 %v557
  %v2265 = vunpack.c.h.b16 %v557
  %v2266 = vpack.c.b16 %v1244, %v1242
  %v2267 = vpack.c.b16 %v1245, %v1243
  %v2268 = vpack.c.b16 %v1248, %v1246
  %v2269 = vpack.c.b16 %v1249, %v1247
  %v2270 = vpack.c.b16 %v1252, %v1250
  %v2271 = vpack.c.b16 %v1253, %v1251
  %v2272 = vpack.c.b16 %v1256, %v1254
  %v2273 = vpack.c.b16 %v1257, %v1255
  %v2274 = vpack.c.b16 %v1260, %v1258
  %v2275 = vpack.c.b16 %v1261, %v1259
  %v2276 = vpack.c.b16 %v1264, %v1262
  %v2277 = vpack.c.b16 %v1265, %v1263
  %v2278 = vpack.c.b16 %v1268, %v1266
  %v2279 = vpack.c.b16 %v1269, %v1267
  %v2280 = vpack.c.b16 %v1272, %v1270
  %v2281 = vpack.c.b16 %v1273, %v1271
  %v2282 = vpack.c.b16 %v1276, %v1274
  %v2283 = vpack.c.b16 %v1277, %v1275
  %v2284 = vpack.c.b16 %v1280, %v1278
  %v2285 = vpack.c.b16 %v1281, %v1279
  %v2286 = vpack.c.b16 %v1284, %v1282
  %v2287 = vpack.c.b16 %v1285, %v1283
  %v2288 = vpack.c.b16 %v1288, %v1286
  %v2289 = vpack.c.b16 %v1289, %v1287
  %v2290 = vpack.c.b16 %v1292, %v1290
  %v2291 = vpack.c.b16 %v1293, %v1291
  %v2292 = vpack.c.b16 %v1296, %v1294
  %v2293 = vpack.c.b16 %v1297, %v1295
  %v2294 = vpack.c.b16 %v1300, %v1298
  %v2295 = vpack.c.b16 %v1301, %v1299
  %v2296 = vpack.c.b16 %v1304, %v1302
  %v2297 = vpack.c.b16 %v1305, %v1303
  %v2298 = vpack.c.b16 %v1308, %v1306
  %v2299 = vpack.c.b16 %v1309, %v1307
  %v2300 = vpack.c.b16 %v1312, %v1310
  %v2301 = vpack.c.b16 %v1313, %v1311
  %v2302 = vpack.c.b16 %v1316, %v1314
  %v2303 = vpack.c.b16 %v1317, %v1315
  %v2304 = vpack.c.b16 %v1320, %v1318
  %v2305 = vpack.c.b16 %v1321, %v1319
  %v2306 = vpack.c.b16 %v1324, %v1322
  %v2307 = vpack.c.b16 %v1325, %v1323
  %v2308 = vpack.c.b16 %v1328, %v1326
  %v2309 = vpack.c.b16 %v1329, %v1327
  %v2310 = vpack.c.b16 %v1332, %v1330
  %v2311 = vpack.c.b16 %v1333, %v1331
  %v2312 = vpack.c.b16 %v1336, %v1334
  %v2313 = vpack.c.b16 %v1337, %v1335
  %v2314 = vpack.c.b16 %v1340, %v1338
  %v2315 = vpack.c.b16 %v1341, %v1339
  %v2316 = vpack.c.b16 %v1344, %v1342
  %v2317 = vpack.c.b16 %v1345, %v1343
  %v2318 = vpack.c.b16 %v1348, %v1346
  %v2319 = vpack.c.b16 %v1349, %v1347
  %v2320 = vpack.c.b16 %v1352, %v1350
  %v2321 = vpack.c.b16 %v1353, %v1351
  %v2322 = vpack.c.b16 %v1356, %v1354
  %v2323 = vpack.c.b16 %v1357, %v1355
  %v2324 = vpack.c.b16 %v1360, %v1358
  %v2325 = vpack.c.b16 %v1361, %v1359
  %v2326 = vpack.c.b16 %v1364, %v1362
  %v2327 = vpack.c.b16 %v1365, %v1363
  %v2328 = vpack.c.b16 %v1368, %v1366
  %v2329 = vpack.c.b16 %v1369, %v1367
  %v2330 = vpack.c.b16 %v1372, %v1370
  %v2331 = vpack.c.b16 %v1373, %v1371
  %v2332 = vpack.c.b16 %v1376, %v1374
  %v2333 = vpack.c.b16 %v1377, %v1375
  %v2334 = vpack.c.b16 %v1380, %v1378
  %v2335 = vpack.c.b16 %v1381, %v1379
  %v2336 = vpack.c.b16 %v1384, %v1382
  %v2337 = vpack.c.b16 %v1385, %v1383
  %v2338 = vpack.c.b16 %v1388, %v1386
  %v2339 = vpack.c.b16 %v1389, %v1387
  %v2340 = vpack.c.b16 %v1392, %v1390
  %v2341 = vpack.c.b16 %v1393, %v1391
  %v2342 = vpack.c.b16 %v1396, %v1394
  %v2343 = vpack.c.b16 %v1397, %v1395
  %v2344 = vpack.c.b16 %v1400, %v1398
  %v2345 = vpack.c.b16 %v1401, %v1399
  %v2346 = vpack.c.b16 %v1404, %v1402
  %v2347 = vpack.c.b16 %v1405, %v1403
  %v2348 = vpack.c.b16 %v1408, %v1406
  %v2349 = vpack.c.b16 %v1409, %v1407
  %v2350 = vpack.c.b16 %v1412, %v1410
  %v2351 = vpack.c.b16 %v1413, %v1411
  %v2352 = vpack.c.b16 %v1416, %v1414
  %v2353 = vpack.c.b16 %v1417, %v1415
  %v2354 = vpack.c.b16 %v1420, %v1418
  %v2355 = vpack.c.b16 %v1421, %v1419
  %v2356 = vpack.c.b16 %v1424, %v1422
  %v2357 = vpack.c.b16 %v1425, %v1423
  %v2358 = vpack.c.b16 %v1428, %v1426
  %v2359 = vpack.c.b16 %v1429, %v1427
  %v2360 = vpack.c.b16 %v1432, %v1430
  %v2361 = vpack.c.b16 %v1433, %v1431
  %v2362 = vpack.c.b16 %v1436, %v1434
  %v2363 = vpack.c.b16 %v1437, %v1435
  %v2364 = vpack.c.b16 %v1440, %v1438
  %v2365 = vpack.c.b16 %v1441, %v1439
  %v2366 = vpack.c.b16 %v1444, %v1442
  %v2367 = vpack.c.b16 %v1445, %v1443
  %v2368 = vpack.c.b16 %v1448, %v1446
  %v2369 = vpack.c.b16 %v1449, %v1447
  %v2370 = vpack.c.b16 %v1452, %v1450
  %v2371 = vpack.c.b16 %v1453, %v1451
  %v2372 = vpack.c.b16 %v1456, %v1454
  %v2373 = vpack.c.b16 %v1457, %v1455
  %v2374 = vpack.c.b16 %v1460, %v1458
  %v2375 = vpack.c.b16 %v1461, %v1459
  %v2376 = vpack.c.b16 %v1464, %v1462
  %v2377 = vpack.c.b16 %v1465, %v1463
  %v2378 = vpack.c.b16 %v1468, %v1466
  %v2379 = vpack.c.b16 %v1469, %v1467
  %v2380 = vpack.c.b16 %v1472, %v1470
  %v2381 = vpack.c.b16 %v1473, %v1471
  %v2382 = vpack.c.b16 %v1476, %v1474
  %v2383 = vpack.c.b16 %v1477, %v1475
  %v2384 = vpack.c.b16 %v1480, %v1478
  %v2385 = vpack.c.b16 %v1481, %v1479
  %v2386 = vpack.c.b16 %v1484, %v1482
  %v2387 = vpack.c.b16 %v1485, %v1483
  %v2388 = vpack.c.b16 %v1488, %v1486
  %v2389 = vpack.c.b16 %v1489, %v1487
  %v2390 = vpack.c.b16 %v1492, %v1490
  %v2391 = vpack.c.b16 %v1493, %v1491
  %v2392 = vpack.c.b16 %v1496, %v1494
  %v2393 = vpack.c.b16 %v1497, %v1495
  %v2394 = vpack.c.b16 %v1500, %v1498
  %v2395 = vpack.c.b16 %v1501, %v1499
  %v2396 = vpack.c.b16 %v1504, %v1502
  %v2397 = vpack.c.b16 %v1505, %v1503
  %v2398 = vpack.c.b16 %v1508, %v1506
  %v2399 = vpack.c.b16 %v1509, %v1507
  %v2400 = vpack.c.b16 %v1512, %v1510
  %v2401 = vpack.c.b16 %v1513, %v1511
  %v2402 = vpack.c.b16 %v1516, %v1514
  %v2403 = vpack.c.b16 %v1517, %v1515
  %v2404 = vpack.c.b16 %v1520, %v1518
  %v2405 = vpack.c.b16 %v1521, %v1519
  %v2406 = vpack.c.b16 %v1524, %v1522
  %v2407 = vpack.c.b16 %v1525, %v1523
  %v2408 = vpack.c.b16 %v1528, %v1526
  %v2409 = vpack.c.b16 %v1529, %v1527
  %v2410 = vpack.c.b16 %v1532, %v1530
  %v2411 = vpack.c.b16 %v1533, %v1531
  %v2412 = vpack.c.b16 %v1536, %v1534
  %v2413 = vpack.c.b16 %v1537, %v1535
  %v2414 = vpack.c.b16 %v1540, %v1538
  %v2415 = vpack.c.b16 %v1541, %v1539
  %v2416 = vpack.c.b16 %v1544, %v1542
  %v2417 = vpack.c.b16 %v1545, %v1543
  %v2418 = vpack.c.b16 %v1548, %v1546
  %v2419 = vpack.c.b16 %v1549, %v1547
  %v2420 = vpack.c.b16 %v1552, %v1550
  %v2421 = vpack.c.b16 %v1553, %v1551
  %v2422 = vpack.c.b16 %v1556, %v1554
  %v2423 = vpack.c.b16 %v1557, %v1555
  %v2424 = vpack.c.b16 %v1560, %v1558
  %v2425 = vpack.c.b16 %v1561, %v1559
  %v2426 = vpack.c.b16 %v1564, %v1562
  %v2427 = vpack.c.b16 %v1565, %v1563
  %v2428 = vpack.c.b16 %v1568, %v1566
  %v2429 = vpack.c.b16 %v1569, %v1567
  %v2430 = vpack.c.b16 %v1572, %v1570
  %v2431 = vpack.c.b16 %v1573, %v1571
  %v2432 = vpack.c.b16 %v1576, %v1574
  %v2433 = vpack.c.b16 %v1577, %v1575
  %v2434 = vpack.c.b16 %v1580, %v1578
  %v2435 = vpack.c.b16 %v1581, %v1579
  %v2436 = vpack.c.b16 %v1584, %v1582
  %v2437 = vpack.c.b16 %v1585, %v1583
  %v2438 = vpack.c.b16 %v1588, %v1586
  %v2439 = vpack.c.b16 %v1589, %v1587
  %v2440 = vpack.c.b16 %v1592, %v1590
  %v2441 = vpack.c.b16 %v1593, %v1591
  %v2442 = vpack.c.b16 %v1596, %v1594
  %v2443 = vpack.c.b16 %v1597, %v1595
  %v2444 = vpack.c.b16 %v1600, %v1598
  %v2445 = vpack.c.b16 %v1601, %v1599
  %v2446 = vpack.c.b16 %v1604, %v1602
  %v2447 = vpack.c.b16 %v1605, %v1603
  %v2448 = vpack.c.b16 %v1608, %v1606
  %v2449 = vpack.c.b16 %v1609, %v1607
  %v2450 = vpack.c.b16 %v1612, %v1610
  %v2451 = vpack.c.b16 %v1613, %v1611
  %v2452 = vpack.c.b16 %v1616, %v1614
  %v2453 = vpack.c.b16 %v1617, %v1615
  %v2454 = vpack.c.b16 %v1620, %v1618
  %v2455 = vpack.c.b16 %v1621, %v1619
  %v2456 = vpack.c.b16 %v1624, %v1622
  %v2457 = vpack.c.b16 %v1625, %v1623
  %v2458 = vpack.c.b16 %v1628, %v1626
  %v2459 = vpack.c.b16 %v1629, %v1627
  %v2460 = vpack.c.b16 %v1632, %v1630
  %v2461 = vpack.c.b16 %v1633, %v1631
  %v2462 = vpack.c.b16 %v1636, %v1634
  %v2463 = vpack.c.b16 %v1637, %v1635
  %v2464 = vpack.c.b16 %v1640, %v1638
  %v2465 = vpack.c.b16 %v1641, %v1639
  %v2466 = vpack.c.b16 %v1644, %v1642
  %v2467 = vpack.c.b16 %v1645, %v1643
  %v2468 = vpack.c.b16 %v1648, %v1646
  %v2469 = vpack.c.b16 %v1649, %v1647
  %v2470 = vpack.c.b16 %v1652, %v1650
  %v2471 = vpack.c.b16 %v1653, %v1651
  %v2472 = vpack.c.b16 %v1656, %v1654
  %v2473 = vpack.c.b16 %v1657, %v1655
  %v2474 = vpack.c.b16 %v1660, %v1658
  %v2475 = vpack.c.b16 %v1661, %v1659
  %v2476 = vpack.c.b16 %v1664, %v1662
  %v2477 = vpack.c.b16 %v1665, %v1663
  %v2478 = vpack.c.b16 %v1668, %v1666
  %v2479 = vpack.c.b16 %v1669, %v1667
  %v2480 = vpack.c.b16 %v1672, %v1670
  %v2481 = vpack.c.b16 %v1673, %v1671
  %v2482 = vpack.c.b16 %v1676, %v1674
  %v2483 = vpack.c.b16 %v1677, %v1675
  %v2484 = vpack.c.b16 %v1680, %v1678
  %v2485 = vpack.c.b16 %v1681, %v1679
  %v2486 = vpack.c.b16 %v1684, %v1682
  %v2487 = vpack.c.b16 %v1685, %v1683
  %v2488 = vpack.c.b16 %v1688, %v1686
  %v2489 = vpack.c.b16 %v1689, %v1687
  %v2490 = vpack.c.b16 %v1692, %v1690
  %v2491 = vpack.c.b16 %v1693, %v1691
  %v2492 = vpack.c.b16 %v1696, %v1694
  %v2493 = vpack.c.b16 %v1697, %v1695
  %v2494 = vpack.c.b16 %v1700, %v1698
  %v2495 = vpack.c.b16 %v1701, %v1699
  %v2496 = vpack.c.b16 %v1704, %v1702
  %v2497 = vpack.c.b16 %v1705, %v1703
  %v2498 = vpack.c.b16 %v1708, %v1706
  %v2499 = vpack.c.b16 %v1709, %v1707
  %v2500 = vpack.c.b16 %v1712, %v1710
  %v2501 = vpack.c.b16 %v1713, %v1711
  %v2502 = vpack.c.b16 %v1716, %v1714
  %v2503 = vpack.c.b16 %v1717, %v1715
  %v2504 = vpack.c.b16 %v1720, %v1718
  %v2505 = vpack.c.b16 %v1721, %v1719
  %v2506 = vpack.c.b16 %v1724, %v1722
  %v2507 = vpack.c.b16 %v1725, %v1723
  %v2508 = vpack.c.b16 %v1728, %v1726
  %v2509 = vpack.c.b16 %v1729, %v1727
  %v2510 = vpack.c.b16 %v1732, %v1730
  %v2511 = vpack.c.b16 %v1733, %v1731
  %v2512 = vpack.c.b16 %v1736, %v1734
  %v2513 = vpack.c.b16 %v1737, %v1735
  %v2514 = vpack.c.b16 %v1740, %v1738
  %v2515 = vpack.c.b16 %v1741, %v1739
  %v2516 = vpack.c.b16 %v1744, %v1742
  %v2517 = vpack.c.b16 %v1745, %v1743
  %v2518 = vpack.c.b16 %v1748, %v1746
  %v2519 = vpack.c.b16 %v1749, %v1747
  %v2520 = vpack.c.b16 %v1752, %v1750
  %v2521 = vpack.c.b16 %v1753, %v1751
  %v2522 = vpack.c.b16 %v1756, %v1754
  %v2523 = vpack.c.b16 %v1757, %v1755
  %v2524 = vpack.c.b16 %v1760, %v1758
  %v2525 = vpack.c.b16 %v1761, %v1759
  %v2526 = vpack.c.b16 %v1764, %v1762
  %v2527 = vpack.c.b16 %v1765, %v1763
  %v2528 = vpack.c.b16 %v1768, %v1766
  %v2529 = vpack.c.b16 %v1769, %v1767
  %v2530 = vpack.c.b16 %v1772, %v1770
  %v2531 = vpack.c.b16 %v1773, %v1771
  %v2532 = vpack.c.b16 %v1776, %v1774
  %v2533 = vpack.c.b16 %v1777, %v1775
  %v2534 = vpack.c.b16 %v1780, %v1778
  %v2535 = vpack.c.b16 %v1781, %v1779
  %v2536 = vpack.c.b16 %v1784, %v1782
  %v2537 = vpack.c.b16 %v1785, %v1783
  %v2538 = vpack.c.b16 %v1788, %v1786
  %v2539 = vpack.c.b16 %v1789, %v1787
  %v2540 = vpack.c.b16 %v1792, %v1790
  %v2541 = vpack.c.b16 %v1793, %v1791
  %v2542 = vpack.c.b16 %v1796, %v1794
  %v2543 = vpack.c.b16 %v1797, %v1795
  %v2544 = vpack.c.b16 %v1800, %v1798
  %v2545 = vpack.c.b16 %v1801, %v1799
  %v2546 = vpack.c.b16 %v1804, %v1802
  %v2547 = vpack.c.b16 %v1805, %v1803
  %v2548 = vpack.c.b16 %v1808, %v1806
  %v2549 = vpack.c.b16 %v1809, %v1807
  %v2550 = vpack.c.b16 %v1812, %v1810
  %v2551 = vpack.c.b16 %v1813, %v1811
  %v2552 = vpack.c.b16 %v1816, %v1814
  %v2553 = vpack.c.b16 %v1817, %v1815
  %v2554 = vpack.c.b16 %v1820, %v1818
  %v2555 = vpack.c.b16 %v1821, %v1819
  %v2556 = vpack.c.b16 %v1824, %v1822
  %v2557 = vpack.c.b16 %v1825, %v1823
  %v2558 = vpack.c.b16 %v1828, %v1826
  %v2559 = vpack.c.b16 %v1829, %v1827
  %v2560 = vpack.c.b16 %v1832, %v1830
  %v2561 = vpack.c.b16 %v1833, %v1831
  %v2562 = vpack.c.b16 %v1836, %v1834
  %v2563 = vpack.c.b16 %v1837, %v1835
  %v2564 = vpack.c.b16 %v1840, %v1838
  %v2565 = vpack.c.b16 %v1841, %v1839
  %v2566 = vpack.c.b16 %v1844, %v1842
  %v2567 = vpack.c.b16 %v1845, %v1843
  %v2568 = vpack.c.b16 %v1848, %v1846
  %v2569 = vpack.c.b16 %v1849, %v1847
  %v2570 = vpack.c.b16 %v1852, %v1850
  %v2571 = vpack.c.b16 %v1853, %v1851
  %v2572 = vpack.c.b16 %v1856, %v1854
  %v2573 = vpack.c.b16 %v1857, %v1855
  %v2574 = vpack.c.b16 %v1860, %v1858
  %v2575 = vpack.c.b16 %v1861, %v1859
  %v2576 = vpack.c.b16 %v1864, %v1862
  %v2577 = vpack.c.b16 %v1865, %v1863
  %v2578 = vpack.c.b16 %v1868, %v1866
  %v2579 = vpack.c.b16 %v1869, %v1867
  %v2580 = vpack.c.b16 %v1872, %v1870
  %v2581 = vpack.c.b16 %v1873, %v1871
  %v2582 = vpack.c.b16 %v1876, %v1874
  %v2583 = vpack.c.b16 %v1877, %v1875
  %v2584 = vpack.c.b16 %v1880, %v1878
  %v2585 = vpack.c.b16 %v1881, %v1879
  %v2586 = vpack.c.b16 %v1884, %v1882
  %v2587 = vpack.c.b16 %v1885, %v1883
  %v2588 = vpack.c.b16 %v1888, %v1886
  %v2589 = vpack.c.b16 %v1889, %v1887
  %v2590 = vpack.c.b16 %v1892, %v1890
  %v2591 = vpack.c.b16 %v1893, %v1891
  %v2592 = vpack.c.b16 %v1896, %v1894
  %v2593 = vpack.c.b16 %v1897, %v1895
  %v2594 = vpack.c.b16 %v1900, %v1898
  %v2595 = vpack.c.b16 %v1901, %v1899
  %v2596 = vpack.c.b16 %v1904, %v1902
  %v2597 = vpack.c.b16 %v1905, %v1903
  %v2598 = vpack.c.b16 %v1908, %v1906
  %v2599 = vpack.c.b16 %v1909, %v1907
  %v2600 = vpack.c.b16 %v1912, %v1910
  %v2601 = vpack.c.b16 %v1913, %v1911
  %v2602 = vpack.c.b16 %v1916, %v1914
  %v2603 = vpack.c.b16 %v1917, %v1915
  %v2604 = vpack.c.b16 %v1920, %v1918
  %v2605 = vpack.c.b16 %v1921, %v1919
  %v2606 = vpack.c.b16 %v1924, %v1922
  %v2607 = vpack.c.b16 %v1925, %v1923
  %v2608 = vpack.c.b16 %v1928, %v1926
  %v2609 = vpack.c.b16 %v1929, %v1927
  %v2610 = vpack.c.b16 %v1932, %v1930
  %v2611 = vpack.c.b16 %v1933, %v1931
  %v2612 = vpack.c.b16 %v1936, %v1934
  %v2613 = vpack.c.b16 %v1937, %v1935
  %v2614 = vpack.c.b16 %v1940, %v1938
  %v2615 = vpack.c.b16 %v1941, %v1939
  %v2616 = vpack.c.b16 %v1944, %v1942
  %v2617 = vpack.c.b16 %v1945, %v1943
  %v2618 = vpack.c.b16 %v1948, %v1946
  %v2619 = vpack.c.b16 %v1949, %v1947
  %v2620 = vpack.c.b16 %v1952, %v1950
  %v2621 = vpack.c.b16 %v1953, %v1951
  %v2622 = vpack.c.b16 %v1956, %v1954
  %v2623 = vpack.c.b16 %v1957, %v1955
  %v2624 = vpack.c.b16 %v1960, %v1958
  %v2625 = vpack.c.b16 %v1961, %v1959
  %v2626 = vpack.c.b16 %v1964, %v1962
  %v2627 = vpack.c.b16 %v1965, %v1963
  %v2628 = vpack.c.b16 %v1968, %v1966
  %v2629 = vpack.c.b16 %v1969, %v1967
  %v2630 = vpack.c.b16 %v1972, %v1970
  %v2631 = vpack.c.b16 %v1973, %v1971
  %v2632 = vpack.c.b16 %v1976, %v1974
  %v2633 = vpack.c.b16 %v1977, %v1975
  %v2634 = vpack.c.b16 %v1980, %v1978
  %v2635 = vpack.c.b16 %v1981, %v1979
  %v2636 = vpack.c.b16 %v1984, %v1982
  %v2637 = vpack.c.b16 %v1985, %v1983
  %v2638 = vpack.c.b16 %v1988, %v1986
  %v2639 = vpack.c.b16 %v1989, %v1987
  %v2640 = vpack.c.b16 %v1992, %v1990
  %v2641 = vpack.c.b16 %v1993, %v1991
  %v2642 = vpack.c.b16 %v1996, %v1994
  %v2643 = vpack.c.b16 %v1997, %v1995
  %v2644 = vpack.c.b16 %v2000, %v1998
  %v2645 = vpack.c.b16 %v2001, %v1999
  %v2646 = vpack.c.b16 %v2004, %v2002
  %v2647 = vpack.c.b16 %v2005, %v2003
  %v2648 = vpack.c.b16 %v2008, %v2006
  %v2649 = vpack.c.b16 %v2009, %v2007
  %v2650 = vpack.c.b16 %v2012, %v2010
  %v2651 = vpack.c.b16 %v2013, %v2011
  %v2652 = vpack.c.b16 %v2016, %v2014
  %v2653 = vpack.c.b16 %v2017, %v2015
  %v2654 = vpack.c.b16 %v2020, %v2018
  %v2655 = vpack.c.b16 %v2021, %v2019
  %v2656 = vpack.c.b16 %v2024, %v2022
  %v2657 = vpack.c.b16 %v2025, %v2023
  %v2658 = vpack.c.b16 %v2028, %v2026
  %v2659 = vpack.c.b16 %v2029, %v2027
  %v2660 = vpack.c.b16 %v2032, %v2030
  %v2661 = vpack.c.b16 %v2033, %v2031
  %v2662 = vpack.c.b16 %v2036, %v2034
  %v2663 = vpack.c.b16 %v2037, %v2035
  %v2664 = vpack.c.b16 %v2040, %v2038
  %v2665 = vpack.c.b16 %v2041, %v2039
  %v2666 = vpack.c.b16 %v2044, %v2042
  %v2667 = vpack.c.b16 %v2045, %v2043
  %v2668 = vpack.c.b16 %v2048, %v2046
  %v2669 = vpack.c.b16 %v2049, %v2047
  %v2670 = vpack.c.b16 %v2052, %v2050
  %v2671 = vpack.c.b16 %v2053, %v2051
  %v2672 = vpack.c.b16 %v2056, %v2054
  %v2673 = vpack.c.b16 %v2057, %v2055
  %v2674 = vpack.c.b16 %v2060, %v2058
  %v2675 = vpack.c.b16 %v2061, %v2059
  %v2676 = vpack.c.b16 %v2064, %v2062
  %v2677 = vpack.c.b16 %v2065, %v2063
  %v2678 = vpack.c.b16 %v2068, %v2066
  %v2679 = vpack.c.b16 %v2069, %v2067
  %v2680 = vpack.c.b16 %v2072, %v2070
  %v2681 = vpack.c.b16 %v2073, %v2071
  %v2682 = vpack.c.b16 %v2076, %v2074
  %v2683 = vpack.c.b16 %v2077, %v2075
  %v2684 = vpack.c.b16 %v2080, %v2078
  %v2685 = vpack.c.b16 %v2081, %v2079
  %v2686 = vpack.c.b16 %v2084, %v2082
  %v2687 = vpack.c.b16 %v2085, %v2083
  %v2688 = vpack.c.b16 %v2088, %v2086
  %v2689 = vpack.c.b16 %v2089, %v2087
  %v2690 = vpack.c.b16 %v2092, %v2090
  %v2691 = vpack.c.b16 %v2093, %v2091
  %v2692 = vpack.c.b16 %v2096, %v2094
  %v2693 = vpack.c.b16 %v2097, %v2095
  %v2694 = vpack.c.b16 %v2100, %v2098
  %v2695 = vpack.c.b16 %v2101, %v2099
  %v2696 = vpack.c.b16 %v2104, %v2102
  %v2697 = vpack.c.b16 %v2105, %v2103
  %v2698 = vpack.c.b16 %v2108, %v2106
  %v2699 = vpack.c.b16 %v2109, %v2107
  %v2700 = vpack.c.b16 %v2112, %v2110
  %v2701 = vpack.c.b16 %v2113, %v2111
  %v2702 = vpack.c.b16 %v2116, %v2114
  %v2703 = vpack.c.b16 %v2117, %v2115
  %v2704 = vpack.c.b16 %v2120, %v2118
  %v2705 = vpack.c.b16 %v2121, %v2119
  %v2706 = vpack.c.b16 %v2124, %v2122
  %v2707 = vpack.c.b16 %v2125, %v2123
  %v2708 = vpack.c.b16 %v2128, %v2126
  %v2709 = vpack.c.b16 %v2129, %v2127
  %v2710 = vpack.c.b16 %v2132, %v2130
  %v2711 = vpack.c.b16 %v2133, %v2131
  %v2712 = vpack.c.b16 %v2136, %v2134
  %v2713 = vpack.c.b16 %v2137, %v2135
  %v2714 = vpack.c.b16 %v2140, %v2138
  %v2715 = vpack.c.b16 %v2141, %v2139
  %v2716 = vpack.c.b16 %v2144, %v2142
  %v2717 = vpack.c.b16 %v2145, %v2143
  %v2718 = vpack.c.b16 %v2148, %v2146
  %v2719 = vpack.c.b16 %v2149, %v2147
  %v2720 = vpack.c.b16 %v2152, %v2150
  %v2721 = vpack.c.b16 %v2153, %v2151
  %v2722 = vpack.c.b16 %v2156, %v2154
  %v2723 = vpack.c.b16 %v2157, %v2155
  %v2724 = vpack.c.b16 %v2160, %v2158
  %v2725 = vpack.c.b16 %v2161, %v2159
  %v2726 = vpack.c.b16 %v2164, %v2162
  %v2727 = vpack.c.b16 %v2165, %v2163
  %v2728 = vpack.c.b16 %v2168, %v2166
  %v2729 = vpack.c.b16 %v2169, %v2167
  %v2730 = vpack.c.b16 %v2172, %v2170
  %v2731 = vpack.c.b16 %v2173, %v2171
  %v2732 = vpack.c.b16 %v2176, %v2174
  %v2733 = vpack.c.b16 %v2177, %v2175
  %v2734 = vpack.c.b16 %v2180, %v2178
  %v2735 = vpack.c.b16 %v2181, %v2179
  %v2736 = vpack.c.b16 %v2184, %v2182
  %v2737 = vpack.c.b16 %v2185, %v2183
  %v2738 = vpack.c.b16 %v2188, %v2186
  %v2739 = vpack.c.b16 %v2189, %v2187
  %v2740 = vpack.c.b16 %v2192, %v2190
  %v2741 = vpack.c.b16 %v2193, %v2191
  %v2742 = vpack.c.b16 %v2196, %v2194
  %v2743 = vpack.c.b16 %v2197, %v2195
  %v2744 = vpack.c.b16 %v2200, %v2198
  %v2745 = vpack.c.b16 %v2201, %v2199
  %v2746 = vpack.c.b16 %v2204, %v2202
  %v2747 = vpack.c.b16 %v2205, %v2203
  %v2748 = vpack.c.b16 %v2208, %v2206
  %v2749 = vpack.c.b16 %v2209, %v2207
  %v2750 = vpack.c.b16 %v2212, %v2210
  %v2751 = vpack.c.b16 %v2213, %v2211
  %v2752 = vpack.c.b16 %v2216, %v2214
  %v2753 = vpack.c.b16 %v2217, %v2215
  %v2754 = vpack.c.b16 %v2220, %v2218
  %v2755 = vpack.c.b16 %v2221, %v2219
  %v2756 = vpack.c.b16 %v2224, %v2222
  %v2757 = vpack.c.b16 %v2225, %v2223
  %v2758 = vpack.c.b16 %v2228, %v2226
  %v2759 = vpack.c.b16 %v2229, %v2227
  %v2760 = vpack.c.b16 %v2232, %v2230
  %v2761 = vpack.c.b16 %v2233, %v2231
  %v2762 = vpack.c.b16 %v2236, %v2234
  %v2763 = vpack.c.b16 %v2237, %v2235
  %v2764 = vpack.c.b16 %v2240, %v2238
  %v2765 = vpack.c.b16 %v2241, %v2239
  %v2766 = vpack.c.b16 %v2244, %v2242
  %v2767 = vpack.c.b16 %v2245, %v2243
  %v2768 = vpack.c.b16 %v2248, %v2246
  %v2769 = vpack.c.b16 %v2249, %v2247
  %v2770 = vpack.c.b16 %v2252, %v2250
  %v2771 = vpack.c.b16 %v2253, %v2251
  %v2772 = vpack.c.b16 %v2256, %v2254
  %v2773 = vpack.c.b16 %v2257, %v2255
  %v2774 = vpack.c.b16 %v2260, %v2258
  %v2775 = vpack.c.b16 %v2261, %v2259
  %v2776 = vpack.c.b16 %v2264, %v2262
  %v2777 = vpack.c.b16 %v2265, %v2263
  %3290 = vmatprep.subr.bf16.mxu0 %v2267
  %3291 = vmatpush1.bf16.msra.mxu0 %v2266
  %3292 = vmatprep.subr.bf16.mxu0 %v2269
  %3293 = vmatpush1.bf16.msra.mxu0 %v2268
  %3294 = vmatprep.subr.bf16.mxu0 %v2271
  %3295 = vmatpush1.bf16.msra.mxu0 %v2270
  %3296 = vmatprep.subr.bf16.mxu0 %v2273
  %3297 = vmatpush1.bf16.msra.mxu0 %v2272
  %3298 = vmatprep.subr.bf16.mxu0 %v2275
  %3299 = vmatpush1.bf16.msra.mxu0 %v2274
  %3300 = vmatprep.subr.bf16.mxu0 %v2277
  %3301 = vmatpush1.bf16.msra.mxu0 %v2276
  %3302 = vmatprep.subr.bf16.mxu0 %v2279
  %3303 = vmatpush1.bf16.msra.mxu0 %v2278
  %3304 = vmatprep.subr.bf16.mxu0 %v2281
  %3305 = vmatpush1.bf16.msra.mxu0 %v2280
  %3306 = vmatprep.subr.bf16.mxu0 %v2283
  %3307 = vmatpush1.bf16.msra.mxu0 %v2282
  %3308 = vmatprep.subr.bf16.mxu0 %v2285
  %3309 = vmatpush1.bf16.msra.mxu0 %v2284
  %3310 = vmatprep.subr.bf16.mxu0 %v2287
  %3311 = vmatpush1.bf16.msra.mxu0 %v2286
  %3312 = vmatprep.subr.bf16.mxu0 %v2289
  %3313 = vmatpush1.bf16.msra.mxu0 %v2288
  %3314 = vmatprep.subr.bf16.mxu0 %v2291
  %3315 = vmatpush1.bf16.msra.mxu0 %v2290
  %3316 = vmatprep.subr.bf16.mxu0 %v2293
  %3317 = vmatpush1.bf16.msra.mxu0 %v2292
  %3318 = vmatprep.subr.bf16.mxu0 %v2295
  %3319 = vmatpush1.bf16.msra.mxu0 %v2294
  %3320 = vmatprep.subr.bf16.mxu0 %v2297
  %3321 = vmatpush1.bf16.msra.mxu0 %v2296
  %3322 = vmatprep.mubr.bf16.mxu0 %v667
  %3323 = vmatmul.mubr.bf16.gmra.mrb[0].mxu0 %v666
  %v3324 = vpop.f32.mrb[0].mxu0
  %v3325 = vadd.f32 %v563, %v3324
  %v3326 = vpop.f32.mrb[0].mxu0
  %v3327 = vadd.f32 %v567, %v3326
  %v3328 = vpop.f32.mrb[0].mxu0
  %v3329 = vadd.f32 %v563, %v3328
  %v3330 = vpop.f32.mrb[0].mxu0
  %v3331 = vadd.f32 %v567, %v3330
  %3332 = vdwg.mxu0
  %3333 = vmatprep.subr.bf16.mxu0 %v2299
  %3334 = vmatpush1.bf16.msra.mxu0 %v2298
  %3335 = vmatprep.subr.bf16.mxu0 %v2301
  %3336 = vmatpush1.bf16.msra.mxu0 %v2300
  %3337 = vmatprep.subr.bf16.mxu0 %v2303
  %3338 = vmatpush1.bf16.msra.mxu0 %v2302
  %3339 = vmatprep.subr.bf16.mxu0 %v2305
  %3340 = vmatpush1.bf16.msra.mxu0 %v2304
  %3341 = vmatprep.subr.bf16.mxu0 %v2307
  %3342 = vmatpush1.bf16.msra.mxu0 %v2306
  %3343 = vmatprep.subr.bf16.mxu0 %v2309
  %3344 = vmatpush1.bf16.msra.mxu0 %v2308
  %3345 = vmatprep.subr.bf16.mxu0 %v2311
  %3346 = vmatpush1.bf16.msra.mxu0 %v2310
  %3347 = vmatprep.subr.bf16.mxu0 %v2313
  %3348 = vmatpush1.bf16.msra.mxu0 %v2312
  %3349 = vmatprep.subr.bf16.mxu0 %v2315
  %3350 = vmatpush1.bf16.msra.mxu0 %v2314
  %3351 = vmatprep.subr.bf16.mxu0 %v2317
  %3352 = vmatpush1.bf16.msra.mxu0 %v2316
  %3353 = vmatprep.subr.bf16.mxu0 %v2319
  %3354 = vmatpush1.bf16.msra.mxu0 %v2318
  %3355 = vmatprep.subr.bf16.mxu0 %v2321
  %3356 = vmatpush1.bf16.msra.mxu0 %v2320
  %3357 = vmatprep.subr.bf16.mxu0 %v2323
  %3358 = vmatpush1.bf16.msra.mxu0 %v2322
  %3359 = vmatprep.subr.bf16.mxu0 %v2325
  %3360 = vmatpush1.bf16.msra.mxu0 %v2324
  %3361 = vmatprep.subr.bf16.mxu0 %v2327
  %3362 = vmatpush1.bf16.msra.mxu0 %v2326
  %3363 = vmatprep.subr.bf16.mxu0 %v2329
  %3364 = vmatpush1.bf16.msra.mxu0 %v2328
  %3365 = vmatprep.mubr.bf16.mxu0 %v669
  %3366 = vmatmul.mubr.bf16.gmra.mrb[0].mxu0 %v668
  %v3367 = vpop.f32.mrb[0].mxu0
  %v3368 = vadd.f32 %v3325, %v3367
  %v3369 = vpop.f32.mrb[0].mxu0
  %v3370 = vadd.f32 %v3327, %v3369
  %v3371 = vpop.f32.mrb[0].mxu0
  %v3372 = vadd.f32 %v3329, %v3371
  %v3373 = vpop.f32.mrb[0].mxu0
  %v3374 = vadd.f32 %v3331, %v3373
  %3375 = vdwg.mxu0
  %3376 = vmatprep.subr.bf16.mxu0 %v2331
  %3377 = vmatpush1.bf16.msra.mxu0 %v2330
  %3378 = vmatprep.subr.bf16.mxu0 %v2333
  %3379 = vmatpush1.bf16.msra.mxu0 %v2332
  %3380 = vmatprep.subr.bf16.mxu0 %v2335
  %3381 = vmatpush1.bf16.msra.mxu0 %v2334
  %3382 = vmatprep.subr.bf16.mxu0 %v2337
  %3383 = vmatpush1.bf16.msra.mxu0 %v2336
  %3384 = vmatprep.subr.bf16.mxu0 %v2339
  %3385 = vmatpush1.bf16.msra.mxu0 %v2338
  %3386 = vmatprep.subr.bf16.mxu0 %v2341
  %3387 = vmatpush1.bf16.msra.mxu0 %v2340
  %3388 = vmatprep.subr.bf16.mxu0 %v2343
  %3389 = vmatpush1.bf16.msra.mxu0 %v2342
  %3390 = vmatprep.subr.bf16.mxu0 %v2345
  %3391 = vmatpush1.bf16.msra.mxu0 %v2344
  %3392 = vmatprep.subr.bf16.mxu0 %v2347
  %3393 = vmatpush1.bf16.msra.mxu0 %v2346
  %3394 = vmatprep.subr.bf16.mxu0 %v2349
  %3395 = vmatpush1.bf16.msra.mxu0 %v2348
  %3396 = vmatprep.subr.bf16.mxu0 %v2351
  %3397 = vmatpush1.bf16.msra.mxu0 %v2350
  %3398 = vmatprep.subr.bf16.mxu0 %v2353
  %3399 = vmatpush1.bf16.msra.mxu0 %v2352
  %3400 = vmatprep.subr.bf16.mxu0 %v2355
  %3401 = vmatpush1.bf16.msra.mxu0 %v2354
  %3402 = vmatprep.subr.bf16.mxu0 %v2357
  %3403 = vmatpush1.bf16.msra.mxu0 %v2356
  %3404 = vmatprep.subr.bf16.mxu0 %v2359
  %3405 = vmatpush1.bf16.msra.mxu0 %v2358
  %3406 = vmatprep.subr.bf16.mxu0 %v2361
  %3407 = vmatpush1.bf16.msra.mxu0 %v2360
  %3408 = vmatprep.mubr.bf16.mxu0 %v671
  %3409 = vmatmul.mubr.bf16.gmra.mrb[0].mxu0 %v670
  %v3410 = vpop.f32.mrb[0].mxu0
  %v3411 = vadd.f32 %v3368, %v3410
  %v3412 = vpop.f32.mrb[0].mxu0
  %v3413 = vadd.f32 %v3370, %v3412
  %v3414 = vpop.f32.mrb[0].mxu0
  %v3415 = vadd.f32 %v3372, %v3414
  %v3416 = vpop.f32.mrb[0].mxu0
  %v3417 = vadd.f32 %v3374, %v3416
  %3418 = vdwg.mxu0
  %3419 = vmatprep.subr.bf16.mxu0 %v2363
  %3420 = vmatpush1.bf16.msra.mxu0 %v2362
  %3421 = vmatprep.subr.bf16.mxu0 %v2365
  %3422 = vmatpush1.bf16.msra.mxu0 %v2364
  %3423 = vmatprep.subr.bf16.mxu0 %v2367
  %3424 = vmatpush1.bf16.msra.mxu0 %v2366
  %3425 = vmatprep.subr.bf16.mxu0 %v2369
  %3426 = vmatpush1.bf16.msra.mxu0 %v2368
  %3427 = vmatprep.subr.bf16.mxu0 %v2371
  %3428 = vmatpush1.bf16.msra.mxu0 %v2370
  %3429 = vmatprep.subr.bf16.mxu0 %v2373
  %3430 = vmatpush1.bf16.msra.mxu0 %v2372
  %3431 = vmatprep.subr.bf16.mxu0 %v2375
  %3432 = vmatpush1.bf16.msra.mxu0 %v2374
  %3433 = vmatprep.subr.bf16.mxu0 %v2377
  %3434 = vmatpush1.bf16.msra.mxu0 %v2376
  %3435 = vmatprep.subr.bf16.mxu0 %v2379
  %3436 = vmatpush1.bf16.msra.mxu0 %v2378
  %3437 = vmatprep.subr.bf16.mxu0 %v2381
  %3438 = vmatpush1.bf16.msra.mxu0 %v2380
  %3439 = vmatprep.subr.bf16.mxu0 %v2383
  %3440 = vmatpush1.bf16.msra.mxu0 %v2382
  %3441 = vmatprep.subr.bf16.mxu0 %v2385
  %3442 = vmatpush1.bf16.msra.mxu0 %v2384
  %3443 = vmatprep.subr.bf16.mxu0 %v2387
  %3444 = vmatpush1.bf16.msra.mxu0 %v2386
  %3445 = vmatprep.subr.bf16.mxu0 %v2389
  %3446 = vmatpush1.bf16.msra.mxu0 %v2388
  %3447 = vmatprep.subr.bf16.mxu0 %v2391
  %3448 = vmatpush1.bf16.msra.mxu0 %v2390
  %3449 = vmatprep.subr.bf16.mxu0 %v2393
  %3450 = vmatpush1.bf16.msra.mxu0 %v2392
  %3451 = vmatprep.mubr.bf16.mxu0 %v673
  %3452 = vmatmul.mubr.bf16.gmra.mrb[0].mxu0 %v672
  %v3453 = vpop.f32.mrb[0].mxu0
  %v3454 = vadd.f32 %v3411, %v3453
  %v3455 = vpop.f32.mrb[0].mxu0
  %v3456 = vadd.f32 %v3413, %v3455
  %v3457 = vpop.f32.mrb[0].mxu0
  %v3458 = vadd.f32 %v3415, %v3457
  %v3459 = vpop.f32.mrb[0].mxu0
  %v3460 = vadd.f32 %v3417, %v3459
  %3461 = vdwg.mxu0
  %3462 = vmatprep.subr.bf16.mxu0 %v2395
  %3463 = vmatpush1.bf16.msra.mxu0 %v2394
  %3464 = vmatprep.subr.bf16.mxu0 %v2397
  %3465 = vmatpush1.bf16.msra.mxu0 %v2396
  %3466 = vmatprep.subr.bf16.mxu0 %v2399
  %3467 = vmatpush1.bf16.msra.mxu0 %v2398
  %3468 = vmatprep.subr.bf16.mxu0 %v2401
  %3469 = vmatpush1.bf16.msra.mxu0 %v2400
  %3470 = vmatprep.subr.bf16.mxu0 %v2403
  %3471 = vmatpush1.bf16.msra.mxu0 %v2402
  %3472 = vmatprep.subr.bf16.mxu0 %v2405
  %3473 = vmatpush1.bf16.msra.mxu0 %v2404
  %3474 = vmatprep.subr.bf16.mxu0 %v2407
  %3475 = vmatpush1.bf16.msra.mxu0 %v2406
  %3476 = vmatprep.subr.bf16.mxu0 %v2409
  %3477 = vmatpush1.bf16.msra.mxu0 %v2408
  %3478 = vmatprep.subr.bf16.mxu0 %v2411
  %3479 = vmatpush1.bf16.msra.mxu0 %v2410
  %3480 = vmatprep.subr.bf16.mxu0 %v2413
  %3481 = vmatpush1.bf16.msra.mxu0 %v2412
  %3482 = vmatprep.subr.bf16.mxu0 %v2415
  %3483 = vmatpush1.bf16.msra.mxu0 %v2414
  %3484 = vmatprep.subr.bf16.mxu0 %v2417
  %3485 = vmatpush1.bf16.msra.mxu0 %v2416
  %3486 = vmatprep.subr.bf16.mxu0 %v2419
  %3487 = vmatpush1.bf16.msra.mxu0 %v2418
  %3488 = vmatprep.subr.bf16.mxu0 %v2421
  %3489 = vmatpush1.bf16.msra.mxu0 %v2420
  %3490 = vmatprep.subr.bf16.mxu0 %v2423
  %3491 = vmatpush1.bf16.msra.mxu0 %v2422
  %3492 = vmatprep.subr.bf16.mxu0 %v2425
  %3493 = vmatpush1.bf16.msra.mxu0 %v2424
  %3494 = vmatprep.mubr.bf16.mxu0 %v675
  %3495 = vmatmul.mubr.bf16.gmra.mrb[0].mxu0 %v674
  %v3496 = vpop.f32.mrb[0].mxu0
  %v3497 = vadd.f32 %v3454, %v3496
  %v3498 = vpop.f32.mrb[0].mxu0
  %v3499 = vadd.f32 %v3456, %v3498
  %v3500 = vpop.f32.mrb[0].mxu0
  %v3501 = vadd.f32 %v3458, %v3500
  %v3502 = vpop.f32.mrb[0].mxu0
  %v3503 = vadd.f32 %v3460, %v3502
  %3504 = vdwg.mxu0
  %3505 = vmatprep.subr.bf16.mxu0 %v2427
  %3506 = vmatpush1.bf16.msra.mxu0 %v2426
  %3507 = vmatprep.subr.bf16.mxu0 %v2429
  %3508 = vmatpush1.bf16.msra.mxu0 %v2428
  %3509 = vmatprep.subr.bf16.mxu0 %v2431
  %3510 = vmatpush1.bf16.msra.mxu0 %v2430
  %3511 = vmatprep.subr.bf16.mxu0 %v2433
  %3512 = vmatpush1.bf16.msra.mxu0 %v2432
  %3513 = vmatprep.subr.bf16.mxu0 %v2435
  %3514 = vmatpush1.bf16.msra.mxu0 %v2434
  %3515 = vmatprep.subr.bf16.mxu0 %v2437
  %3516 = vmatpush1.bf16.msra.mxu0 %v2436
  %3517 = vmatprep.subr.bf16.mxu0 %v2439
  %3518 = vmatpush1.bf16.msra.mxu0 %v2438
  %3519 = vmatprep.subr.bf16.mxu0 %v2441
  %3520 = vmatpush1.bf16.msra.mxu0 %v2440
  %3521 = vmatprep.subr.bf16.mxu0 %v2443
  %3522 = vmatpush1.bf16.msra.mxu0 %v2442
  %3523 = vmatprep.subr.bf16.mxu0 %v2445
  %3524 = vmatpush1.bf16.msra.mxu0 %v2444
  %3525 = vmatprep.subr.bf16.mxu0 %v2447
  %3526 = vmatpush1.bf16.msra.mxu0 %v2446
  %3527 = vmatprep.subr.bf16.mxu0 %v2449
  %3528 = vmatpush1.bf16.msra.mxu0 %v2448
  %3529 = vmatprep.subr.bf16.mxu0 %v2451
  %3530 = vmatpush1.bf16.msra.mxu0 %v2450
  %3531 = vmatprep.subr.bf16.mxu0 %v2453
  %3532 = vmatpush1.bf16.msra.mxu0 %v2452
  %3533 = vmatprep.subr.bf16.mxu0 %v2455
  %3534 = vmatpush1.bf16.msra.mxu0 %v2454
  %3535 = vmatprep.subr.bf16.mxu0 %v2457
  %3536 = vmatpush1.bf16.msra.mxu0 %v2456
  %3537 = vmatprep.mubr.bf16.mxu0 %v677
  %3538 = vmatmul.mubr.bf16.gmra.mrb[0].mxu0 %v676
  %v3539 = vpop.f32.mrb[0].mxu0
  %v3540 = vadd.f32 %v3497, %v3539
  %v3541 = vpop.f32.mrb[0].mxu0
  %v3542 = vadd.f32 %v3499, %v3541
  %v3543 = vpop.f32.mrb[0].mxu0
  %v3544 = vadd.f32 %v3501, %v3543
  %v3545 = vpop.f32.mrb[0].mxu0
  %v3546 = vadd.f32 %v3503, %v3545
  %3547 = vdwg.mxu0
  %3548 = vmatprep.subr.bf16.mxu0 %v2459
  %3549 = vmatpush1.bf16.msra.mxu0 %v2458
  %3550 = vmatprep.subr.bf16.mxu0 %v2461
  %3551 = vmatpush1.bf16.msra.mxu0 %v2460
  %3552 = vmatprep.subr.bf16.mxu0 %v2463
  %3553 = vmatpush1.bf16.msra.mxu0 %v2462
  %3554 = vmatprep.subr.bf16.mxu0 %v2465
  %3555 = vmatpush1.bf16.msra.mxu0 %v2464
  %3556 = vmatprep.subr.bf16.mxu0 %v2467
  %3557 = vmatpush1.bf16.msra.mxu0 %v2466
  %3558 = vmatprep.subr.bf16.mxu0 %v2469
  %3559 = vmatpush1.bf16.msra.mxu0 %v2468
  %3560 = vmatprep.subr.bf16.mxu0 %v2471
  %3561 = vmatpush1.bf16.msra.mxu0 %v2470
  %3562 = vmatprep.subr.bf16.mxu0 %v2473
  %3563 = vmatpush1.bf16.msra.mxu0 %v2472
  %3564 = vmatprep.subr.bf16.mxu0 %v2475
  %3565 = vmatpush1.bf16.msra.mxu0 %v2474
  %3566 = vmatprep.subr.bf16.mxu0 %v2477
  %3567 = vmatpush1.bf16.msra.mxu0 %v2476
  %3568 = vmatprep.subr.bf16.mxu0 %v2479
  %3569 = vmatpush1.bf16.msra.mxu0 %v2478
  %3570 = vmatprep.subr.bf16.mxu0 %v2481
  %3571 = vmatpush1.bf16.msra.mxu0 %v2480
  %3572 = vmatprep.subr.bf16.mxu0 %v2483
  %3573 = vmatpush1.bf16.msra.mxu0 %v2482
  %3574 = vmatprep.subr.bf16.mxu0 %v2485
  %3575 = vmatpush1.bf16.msra.mxu0 %v2484
  %3576 = vmatprep.subr.bf16.mxu0 %v2487
  %3577 = vmatpush1.bf16.msra.mxu0 %v2486
  %3578 = vmatprep.subr.bf16.mxu0 %v2489
  %3579 = vmatpush1.bf16.msra.mxu0 %v2488
  %3580 = vmatprep.mubr.bf16.mxu0 %v679
  %3581 = vmatmul.mubr.bf16.gmra.mrb[0].mxu0 %v678
  %v3582 = vpop.f32.mrb[0].mxu0
  %v3583 = vadd.f32 %v3540, %v3582
  %v3584 = vpop.f32.mrb[0].mxu0
  %v3585 = vadd.f32 %v3542, %v3584
  %v3586 = vpop.f32.mrb[0].mxu0
  %v3587 = vadd.f32 %v3544, %v3586
  %v3588 = vpop.f32.mrb[0].mxu0
  %v3589 = vadd.f32 %v3546, %v3588
  %3590 = vdwg.mxu0
  %3591 = vmatprep.subr.bf16.mxu0 %v2491
  %3592 = vmatpush1.bf16.msra.mxu0 %v2490
  %3593 = vmatprep.subr.bf16.mxu0 %v2493
  %3594 = vmatpush1.bf16.msra.mxu0 %v2492
  %3595 = vmatprep.subr.bf16.mxu0 %v2495
  %3596 = vmatpush1.bf16.msra.mxu0 %v2494
  %3597 = vmatprep.subr.bf16.mxu0 %v2497
  %3598 = vmatpush1.bf16.msra.mxu0 %v2496
  %3599 = vmatprep.subr.bf16.mxu0 %v2499
  %3600 = vmatpush1.bf16.msra.mxu0 %v2498
  %3601 = vmatprep.subr.bf16.mxu0 %v2501
  %3602 = vmatpush1.bf16.msra.mxu0 %v2500
  %3603 = vmatprep.subr.bf16.mxu0 %v2503
  %3604 = vmatpush1.bf16.msra.mxu0 %v2502
  %3605 = vmatprep.subr.bf16.mxu0 %v2505
  %3606 = vmatpush1.bf16.msra.mxu0 %v2504
  %3607 = vmatprep.subr.bf16.mxu0 %v2507
  %3608 = vmatpush1.bf16.msra.mxu0 %v2506
  %3609 = vmatprep.subr.bf16.mxu0 %v2509
  %3610 = vmatpush1.bf16.msra.mxu0 %v2508
  %3611 = vmatprep.subr.bf16.mxu0 %v2511
  %3612 = vmatpush1.bf16.msra.mxu0 %v2510
  %3613 = vmatprep.subr.bf16.mxu0 %v2513
  %3614 = vmatpush1.bf16.msra.mxu0 %v2512
  %3615 = vmatprep.subr.bf16.mxu0 %v2515
  %3616 = vmatpush1.bf16.msra.mxu0 %v2514
  %3617 = vmatprep.subr.bf16.mxu0 %v2517
  %3618 = vmatpush1.bf16.msra.mxu0 %v2516
  %3619 = vmatprep.subr.bf16.mxu0 %v2519
  %3620 = vmatpush1.bf16.msra.mxu0 %v2518
  %3621 = vmatprep.subr.bf16.mxu0 %v2521
  %3622 = vmatpush1.bf16.msra.mxu0 %v2520
  %3623 = vmatprep.mubr.bf16.mxu0 %v681
  %3624 = vmatmul.mubr.bf16.gmra.mrb[0].mxu0 %v680
  %v3625 = vpop.f32.mrb[0].mxu0
  %v3626 = vadd.f32 %v3583, %v3625
  %v3627 = vpop.f32.mrb[0].mxu0
  %v3628 = vadd.f32 %v3585, %v3627
  %v3629 = vpop.f32.mrb[0].mxu0
  %v3630 = vadd.f32 %v3587, %v3629
  %v3631 = vpop.f32.mrb[0].mxu0
  %v3632 = vadd.f32 %v3589, %v3631
  %3633 = vdwg.mxu0
  %3634 = vmatprep.subr.bf16.mxu0 %v2523
  %3635 = vmatpush1.bf16.msra.mxu0 %v2522
  %3636 = vmatprep.subr.bf16.mxu0 %v2525
  %3637 = vmatpush1.bf16.msra.mxu0 %v2524
  %3638 = vmatprep.subr.bf16.mxu0 %v2527
  %3639 = vmatpush1.bf16.msra.mxu0 %v2526
  %3640 = vmatprep.subr.bf16.mxu0 %v2529
  %3641 = vmatpush1.bf16.msra.mxu0 %v2528
  %3642 = vmatprep.subr.bf16.mxu0 %v2531
  %3643 = vmatpush1.bf16.msra.mxu0 %v2530
  %3644 = vmatprep.subr.bf16.mxu0 %v2533
  %3645 = vmatpush1.bf16.msra.mxu0 %v2532
  %3646 = vmatprep.subr.bf16.mxu0 %v2535
  %3647 = vmatpush1.bf16.msra.mxu0 %v2534
  %3648 = vmatprep.subr.bf16.mxu0 %v2537
  %3649 = vmatpush1.bf16.msra.mxu0 %v2536
  %3650 = vmatprep.subr.bf16.mxu0 %v2539
  %3651 = vmatpush1.bf16.msra.mxu0 %v2538
  %3652 = vmatprep.subr.bf16.mxu0 %v2541
  %3653 = vmatpush1.bf16.msra.mxu0 %v2540
  %3654 = vmatprep.subr.bf16.mxu0 %v2543
  %3655 = vmatpush1.bf16.msra.mxu0 %v2542
  %3656 = vmatprep.subr.bf16.mxu0 %v2545
  %3657 = vmatpush1.bf16.msra.mxu0 %v2544
  %3658 = vmatprep.subr.bf16.mxu0 %v2547
  %3659 = vmatpush1.bf16.msra.mxu0 %v2546
  %3660 = vmatprep.subr.bf16.mxu0 %v2549
  %3661 = vmatpush1.bf16.msra.mxu0 %v2548
  %3662 = vmatprep.subr.bf16.mxu0 %v2551
  %3663 = vmatpush1.bf16.msra.mxu0 %v2550
  %3664 = vmatprep.subr.bf16.mxu0 %v2553
  %3665 = vmatpush1.bf16.msra.mxu0 %v2552
  %3666 = vmatprep.mubr.bf16.mxu0 %v683
  %3667 = vmatmul.mubr.bf16.gmra.mrb[0].mxu0 %v682
  %v3668 = vpop.f32.mrb[0].mxu0
  %v3669 = vadd.f32 %v3626, %v3668
  %v3670 = vpop.f32.mrb[0].mxu0
  %v3671 = vadd.f32 %v3628, %v3670
  %v3672 = vpop.f32.mrb[0].mxu0
  %v3673 = vadd.f32 %v3630, %v3672
  %v3674 = vpop.f32.mrb[0].mxu0
  %v3675 = vadd.f32 %v3632, %v3674
  %3676 = vdwg.mxu0
  %3677 = vmatprep.subr.bf16.mxu0 %v2555
  %3678 = vmatpush1.bf16.msra.mxu0 %v2554
  %3679 = vmatprep.subr.bf16.mxu0 %v2557
  %3680 = vmatpush1.bf16.msra.mxu0 %v2556
  %3681 = vmatprep.subr.bf16.mxu0 %v2559
  %3682 = vmatpush1.bf16.msra.mxu0 %v2558
  %3683 = vmatprep.subr.bf16.mxu0 %v2561
  %3684 = vmatpush1.bf16.msra.mxu0 %v2560
  %3685 = vmatprep.subr.bf16.mxu0 %v2563
  %3686 = vmatpush1.bf16.msra.mxu0 %v2562
  %3687 = vmatprep.subr.bf16.mxu0 %v2565
  %3688 = vmatpush1.bf16.msra.mxu0 %v2564
  %3689 = vmatprep.subr.bf16.mxu0 %v2567
  %3690 = vmatpush1.bf16.msra.mxu0 %v2566
  %3691 = vmatprep.subr.bf16.mxu0 %v2569
  %3692 = vmatpush1.bf16.msra.mxu0 %v2568
  %3693 = vmatprep.subr.bf16.mxu0 %v2571
  %3694 = vmatpush1.bf16.msra.mxu0 %v2570
  %3695 = vmatprep.subr.bf16.mxu0 %v2573
  %3696 = vmatpush1.bf16.msra.mxu0 %v2572
  %3697 = vmatprep.subr.bf16.mxu0 %v2575
  %3698 = vmatpush1.bf16.msra.mxu0 %v2574
  %3699 = vmatprep.subr.bf16.mxu0 %v2577
  %3700 = vmatpush1.bf16.msra.mxu0 %v2576
  %3701 = vmatprep.subr.bf16.mxu0 %v2579
  %3702 = vmatpush1.bf16.msra.mxu0 %v2578
  %3703 = vmatprep.subr.bf16.mxu0 %v2581
  %3704 = vmatpush1.bf16.msra.mxu0 %v2580
  %3705 = vmatprep.subr.bf16.mxu0 %v2583
  %3706 = vmatpush1.bf16.msra.mxu0 %v2582
  %3707 = vmatprep.subr.bf16.mxu0 %v2585
  %3708 = vmatpush1.bf16.msra.mxu0 %v2584
  %3709 = vmatprep.mubr.bf16.mxu0 %v685
  %3710 = vmatmul.mubr.bf16.gmra.mrb[0].mxu0 %v684
  %v3711 = vpop.f32.mrb[0].mxu0
  %v3712 = vadd.f32 %v3669, %v3711
  %v3713 = vpop.f32.mrb[0].mxu0
  %v3714 = vadd.f32 %v3671, %v3713
  %v3715 = vpop.f32.mrb[0].mxu0
  %v3716 = vadd.f32 %v3673, %v3715
  %v3717 = vpop.f32.mrb[0].mxu0
  %v3718 = vadd.f32 %v3675, %v3717
  %3719 = vdwg.mxu0
  %3720 = vmatprep.subr.bf16.mxu0 %v2587
  %3721 = vmatpush1.bf16.msra.mxu0 %v2586
  %3722 = vmatprep.subr.bf16.mxu0 %v2589
  %3723 = vmatpush1.bf16.msra.mxu0 %v2588
  %3724 = vmatprep.subr.bf16.mxu0 %v2591
  %3725 = vmatpush1.bf16.msra.mxu0 %v2590
  %3726 = vmatprep.subr.bf16.mxu0 %v2593
  %3727 = vmatpush1.bf16.msra.mxu0 %v2592
  %3728 = vmatprep.subr.bf16.mxu0 %v2595
  %3729 = vmatpush1.bf16.msra.mxu0 %v2594
  %3730 = vmatprep.subr.bf16.mxu0 %v2597
  %3731 = vmatpush1.bf16.msra.mxu0 %v2596
  %3732 = vmatprep.subr.bf16.mxu0 %v2599
  %3733 = vmatpush1.bf16.msra.mxu0 %v2598
  %3734 = vmatprep.subr.bf16.mxu0 %v2601
  %3735 = vmatpush1.bf16.msra.mxu0 %v2600
  %3736 = vmatprep.subr.bf16.mxu0 %v2603
  %3737 = vmatpush1.bf16.msra.mxu0 %v2602
  %3738 = vmatprep.subr.bf16.mxu0 %v2605
  %3739 = vmatpush1.bf16.msra.mxu0 %v2604
  %3740 = vmatprep.subr.bf16.mxu0 %v2607
  %3741 = vmatpush1.bf16.msra.mxu0 %v2606
  %3742 = vmatprep.subr.bf16.mxu0 %v2609
  %3743 = vmatpush1.bf16.msra.mxu0 %v2608
  %3744 = vmatprep.subr.bf16.mxu0 %v2611
  %3745 = vmatpush1.bf16.msra.mxu0 %v2610
  %3746 = vmatprep.subr.bf16.mxu0 %v2613
  %3747 = vmatpush1.bf16.msra.mxu0 %v2612
  %3748 = vmatprep.subr.bf16.mxu0 %v2615
  %3749 = vmatpush1.bf16.msra.mxu0 %v2614
  %3750 = vmatprep.subr.bf16.mxu0 %v2617
  %3751 = vmatpush1.bf16.msra.mxu0 %v2616
  %3752 = vmatprep.mubr.bf16.mxu0 %v687
  %3753 = vmatmul.mubr.bf16.gmra.mrb[0].mxu0 %v686
  %v3754 = vpop.f32.mrb[0].mxu0
  %v3755 = vadd.f32 %v3712, %v3754
  %v3756 = vpop.f32.mrb[0].mxu0
  %v3757 = vadd.f32 %v3714, %v3756
  %v3758 = vpop.f32.mrb[0].mxu0
  %v3759 = vadd.f32 %v3716, %v3758
  %v3760 = vpop.f32.mrb[0].mxu0
  %v3761 = vadd.f32 %v3718, %v3760
  %3762 = vdwg.mxu0
  %3763 = vmatprep.subr.bf16.mxu0 %v2619
  %3764 = vmatpush1.bf16.msra.mxu0 %v2618
  %3765 = vmatprep.subr.bf16.mxu0 %v2621
  %3766 = vmatpush1.bf16.msra.mxu0 %v2620
  %3767 = vmatprep.subr.bf16.mxu0 %v2623
  %3768 = vmatpush1.bf16.msra.mxu0 %v2622
  %3769 = vmatprep.subr.bf16.mxu0 %v2625
  %3770 = vmatpush1.bf16.msra.mxu0 %v2624
  %3771 = vmatprep.subr.bf16.mxu0 %v2627
  %3772 = vmatpush1.bf16.msra.mxu0 %v2626
  %3773 = vmatprep.subr.bf16.mxu0 %v2629
  %3774 = vmatpush1.bf16.msra.mxu0 %v2628
  %3775 = vmatprep.subr.bf16.mxu0 %v2631
  %3776 = vmatpush1.bf16.msra.mxu0 %v2630
  %3777 = vmatprep.subr.bf16.mxu0 %v2633
  %3778 = vmatpush1.bf16.msra.mxu0 %v2632
  %3779 = vmatprep.subr.bf16.mxu0 %v2635
  %3780 = vmatpush1.bf16.msra.mxu0 %v2634
  %3781 = vmatprep.subr.bf16.mxu0 %v2637
  %3782 = vmatpush1.bf16.msra.mxu0 %v2636
  %3783 = vmatprep.subr.bf16.mxu0 %v2639
  %3784 = vmatpush1.bf16.msra.mxu0 %v2638
  %3785 = vmatprep.subr.bf16.mxu0 %v2641
  %3786 = vmatpush1.bf16.msra.mxu0 %v2640
  %3787 = vmatprep.subr.bf16.mxu0 %v2643
  %3788 = vmatpush1.bf16.msra.mxu0 %v2642
  %3789 = vmatprep.subr.bf16.mxu0 %v2645
  %3790 = vmatpush1.bf16.msra.mxu0 %v2644
  %3791 = vmatprep.subr.bf16.mxu0 %v2647
  %3792 = vmatpush1.bf16.msra.mxu0 %v2646
  %3793 = vmatprep.subr.bf16.mxu0 %v2649
  %3794 = vmatpush1.bf16.msra.mxu0 %v2648
  %3795 = vmatprep.mubr.bf16.mxu0 %v689
  %3796 = vmatmul.mubr.bf16.gmra.mrb[0].mxu0 %v688
  %v3797 = vpop.f32.mrb[0].mxu0
  %v3798 = vadd.f32 %v3755, %v3797
  %v3799 = vpop.f32.mrb[0].mxu0
  %v3800 = vadd.f32 %v3757, %v3799
  %v3801 = vpop.f32.mrb[0].mxu0
  %v3802 = vadd.f32 %v3759, %v3801
  %v3803 = vpop.f32.mrb[0].mxu0
  %v3804 = vadd.f32 %v3761, %v3803
  %3805 = vdwg.mxu0
  %3806 = vmatprep.subr.bf16.mxu0 %v2651
  %3807 = vmatpush1.bf16.msra.mxu0 %v2650
  %3808 = vmatprep.subr.bf16.mxu0 %v2653
  %3809 = vmatpush1.bf16.msra.mxu0 %v2652
  %3810 = vmatprep.subr.bf16.mxu0 %v2655
  %3811 = vmatpush1.bf16.msra.mxu0 %v2654
  %3812 = vmatprep.subr.bf16.mxu0 %v2657
  %3813 = vmatpush1.bf16.msra.mxu0 %v2656
  %3814 = vmatprep.subr.bf16.mxu0 %v2659
  %3815 = vmatpush1.bf16.msra.mxu0 %v2658
  %3816 = vmatprep.subr.bf16.mxu0 %v2661
  %3817 = vmatpush1.bf16.msra.mxu0 %v2660
  %3818 = vmatprep.subr.bf16.mxu0 %v2663
  %3819 = vmatpush1.bf16.msra.mxu0 %v2662
  %3820 = vmatprep.subr.bf16.mxu0 %v2665
  %3821 = vmatpush1.bf16.msra.mxu0 %v2664
  %3822 = vmatprep.subr.bf16.mxu0 %v2667
  %3823 = vmatpush1.bf16.msra.mxu0 %v2666
  %3824 = vmatprep.subr.bf16.mxu0 %v2669
  %3825 = vmatpush1.bf16.msra.mxu0 %v2668
  %3826 = vmatprep.subr.bf16.mxu0 %v2671
  %3827 = vmatpush1.bf16.msra.mxu0 %v2670
  %3828 = vmatprep.subr.bf16.mxu0 %v2673
  %3829 = vmatpush1.bf16.msra.mxu0 %v2672
  %3830 = vmatprep.subr.bf16.mxu0 %v2675
  %3831 = vmatpush1.bf16.msra.mxu0 %v2674
  %3832 = vmatprep.subr.bf16.mxu0 %v2677
  %3833 = vmatpush1.bf16.msra.mxu0 %v2676
  %3834 = vmatprep.subr.bf16.mxu0 %v2679
  %3835 = vmatpush1.bf16.msra.mxu0 %v2678
  %3836 = vmatprep.subr.bf16.mxu0 %v2681
  %3837 = vmatpush1.bf16.msra.mxu0 %v2680
  %3838 = vmatprep.mubr.bf16.mxu0 %v691
  %3839 = vmatmul.mubr.bf16.gmra.mrb[0].mxu0 %v690
  %v3840 = vpop.f32.mrb[0].mxu0
  %v3841 = vadd.f32 %v3798, %v3840
  %v3842 = vpop.f32.mrb[0].mxu0
  %v3843 = vadd.f32 %v3800, %v3842
  %v3844 = vpop.f32.mrb[0].mxu0
  %v3845 = vadd.f32 %v3802, %v3844
  %v3846 = vpop.f32.mrb[0].mxu0
  %v3847 = vadd.f32 %v3804, %v3846
  %3848 = vdwg.mxu0
  %3849 = vmatprep.subr.bf16.mxu0 %v2683
  %3850 = vmatpush1.bf16.msra.mxu0 %v2682
  %3851 = vmatprep.subr.bf16.mxu0 %v2685
  %3852 = vmatpush1.bf16.msra.mxu0 %v2684
  %3853 = vmatprep.subr.bf16.mxu0 %v2687
  %3854 = vmatpush1.bf16.msra.mxu0 %v2686
  %3855 = vmatprep.subr.bf16.mxu0 %v2689
  %3856 = vmatpush1.bf16.msra.mxu0 %v2688
  %3857 = vmatprep.subr.bf16.mxu0 %v2691
  %3858 = vmatpush1.bf16.msra.mxu0 %v2690
  %3859 = vmatprep.subr.bf16.mxu0 %v2693
  %3860 = vmatpush1.bf16.msra.mxu0 %v2692
  %3861 = vmatprep.subr.bf16.mxu0 %v2695
  %3862 = vmatpush1.bf16.msra.mxu0 %v2694
  %3863 = vmatprep.subr.bf16.mxu0 %v2697
  %3864 = vmatpush1.bf16.msra.mxu0 %v2696
  %3865 = vmatprep.subr.bf16.mxu0 %v2699
  %3866 = vmatpush1.bf16.msra.mxu0 %v2698
  %3867 = vmatprep.subr.bf16.mxu0 %v2701
  %3868 = vmatpush1.bf16.msra.mxu0 %v2700
  %3869 = vmatprep.subr.bf16.mxu0 %v2703
  %3870 = vmatpush1.bf16.msra.mxu0 %v2702
  %3871 = vmatprep.subr.bf16.mxu0 %v2705
  %3872 = vmatpush1.bf16.msra.mxu0 %v2704
  %3873 = vmatprep.subr.bf16.mxu0 %v2707
  %3874 = vmatpush1.bf16.msra.mxu0 %v2706
  %3875 = vmatprep.subr.bf16.mxu0 %v2709
  %3876 = vmatpush1.bf16.msra.mxu0 %v2708
  %3877 = vmatprep.subr.bf16.mxu0 %v2711
  %3878 = vmatpush1.bf16.msra.mxu0 %v2710
  %3879 = vmatprep.subr.bf16.mxu0 %v2713
  %3880 = vmatpush1.bf16.msra.mxu0 %v2712
  %3881 = vmatprep.mubr.bf16.mxu0 %v693
  %3882 = vmatmul.mubr.bf16.gmra.mrb[0].mxu0 %v692
  %v3883 = vpop.f32.mrb[0].mxu0
  %v3884 = vadd.f32 %v3841, %v3883
  %v3885 = vpop.f32.mrb[0].mxu0
  %v3886 = vadd.f32 %v3843, %v3885
  %v3887 = vpop.f32.mrb[0].mxu0
  %v3888 = vadd.f32 %v3845, %v3887
  %v3889 = vpop.f32.mrb[0].mxu0
  %v3890 = vadd.f32 %v3847, %v3889
  %3891 = vdwg.mxu0
  %3892 = vmatprep.subr.bf16.mxu0 %v2715
  %3893 = vmatpush1.bf16.msra.mxu0 %v2714
  %3894 = vmatprep.subr.bf16.mxu0 %v2717
  %3895 = vmatpush1.bf16.msra.mxu0 %v2716
  %3896 = vmatprep.subr.bf16.mxu0 %v2719
  %3897 = vmatpush1.bf16.msra.mxu0 %v2718
  %3898 = vmatprep.subr.bf16.mxu0 %v2721
  %3899 = vmatpush1.bf16.msra.mxu0 %v2720
  %3900 = vmatprep.subr.bf16.mxu0 %v2723
  %3901 = vmatpush1.bf16.msra.mxu0 %v2722
  %3902 = vmatprep.subr.bf16.mxu0 %v2725
  %3903 = vmatpush1.bf16.msra.mxu0 %v2724
  %3904 = vmatprep.subr.bf16.mxu0 %v2727
  %3905 = vmatpush1.bf16.msra.mxu0 %v2726
  %3906 = vmatprep.subr.bf16.mxu0 %v2729
  %3907 = vmatpush1.bf16.msra.mxu0 %v2728
  %3908 = vmatprep.subr.bf16.mxu0 %v2731
  %3909 = vmatpush1.bf16.msra.mxu0 %v2730
  %3910 = vmatprep.subr.bf16.mxu0 %v2733
  %3911 = vmatpush1.bf16.msra.mxu0 %v2732
  %3912 = vmatprep.subr.bf16.mxu0 %v2735
  %3913 = vmatpush1.bf16.msra.mxu0 %v2734
  %3914 = vmatprep.subr.bf16.mxu0 %v2737
  %3915 = vmatpush1.bf16.msra.mxu0 %v2736
  %3916 = vmatprep.subr.bf16.mxu0 %v2739
  %3917 = vmatpush1.bf16.msra.mxu0 %v2738
  %3918 = vmatprep.subr.bf16.mxu0 %v2741
  %3919 = vmatpush1.bf16.msra.mxu0 %v2740
  %3920 = vmatprep.subr.bf16.mxu0 %v2743
  %3921 = vmatpush1.bf16.msra.mxu0 %v2742
  %3922 = vmatprep.subr.bf16.mxu0 %v2745
  %3923 = vmatpush1.bf16.msra.mxu0 %v2744
  %3924 = vmatprep.mubr.bf16.mxu0 %v695
  %3925 = vmatmul.mubr.bf16.gmra.mrb[0].mxu0 %v694
  %v3926 = vpop.f32.mrb[0].mxu0
  %v3927 = vadd.f32 %v3884, %v3926
  %v3928 = vpop.f32.mrb[0].mxu0
  %v3929 = vadd.f32 %v3886, %v3928
  %v3930 = vpop.f32.mrb[0].mxu0
  %v3931 = vadd.f32 %v3888, %v3930
  %v3932 = vpop.f32.mrb[0].mxu0
  %v3933 = vadd.f32 %v3890, %v3932
  %3934 = vdwg.mxu0
  %3935 = vmatprep.subr.bf16.mxu0 %v2747
  %3936 = vmatpush1.bf16.msra.mxu0 %v2746
  %3937 = vmatprep.subr.bf16.mxu0 %v2749
  %3938 = vmatpush1.bf16.msra.mxu0 %v2748
  %3939 = vmatprep.subr.bf16.mxu0 %v2751
  %3940 = vmatpush1.bf16.msra.mxu0 %v2750
  %3941 = vmatprep.subr.bf16.mxu0 %v2753
  %3942 = vmatpush1.bf16.msra.mxu0 %v2752
  %3943 = vmatprep.subr.bf16.mxu0 %v2755
  %3944 = vmatpush1.bf16.msra.mxu0 %v2754
  %3945 = vmatprep.subr.bf16.mxu0 %v2757
  %3946 = vmatpush1.bf16.msra.mxu0 %v2756
  %3947 = vmatprep.subr.bf16.mxu0 %v2759
  %3948 = vmatpush1.bf16.msra.mxu0 %v2758
  %3949 = vmatprep.subr.bf16.mxu0 %v2761
  %3950 = vmatpush1.bf16.msra.mxu0 %v2760
  %3951 = vmatprep.subr.bf16.mxu0 %v2763
  %3952 = vmatpush1.bf16.msra.mxu0 %v2762
  %3953 = vmatprep.subr.bf16.mxu0 %v2765
  %3954 = vmatpush1.bf16.msra.mxu0 %v2764
  %3955 = vmatprep.subr.bf16.mxu0 %v2767
  %3956 = vmatpush1.bf16.msra.mxu0 %v2766
  %3957 = vmatprep.subr.bf16.mxu0 %v2769
  %3958 = vmatpush1.bf16.msra.mxu0 %v2768
  %3959 = vmatprep.subr.bf16.mxu0 %v2771
  %3960 = vmatpush1.bf16.msra.mxu0 %v2770
  %3961 = vmatprep.subr.bf16.mxu0 %v2773
  %3962 = vmatpush1.bf16.msra.mxu0 %v2772
  %3963 = vmatprep.subr.bf16.mxu0 %v2775
  %3964 = vmatpush1.bf16.msra.mxu0 %v2774
  %3965 = vmatprep.subr.bf16.mxu0 %v2777
  %3966 = vmatpush1.bf16.msra.mxu0 %v2776
  %3967 = vmatprep.mubr.bf16.mxu0 %v697
  %3968 = vmatmul.mubr.bf16.gmra.mrb[0].mxu0 %v696
  %v3969 = vpop.f32.mrb[0].mxu0
  %v3970 = vadd.f32 %v3927, %v3969
  %v3971 = vpop.f32.mrb[0].mxu0
  %v3972 = vadd.f32 %v3929, %v3971
  %v3973 = vpop.f32.mrb[0].mxu0
  %v3974 = vadd.f32 %v3931, %v3973
  %v3975 = vpop.f32.mrb[0].mxu0
  %v3976 = vadd.f32 %v3933, %v3975
  %3977 = vdwg.mxu0
  %v3978 = vmax.f32 %v3970, 0.0
  %v3979 = vmax.f32 %v3972, 0.0
  %v3980 = vmax.f32 %v3974, 0.0
  %v3981 = vmax.f32 %v3976, 0.0
  %v3982 = vpack.c.bf16 %v3980, %v3978
  %v3983 = vpack.c.bf16 %v3981, %v3979
  %v3986 = vunpack.c.l.b16 %v3982
  %v3987 = vunpack.c.l.b16 %v3983
  %v3988 = vunpack.c.h.b16 %v3982
  %v3989 = vunpack.c.h.b16 %v3983
  %v3990 = vpack.c.b16 %v3987, %v3986
  %v3991 = vpack.c.b16 %v3989, %v3988
  %3994 = vst [vmem:[%s3] sm:$0xff] %v3990
  %3995 = vst [vmem:[%s3 + $0x8] sm:$0xff] %v3991
  // Predicated region
  $region14: #{_generator_forward_impl.11} parent=0 // pred_check
    _
  $region15: #{_generator_forward_impl.11} parent=0 // pred_check_branch
    %3997 = sbr.rel (0) target = $region17
  $region16: #{_generator_forward_impl.11} parent=0 // pred_region
    _
  $region17: #{_generator_forward_impl.11} parent=0 // pred_fallthru
    _
  // Predicated region
  $region18: #{_generator_forward_impl.11} parent=0 // pred_check
    _
  $region19: #{_generator_forward_impl.11} parent=0 // pred_check_branch
    %3999 = sbr.rel (0) target = $region21
  $region20: #{_generator_forward_impl.11} parent=0 // pred_region
    _
  $region21: #{_generator_forward_impl.11} parent=0 // pred_fallthru
    _

// kernel: _generator_forward_impl.13
$region0: #{_generator_forward_impl.13}
  #allocation0 [shape = 'u32[]', space=smem, size = 0x4, offset = 0x4, fixed_abs, tag = 'smem constant byte address 0x4 - core index']
  #allocation1 [shape = 'u32[144,128]{1,0:T(1,128)}', space=vmem, size = 0x12000, scoped, tag = 'internal scratch']
  %s0 = inlined_call_operand.vmem [shape: bf16[4,16,1024], index: 0, kind: input, shape index: {}]
  %s1 = inlined_call_operand.vmem [shape: bf16[4,1024,128], index: 1, kind: input, shape index: {}]
  %s2 = inlined_call_operand.vmem [shape: f32[1,128], index: 2, kind: input, shape index: {}]
  %s3 = inlined_call_operand.vmem [shape: bf16[4,16,128], index: 3, kind: output, shape index: {}]
  %s4 = sld [smem:[#allocation0]]
  $region45: #{_generator_forward_impl.13} parent=0
    _
  %s6 = ssub.s32 1, %s4
  %s7 = scalar_select 0, %s6, %s4
  loop: start=0, step=1, limit=6
  $region2: #{_generator_forward_impl.13} parent=0 // loop_pre_header
    _
  $region3: #{_generator_forward_impl.13} parent=0 // loop_header
    %s9 = sphi 0, %s13
    %p10 = scmp.ge.s32.totalorder %s9, 6
    %s16 = sphi 0, %s35
    %s17 = sphi 0, %s31
    %s18 = sphi 0, %s27
    %s19 = sphi 0, %s16
    %s20 = sphi 0, %s17
    %s21 = sphi 0, %s18
    %s22 = sphi 0, %s19
    %s23 = sphi 0, %s20
    %s24 = sphi 0, %s21
    %s40 = sphi 0, %s42
    %s43 = sphi 0, %s40
    %s44 = sphi 0, %s43
    %s60 = sphi 0, %s44
    %s68 = sphi 0, %s70
    %s71 = sphi 0, %s68
    %s72 = sphi 0, %s71
    %s88 = sphi 0, %s72
    %s94 = sphi 0, %s96
    %s97 = sphi 0, %s94
    %s98 = sphi 0, %s97
    %s114 = sphi 0, %s98
    %s124 = sphi 0, %s126
    %s127 = sphi 0, %s124
    %s128 = sphi 0, %s127
    %s144 = sphi 0, %s128
  $region4: #{_generator_forward_impl.13} parent=0 // loop_header_branch
    %12 = sbr.rel (%p10) target = $region8
  $region5: #{_generator_forward_impl.13} parent=0 // loop_body
    %s14 = ssub.s32 %s9, 1
    %s15 = ssub.s32 %s9, 2
    %s25 = sadd.s32 1, %s18
    %p26 = scmp.ge.s32.totalorder %s25, 1
    %s27 = scalar_select %p26, 0, %s25
    %s28 = sadd.s32 1, %s17
    %s29 = scalar_select %p26, %s28, %s17
    %p30 = scmp.ge.s32.totalorder %s29, 1
    %s31 = scalar_select %p30, 0, %s29
    %s32 = sadd.s32 1, %s16
    %s33 = scalar_select %p30, %s32, %s16
    %p34 = scmp.ge.s32.totalorder %s33, 4
    %s35 = scalar_select %p34, 0, %s33
    %s36 = ssub.s32 %s16, %s35
    %s37 = ssub.s32 %s17, %s31
    %s38 = sor.u32 %s36, %s37
    %p39 = scmp.eq.s32.totalorder %s38, 0
    %s41 = sadd.s32 %s40, 1
    %s42 = scalar_select %p39, %s40, %s41
    %p45 = pneg %p39
    %p46 = scmp.eq.s32.totalorder %s9, 3
    %p47 = por %p45, %p46
    %p48 = scmp.ne.s32.totalorder %s40, %s43
    %p49 = scmp.eq.s32.totalorder %s9, 0
    %p50 = por %p48, %p49
    %p51 = scmp.ne.s32.totalorder %s40, %s43
    %p52 = scmp.eq.s32.totalorder %s14, 3
    %p53 = por %p51, %p52
    %p54 = scmp.ne.s32.totalorder %s43, %s44
    %p55 = scmp.eq.s32.totalorder %s14, 0
    %p56 = por %p54, %p55
    %p57 = scmp.ne.s32.totalorder %s43, %s44
    %p58 = scmp.eq.s32.totalorder %s15, 3
    %p59 = por %p57, %p58
    %p61 = scmp.ne.s32.totalorder %s44, %s60
    %p62 = scmp.eq.s32.totalorder %s15, 0
    %p63 = por %p61, %p62
    %s64 = ssub.s32 %s16, %s35
    %s65 = ssub.s32 %s18, %s27
    %s66 = sor.u32 %s64, %s65
    %p67 = scmp.eq.s32.totalorder %s66, 0
    %s69 = sadd.s32 %s68, 1
    %s70 = scalar_select %p67, %s68, %s69
    %p73 = pneg %p67
    %p74 = scmp.eq.s32.totalorder %s9, 3
    %p75 = por %p73, %p74
    %p76 = scmp.ne.s32.totalorder %s68, %s71
    %p77 = scmp.eq.s32.totalorder %s9, 0
    %p78 = por %p76, %p77
    %p79 = scmp.ne.s32.totalorder %s68, %s71
    %p80 = scmp.eq.s32.totalorder %s14, 3
    %p81 = por %p79, %p80
    %p82 = scmp.ne.s32.totalorder %s71, %s72
    %p83 = scmp.eq.s32.totalorder %s14, 0
    %p84 = por %p82, %p83
    %p85 = scmp.ne.s32.totalorder %s71, %s72
    %p86 = scmp.eq.s32.totalorder %s15, 3
    %p87 = por %p85, %p86
    %p89 = scmp.ne.s32.totalorder %s72, %s88
    %p90 = scmp.eq.s32.totalorder %s15, 0
    %p91 = por %p89, %p90
    %s92 = ssub.s32 %s18, %s27
    %p93 = scmp.eq.s32.totalorder %s92, 0
    %s95 = sadd.s32 %s94, 1
    %s96 = scalar_select %p93, %s94, %s95
    %p99 = pneg %p93
    %p100 = scmp.eq.s32.totalorder %s9, 3
    %p101 = por %p99, %p100
    %p102 = scmp.ne.s32.totalorder %s94, %s97
    %p103 = scmp.eq.s32.totalorder %s9, 0
    %p104 = por %p102, %p103
    %p105 = scmp.ne.s32.totalorder %s94, %s97
    %p106 = scmp.eq.s32.totalorder %s14, 3
    %p107 = por %p105, %p106
    %p108 = scmp.ne.s32.totalorder %s97, %s98
    %p109 = scmp.eq.s32.totalorder %s14, 0
    %p110 = por %p108, %p109
    %p111 = scmp.ne.s32.totalorder %s97, %s98
    %p112 = scmp.eq.s32.totalorder %s15, 3
    %p113 = por %p111, %p112
    %p115 = scmp.ne.s32.totalorder %s98, %s114
    %p116 = scmp.eq.s32.totalorder %s15, 0
    %p117 = por %p115, %p116
    %s118 = ssub.s32 %s16, %s35
    %s119 = ssub.s32 %s17, %s31
    %s120 = sor.u32 %s118, %s119
    %s121 = ssub.s32 %s18, %s27
    %s122 = sor.u32 %s120, %s121
    %p123 = scmp.eq.s32.totalorder %s122, 0
    %s125 = sadd.s32 %s124, 1
    %s126 = scalar_select %p123, %s124, %s125
    %p129 = pneg %p123
    %p130 = scmp.eq.s32.totalorder %s9, 3
    %p131 = por %p129, %p130
    %p132 = scmp.ne.s32.totalorder %s124, %s127
    %p133 = scmp.eq.s32.totalorder %s9, 0
    %p134 = por %p132, %p133
    %p135 = scmp.ne.s32.totalorder %s124, %s127
    %p136 = scmp.eq.s32.totalorder %s14, 3
    %p137 = por %p135, %p136
    %p138 = scmp.ne.s32.totalorder %s127, %s128
    %p139 = scmp.eq.s32.totalorder %s14, 0
    %p140 = por %p138, %p139
    %p141 = scmp.ne.s32.totalorder %s127, %s128
    %p142 = scmp.eq.s32.totalorder %s15, 3
    %p143 = por %p141, %p142
    %p145 = scmp.ne.s32.totalorder %s128, %s144
    %p146 = scmp.eq.s32.totalorder %s15, 0
    %p147 = por %p145, %p146
    %p148 = scmp.le.s32.totalorder 1, %s9
    %p149 = scmp.lt.s32.totalorder %s9, 5
    %p150 = pnand %p148, %p149
    %p151 = pneg %p150
    // Predicated region
    $region9: #{_generator_forward_impl.13} parent=5 // pred_check
      _
    $region10: #{_generator_forward_impl.13} parent=5 // pred_check_branch
      %153 = sbr.rel (%p150) target = $region12
    $region11: #{_generator_forward_impl.13} parent=5 // pred_region
      %s154 = ssub.s32 %s9, 1
      // Predicated region
      $region13: #{_generator_forward_impl.13} parent=11 // pred_check
        %p155 = pneg %p110
      $region14: #{_generator_forward_impl.13} parent=11 // pred_check_branch
        %157 = sbr.rel (%p155) target = $region16
      $region15: #{_generator_forward_impl.13} parent=11 // pred_region
        %p158 = scmp.lt.s32.totalorder %s21, 0
        %s159 = scalar_select %p158, %s21, 0
        %s160 = scalar_lea.vmem %s2, %s159
      $region16: #{_generator_forward_impl.13} parent=11 // pred_fallthru
        _
    $region12: #{_generator_forward_impl.13} parent=5 // pred_fallthru
      _
    %p161 = scmp.lt.s32.totalorder %s9, 4
    // Predicated region
    $region17: #{_generator_forward_impl.13} parent=5 // pred_check
      %p162 = pneg %p161
    $region18: #{_generator_forward_impl.13} parent=5 // pred_check_branch
      %164 = sbr.rel (%p162) target = $region20
    $region19: #{_generator_forward_impl.13} parent=5 // pred_region
      // Predicated region
      $region21: #{_generator_forward_impl.13} parent=19 // pred_check
        %p165 = pneg %p50
      $region22: #{_generator_forward_impl.13} parent=19 // pred_check_branch
        %167 = sbr.rel (%p165) target = $region24
      $region23: #{_generator_forward_impl.13} parent=19 // pred_region
        %s168 = smul.u32 2, %s17
        %p169 = scmp.lt.s32.totalorder %s16, 3
        %s170 = scalar_select %p169, %s16, 3
        %p171 = scmp.lt.s32.totalorder %s168, 1
        %s172 = scalar_select %p171, %s168, 1
        %s173 = smul.addr %s172, 8
        %s174 = smul.addr %s170, 16
        %s175 = sadd.s32 %s173, %s174
        %s176 = smul.addr %s175, 4
        %s177 = scalar_lea.vmem %s0, %s176
        %s178 = smul.u32 2, %s17
      $region24: #{_generator_forward_impl.13} parent=19 // pred_fallthru
        _
      // Predicated region
      $region25: #{_generator_forward_impl.13} parent=19 // pred_check
        %p179 = pneg %p78
      $region26: #{_generator_forward_impl.13} parent=19 // pred_check_branch
        %181 = sbr.rel (%p179) target = $region28
      $region27: #{_generator_forward_impl.13} parent=19 // pred_region
        %p182 = scmp.lt.s32.totalorder %s16, 3
        %s183 = scalar_select %p182, %s16, 3
        %p184 = scmp.lt.s32.totalorder %s18, 0
        %s185 = scalar_select %p184, %s18, 0
        %s186 = smul.addr %s183, 128
        %s187 = sadd.s32 %s185, %s186
        %s188 = smul.addr %s187, 4
        %s189 = scalar_lea.vmem %s1, %s188
      $region28: #{_generator_forward_impl.13} parent=19 // pred_fallthru
        _
    $region20: #{_generator_forward_impl.13} parent=5 // pred_fallthru
      _
    %p190 = scmp.le.s32.totalorder 1, %s9
    %p191 = scmp.lt.s32.totalorder %s9, 5
    %p192 = pnand %p190, %p191
    %p193 = pneg %p192
    // Predicated region
    $region29: #{_generator_forward_impl.13} parent=5 // pred_check
      _
    $region30: #{_generator_forward_impl.13} parent=5 // pred_check_branch
      %195 = sbr.rel (%p192) target = $region32
    $region31: #{_generator_forward_impl.13} parent=5 // pred_region
      %s196 = ssub.s32 %s9, 1
      %s197 = smul.u32 2, %s20
      %p198 = scmp.lt.s32.totalorder %s19, 3
      %s199 = scalar_select %p198, %s19, 3
      %p200 = scmp.lt.s32.totalorder %s197, 1
      %s201 = scalar_select %p200, %s197, 1
      %s202 = smul.addr %s201, 8
      %s203 = smul.addr %s199, 16
      %s204 = sadd.s32 %s202, %s203
      %s205 = smul.addr %s204, 4
      %s206 = scalar_lea.vmem %s0, %s205
      %p207 = pneg %p56
      %p208 = pneg %p53
      %p209 = scmp.lt.s32.totalorder %s19, 3
      %s210 = scalar_select %p209, %s19, 3
      %p211 = scmp.lt.s32.totalorder %s21, 0
      %s212 = scalar_select %p211, %s21, 0
      %s213 = smul.addr %s210, 128
      %s214 = sadd.s32 %s212, %s213
      %s215 = smul.addr %s214, 4
      %s216 = scalar_lea.vmem %s1, %s215
      %p217 = pneg %p84
      %p218 = pneg %p81
      %p219 = scmp.lt.s32.totalorder %s21, 0
      %s220 = scalar_select %p219, %s21, 0
      %s221 = scalar_lea.vmem %s2, %s220
      %p222 = pneg %p110
      %p223 = pneg %p107
      %p224 = pneg %p140
      %p225 = pneg %p137
      %s226 = smul.u32 2, %s20
      %p227 = scmp.lt.s32.totalorder %s19, 3
      %s228 = scalar_select %p227, %s19, 3
      %p229 = scmp.lt.s32.totalorder %s226, 1
      %s230 = scalar_select %p229, %s226, 1
      %p231 = scmp.lt.s32.totalorder %s21, 0
      %s232 = scalar_select %p231, %s21, 0
      %s233 = sadd.s32 %s232, %s230
      %s234 = smul.addr %s228, 2
      %s235 = sadd.s32 %s233, %s234
      %s236 = smul.addr %s235, 4
      %s237 = scalar_lea.vmem %s3, %s236
      %s238 = smul.u32 2, %s20
      %p239 = scmp.lt.s32.totalorder %s19, 3
      %s240 = scalar_select %p239, %s19, 3
      %p241 = scmp.lt.s32.totalorder %s238, 1
      %s242 = scalar_select %p241, %s238, 1
      %s243 = smul.addr %s242, 8
      %s244 = smul.addr %s240, 16
      %s245 = sadd.s32 %s243, %s244
      %s246 = smul.addr %s245, 4
      %s247 = scalar_lea.vmem %s0, %s246
      %s248 = smul.u32 2, %s20
      %p249 = scmp.lt.s32.totalorder %s19, 3
      %s250 = scalar_select %p249, %s19, 3
      %p251 = scmp.lt.s32.totalorder %s21, 0
      %s252 = scalar_select %p251, %s21, 0
      %s253 = smul.addr %s250, 128
      %s254 = sadd.s32 %s252, %s253
      %s255 = smul.addr %s254, 4
      %s256 = scalar_lea.vmem %s1, %s255
      %p257 = scmp.lt.s32.totalorder %s21, 0
      %s258 = scalar_select %p257, %s21, 0
      %s259 = scalar_lea.vmem %s2, %s258
      %s260 = smul.u32 2, %s20
      %p261 = scmp.lt.s32.totalorder %s19, 3
      %s262 = scalar_select %p261, %s19, 3
      %p263 = scmp.lt.s32.totalorder %s260, 1
      %s264 = scalar_select %p263, %s260, 1
      %p265 = scmp.lt.s32.totalorder %s21, 0
      %s266 = scalar_select %p265, %s21, 0
      %s267 = sadd.s32 %s266, %s264
      %s268 = smul.addr %s262, 2
      %s269 = sadd.s32 %s267, %s268
      %s270 = smul.addr %s269, 4
      %s271 = scalar_lea.vmem %s3, %s270
      %s272 = smul.u32 2, %s20
      %v274 = vld [vmem:[%s247] sm:$0xff]
      %v275 = vld [vmem:[%s247 + $0x8] sm:$0xff]
      %v276 = vld [vmem:[%s247 + $0x10] sm:$0xff]
      %v277 = vld [vmem:[%s247 + $0x18] sm:$0xff]
      %v278 = vld [vmem:[%s247 + $0x20] sm:$0xff]
      %v279 = vld [vmem:[%s247 + $0x28] sm:$0xff]
      %v280 = vld [vmem:[%s247 + $0x30] sm:$0xff]
      %v281 = vld [vmem:[%s247 + $0x38] sm:$0xff]
      %v282 = vld [vmem:[%s256] sm:$0xf]
      %v283 = vld [vmem:[%s256 + $0x4] sm:$0xf]
      %v284 = vld [vmem:[%s256 + $0x8] sm:$0xf]
      %v285 = vld [vmem:[%s256 + $0xc] sm:$0xf]
      %v286 = vld [vmem:[%s256 + $0x10] sm:$0xf]
      %v287 = vld [vmem:[%s256 + $0x14] sm:$0xf]
      %v288 = vld [vmem:[%s256 + $0x18] sm:$0xf]
      %v289 = vld [vmem:[%s256 + $0x1c] sm:$0xf]
      %v290 = vld [vmem:[%s256 + $0x20] sm:$0xf]
      %v291 = vld [vmem:[%s256 + $0x24] sm:$0xf]
      %v292 = vld [vmem:[%s256 + $0x28] sm:$0xf]
      %v293 = vld [vmem:[%s256 + $0x2c] sm:$0xf]
      %v294 = vld [vmem:[%s256 + $0x30] sm:$0xf]
      %v295 = vld [vmem:[%s256 + $0x34] sm:$0xf]
      %v296 = vld [vmem:[%s256 + $0x38] sm:$0xf]
      %v297 = vld [vmem:[%s256 + $0x3c] sm:$0xf]
      %v298 = vld [vmem:[%s256 + $0x40] sm:$0xf]
      %v299 = vld [vmem:[%s256 + $0x44] sm:$0xf]
      %v300 = vld [vmem:[%s256 + $0x48] sm:$0xf]
      %v301 = vld [vmem:[%s256 + $0x4c] sm:$0xf]
      %v302 = vld [vmem:[%s256 + $0x50] sm:$0xf]
      %v303 = vld [vmem:[%s256 + $0x54] sm:$0xf]
      %v304 = vld [vmem:[%s256 + $0x58] sm:$0xf]
      %v305 = vld [vmem:[%s256 + $0x5c] sm:$0xf]
      %v306 = vld [vmem:[%s256 + $0x60] sm:$0xf]
      %v307 = vld [vmem:[%s256 + $0x64] sm:$0xf]
      %v308 = vld [vmem:[%s256 + $0x68] sm:$0xf]
      %v309 = vld [vmem:[%s256 + $0x6c] sm:$0xf]
      %v310 = vld [vmem:[%s256 + $0x70] sm:$0xf]
      %v311 = vld [vmem:[%s256 + $0x74] sm:$0xf]
      %v312 = vld [vmem:[%s256 + $0x78] sm:$0xf]
      %v313 = vld [vmem:[%s256 + $0x7c] sm:$0xf]
      %v314 = vld [vmem:[%s256 + $0x80] sm:$0xf]
      %v315 = vld [vmem:[%s256 + $0x84] sm:$0xf]
      %v316 = vld [vmem:[%s256 + $0x88] sm:$0xf]
      %v317 = vld [vmem:[%s256 + $0x8c] sm:$0xf]
      %v318 = vld [vmem:[%s256 + $0x90] sm:$0xf]
      %v319 = vld [vmem:[%s256 + $0x94] sm:$0xf]
      %v320 = vld [vmem:[%s256 + $0x98] sm:$0xf]
      %v321 = vld [vmem:[%s256 + $0x9c] sm:$0xf]
      %v322 = vld [vmem:[%s256 + $0xa0] sm:$0xf]
      %v323 = vld [vmem:[%s256 + $0xa4] sm:$0xf]
      %v324 = vld [vmem:[%s256 + $0xa8] sm:$0xf]
      %v325 = vld [vmem:[%s256 + $0xac] sm:$0xf]
      %v326 = vld [vmem:[%s256 + $0xb0] sm:$0xf]
      %v327 = vld [vmem:[%s256 + $0xb4] sm:$0xf]
      %v328 = vld [vmem:[%s256 + $0xb8] sm:$0xf]
      %v329 = vld [vmem:[%s256 + $0xbc] sm:$0xf]
      %v330 = vld [vmem:[%s256 + $0xc0] sm:$0xf]
      %v331 = vld [vmem:[%s256 + $0xc4] sm:$0xf]
      %v332 = vld [vmem:[%s256 + $0xc8] sm:$0xf]
      %v333 = vld [vmem:[%s256 + $0xcc] sm:$0xf]
      %v334 = vld [vmem:[%s256 + $0xd0] sm:$0xf]
      %v335 = vld [vmem:[%s256 + $0xd4] sm:$0xf]
      %v336 = vld [vmem:[%s256 + $0xd8] sm:$0xf]
      %v337 = vld [vmem:[%s256 + $0xdc] sm:$0xf]
      %v338 = vld [vmem:[%s256 + $0xe0] sm:$0xf]
      %v339 = vld [vmem:[%s256 + $0xe4] sm:$0xf]
      %v340 = vld [vmem:[%s256 + $0xe8] sm:$0xf]
      %v341 = vld [vmem:[%s256 + $0xec] sm:$0xf]
      %v342 = vld [vmem:[%s256 + $0xf0] sm:$0xf]
      %v343 = vld [vmem:[%s256 + $0xf4] sm:$0xf]
      %v344 = vld [vmem:[%s256 + $0xf8] sm:$0xf]
      %v345 = vld [vmem:[%s256 + $0xfc] sm:$0xf]
      %v346 = vld [vmem:[%s256 + $0x100] sm:$0xf]
      %v347 = vld [vmem:[%s256 + $0x104] sm:$0xf]
      %v348 = vld [vmem:[%s256 + $0x108] sm:$0xf]
      %v349 = vld [vmem:[%s256 + $0x10c] sm:$0xf]
      %v350 = vld [vmem:[%s256 + $0x110] sm:$0xf]
      %v351 = vld [vmem:[%s256 + $0x114] sm:$0xf]
      %v352 = vld [vmem:[%s256 + $0x118] sm:$0xf]
      %v353 = vld [vmem:[%s256 + $0x11c] sm:$0xf]
      %v354 = vld [vmem:[%s256 + $0x120] sm:$0xf]
      %v355 = vld [vmem:[%s256 + $0x124] sm:$0xf]
      %v356 = vld [vmem:[%s256 + $0x128] sm:$0xf]
      %v357 = vld [vmem:[%s256 + $0x12c] sm:$0xf]
      %v358 = vld [vmem:[%s256 + $0x130] sm:$0xf]
      %v359 = vld [vmem:[%s256 + $0x134] sm:$0xf]
      %v360 = vld [vmem:[%s256 + $0x138] sm:$0xf]
      %v361 = vld [vmem:[%s256 + $0x13c] sm:$0xf]
      %v362 = vld [vmem:[%s256 + $0x140] sm:$0xf]
      %v363 = vld [vmem:[%s256 + $0x144] sm:$0xf]
      %v364 = vld [vmem:[%s256 + $0x148] sm:$0xf]
      %v365 = vld [vmem:[%s256 + $0x14c] sm:$0xf]
      %v366 = vld [vmem:[%s256 + $0x150] sm:$0xf]
      %v367 = vld [vmem:[%s256 + $0x154] sm:$0xf]
      %v368 = vld [vmem:[%s256 + $0x158] sm:$0xf]
      %v369 = vld [vmem:[%s256 + $0x15c] sm:$0xf]
      %v370 = vld [vmem:[%s256 + $0x160] sm:$0xf]
      %v371 = vld [vmem:[%s256 + $0x164] sm:$0xf]
      %v372 = vld [vmem:[%s256 + $0x168] sm:$0xf]
      %v373 = vld [vmem:[%s256 + $0x16c] sm:$0xf]
      %v374 = vld [vmem:[%s256 + $0x170] sm:$0xf]
      %v375 = vld [vmem:[%s256 + $0x174] sm:$0xf]
      %v376 = vld [vmem:[%s256 + $0x178] sm:$0xf]
      %v377 = vld [vmem:[%s256 + $0x17c] sm:$0xf]
      %v378 = vld [vmem:[%s256 + $0x180] sm:$0xf]
      %v379 = vld [vmem:[%s256 + $0x184] sm:$0xf]
      %v380 = vld [vmem:[%s256 + $0x188] sm:$0xf]
      %v381 = vld [vmem:[%s256 + $0x18c] sm:$0xf]
      %v382 = vld [vmem:[%s256 + $0x190] sm:$0xf]
      %v383 = vld [vmem:[%s256 + $0x194] sm:$0xf]
      %v384 = vld [vmem:[%s256 + $0x198] sm:$0xf]
      %v385 = vld [vmem:[%s256 + $0x19c] sm:$0xf]
      %v386 = vld [vmem:[%s256 + $0x1a0] sm:$0xf]
      %v387 = vld [vmem:[%s256 + $0x1a4] sm:$0xf]
      %v388 = vld [vmem:[%s256 + $0x1a8] sm:$0xf]
      %v389 = vld [vmem:[%s256 + $0x1ac] sm:$0xf]
      %v390 = vld [vmem:[%s256 + $0x1b0] sm:$0xf]
      %v391 = vld [vmem:[%s256 + $0x1b4] sm:$0xf]
      %v392 = vld [vmem:[%s256 + $0x1b8] sm:$0xf]
      %v393 = vld [vmem:[%s256 + $0x1bc] sm:$0xf]
      %v394 = vld [vmem:[%s256 + $0x1c0] sm:$0xf]
      %v395 = vld [vmem:[%s256 + $0x1c4] sm:$0xf]
      %v396 = vld [vmem:[%s256 + $0x1c8] sm:$0xf]
      %v397 = vld [vmem:[%s256 + $0x1cc] sm:$0xf]
      %v398 = vld [vmem:[%s256 + $0x1d0] sm:$0xf]
      %v399 = vld [vmem:[%s256 + $0x1d4] sm:$0xf]
      %v400 = vld [vmem:[%s256 + $0x1d8] sm:$0xf]
      %v401 = vld [vmem:[%s256 + $0x1dc] sm:$0xf]
      %v402 = vld [vmem:[%s256 + $0x1e0] sm:$0xf]
      %v403 = vld [vmem:[%s256 + $0x1e4] sm:$0xf]
      %v404 = vld [vmem:[%s256 + $0x1e8] sm:$0xf]
      %v405 = vld [vmem:[%s256 + $0x1ec] sm:$0xf]
      %v406 = vld [vmem:[%s256 + $0x1f0] sm:$0xf]
      %v407 = vld [vmem:[%s256 + $0x1f4] sm:$0xf]
      %v408 = vld [vmem:[%s256 + $0x1f8] sm:$0xf]
      %v409 = vld [vmem:[%s256 + $0x1fc] sm:$0xf]
      %v410 = vld [vmem:[%s259] sm:$0x1]
      %v412 = vlaneseq
      %v413 = vshrl.u32 %v412, 7
      %v414 = vsub.s32 0, %v413
      %v415 = vrot.slane %v410, %v414
      %v425 = vunpack.c.l.b16 %v274
      %v426 = vunpack.c.h.b16 %v274
      %v427 = vunpack.c.l.b16 %v275
      %v428 = vunpack.c.h.b16 %v275
      %v429 = vunpack.c.l.b16 %v276
      %v430 = vunpack.c.h.b16 %v276
      %v431 = vunpack.c.l.b16 %v277
      %v432 = vunpack.c.h.b16 %v277
      %v433 = vunpack.c.l.b16 %v278
      %v434 = vunpack.c.h.b16 %v278
      %v435 = vunpack.c.l.b16 %v279
      %v436 = vunpack.c.h.b16 %v279
      %v437 = vunpack.c.l.b16 %v280
      %v438 = vunpack.c.h.b16 %v280
      %v439 = vunpack.c.l.b16 %v281
      %v440 = vunpack.c.h.b16 %v281
      %v441 = vpack.c.b16 %v433, %v425
      %v442 = vpack.c.b16 %v434, %v426
      %v443 = vpack.c.b16 %v435, %v427
      %v444 = vpack.c.b16 %v436, %v428
      %v445 = vpack.c.b16 %v437, %v429
      %v446 = vpack.c.b16 %v438, %v430
      %v447 = vpack.c.b16 %v439, %v431
      %v448 = vpack.c.b16 %v440, %v432
      %v585 = vunpack.c.l.b16 %v282
      %v586 = vunpack.c.l.b16 %v283
      %v587 = vunpack.c.l.b16 %v284
      %v588 = vunpack.c.l.b16 %v285
      %v589 = vunpack.c.l.b16 %v286
      %v590 = vunpack.c.l.b16 %v287
      %v591 = vunpack.c.l.b16 %v288
      %v592 = vunpack.c.l.b16 %v289
      %v593 = vunpack.c.l.b16 %v290
      %v594 = vunpack.c.l.b16 %v291
      %v595 = vunpack.c.l.b16 %v292
      %v596 = vunpack.c.l.b16 %v293
      %v597 = vunpack.c.l.b16 %v294
      %v598 = vunpack.c.l.b16 %v295
      %v599 = vunpack.c.l.b16 %v296
      %v600 = vunpack.c.l.b16 %v297
      %v601 = vunpack.c.l.b16 %v298
      %v602 = vunpack.c.l.b16 %v299
      %v603 = vunpack.c.l.b16 %v300
      %v604 = vunpack.c.l.b16 %v301
      %v605 = vunpack.c.l.b16 %v302
      %v606 = vunpack.c.l.b16 %v303
      %v607 = vunpack.c.l.b16 %v304
      %v608 = vunpack.c.l.b16 %v305
      %v609 = vunpack.c.l.b16 %v306
      %v610 = vunpack.c.l.b16 %v307
      %v611 = vunpack.c.l.b16 %v308
      %v612 = vunpack.c.l.b16 %v309
      %v613 = vunpack.c.l.b16 %v310
      %v614 = vunpack.c.l.b16 %v311
      %v615 = vunpack.c.l.b16 %v312
      %v616 = vunpack.c.l.b16 %v313
      %v617 = vunpack.c.l.b16 %v314
      %v618 = vunpack.c.l.b16 %v315
      %v619 = vunpack.c.l.b16 %v316
      %v620 = vunpack.c.l.b16 %v317
      %v621 = vunpack.c.l.b16 %v318
      %v622 = vunpack.c.l.b16 %v319
      %v623 = vunpack.c.l.b16 %v320
      %v624 = vunpack.c.l.b16 %v321
      %v625 = vunpack.c.l.b16 %v322
      %v626 = vunpack.c.l.b16 %v323
      %v627 = vunpack.c.l.b16 %v324
      %v628 = vunpack.c.l.b16 %v325
      %v629 = vunpack.c.l.b16 %v326
      %v630 = vunpack.c.l.b16 %v327
      %v631 = vunpack.c.l.b16 %v328
      %v632 = vunpack.c.l.b16 %v329
      %v633 = vunpack.c.l.b16 %v330
      %v634 = vunpack.c.l.b16 %v331
      %v635 = vunpack.c.l.b16 %v332
      %v636 = vunpack.c.l.b16 %v333
      %v637 = vunpack.c.l.b16 %v334
      %v638 = vunpack.c.l.b16 %v335
      %v639 = vunpack.c.l.b16 %v336
      %v640 = vunpack.c.l.b16 %v337
      %v641 = vunpack.c.l.b16 %v338
      %v642 = vunpack.c.l.b16 %v339
      %v643 = vunpack.c.l.b16 %v340
      %v644 = vunpack.c.l.b16 %v341
      %v645 = vunpack.c.l.b16 %v342
      %v646 = vunpack.c.l.b16 %v343
      %v647 = vunpack.c.l.b16 %v344
      %v648 = vunpack.c.l.b16 %v345
      %v649 = vunpack.c.l.b16 %v346
      %v650 = vunpack.c.l.b16 %v347
      %v651 = vunpack.c.l.b16 %v348
      %v652 = vunpack.c.l.b16 %v349
      %v653 = vunpack.c.l.b16 %v350
      %v654 = vunpack.c.l.b16 %v351
      %v655 = vunpack.c.l.b16 %v352
      %v656 = vunpack.c.l.b16 %v353
      %v657 = vunpack.c.l.b16 %v354
      %v658 = vunpack.c.l.b16 %v355
      %v659 = vunpack.c.l.b16 %v356
      %v660 = vunpack.c.l.b16 %v357
      %v661 = vunpack.c.l.b16 %v358
      %v662 = vunpack.c.l.b16 %v359
      %v663 = vunpack.c.l.b16 %v360
      %v664 = vunpack.c.l.b16 %v361
      %v665 = vunpack.c.l.b16 %v362
      %v666 = vunpack.c.l.b16 %v363
      %v667 = vunpack.c.l.b16 %v364
      %v668 = vunpack.c.l.b16 %v365
      %v669 = vunpack.c.l.b16 %v366
      %v670 = vunpack.c.l.b16 %v367
      %v671 = vunpack.c.l.b16 %v368
      %v672 = vunpack.c.l.b16 %v369
      %v673 = vunpack.c.l.b16 %v370
      %v674 = vunpack.c.l.b16 %v371
      %v675 = vunpack.c.l.b16 %v372
      %v676 = vunpack.c.l.b16 %v373
      %v677 = vunpack.c.l.b16 %v374
      %v678 = vunpack.c.l.b16 %v375
      %v679 = vunpack.c.l.b16 %v376
      %v680 = vunpack.c.l.b16 %v377
      %v681 = vunpack.c.l.b16 %v378
      %v682 = vunpack.c.l.b16 %v379
      %v683 = vunpack.c.l.b16 %v380
      %v684 = vunpack.c.l.b16 %v381
      %v685 = vunpack.c.l.b16 %v382
      %v686 = vunpack.c.l.b16 %v383
      %v687 = vunpack.c.l.b16 %v384
      %v688 = vunpack.c.l.b16 %v385
      %v689 = vunpack.c.l.b16 %v386
      %v690 = vunpack.c.l.b16 %v387
      %v691 = vunpack.c.l.b16 %v388
      %v692 = vunpack.c.l.b16 %v389
      %v693 = vunpack.c.l.b16 %v390
      %v694 = vunpack.c.l.b16 %v391
      %v695 = vunpack.c.l.b16 %v392
      %v696 = vunpack.c.l.b16 %v393
      %v697 = vunpack.c.l.b16 %v394
      %v698 = vunpack.c.l.b16 %v395
      %v699 = vunpack.c.l.b16 %v396
      %v700 = vunpack.c.l.b16 %v397
      %v701 = vunpack.c.l.b16 %v398
      %v702 = vunpack.c.l.b16 %v399
      %v703 = vunpack.c.l.b16 %v400
      %v704 = vunpack.c.l.b16 %v401
      %v705 = vunpack.c.l.b16 %v402
      %v706 = vunpack.c.l.b16 %v403
      %v707 = vunpack.c.l.b16 %v404
      %v708 = vunpack.c.l.b16 %v405
      %v709 = vunpack.c.l.b16 %v406
      %v710 = vunpack.c.l.b16 %v407
      %v711 = vunpack.c.l.b16 %v408
      %v712 = vunpack.c.l.b16 %v409
      %v713 = vpack.c.b16 %v586, %v585
      %v714 = vpack.c.b16 %v588, %v587
      %v715 = vpack.c.b16 %v590, %v589
      %v716 = vpack.c.b16 %v592, %v591
      %v717 = vpack.c.b16 %v594, %v593
      %v718 = vpack.c.b16 %v596, %v595
      %v719 = vpack.c.b16 %v598, %v597
      %v720 = vpack.c.b16 %v600, %v599
      %v721 = vpack.c.b16 %v602, %v601
      %v722 = vpack.c.b16 %v604, %v603
      %v723 = vpack.c.b16 %v606, %v605
      %v724 = vpack.c.b16 %v608, %v607
      %v725 = vpack.c.b16 %v610, %v609
      %v726 = vpack.c.b16 %v612, %v611
      %v727 = vpack.c.b16 %v614, %v613
      %v728 = vpack.c.b16 %v616, %v615
      %v729 = vpack.c.b16 %v618, %v617
      %v730 = vpack.c.b16 %v620, %v619
      %v731 = vpack.c.b16 %v622, %v621
      %v732 = vpack.c.b16 %v624, %v623
      %v733 = vpack.c.b16 %v626, %v625
      %v734 = vpack.c.b16 %v628, %v627
      %v735 = vpack.c.b16 %v630, %v629
      %v736 = vpack.c.b16 %v632, %v631
      %v737 = vpack.c.b16 %v634, %v633
      %v738 = vpack.c.b16 %v636, %v635
      %v739 = vpack.c.b16 %v638, %v637
      %v740 = vpack.c.b16 %v640, %v639
      %v741 = vpack.c.b16 %v642, %v641
      %v742 = vpack.c.b16 %v644, %v643
      %v743 = vpack.c.b16 %v646, %v645
      %v744 = vpack.c.b16 %v648, %v647
      %v745 = vpack.c.b16 %v650, %v649
      %v746 = vpack.c.b16 %v652, %v651
      %v747 = vpack.c.b16 %v654, %v653
      %v748 = vpack.c.b16 %v656, %v655
      %v749 = vpack.c.b16 %v658, %v657
      %v750 = vpack.c.b16 %v660, %v659
      %v751 = vpack.c.b16 %v662, %v661
      %v752 = vpack.c.b16 %v664, %v663
      %v753 = vpack.c.b16 %v666, %v665
      %v754 = vpack.c.b16 %v668, %v667
      %v755 = vpack.c.b16 %v670, %v669
      %v756 = vpack.c.b16 %v672, %v671
      %v757 = vpack.c.b16 %v674, %v673
      %v758 = vpack.c.b16 %v676, %v675
      %v759 = vpack.c.b16 %v678, %v677
      %v760 = vpack.c.b16 %v680, %v679
      %v761 = vpack.c.b16 %v682, %v681
      %v762 = vpack.c.b16 %v684, %v683
      %v763 = vpack.c.b16 %v686, %v685
      %v764 = vpack.c.b16 %v688, %v687
      %v765 = vpack.c.b16 %v690, %v689
      %v766 = vpack.c.b16 %v692, %v691
      %v767 = vpack.c.b16 %v694, %v693
      %v768 = vpack.c.b16 %v696, %v695
      %v769 = vpack.c.b16 %v698, %v697
      %v770 = vpack.c.b16 %v700, %v699
      %v771 = vpack.c.b16 %v702, %v701
      %v772 = vpack.c.b16 %v704, %v703
      %v773 = vpack.c.b16 %v706, %v705
      %v774 = vpack.c.b16 %v708, %v707
      %v775 = vpack.c.b16 %v710, %v709
      %v776 = vpack.c.b16 %v712, %v711
      %841 = vmatprep.subr.bf16.mxu0 0
      %842 = vmatpush1.bf16.msra.mxu0 %v713
      %843 = vmatprep.subr.bf16.mxu0 0
      %844 = vmatpush1.bf16.msra.mxu0 %v714
      %845 = vmatprep.subr.bf16.mxu0 0
      %846 = vmatpush1.bf16.msra.mxu0 %v715
      %847 = vmatprep.subr.bf16.mxu0 0
      %848 = vmatpush1.bf16.msra.mxu0 %v716
      %849 = vmatprep.subr.bf16.mxu0 0
      %850 = vmatpush1.bf16.msra.mxu0 %v717
      %851 = vmatprep.subr.bf16.mxu0 0
      %852 = vmatpush1.bf16.msra.mxu0 %v718
      %853 = vmatprep.subr.bf16.mxu0 0
      %854 = vmatpush1.bf16.msra.mxu0 %v719
      %855 = vmatprep.subr.bf16.mxu0 0
      %856 = vmatpush1.bf16.msra.mxu0 %v720
      %857 = vmatprep.subr.bf16.mxu0 0
      %858 = vmatpush1.bf16.msra.mxu0 %v721
      %859 = vmatprep.subr.bf16.mxu0 0
      %860 = vmatpush1.bf16.msra.mxu0 %v722
      %861 = vmatprep.subr.bf16.mxu0 0
      %862 = vmatpush1.bf16.msra.mxu0 %v723
      %863 = vmatprep.subr.bf16.mxu0 0
      %864 = vmatpush1.bf16.msra.mxu0 %v724
      %865 = vmatprep.subr.bf16.mxu0 0
      %866 = vmatpush1.bf16.msra.mxu0 %v725
      %867 = vmatprep.subr.bf16.mxu0 0
      %868 = vmatpush1.bf16.msra.mxu0 %v726
      %869 = vmatprep.subr.bf16.mxu0 0
      %870 = vmatpush1.bf16.msra.mxu0 %v727
      %871 = vmatprep.subr.bf16.mxu0 0
      %872 = vmatpush1.bf16.msra.mxu0 %v728
      %873 = vmatprep.mubr.bf16.mxu0 %v442
      %874 = vmatmul.mubr.bf16.gmra.mrb[0].mxu0 %v441
      %v875 = vpop.f32.mrb[0].mxu0
      %v876 = vadd.f32 %v415, %v875
      %v877 = vpop.f32.mrb[0].mxu0
      %v878 = vpop.f32.mrb[0].mxu0
      %v879 = vadd.f32 %v415, %v878
      %v880 = vpop.f32.mrb[0].mxu0
      %881 = vdwg.mxu0
      %882 = vmatprep.subr.bf16.mxu0 0
      %883 = vmatpush1.bf16.msra.mxu0 %v729
      %884 = vmatprep.subr.bf16.mxu0 0
      %885 = vmatpush1.bf16.msra.mxu0 %v730
      %886 = vmatprep.subr.bf16.mxu0 0
      %887 = vmatpush1.bf16.msra.mxu0 %v731
      %888 = vmatprep.subr.bf16.mxu0 0
      %889 = vmatpush1.bf16.msra.mxu0 %v732
      %890 = vmatprep.subr.bf16.mxu0 0
      %891 = vmatpush1.bf16.msra.mxu0 %v733
      %892 = vmatprep.subr.bf16.mxu0 0
      %893 = vmatpush1.bf16.msra.mxu0 %v734
      %894 = vmatprep.subr.bf16.mxu0 0
      %895 = vmatpush1.bf16.msra.mxu0 %v735
      %896 = vmatprep.subr.bf16.mxu0 0
      %897 = vmatpush1.bf16.msra.mxu0 %v736
      %898 = vmatprep.subr.bf16.mxu0 0
      %899 = vmatpush1.bf16.msra.mxu0 %v737
      %900 = vmatprep.subr.bf16.mxu0 0
      %901 = vmatpush1.bf16.msra.mxu0 %v738
      %902 = vmatprep.subr.bf16.mxu0 0
      %903 = vmatpush1.bf16.msra.mxu0 %v739
      %904 = vmatprep.subr.bf16.mxu0 0
      %905 = vmatpush1.bf16.msra.mxu0 %v740
      %906 = vmatprep.subr.bf16.mxu0 0
      %907 = vmatpush1.bf16.msra.mxu0 %v741
      %908 = vmatprep.subr.bf16.mxu0 0
      %909 = vmatpush1.bf16.msra.mxu0 %v742
      %910 = vmatprep.subr.bf16.mxu0 0
      %911 = vmatpush1.bf16.msra.mxu0 %v743
      %912 = vmatprep.subr.bf16.mxu0 0
      %913 = vmatpush1.bf16.msra.mxu0 %v744
      %914 = vmatprep.mubr.bf16.mxu0 %v444
      %915 = vmatmul.mubr.bf16.gmra.mrb[0].mxu0 %v443
      %v916 = vpop.f32.mrb[0].mxu0
      %v917 = vadd.f32 %v876, %v916
      %v918 = vpop.f32.mrb[0].mxu0
      %v919 = vpop.f32.mrb[0].mxu0
      %v920 = vadd.f32 %v879, %v919
      %v921 = vpop.f32.mrb[0].mxu0
      %922 = vdwg.mxu0
      %923 = vmatprep.subr.bf16.mxu0 0
      %924 = vmatpush1.bf16.msra.mxu0 %v745
      %925 = vmatprep.subr.bf16.mxu0 0
      %926 = vmatpush1.bf16.msra.mxu0 %v746
      %927 = vmatprep.subr.bf16.mxu0 0
      %928 = vmatpush1.bf16.msra.mxu0 %v747
      %929 = vmatprep.subr.bf16.mxu0 0
      %930 = vmatpush1.bf16.msra.mxu0 %v748
      %931 = vmatprep.subr.bf16.mxu0 0
      %932 = vmatpush1.bf16.msra.mxu0 %v749
      %933 = vmatprep.subr.bf16.mxu0 0
      %934 = vmatpush1.bf16.msra.mxu0 %v750
      %935 = vmatprep.subr.bf16.mxu0 0
      %936 = vmatpush1.bf16.msra.mxu0 %v751
      %937 = vmatprep.subr.bf16.mxu0 0
      %938 = vmatpush1.bf16.msra.mxu0 %v752
      %939 = vmatprep.subr.bf16.mxu0 0
      %940 = vmatpush1.bf16.msra.mxu0 %v753
      %941 = vmatprep.subr.bf16.mxu0 0
      %942 = vmatpush1.bf16.msra.mxu0 %v754
      %943 = vmatprep.subr.bf16.mxu0 0
      %944 = vmatpush1.bf16.msra.mxu0 %v755
      %945 = vmatprep.subr.bf16.mxu0 0
      %946 = vmatpush1.bf16.msra.mxu0 %v756
      %947 = vmatprep.subr.bf16.mxu0 0
      %948 = vmatpush1.bf16.msra.mxu0 %v757
      %949 = vmatprep.subr.bf16.mxu0 0
      %950 = vmatpush1.bf16.msra.mxu0 %v758
      %951 = vmatprep.subr.bf16.mxu0 0
      %952 = vmatpush1.bf16.msra.mxu0 %v759
      %953 = vmatprep.subr.bf16.mxu0 0
      %954 = vmatpush1.bf16.msra.mxu0 %v760
      %955 = vmatprep.mubr.bf16.mxu0 %v446
      %956 = vmatmul.mubr.bf16.gmra.mrb[0].mxu0 %v445
      %v957 = vpop.f32.mrb[0].mxu0
      %v958 = vadd.f32 %v917, %v957
      %v959 = vpop.f32.mrb[0].mxu0
      %v960 = vpop.f32.mrb[0].mxu0
      %v961 = vadd.f32 %v920, %v960
      %v962 = vpop.f32.mrb[0].mxu0
      %963 = vdwg.mxu0
      %964 = vmatprep.subr.bf16.mxu0 0
      %965 = vmatpush1.bf16.msra.mxu0 %v761
      %966 = vmatprep.subr.bf16.mxu0 0
      %967 = vmatpush1.bf16.msra.mxu0 %v762
      %968 = vmatprep.subr.bf16.mxu0 0
      %969 = vmatpush1.bf16.msra.mxu0 %v763
      %970 = vmatprep.subr.bf16.mxu0 0
      %971 = vmatpush1.bf16.msra.mxu0 %v764
      %972 = vmatprep.subr.bf16.mxu0 0
      %973 = vmatpush1.bf16.msra.mxu0 %v765
      %974 = vmatprep.subr.bf16.mxu0 0
      %975 = vmatpush1.bf16.msra.mxu0 %v766
      %976 = vmatprep.subr.bf16.mxu0 0
      %977 = vmatpush1.bf16.msra.mxu0 %v767
      %978 = vmatprep.subr.bf16.mxu0 0
      %979 = vmatpush1.bf16.msra.mxu0 %v768
      %980 = vmatprep.subr.bf16.mxu0 0
      %981 = vmatpush1.bf16.msra.mxu0 %v769
      %982 = vmatprep.subr.bf16.mxu0 0
      %983 = vmatpush1.bf16.msra.mxu0 %v770
      %984 = vmatprep.subr.bf16.mxu0 0
      %985 = vmatpush1.bf16.msra.mxu0 %v771
      %986 = vmatprep.subr.bf16.mxu0 0
      %987 = vmatpush1.bf16.msra.mxu0 %v772
      %988 = vmatprep.subr.bf16.mxu0 0
      %989 = vmatpush1.bf16.msra.mxu0 %v773
      %990 = vmatprep.subr.bf16.mxu0 0
      %991 = vmatpush1.bf16.msra.mxu0 %v774
      %992 = vmatprep.subr.bf16.mxu0 0
      %993 = vmatpush1.bf16.msra.mxu0 %v775
      %994 = vmatprep.subr.bf16.mxu0 0
      %995 = vmatpush1.bf16.msra.mxu0 %v776
      %996 = vmatprep.mubr.bf16.mxu0 %v448
      %997 = vmatmul.mubr.bf16.gmra.mrb[0].mxu0 %v447
      %v998 = vpop.f32.mrb[0].mxu0
      %v999 = vadd.f32 %v958, %v998
      %v1000 = vpop.f32.mrb[0].mxu0
      %v1001 = vpop.f32.mrb[0].mxu0
      %v1002 = vadd.f32 %v961, %v1001
      %v1003 = vpop.f32.mrb[0].mxu0
      %1004 = vdwg.mxu0
      %v1005 = vmax.f32 %v999, 0.0
      %v1006 = vmax.f32 %v1002, 0.0
      %v1007 = vpack.c.bf16 %v1006, %v1005
      %v1009 = vunpack.c.l.b16 %v1007
      %v1010 = vunpack.c.h.b16 %v1007
      %v1011 = vpack.c.b16 %v1009, %v1009
      %v1012 = vpack.c.b16 %v1010, %v1010
      %1015 = vst [vmem:[%s271] sm:$0xf] %v1011
      %1016 = vst [vmem:[%s271 + $0x4] sm:$0xf] %v1012
      %s1017 = smul.u32 2, %s20
      %p1018 = scmp.lt.s32.totalorder %s19, 3
      %s1019 = scalar_select %p1018, %s19, 3
      %p1020 = scmp.lt.s32.totalorder %s1017, 1
      %s1021 = scalar_select %p1020, %s1017, 1
      %p1022 = scmp.lt.s32.totalorder %s21, 0
      %s1023 = scalar_select %p1022, %s21, 0
      %s1024 = sadd.s32 %s1023, %s1021
      %s1025 = smul.addr %s1019, 2
      %s1026 = sadd.s32 %s1024, %s1025
      %s1027 = smul.addr %s1026, 4
      %s1028 = scalar_lea.vmem %s3, %s1027
      // Predicated region
      $region33: #{_generator_forward_impl.13} parent=31 // pred_check
        %p1029 = pneg %p137
      $region34: #{_generator_forward_impl.13} parent=31 // pred_check_branch
        %1031 = sbr.rel (%p1029) target = $region36
      $region35: #{_generator_forward_impl.13} parent=31 // pred_region
        %s1032 = smul.u32 2, %s20
      $region36: #{_generator_forward_impl.13} parent=31 // pred_fallthru
        _
    $region32: #{_generator_forward_impl.13} parent=5 // pred_fallthru
      _
    %p1033 = scmp.le.s32.totalorder 2, %s9
    // Predicated region
    $region37: #{_generator_forward_impl.13} parent=5 // pred_check
      %p1034 = pneg %p1033
    $region38: #{_generator_forward_impl.13} parent=5 // pred_check_branch
      %1036 = sbr.rel (%p1034) target = $region40
    $region39: #{_generator_forward_impl.13} parent=5 // pred_region
      %s1037 = ssub.s32 %s9, 2
      // Predicated region
      $region41: #{_generator_forward_impl.13} parent=39 // pred_check
        %p1038 = pneg %p143
      $region42: #{_generator_forward_impl.13} parent=39 // pred_check_branch
        %1040 = sbr.rel (%p1038) target = $region44
      $region43: #{_generator_forward_impl.13} parent=39 // pred_region
        %s1041 = smul.u32 2, %s23
        %p1042 = scmp.lt.s32.totalorder %s22, 3
        %s1043 = scalar_select %p1042, %s22, 3
        %p1044 = scmp.lt.s32.totalorder %s1041, 1
        %s1045 = scalar_select %p1044, %s1041, 1
        %p1046 = scmp.lt.s32.totalorder %s24, 0
        %s1047 = scalar_select %p1046, %s24, 0
        %s1048 = sadd.s32 %s1047, %s1045
        %s1049 = smul.addr %s1043, 2
        %s1050 = sadd.s32 %s1048, %s1049
        %s1051 = smul.addr %s1050, 4
        %s1052 = scalar_lea.vmem %s3, %s1051
      $region44: #{_generator_forward_impl.13} parent=39 // pred_fallthru
        _
    $region40: #{_generator_forward_impl.13} parent=5 // pred_fallthru
      _
  $region6: #{_generator_forward_impl.13} parent=0 // loop_footer
    %s13 = sadd.s32 1, %s9
  $region7: #{_generator_forward_impl.13} parent=0 // loop_footer_branch
    %8 = sbr.rel target = $region3
  $region8: #{_generator_forward_impl.13} parent=0 // loop_exit
    _

// kernel: _generator_forward_impl.14
$region0: #{_generator_forward_impl.14}
  #allocation0 [shape = 'u32[]', space=smem, size = 0x4, offset = 0x4, fixed_abs, tag = 'smem constant byte address 0x4 - core index']
  #allocation1 [shape = 'u32[144,128]{1,0:T(1,128)}', space=vmem, size = 0x12000, scoped, tag = 'internal scratch']
  %s0 = inlined_call_operand.vmem [shape: bf16[4,32,512], index: 0, kind: input, shape index: {}]
  %s1 = inlined_call_operand.vmem [shape: bf16[4,512,128], index: 1, kind: input, shape index: {}]
  %s2 = inlined_call_operand.vmem [shape: f32[1,128], index: 2, kind: input, shape index: {}]
  %s3 = inlined_call_operand.vmem [shape: bf16[4,32,128], index: 3, kind: output, shape index: {}]
  %s4 = sld [smem:[#allocation0]]
  $region45: #{_generator_forward_impl.14} parent=0
    _
  %s6 = ssub.s32 1, %s4
  %s7 = scalar_select 0, %s6, %s4
  loop: start=0, step=1, limit=6
  $region2: #{_generator_forward_impl.14} parent=0 // loop_pre_header
    _
  $region3: #{_generator_forward_impl.14} parent=0 // loop_header
    %s9 = sphi 0, %s13
    %p10 = scmp.ge.s32.totalorder %s9, 6
    %s16 = sphi 0, %s35
    %s17 = sphi 0, %s31
    %s18 = sphi 0, %s27
    %s19 = sphi 0, %s16
    %s20 = sphi 0, %s17
    %s21 = sphi 0, %s18
    %s22 = sphi 0, %s19
    %s23 = sphi 0, %s20
    %s24 = sphi 0, %s21
    %s40 = sphi 0, %s42
    %s43 = sphi 0, %s40
    %s44 = sphi 0, %s43
    %s60 = sphi 0, %s44
    %s68 = sphi 0, %s70
    %s71 = sphi 0, %s68
    %s72 = sphi 0, %s71
    %s88 = sphi 0, %s72
    %s94 = sphi 0, %s96
    %s97 = sphi 0, %s94
    %s98 = sphi 0, %s97
    %s114 = sphi 0, %s98
    %s124 = sphi 0, %s126
    %s127 = sphi 0, %s124
    %s128 = sphi 0, %s127
    %s144 = sphi 0, %s128
  $region4: #{_generator_forward_impl.14} parent=0 // loop_header_branch
    %12 = sbr.rel (%p10) target = $region8
  $region5: #{_generator_forward_impl.14} parent=0 // loop_body
    %s14 = ssub.s32 %s9, 1
    %s15 = ssub.s32 %s9, 2
    %s25 = sadd.s32 1, %s18
    %p26 = scmp.ge.s32.totalorder %s25, 1
    %s27 = scalar_select %p26, 0, %s25
    %s28 = sadd.s32 1, %s17
    %s29 = scalar_select %p26, %s28, %s17
    %p30 = scmp.ge.s32.totalorder %s29, 1
    %s31 = scalar_select %p30, 0, %s29
    %s32 = sadd.s32 1, %s16
    %s33 = scalar_select %p30, %s32, %s16
    %p34 = scmp.ge.s32.totalorder %s33, 4
    %s35 = scalar_select %p34, 0, %s33
    %s36 = ssub.s32 %s16, %s35
    %s37 = ssub.s32 %s17, %s31
    %s38 = sor.u32 %s36, %s37
    %p39 = scmp.eq.s32.totalorder %s38, 0
    %s41 = sadd.s32 %s40, 1
    %s42 = scalar_select %p39, %s40, %s41
    %p45 = pneg %p39
    %p46 = scmp.eq.s32.totalorder %s9, 3
    %p47 = por %p45, %p46
    %p48 = scmp.ne.s32.totalorder %s40, %s43
    %p49 = scmp.eq.s32.totalorder %s9, 0
    %p50 = por %p48, %p49
    %p51 = scmp.ne.s32.totalorder %s40, %s43
    %p52 = scmp.eq.s32.totalorder %s14, 3
    %p53 = por %p51, %p52
    %p54 = scmp.ne.s32.totalorder %s43, %s44
    %p55 = scmp.eq.s32.totalorder %s14, 0
    %p56 = por %p54, %p55
    %p57 = scmp.ne.s32.totalorder %s43, %s44
    %p58 = scmp.eq.s32.totalorder %s15, 3
    %p59 = por %p57, %p58
    %p61 = scmp.ne.s32.totalorder %s44, %s60
    %p62 = scmp.eq.s32.totalorder %s15, 0
    %p63 = por %p61, %p62
    %s64 = ssub.s32 %s16, %s35
    %s65 = ssub.s32 %s18, %s27
    %s66 = sor.u32 %s64, %s65
    %p67 = scmp.eq.s32.totalorder %s66, 0
    %s69 = sadd.s32 %s68, 1
    %s70 = scalar_select %p67, %s68, %s69
    %p73 = pneg %p67
    %p74 = scmp.eq.s32.totalorder %s9, 3
    %p75 = por %p73, %p74
    %p76 = scmp.ne.s32.totalorder %s68, %s71
    %p77 = scmp.eq.s32.totalorder %s9, 0
    %p78 = por %p76, %p77
    %p79 = scmp.ne.s32.totalorder %s68, %s71
    %p80 = scmp.eq.s32.totalorder %s14, 3
    %p81 = por %p79, %p80
    %p82 = scmp.ne.s32.totalorder %s71, %s72
    %p83 = scmp.eq.s32.totalorder %s14, 0
    %p84 = por %p82, %p83
    %p85 = scmp.ne.s32.totalorder %s71, %s72
    %p86 = scmp.eq.s32.totalorder %s15, 3
    %p87 = por %p85, %p86
    %p89 = scmp.ne.s32.totalorder %s72, %s88
    %p90 = scmp.eq.s32.totalorder %s15, 0
    %p91 = por %p89, %p90
    %s92 = ssub.s32 %s18, %s27
    %p93 = scmp.eq.s32.totalorder %s92, 0
    %s95 = sadd.s32 %s94, 1
    %s96 = scalar_select %p93, %s94, %s95
    %p99 = pneg %p93
    %p100 = scmp.eq.s32.totalorder %s9, 3
    %p101 = por %p99, %p100
    %p102 = scmp.ne.s32.totalorder %s94, %s97
    %p103 = scmp.eq.s32.totalorder %s9, 0
    %p104 = por %p102, %p103
    %p105 = scmp.ne.s32.totalorder %s94, %s97
    %p106 = scmp.eq.s32.totalorder %s14, 3
    %p107 = por %p105, %p106
    %p108 = scmp.ne.s32.totalorder %s97, %s98
    %p109 = scmp.eq.s32.totalorder %s14, 0
    %p110 = por %p108, %p109
    %p111 = scmp.ne.s32.totalorder %s97, %s98
    %p112 = scmp.eq.s32.totalorder %s15, 3
    %p113 = por %p111, %p112
    %p115 = scmp.ne.s32.totalorder %s98, %s114
    %p116 = scmp.eq.s32.totalorder %s15, 0
    %p117 = por %p115, %p116
    %s118 = ssub.s32 %s16, %s35
    %s119 = ssub.s32 %s17, %s31
    %s120 = sor.u32 %s118, %s119
    %s121 = ssub.s32 %s18, %s27
    %s122 = sor.u32 %s120, %s121
    %p123 = scmp.eq.s32.totalorder %s122, 0
    %s125 = sadd.s32 %s124, 1
    %s126 = scalar_select %p123, %s124, %s125
    %p129 = pneg %p123
    %p130 = scmp.eq.s32.totalorder %s9, 3
    %p131 = por %p129, %p130
    %p132 = scmp.ne.s32.totalorder %s124, %s127
    %p133 = scmp.eq.s32.totalorder %s9, 0
    %p134 = por %p132, %p133
    %p135 = scmp.ne.s32.totalorder %s124, %s127
    %p136 = scmp.eq.s32.totalorder %s14, 3
    %p137 = por %p135, %p136
    %p138 = scmp.ne.s32.totalorder %s127, %s128
    %p139 = scmp.eq.s32.totalorder %s14, 0
    %p140 = por %p138, %p139
    %p141 = scmp.ne.s32.totalorder %s127, %s128
    %p142 = scmp.eq.s32.totalorder %s15, 3
    %p143 = por %p141, %p142
    %p145 = scmp.ne.s32.totalorder %s128, %s144
    %p146 = scmp.eq.s32.totalorder %s15, 0
    %p147 = por %p145, %p146
    %p148 = scmp.le.s32.totalorder 1, %s9
    %p149 = scmp.lt.s32.totalorder %s9, 5
    %p150 = pnand %p148, %p149
    %p151 = pneg %p150
    // Predicated region
    $region9: #{_generator_forward_impl.14} parent=5 // pred_check
      _
    $region10: #{_generator_forward_impl.14} parent=5 // pred_check_branch
      %153 = sbr.rel (%p150) target = $region12
    $region11: #{_generator_forward_impl.14} parent=5 // pred_region
      %s154 = ssub.s32 %s9, 1
      // Predicated region
      $region13: #{_generator_forward_impl.14} parent=11 // pred_check
        %p155 = pneg %p110
      $region14: #{_generator_forward_impl.14} parent=11 // pred_check_branch
        %157 = sbr.rel (%p155) target = $region16
      $region15: #{_generator_forward_impl.14} parent=11 // pred_region
        %p158 = scmp.lt.s32.totalorder %s21, 0
        %s159 = scalar_select %p158, %s21, 0
        %s160 = scalar_lea.vmem %s2, %s159
      $region16: #{_generator_forward_impl.14} parent=11 // pred_fallthru
        _
    $region12: #{_generator_forward_impl.14} parent=5 // pred_fallthru
      _
    %p161 = scmp.lt.s32.totalorder %s9, 4
    // Predicated region
    $region17: #{_generator_forward_impl.14} parent=5 // pred_check
      %p162 = pneg %p161
    $region18: #{_generator_forward_impl.14} parent=5 // pred_check_branch
      %164 = sbr.rel (%p162) target = $region20
    $region19: #{_generator_forward_impl.14} parent=5 // pred_region
      // Predicated region
      $region21: #{_generator_forward_impl.14} parent=19 // pred_check
        %p165 = pneg %p50
      $region22: #{_generator_forward_impl.14} parent=19 // pred_check_branch
        %167 = sbr.rel (%p165) target = $region24
      $region23: #{_generator_forward_impl.14} parent=19 // pred_region
        %s168 = smul.u32 4, %s17
        %p169 = scmp.lt.s32.totalorder %s16, 3
        %s170 = scalar_select %p169, %s16, 3
        %p171 = scmp.lt.s32.totalorder %s168, 3
        %s172 = scalar_select %p171, %s168, 3
        %s173 = smul.addr %s172, 4
        %s174 = smul.addr %s170, 16
        %s175 = sadd.s32 %s173, %s174
        %s176 = smul.addr %s175, 4
        %s177 = scalar_lea.vmem %s0, %s176
        %s178 = smul.u32 4, %s17
      $region24: #{_generator_forward_impl.14} parent=19 // pred_fallthru
        _
      // Predicated region
      $region25: #{_generator_forward_impl.14} parent=19 // pred_check
        %p179 = pneg %p78
      $region26: #{_generator_forward_impl.14} parent=19 // pred_check_branch
        %181 = sbr.rel (%p179) target = $region28
      $region27: #{_generator_forward_impl.14} parent=19 // pred_region
        %p182 = scmp.lt.s32.totalorder %s16, 3
        %s183 = scalar_select %p182, %s16, 3
        %p184 = scmp.lt.s32.totalorder %s18, 0
        %s185 = scalar_select %p184, %s18, 0
        %s186 = smul.addr %s183, 64
        %s187 = sadd.s32 %s185, %s186
        %s188 = smul.addr %s187, 4
        %s189 = scalar_lea.vmem %s1, %s188
      $region28: #{_generator_forward_impl.14} parent=19 // pred_fallthru
        _
    $region20: #{_generator_forward_impl.14} parent=5 // pred_fallthru
      _
    %p190 = scmp.le.s32.totalorder 1, %s9
    %p191 = scmp.lt.s32.totalorder %s9, 5
    %p192 = pnand %p190, %p191
    %p193 = pneg %p192
    // Predicated region
    $region29: #{_generator_forward_impl.14} parent=5 // pred_check
      _
    $region30: #{_generator_forward_impl.14} parent=5 // pred_check_branch
      %195 = sbr.rel (%p192) target = $region32
    $region31: #{_generator_forward_impl.14} parent=5 // pred_region
      %s196 = ssub.s32 %s9, 1
      %s197 = smul.u32 4, %s20
      %p198 = scmp.lt.s32.totalorder %s19, 3
      %s199 = scalar_select %p198, %s19, 3
      %p200 = scmp.lt.s32.totalorder %s197, 3
      %s201 = scalar_select %p200, %s197, 3
      %s202 = smul.addr %s201, 4
      %s203 = smul.addr %s199, 16
      %s204 = sadd.s32 %s202, %s203
      %s205 = smul.addr %s204, 4
      %s206 = scalar_lea.vmem %s0, %s205
      %p207 = pneg %p56
      %p208 = pneg %p53
      %p209 = scmp.lt.s32.totalorder %s19, 3
      %s210 = scalar_select %p209, %s19, 3
      %p211 = scmp.lt.s32.totalorder %s21, 0
      %s212 = scalar_select %p211, %s21, 0
      %s213 = smul.addr %s210, 64
      %s214 = sadd.s32 %s212, %s213
      %s215 = smul.addr %s214, 4
      %s216 = scalar_lea.vmem %s1, %s215
      %p217 = pneg %p84
      %p218 = pneg %p81
      %p219 = scmp.lt.s32.totalorder %s21, 0
      %s220 = scalar_select %p219, %s21, 0
      %s221 = scalar_lea.vmem %s2, %s220
      %p222 = pneg %p110
      %p223 = pneg %p107
      %p224 = pneg %p140
      %p225 = pneg %p137
      %s226 = smul.u32 4, %s20
      %p227 = scmp.lt.s32.totalorder %s19, 3
      %s228 = scalar_select %p227, %s19, 3
      %p229 = scmp.lt.s32.totalorder %s226, 3
      %s230 = scalar_select %p229, %s226, 3
      %p231 = scmp.lt.s32.totalorder %s21, 0
      %s232 = scalar_select %p231, %s21, 0
      %s233 = sadd.s32 %s232, %s230
      %s234 = smul.addr %s228, 4
      %s235 = sadd.s32 %s233, %s234
      %s236 = smul.addr %s235, 4
      %s237 = scalar_lea.vmem %s3, %s236
      %s238 = smul.u32 4, %s20
      %p239 = scmp.lt.s32.totalorder %s19, 3
      %s240 = scalar_select %p239, %s19, 3
      %p241 = scmp.lt.s32.totalorder %s238, 3
      %s242 = scalar_select %p241, %s238, 3
      %s243 = smul.addr %s242, 4
      %s244 = smul.addr %s240, 16
      %s245 = sadd.s32 %s243, %s244
      %s246 = smul.addr %s245, 4
      %s247 = scalar_lea.vmem %s0, %s246
      %s248 = smul.u32 4, %s20
      %p249 = scmp.lt.s32.totalorder %s19, 3
      %s250 = scalar_select %p249, %s19, 3
      %p251 = scmp.lt.s32.totalorder %s21, 0
      %s252 = scalar_select %p251, %s21, 0
      %s253 = smul.addr %s250, 64
      %s254 = sadd.s32 %s252, %s253
      %s255 = smul.addr %s254, 4
      %s256 = scalar_lea.vmem %s1, %s255
      %p257 = scmp.lt.s32.totalorder %s21, 0
      %s258 = scalar_select %p257, %s21, 0
      %s259 = scalar_lea.vmem %s2, %s258
      %s260 = smul.u32 4, %s20
      %p261 = scmp.lt.s32.totalorder %s19, 3
      %s262 = scalar_select %p261, %s19, 3
      %p263 = scmp.lt.s32.totalorder %s260, 3
      %s264 = scalar_select %p263, %s260, 3
      %p265 = scmp.lt.s32.totalorder %s21, 0
      %s266 = scalar_select %p265, %s21, 0
      %s267 = sadd.s32 %s266, %s264
      %s268 = smul.addr %s262, 4
      %s269 = sadd.s32 %s267, %s268
      %s270 = smul.addr %s269, 4
      %s271 = scalar_lea.vmem %s3, %s270
      %s272 = smul.u32 4, %s20
      %v274 = vld [vmem:[%s247] sm:$0xff]
      %v275 = vld [vmem:[%s247 + $0x8] sm:$0xff]
      %v276 = vld [vmem:[%s247 + $0x10] sm:$0xff]
      %v277 = vld [vmem:[%s247 + $0x18] sm:$0xff]
      %v278 = vld [vmem:[%s247 + $0x20] sm:$0xff]
      %v279 = vld [vmem:[%s247 + $0x28] sm:$0xff]
      %v280 = vld [vmem:[%s247 + $0x30] sm:$0xff]
      %v281 = vld [vmem:[%s247 + $0x38] sm:$0xff]
      %v282 = vld [vmem:[%s256] sm:$0xf]
      %v283 = vld [vmem:[%s256 + $0x4] sm:$0xf]
      %v284 = vld [vmem:[%s256 + $0x8] sm:$0xf]
      %v285 = vld [vmem:[%s256 + $0xc] sm:$0xf]
      %v286 = vld [vmem:[%s256 + $0x10] sm:$0xf]
      %v287 = vld [vmem:[%s256 + $0x14] sm:$0xf]
      %v288 = vld [vmem:[%s256 + $0x18] sm:$0xf]
      %v289 = vld [vmem:[%s256 + $0x1c] sm:$0xf]
      %v290 = vld [vmem:[%s256 + $0x20] sm:$0xf]
      %v291 = vld [vmem:[%s256 + $0x24] sm:$0xf]
      %v292 = vld [vmem:[%s256 + $0x28] sm:$0xf]
      %v293 = vld [vmem:[%s256 + $0x2c] sm:$0xf]
      %v294 = vld [vmem:[%s256 + $0x30] sm:$0xf]
      %v295 = vld [vmem:[%s256 + $0x34] sm:$0xf]
      %v296 = vld [vmem:[%s256 + $0x38] sm:$0xf]
      %v297 = vld [vmem:[%s256 + $0x3c] sm:$0xf]
      %v298 = vld [vmem:[%s256 + $0x40] sm:$0xf]
      %v299 = vld [vmem:[%s256 + $0x44] sm:$0xf]
      %v300 = vld [vmem:[%s256 + $0x48] sm:$0xf]
      %v301 = vld [vmem:[%s256 + $0x4c] sm:$0xf]
      %v302 = vld [vmem:[%s256 + $0x50] sm:$0xf]
      %v303 = vld [vmem:[%s256 + $0x54] sm:$0xf]
      %v304 = vld [vmem:[%s256 + $0x58] sm:$0xf]
      %v305 = vld [vmem:[%s256 + $0x5c] sm:$0xf]
      %v306 = vld [vmem:[%s256 + $0x60] sm:$0xf]
      %v307 = vld [vmem:[%s256 + $0x64] sm:$0xf]
      %v308 = vld [vmem:[%s256 + $0x68] sm:$0xf]
      %v309 = vld [vmem:[%s256 + $0x6c] sm:$0xf]
      %v310 = vld [vmem:[%s256 + $0x70] sm:$0xf]
      %v311 = vld [vmem:[%s256 + $0x74] sm:$0xf]
      %v312 = vld [vmem:[%s256 + $0x78] sm:$0xf]
      %v313 = vld [vmem:[%s256 + $0x7c] sm:$0xf]
      %v314 = vld [vmem:[%s256 + $0x80] sm:$0xf]
      %v315 = vld [vmem:[%s256 + $0x84] sm:$0xf]
      %v316 = vld [vmem:[%s256 + $0x88] sm:$0xf]
      %v317 = vld [vmem:[%s256 + $0x8c] sm:$0xf]
      %v318 = vld [vmem:[%s256 + $0x90] sm:$0xf]
      %v319 = vld [vmem:[%s256 + $0x94] sm:$0xf]
      %v320 = vld [vmem:[%s256 + $0x98] sm:$0xf]
      %v321 = vld [vmem:[%s256 + $0x9c] sm:$0xf]
      %v322 = vld [vmem:[%s256 + $0xa0] sm:$0xf]
      %v323 = vld [vmem:[%s256 + $0xa4] sm:$0xf]
      %v324 = vld [vmem:[%s256 + $0xa8] sm:$0xf]
      %v325 = vld [vmem:[%s256 + $0xac] sm:$0xf]
      %v326 = vld [vmem:[%s256 + $0xb0] sm:$0xf]
      %v327 = vld [vmem:[%s256 + $0xb4] sm:$0xf]
      %v328 = vld [vmem:[%s256 + $0xb8] sm:$0xf]
      %v329 = vld [vmem:[%s256 + $0xbc] sm:$0xf]
      %v330 = vld [vmem:[%s256 + $0xc0] sm:$0xf]
      %v331 = vld [vmem:[%s256 + $0xc4] sm:$0xf]
      %v332 = vld [vmem:[%s256 + $0xc8] sm:$0xf]
      %v333 = vld [vmem:[%s256 + $0xcc] sm:$0xf]
      %v334 = vld [vmem:[%s256 + $0xd0] sm:$0xf]
      %v335 = vld [vmem:[%s256 + $0xd4] sm:$0xf]
      %v336 = vld [vmem:[%s256 + $0xd8] sm:$0xf]
      %v337 = vld [vmem:[%s256 + $0xdc] sm:$0xf]
      %v338 = vld [vmem:[%s256 + $0xe0] sm:$0xf]
      %v339 = vld [vmem:[%s256 + $0xe4] sm:$0xf]
      %v340 = vld [vmem:[%s256 + $0xe8] sm:$0xf]
      %v341 = vld [vmem:[%s256 + $0xec] sm:$0xf]
      %v342 = vld [vmem:[%s256 + $0xf0] sm:$0xf]
      %v343 = vld [vmem:[%s256 + $0xf4] sm:$0xf]
      %v344 = vld [vmem:[%s256 + $0xf8] sm:$0xf]
      %v345 = vld [vmem:[%s256 + $0xfc] sm:$0xf]
      %v346 = vld [vmem:[%s259] sm:$0x1]
      %v348 = vlaneseq
      %v349 = vshrl.u32 %v348, 7
      %v350 = vsub.s32 0, %v349
      %v351 = vrot.slane %v346, %v350
      %v361 = vunpack.c.l.b16 %v274
      %v362 = vunpack.c.h.b16 %v274
      %v363 = vunpack.c.l.b16 %v275
      %v364 = vunpack.c.h.b16 %v275
      %v365 = vunpack.c.l.b16 %v276
      %v366 = vunpack.c.h.b16 %v276
      %v367 = vunpack.c.l.b16 %v277
      %v368 = vunpack.c.h.b16 %v277
      %v369 = vunpack.c.l.b16 %v278
      %v370 = vunpack.c.h.b16 %v278
      %v371 = vunpack.c.l.b16 %v279
      %v372 = vunpack.c.h.b16 %v279
      %v373 = vunpack.c.l.b16 %v280
      %v374 = vunpack.c.h.b16 %v280
      %v375 = vunpack.c.l.b16 %v281
      %v376 = vunpack.c.h.b16 %v281
      %v377 = vpack.c.b16 %v365, %v361
      %v378 = vpack.c.b16 %v366, %v362
      %v379 = vpack.c.b16 %v367, %v363
      %v380 = vpack.c.b16 %v368, %v364
      %v381 = vpack.c.b16 %v373, %v369
      %v382 = vpack.c.b16 %v374, %v370
      %v383 = vpack.c.b16 %v375, %v371
      %v384 = vpack.c.b16 %v376, %v372
      %v457 = vunpack.c.l.b16 %v282
      %v458 = vunpack.c.l.b16 %v283
      %v459 = vunpack.c.l.b16 %v284
      %v460 = vunpack.c.l.b16 %v285
      %v461 = vunpack.c.l.b16 %v286
      %v462 = vunpack.c.l.b16 %v287
      %v463 = vunpack.c.l.b16 %v288
      %v464 = vunpack.c.l.b16 %v289
      %v465 = vunpack.c.l.b16 %v290
      %v466 = vunpack.c.l.b16 %v291
      %v467 = vunpack.c.l.b16 %v292
      %v468 = vunpack.c.l.b16 %v293
      %v469 = vunpack.c.l.b16 %v294
      %v470 = vunpack.c.l.b16 %v295
      %v471 = vunpack.c.l.b16 %v296
      %v472 = vunpack.c.l.b16 %v297
      %v473 = vunpack.c.l.b16 %v298
      %v474 = vunpack.c.l.b16 %v299
      %v475 = vunpack.c.l.b16 %v300
      %v476 = vunpack.c.l.b16 %v301
      %v477 = vunpack.c.l.b16 %v302
      %v478 = vunpack.c.l.b16 %v303
      %v479 = vunpack.c.l.b16 %v304
      %v480 = vunpack.c.l.b16 %v305
      %v481 = vunpack.c.l.b16 %v306
      %v482 = vunpack.c.l.b16 %v307
      %v483 = vunpack.c.l.b16 %v308
      %v484 = vunpack.c.l.b16 %v309
      %v485 = vunpack.c.l.b16 %v310
      %v486 = vunpack.c.l.b16 %v311
      %v487 = vunpack.c.l.b16 %v312
      %v488 = vunpack.c.l.b16 %v313
      %v489 = vunpack.c.l.b16 %v314
      %v490 = vunpack.c.l.b16 %v315
      %v491 = vunpack.c.l.b16 %v316
      %v492 = vunpack.c.l.b16 %v317
      %v493 = vunpack.c.l.b16 %v318
      %v494 = vunpack.c.l.b16 %v319
      %v495 = vunpack.c.l.b16 %v320
      %v496 = vunpack.c.l.b16 %v321
      %v497 = vunpack.c.l.b16 %v322
      %v498 = vunpack.c.l.b16 %v323
      %v499 = vunpack.c.l.b16 %v324
      %v500 = vunpack.c.l.b16 %v325
      %v501 = vunpack.c.l.b16 %v326
      %v502 = vunpack.c.l.b16 %v327
      %v503 = vunpack.c.l.b16 %v328
      %v504 = vunpack.c.l.b16 %v329
      %v505 = vunpack.c.l.b16 %v330
      %v506 = vunpack.c.l.b16 %v331
      %v507 = vunpack.c.l.b16 %v332
      %v508 = vunpack.c.l.b16 %v333
      %v509 = vunpack.c.l.b16 %v334
      %v510 = vunpack.c.l.b16 %v335
      %v511 = vunpack.c.l.b16 %v336
      %v512 = vunpack.c.l.b16 %v337
      %v513 = vunpack.c.l.b16 %v338
      %v514 = vunpack.c.l.b16 %v339
      %v515 = vunpack.c.l.b16 %v340
      %v516 = vunpack.c.l.b16 %v341
      %v517 = vunpack.c.l.b16 %v342
      %v518 = vunpack.c.l.b16 %v343
      %v519 = vunpack.c.l.b16 %v344
      %v520 = vunpack.c.l.b16 %v345
      %v521 = vpack.c.b16 %v458, %v457
      %v522 = vpack.c.b16 %v460, %v459
      %v523 = vpack.c.b16 %v462, %v461
      %v524 = vpack.c.b16 %v464, %v463
      %v525 = vpack.c.b16 %v466, %v465
      %v526 = vpack.c.b16 %v468, %v467
      %v527 = vpack.c.b16 %v470, %v469
      %v528 = vpack.c.b16 %v472, %v471
      %v529 = vpack.c.b16 %v474, %v473
      %v530 = vpack.c.b16 %v476, %v475
      %v531 = vpack.c.b16 %v478, %v477
      %v532 = vpack.c.b16 %v480, %v479
      %v533 = vpack.c.b16 %v482, %v481
      %v534 = vpack.c.b16 %v484, %v483
      %v535 = vpack.c.b16 %v486, %v485
      %v536 = vpack.c.b16 %v488, %v487
      %v537 = vpack.c.b16 %v490, %v489
      %v538 = vpack.c.b16 %v492, %v491
      %v539 = vpack.c.b16 %v494, %v493
      %v540 = vpack.c.b16 %v496, %v495
      %v541 = vpack.c.b16 %v498, %v497
      %v542 = vpack.c.b16 %v500, %v499
      %v543 = vpack.c.b16 %v502, %v501
      %v544 = vpack.c.b16 %v504, %v503
      %v545 = vpack.c.b16 %v506, %v505
      %v546 = vpack.c.b16 %v508, %v507
      %v547 = vpack.c.b16 %v510, %v509
      %v548 = vpack.c.b16 %v512, %v511
      %v549 = vpack.c.b16 %v514, %v513
      %v550 = vpack.c.b16 %v516, %v515
      %v551 = vpack.c.b16 %v518, %v517
      %v552 = vpack.c.b16 %v520, %v519
      %585 = vmatprep.subr.bf16.mxu0 0
      %586 = vmatpush1.bf16.msra.mxu0 %v521
      %587 = vmatprep.subr.bf16.mxu0 0
      %588 = vmatpush1.bf16.msra.mxu0 %v522
      %589 = vmatprep.subr.bf16.mxu0 0
      %590 = vmatpush1.bf16.msra.mxu0 %v523
      %591 = vmatprep.subr.bf16.mxu0 0
      %592 = vmatpush1.bf16.msra.mxu0 %v524
      %593 = vmatprep.subr.bf16.mxu0 0
      %594 = vmatpush1.bf16.msra.mxu0 %v525
      %595 = vmatprep.subr.bf16.mxu0 0
      %596 = vmatpush1.bf16.msra.mxu0 %v526
      %597 = vmatprep.subr.bf16.mxu0 0
      %598 = vmatpush1.bf16.msra.mxu0 %v527
      %599 = vmatprep.subr.bf16.mxu0 0
      %600 = vmatpush1.bf16.msra.mxu0 %v528
      %601 = vmatprep.subr.bf16.mxu0 0
      %602 = vmatpush1.bf16.msra.mxu0 %v529
      %603 = vmatprep.subr.bf16.mxu0 0
      %604 = vmatpush1.bf16.msra.mxu0 %v530
      %605 = vmatprep.subr.bf16.mxu0 0
      %606 = vmatpush1.bf16.msra.mxu0 %v531
      %607 = vmatprep.subr.bf16.mxu0 0
      %608 = vmatpush1.bf16.msra.mxu0 %v532
      %609 = vmatprep.subr.bf16.mxu0 0
      %610 = vmatpush1.bf16.msra.mxu0 %v533
      %611 = vmatprep.subr.bf16.mxu0 0
      %612 = vmatpush1.bf16.msra.mxu0 %v534
      %613 = vmatprep.subr.bf16.mxu0 0
      %614 = vmatpush1.bf16.msra.mxu0 %v535
      %615 = vmatprep.subr.bf16.mxu0 0
      %616 = vmatpush1.bf16.msra.mxu0 %v536
      %617 = vmatprep.mubr.bf16.mxu0 %v378
      %618 = vmatmul.mubr.bf16.gmra.mrb[0].mxu0 %v377
      %v619 = vpop.f32.mrb[0].mxu0
      %v620 = vadd.f32 %v351, %v619
      %v621 = vpop.f32.mrb[0].mxu0
      %v622 = vpop.f32.mrb[0].mxu0
      %v623 = vadd.f32 %v351, %v622
      %v624 = vpop.f32.mrb[0].mxu0
      %625 = vmatprep.mubr.bf16.mxu0 %v382
      %626 = vmatmul.mubr.bf16.gmra.mrb[0].mxu0 %v381
      %v627 = vpop.f32.mrb[0].mxu0
      %v628 = vadd.f32 %v351, %v627
      %v629 = vpop.f32.mrb[0].mxu0
      %v630 = vpop.f32.mrb[0].mxu0
      %v631 = vadd.f32 %v351, %v630
      %v632 = vpop.f32.mrb[0].mxu0
      %633 = vdwg.mxu0
      %634 = vmatprep.subr.bf16.mxu0 0
      %635 = vmatpush1.bf16.msra.mxu0 %v537
      %636 = vmatprep.subr.bf16.mxu0 0
      %637 = vmatpush1.bf16.msra.mxu0 %v538
      %638 = vmatprep.subr.bf16.mxu0 0
      %639 = vmatpush1.bf16.msra.mxu0 %v539
      %640 = vmatprep.subr.bf16.mxu0 0
      %641 = vmatpush1.bf16.msra.mxu0 %v540
      %642 = vmatprep.subr.bf16.mxu0 0
      %643 = vmatpush1.bf16.msra.mxu0 %v541
      %644 = vmatprep.subr.bf16.mxu0 0
      %645 = vmatpush1.bf16.msra.mxu0 %v542
      %646 = vmatprep.subr.bf16.mxu0 0
      %647 = vmatpush1.bf16.msra.mxu0 %v543
      %648 = vmatprep.subr.bf16.mxu0 0
      %649 = vmatpush1.bf16.msra.mxu0 %v544
      %650 = vmatprep.subr.bf16.mxu0 0
      %651 = vmatpush1.bf16.msra.mxu0 %v545
      %652 = vmatprep.subr.bf16.mxu0 0
      %653 = vmatpush1.bf16.msra.mxu0 %v546
      %654 = vmatprep.subr.bf16.mxu0 0
      %655 = vmatpush1.bf16.msra.mxu0 %v547
      %656 = vmatprep.subr.bf16.mxu0 0
      %657 = vmatpush1.bf16.msra.mxu0 %v548
      %658 = vmatprep.subr.bf16.mxu0 0
      %659 = vmatpush1.bf16.msra.mxu0 %v549
      %660 = vmatprep.subr.bf16.mxu0 0
      %661 = vmatpush1.bf16.msra.mxu0 %v550
      %662 = vmatprep.subr.bf16.mxu0 0
      %663 = vmatpush1.bf16.msra.mxu0 %v551
      %664 = vmatprep.subr.bf16.mxu0 0
      %665 = vmatpush1.bf16.msra.mxu0 %v552
      %666 = vmatprep.mubr.bf16.mxu0 %v380
      %667 = vmatmul.mubr.bf16.gmra.mrb[0].mxu0 %v379
      %v668 = vpop.f32.mrb[0].mxu0
      %v669 = vadd.f32 %v620, %v668
      %v670 = vpop.f32.mrb[0].mxu0
      %v671 = vpop.f32.mrb[0].mxu0
      %v672 = vadd.f32 %v623, %v671
      %v673 = vpop.f32.mrb[0].mxu0
      %674 = vmatprep.mubr.bf16.mxu0 %v384
      %675 = vmatmul.mubr.bf16.gmra.mrb[0].mxu0 %v383
      %v676 = vpop.f32.mrb[0].mxu0
      %v677 = vadd.f32 %v628, %v676
      %v678 = vpop.f32.mrb[0].mxu0
      %v679 = vpop.f32.mrb[0].mxu0
      %v680 = vadd.f32 %v631, %v679
      %v681 = vpop.f32.mrb[0].mxu0
      %682 = vdwg.mxu0
      %v683 = vmax.f32 %v669, 0.0
      %v684 = vmax.f32 %v672, 0.0
      %v685 = vmax.f32 %v677, 0.0
      %v686 = vmax.f32 %v680, 0.0
      %v687 = vpack.c.bf16 %v684, %v683
      %v688 = vpack.c.bf16 %v686, %v685
      %v691 = vunpack.c.l.b16 %v687
      %v692 = vunpack.c.h.b16 %v687
      %v693 = vunpack.c.l.b16 %v688
      %v694 = vunpack.c.h.b16 %v688
      %v695 = vpack.c.b16 %v691, %v691
      %v696 = vpack.c.b16 %v692, %v692
      %v697 = vpack.c.b16 %v693, %v693
      %v698 = vpack.c.b16 %v694, %v694
      %703 = vst [vmem:[%s271] sm:$0xf] %v695
      %704 = vst [vmem:[%s271 + $0x4] sm:$0xf] %v696
      %705 = vst [vmem:[%s271 + $0x8] sm:$0xf] %v697
      %706 = vst [vmem:[%s271 + $0xc] sm:$0xf] %v698
      %s707 = smul.u32 4, %s20
      %p708 = scmp.lt.s32.totalorder %s19, 3
      %s709 = scalar_select %p708, %s19, 3
      %p710 = scmp.lt.s32.totalorder %s707, 3
      %s711 = scalar_select %p710, %s707, 3
      %p712 = scmp.lt.s32.totalorder %s21, 0
      %s713 = scalar_select %p712, %s21, 0
      %s714 = sadd.s32 %s713, %s711
      %s715 = smul.addr %s709, 4
      %s716 = sadd.s32 %s714, %s715
      %s717 = smul.addr %s716, 4
      %s718 = scalar_lea.vmem %s3, %s717
      // Predicated region
      $region33: #{_generator_forward_impl.14} parent=31 // pred_check
        %p719 = pneg %p137
      $region34: #{_generator_forward_impl.14} parent=31 // pred_check_branch
        %721 = sbr.rel (%p719) target = $region36
      $region35: #{_generator_forward_impl.14} parent=31 // pred_region
        %s722 = smul.u32 4, %s20
      $region36: #{_generator_forward_impl.14} parent=31 // pred_fallthru
        _
    $region32: #{_generator_forward_impl.14} parent=5 // pred_fallthru
      _
    %p723 = scmp.le.s32.totalorder 2, %s9
    // Predicated region
    $region37: #{_generator_forward_impl.14} parent=5 // pred_check
      %p724 = pneg %p723
    $region38: #{_generator_forward_impl.14} parent=5 // pred_check_branch
      %726 = sbr.rel (%p724) target = $region40
    $region39: #{_generator_forward_impl.14} parent=5 // pred_region
      %s727 = ssub.s32 %s9, 2
      // Predicated region
      $region41: #{_generator_forward_impl.14} parent=39 // pred_check
        %p728 = pneg %p143
      $region42: #{_generator_forward_impl.14} parent=39 // pred_check_branch
        %730 = sbr.rel (%p728) target = $region44
      $region43: #{_generator_forward_impl.14} parent=39 // pred_region
        %s731 = smul.u32 4, %s23
        %p732 = scmp.lt.s32.totalorder %s22, 3
        %s733 = scalar_select %p732, %s22, 3
        %p734 = scmp.lt.s32.totalorder %s731, 3
        %s735 = scalar_select %p734, %s731, 3
        %p736 = scmp.lt.s32.totalorder %s24, 0
        %s737 = scalar_select %p736, %s24, 0
        %s738 = sadd.s32 %s737, %s735
        %s739 = smul.addr %s733, 4
        %s740 = sadd.s32 %s738, %s739
        %s741 = smul.addr %s740, 4
        %s742 = scalar_lea.vmem %s3, %s741
      $region44: #{_generator_forward_impl.14} parent=39 // pred_fallthru
        _
    $region40: #{_generator_forward_impl.14} parent=5 // pred_fallthru
      _
  $region6: #{_generator_forward_impl.14} parent=0 // loop_footer
    %s13 = sadd.s32 1, %s9
  $region7: #{_generator_forward_impl.14} parent=0 // loop_footer_branch
    %8 = sbr.rel target = $region3
  $region8: #{_generator_forward_impl.14} parent=0 // loop_exit
    _

// kernel: _generator_forward_impl.15
$region0: #{_generator_forward_impl.15}
  #allocation0 [shape = 'u32[]', space=smem, size = 0x4, offset = 0x4, fixed_abs, tag = 'smem constant byte address 0x4 - core index']
  #allocation1 [shape = 'u32[144,128]{1,0:T(1,128)}', space=vmem, size = 0x12000, scoped, tag = 'internal scratch']
  %s0 = inlined_call_operand.vmem [shape: bf16[4,128,256], index: 0, kind: input, shape index: {}]
  %s1 = inlined_call_operand.vmem [shape: bf16[4,256,128], index: 1, kind: input, shape index: {}]
  %s2 = inlined_call_operand.vmem [shape: f32[1,128], index: 2, kind: input, shape index: {}]
  %s3 = inlined_call_operand.vmem [shape: f32[4,128,128], index: 3, kind: output, shape index: {}]
  %s4 = sld [smem:[#allocation0]]
  $region45: #{_generator_forward_impl.15} parent=0
    _
  %s6 = ssub.s32 1, %s4
  %s7 = scalar_select 0, %s6, %s4
  loop: start=0, step=1, limit=6
  $region2: #{_generator_forward_impl.15} parent=0 // loop_pre_header
    _
  $region3: #{_generator_forward_impl.15} parent=0 // loop_header
    %s9 = sphi 0, %s13
    %p10 = scmp.ge.s32.totalorder %s9, 6
    %s16 = sphi 0, %s35
    %s17 = sphi 0, %s31
    %s18 = sphi 0, %s27
    %s19 = sphi 0, %s16
    %s20 = sphi 0, %s17
    %s21 = sphi 0, %s18
    %s22 = sphi 0, %s19
    %s23 = sphi 0, %s20
    %s24 = sphi 0, %s21
    %s40 = sphi 0, %s42
    %s43 = sphi 0, %s40
    %s44 = sphi 0, %s43
    %s60 = sphi 0, %s44
    %s68 = sphi 0, %s70
    %s71 = sphi 0, %s68
    %s72 = sphi 0, %s71
    %s88 = sphi 0, %s72
    %s94 = sphi 0, %s96
    %s97 = sphi 0, %s94
    %s98 = sphi 0, %s97
    %s114 = sphi 0, %s98
    %s124 = sphi 0, %s126
    %s127 = sphi 0, %s124
    %s128 = sphi 0, %s127
    %s144 = sphi 0, %s128
  $region4: #{_generator_forward_impl.15} parent=0 // loop_header_branch
    %12 = sbr.rel (%p10) target = $region8
  $region5: #{_generator_forward_impl.15} parent=0 // loop_body
    %s14 = ssub.s32 %s9, 1
    %s15 = ssub.s32 %s9, 2
    %s25 = sadd.s32 1, %s18
    %p26 = scmp.ge.s32.totalorder %s25, 1
    %s27 = scalar_select %p26, 0, %s25
    %s28 = sadd.s32 1, %s17
    %s29 = scalar_select %p26, %s28, %s17
    %p30 = scmp.ge.s32.totalorder %s29, 1
    %s31 = scalar_select %p30, 0, %s29
    %s32 = sadd.s32 1, %s16
    %s33 = scalar_select %p30, %s32, %s16
    %p34 = scmp.ge.s32.totalorder %s33, 4
    %s35 = scalar_select %p34, 0, %s33
    %s36 = ssub.s32 %s16, %s35
    %s37 = ssub.s32 %s17, %s31
    %s38 = sor.u32 %s36, %s37
    %p39 = scmp.eq.s32.totalorder %s38, 0
    %s41 = sadd.s32 %s40, 1
    %s42 = scalar_select %p39, %s40, %s41
    %p45 = pneg %p39
    %p46 = scmp.eq.s32.totalorder %s9, 3
    %p47 = por %p45, %p46
    %p48 = scmp.ne.s32.totalorder %s40, %s43
    %p49 = scmp.eq.s32.totalorder %s9, 0
    %p50 = por %p48, %p49
    %p51 = scmp.ne.s32.totalorder %s40, %s43
    %p52 = scmp.eq.s32.totalorder %s14, 3
    %p53 = por %p51, %p52
    %p54 = scmp.ne.s32.totalorder %s43, %s44
    %p55 = scmp.eq.s32.totalorder %s14, 0
    %p56 = por %p54, %p55
    %p57 = scmp.ne.s32.totalorder %s43, %s44
    %p58 = scmp.eq.s32.totalorder %s15, 3
    %p59 = por %p57, %p58
    %p61 = scmp.ne.s32.totalorder %s44, %s60
    %p62 = scmp.eq.s32.totalorder %s15, 0
    %p63 = por %p61, %p62
    %s64 = ssub.s32 %s16, %s35
    %s65 = ssub.s32 %s18, %s27
    %s66 = sor.u32 %s64, %s65
    %p67 = scmp.eq.s32.totalorder %s66, 0
    %s69 = sadd.s32 %s68, 1
    %s70 = scalar_select %p67, %s68, %s69
    %p73 = pneg %p67
    %p74 = scmp.eq.s32.totalorder %s9, 3
    %p75 = por %p73, %p74
    %p76 = scmp.ne.s32.totalorder %s68, %s71
    %p77 = scmp.eq.s32.totalorder %s9, 0
    %p78 = por %p76, %p77
    %p79 = scmp.ne.s32.totalorder %s68, %s71
    %p80 = scmp.eq.s32.totalorder %s14, 3
    %p81 = por %p79, %p80
    %p82 = scmp.ne.s32.totalorder %s71, %s72
    %p83 = scmp.eq.s32.totalorder %s14, 0
    %p84 = por %p82, %p83
    %p85 = scmp.ne.s32.totalorder %s71, %s72
    %p86 = scmp.eq.s32.totalorder %s15, 3
    %p87 = por %p85, %p86
    %p89 = scmp.ne.s32.totalorder %s72, %s88
    %p90 = scmp.eq.s32.totalorder %s15, 0
    %p91 = por %p89, %p90
    %s92 = ssub.s32 %s18, %s27
    %p93 = scmp.eq.s32.totalorder %s92, 0
    %s95 = sadd.s32 %s94, 1
    %s96 = scalar_select %p93, %s94, %s95
    %p99 = pneg %p93
    %p100 = scmp.eq.s32.totalorder %s9, 3
    %p101 = por %p99, %p100
    %p102 = scmp.ne.s32.totalorder %s94, %s97
    %p103 = scmp.eq.s32.totalorder %s9, 0
    %p104 = por %p102, %p103
    %p105 = scmp.ne.s32.totalorder %s94, %s97
    %p106 = scmp.eq.s32.totalorder %s14, 3
    %p107 = por %p105, %p106
    %p108 = scmp.ne.s32.totalorder %s97, %s98
    %p109 = scmp.eq.s32.totalorder %s14, 0
    %p110 = por %p108, %p109
    %p111 = scmp.ne.s32.totalorder %s97, %s98
    %p112 = scmp.eq.s32.totalorder %s15, 3
    %p113 = por %p111, %p112
    %p115 = scmp.ne.s32.totalorder %s98, %s114
    %p116 = scmp.eq.s32.totalorder %s15, 0
    %p117 = por %p115, %p116
    %s118 = ssub.s32 %s16, %s35
    %s119 = ssub.s32 %s17, %s31
    %s120 = sor.u32 %s118, %s119
    %s121 = ssub.s32 %s18, %s27
    %s122 = sor.u32 %s120, %s121
    %p123 = scmp.eq.s32.totalorder %s122, 0
    %s125 = sadd.s32 %s124, 1
    %s126 = scalar_select %p123, %s124, %s125
    %p129 = pneg %p123
    %p130 = scmp.eq.s32.totalorder %s9, 3
    %p131 = por %p129, %p130
    %p132 = scmp.ne.s32.totalorder %s124, %s127
    %p133 = scmp.eq.s32.totalorder %s9, 0
    %p134 = por %p132, %p133
    %p135 = scmp.ne.s32.totalorder %s124, %s127
    %p136 = scmp.eq.s32.totalorder %s14, 3
    %p137 = por %p135, %p136
    %p138 = scmp.ne.s32.totalorder %s127, %s128
    %p139 = scmp.eq.s32.totalorder %s14, 0
    %p140 = por %p138, %p139
    %p141 = scmp.ne.s32.totalorder %s127, %s128
    %p142 = scmp.eq.s32.totalorder %s15, 3
    %p143 = por %p141, %p142
    %p145 = scmp.ne.s32.totalorder %s128, %s144
    %p146 = scmp.eq.s32.totalorder %s15, 0
    %p147 = por %p145, %p146
    %p148 = scmp.le.s32.totalorder 1, %s9
    %p149 = scmp.lt.s32.totalorder %s9, 5
    %p150 = pnand %p148, %p149
    %p151 = pneg %p150
    // Predicated region
    $region9: #{_generator_forward_impl.15} parent=5 // pred_check
      _
    $region10: #{_generator_forward_impl.15} parent=5 // pred_check_branch
      %153 = sbr.rel (%p150) target = $region12
    $region11: #{_generator_forward_impl.15} parent=5 // pred_region
      %s154 = ssub.s32 %s9, 1
      // Predicated region
      $region13: #{_generator_forward_impl.15} parent=11 // pred_check
        %p155 = pneg %p110
      $region14: #{_generator_forward_impl.15} parent=11 // pred_check_branch
        %157 = sbr.rel (%p155) target = $region16
      $region15: #{_generator_forward_impl.15} parent=11 // pred_region
        %p158 = scmp.lt.s32.totalorder %s21, 0
        %s159 = scalar_select %p158, %s21, 0
        %s160 = scalar_lea.vmem %s2, %s159
      $region16: #{_generator_forward_impl.15} parent=11 // pred_fallthru
        _
    $region12: #{_generator_forward_impl.15} parent=5 // pred_fallthru
      _
    %p161 = scmp.lt.s32.totalorder %s9, 4
    // Predicated region
    $region17: #{_generator_forward_impl.15} parent=5 // pred_check
      %p162 = pneg %p161
    $region18: #{_generator_forward_impl.15} parent=5 // pred_check_branch
      %164 = sbr.rel (%p162) target = $region20
    $region19: #{_generator_forward_impl.15} parent=5 // pred_region
      // Predicated region
      $region21: #{_generator_forward_impl.15} parent=19 // pred_check
        %p165 = pneg %p50
      $region22: #{_generator_forward_impl.15} parent=19 // pred_check_branch
        %167 = sbr.rel (%p165) target = $region24
      $region23: #{_generator_forward_impl.15} parent=19 // pred_region
        %s168 = smul.u32 16, %s17
        %p169 = scmp.lt.s32.totalorder %s16, 3
        %s170 = scalar_select %p169, %s16, 3
        %p171 = scmp.lt.s32.totalorder %s168, 15
        %s172 = scalar_select %p171, %s168, 15
        %s173 = smul.addr %s172, 2
        %s174 = smul.addr %s170, 32
        %s175 = sadd.s32 %s173, %s174
        %s176 = smul.addr %s175, 4
        %s177 = scalar_lea.vmem %s0, %s176
        %s178 = smul.u32 16, %s17
      $region24: #{_generator_forward_impl.15} parent=19 // pred_fallthru
        _
      // Predicated region
      $region25: #{_generator_forward_impl.15} parent=19 // pred_check
        %p179 = pneg %p78
      $region26: #{_generator_forward_impl.15} parent=19 // pred_check_branch
        %181 = sbr.rel (%p179) target = $region28
      $region27: #{_generator_forward_impl.15} parent=19 // pred_region
        %p182 = scmp.lt.s32.totalorder %s16, 3
        %s183 = scalar_select %p182, %s16, 3
        %p184 = scmp.lt.s32.totalorder %s18, 0
        %s185 = scalar_select %p184, %s18, 0
        %s186 = smul.addr %s183, 32
        %s187 = sadd.s32 %s185, %s186
        %s188 = smul.addr %s187, 4
        %s189 = scalar_lea.vmem %s1, %s188
      $region28: #{_generator_forward_impl.15} parent=19 // pred_fallthru
        _
    $region20: #{_generator_forward_impl.15} parent=5 // pred_fallthru
      _
    %p190 = scmp.le.s32.totalorder 1, %s9
    %p191 = scmp.lt.s32.totalorder %s9, 5
    %p192 = pnand %p190, %p191
    %p193 = pneg %p192
    // Predicated region
    $region29: #{_generator_forward_impl.15} parent=5 // pred_check
      _
    $region30: #{_generator_forward_impl.15} parent=5 // pred_check_branch
      %195 = sbr.rel (%p192) target = $region32
    $region31: #{_generator_forward_impl.15} parent=5 // pred_region
      %s196 = ssub.s32 %s9, 1
      %s197 = smul.u32 16, %s20
      %p198 = scmp.lt.s32.totalorder %s19, 3
      %s199 = scalar_select %p198, %s19, 3
      %p200 = scmp.lt.s32.totalorder %s197, 15
      %s201 = scalar_select %p200, %s197, 15
      %s202 = smul.addr %s201, 2
      %s203 = smul.addr %s199, 32
      %s204 = sadd.s32 %s202, %s203
      %s205 = smul.addr %s204, 4
      %s206 = scalar_lea.vmem %s0, %s205
      %p207 = pneg %p56
      %p208 = pneg %p53
      %p209 = scmp.lt.s32.totalorder %s19, 3
      %s210 = scalar_select %p209, %s19, 3
      %p211 = scmp.lt.s32.totalorder %s21, 0
      %s212 = scalar_select %p211, %s21, 0
      %s213 = smul.addr %s210, 32
      %s214 = sadd.s32 %s212, %s213
      %s215 = smul.addr %s214, 4
      %s216 = scalar_lea.vmem %s1, %s215
      %p217 = pneg %p84
      %p218 = pneg %p81
      %p219 = scmp.lt.s32.totalorder %s21, 0
      %s220 = scalar_select %p219, %s21, 0
      %s221 = scalar_lea.vmem %s2, %s220
      %p222 = pneg %p110
      %p223 = pneg %p107
      %p224 = pneg %p140
      %p225 = pneg %p137
      %s226 = smul.u32 16, %s20
      %p227 = scmp.lt.s32.totalorder %s19, 3
      %s228 = scalar_select %p227, %s19, 3
      %p229 = scmp.lt.s32.totalorder %s226, 15
      %s230 = scalar_select %p229, %s226, 15
      %p231 = scmp.lt.s32.totalorder %s21, 0
      %s232 = scalar_select %p231, %s21, 0
      %s233 = sadd.s32 %s232, %s230
      %s234 = smul.addr %s228, 16
      %s235 = sadd.s32 %s233, %s234
      %s236 = smul.addr %s235, 8
      %s237 = scalar_lea.vmem %s3, %s236
      %s238 = smul.u32 16, %s20
      %p239 = scmp.lt.s32.totalorder %s19, 3
      %s240 = scalar_select %p239, %s19, 3
      %p241 = scmp.lt.s32.totalorder %s238, 15
      %s242 = scalar_select %p241, %s238, 15
      %s243 = smul.addr %s242, 2
      %s244 = smul.addr %s240, 32
      %s245 = sadd.s32 %s243, %s244
      %s246 = smul.addr %s245, 4
      %s247 = scalar_lea.vmem %s0, %s246
      %s248 = smul.u32 16, %s20
      %p249 = scmp.lt.s32.totalorder %s19, 3
      %s250 = scalar_select %p249, %s19, 3
      %p251 = scmp.lt.s32.totalorder %s21, 0
      %s252 = scalar_select %p251, %s21, 0
      %s253 = smul.addr %s250, 32
      %s254 = sadd.s32 %s252, %s253
      %s255 = smul.addr %s254, 4
      %s256 = scalar_lea.vmem %s1, %s255
      %p257 = scmp.lt.s32.totalorder %s21, 0
      %s258 = scalar_select %p257, %s21, 0
      %s259 = scalar_lea.vmem %s2, %s258
      %s260 = smul.u32 16, %s20
      %p261 = scmp.lt.s32.totalorder %s19, 3
      %s262 = scalar_select %p261, %s19, 3
      %p263 = scmp.lt.s32.totalorder %s260, 15
      %s264 = scalar_select %p263, %s260, 15
      %p265 = scmp.lt.s32.totalorder %s21, 0
      %s266 = scalar_select %p265, %s21, 0
      %s267 = sadd.s32 %s266, %s264
      %s268 = smul.addr %s262, 16
      %s269 = sadd.s32 %s267, %s268
      %s270 = smul.addr %s269, 8
      %s271 = scalar_lea.vmem %s3, %s270
      %s272 = smul.u32 16, %s20
      %v274 = vld [vmem:[%s247] sm:$0xff]
      %v275 = vld [vmem:[%s247 + $0x8] sm:$0xff]
      %v276 = vld [vmem:[%s247 + $0x10] sm:$0xff]
      %v277 = vld [vmem:[%s247 + $0x18] sm:$0xff]
      %v278 = vld [vmem:[%s247 + $0x20] sm:$0xff]
      %v279 = vld [vmem:[%s247 + $0x28] sm:$0xff]
      %v280 = vld [vmem:[%s247 + $0x30] sm:$0xff]
      %v281 = vld [vmem:[%s247 + $0x38] sm:$0xff]
      %v282 = vld [vmem:[%s247 + $0x40] sm:$0xff]
      %v283 = vld [vmem:[%s247 + $0x48] sm:$0xff]
      %v284 = vld [vmem:[%s247 + $0x50] sm:$0xff]
      %v285 = vld [vmem:[%s247 + $0x58] sm:$0xff]
      %v286 = vld [vmem:[%s247 + $0x60] sm:$0xff]
      %v287 = vld [vmem:[%s247 + $0x68] sm:$0xff]
      %v288 = vld [vmem:[%s247 + $0x70] sm:$0xff]
      %v289 = vld [vmem:[%s247 + $0x78] sm:$0xff]
      %v290 = vld [vmem:[%s256] sm:$0xf]
      %v291 = vld [vmem:[%s256 + $0x4] sm:$0xf]
      %v292 = vld [vmem:[%s256 + $0x8] sm:$0xf]
      %v293 = vld [vmem:[%s256 + $0xc] sm:$0xf]
      %v294 = vld [vmem:[%s256 + $0x10] sm:$0xf]
      %v295 = vld [vmem:[%s256 + $0x14] sm:$0xf]
      %v296 = vld [vmem:[%s256 + $0x18] sm:$0xf]
      %v297 = vld [vmem:[%s256 + $0x1c] sm:$0xf]
      %v298 = vld [vmem:[%s256 + $0x20] sm:$0xf]
      %v299 = vld [vmem:[%s256 + $0x24] sm:$0xf]
      %v300 = vld [vmem:[%s256 + $0x28] sm:$0xf]
      %v301 = vld [vmem:[%s256 + $0x2c] sm:$0xf]
      %v302 = vld [vmem:[%s256 + $0x30] sm:$0xf]
      %v303 = vld [vmem:[%s256 + $0x34] sm:$0xf]
      %v304 = vld [vmem:[%s256 + $0x38] sm:$0xf]
      %v305 = vld [vmem:[%s256 + $0x3c] sm:$0xf]
      %v306 = vld [vmem:[%s256 + $0x40] sm:$0xf]
      %v307 = vld [vmem:[%s256 + $0x44] sm:$0xf]
      %v308 = vld [vmem:[%s256 + $0x48] sm:$0xf]
      %v309 = vld [vmem:[%s256 + $0x4c] sm:$0xf]
      %v310 = vld [vmem:[%s256 + $0x50] sm:$0xf]
      %v311 = vld [vmem:[%s256 + $0x54] sm:$0xf]
      %v312 = vld [vmem:[%s256 + $0x58] sm:$0xf]
      %v313 = vld [vmem:[%s256 + $0x5c] sm:$0xf]
      %v314 = vld [vmem:[%s256 + $0x60] sm:$0xf]
      %v315 = vld [vmem:[%s256 + $0x64] sm:$0xf]
      %v316 = vld [vmem:[%s256 + $0x68] sm:$0xf]
      %v317 = vld [vmem:[%s256 + $0x6c] sm:$0xf]
      %v318 = vld [vmem:[%s256 + $0x70] sm:$0xf]
      %v319 = vld [vmem:[%s256 + $0x74] sm:$0xf]
      %v320 = vld [vmem:[%s256 + $0x78] sm:$0xf]
      %v321 = vld [vmem:[%s256 + $0x7c] sm:$0xf]
      %v322 = vld [vmem:[%s259] sm:$0x1]
      %v324 = vlaneseq
      %v325 = vshrl.u32 %v324, 7
      %v326 = vsub.s32 0, %v325
      %v327 = vrot.slane %v322, %v326
      %v345 = vunpack.c.l.b16 %v274
      %v346 = vunpack.c.h.b16 %v274
      %v347 = vunpack.c.l.b16 %v275
      %v348 = vunpack.c.h.b16 %v275
      %v349 = vunpack.c.l.b16 %v276
      %v350 = vunpack.c.h.b16 %v276
      %v351 = vunpack.c.l.b16 %v277
      %v352 = vunpack.c.h.b16 %v277
      %v353 = vunpack.c.l.b16 %v278
      %v354 = vunpack.c.h.b16 %v278
      %v355 = vunpack.c.l.b16 %v279
      %v356 = vunpack.c.h.b16 %v279
      %v357 = vunpack.c.l.b16 %v280
      %v358 = vunpack.c.h.b16 %v280
      %v359 = vunpack.c.l.b16 %v281
      %v360 = vunpack.c.h.b16 %v281
      %v361 = vunpack.c.l.b16 %v282
      %v362 = vunpack.c.h.b16 %v282
      %v363 = vunpack.c.l.b16 %v283
      %v364 = vunpack.c.h.b16 %v283
      %v365 = vunpack.c.l.b16 %v284
      %v366 = vunpack.c.h.b16 %v284
      %v367 = vunpack.c.l.b16 %v285
      %v368 = vunpack.c.h.b16 %v285
      %v369 = vunpack.c.l.b16 %v286
      %v370 = vunpack.c.h.b16 %v286
      %v371 = vunpack.c.l.b16 %v287
      %v372 = vunpack.c.h.b16 %v287
      %v373 = vunpack.c.l.b16 %v288
      %v374 = vunpack.c.h.b16 %v288
      %v375 = vunpack.c.l.b16 %v289
      %v376 = vunpack.c.h.b16 %v289
      %v377 = vpack.c.b16 %v347, %v345
      %v378 = vpack.c.b16 %v348, %v346
      %v379 = vpack.c.b16 %v351, %v349
      %v380 = vpack.c.b16 %v352, %v350
      %v381 = vpack.c.b16 %v355, %v353
      %v382 = vpack.c.b16 %v356, %v354
      %v383 = vpack.c.b16 %v359, %v357
      %v384 = vpack.c.b16 %v360, %v358
      %v385 = vpack.c.b16 %v363, %v361
      %v386 = vpack.c.b16 %v364, %v362
      %v387 = vpack.c.b16 %v367, %v365
      %v388 = vpack.c.b16 %v368, %v366
      %v389 = vpack.c.b16 %v371, %v369
      %v390 = vpack.c.b16 %v372, %v370
      %v391 = vpack.c.b16 %v375, %v373
      %v392 = vpack.c.b16 %v376, %v374
      %v441 = vunpack.c.l.b16 %v290
      %v442 = vunpack.c.l.b16 %v291
      %v443 = vunpack.c.l.b16 %v292
      %v444 = vunpack.c.l.b16 %v293
      %v445 = vunpack.c.l.b16 %v294
      %v446 = vunpack.c.l.b16 %v295
      %v447 = vunpack.c.l.b16 %v296
      %v448 = vunpack.c.l.b16 %v297
      %v449 = vunpack.c.l.b16 %v298
      %v450 = vunpack.c.l.b16 %v299
      %v451 = vunpack.c.l.b16 %v300
      %v452 = vunpack.c.l.b16 %v301
      %v453 = vunpack.c.l.b16 %v302
      %v454 = vunpack.c.l.b16 %v303
      %v455 = vunpack.c.l.b16 %v304
      %v456 = vunpack.c.l.b16 %v305
      %v457 = vunpack.c.l.b16 %v306
      %v458 = vunpack.c.l.b16 %v307
      %v459 = vunpack.c.l.b16 %v308
      %v460 = vunpack.c.l.b16 %v309
      %v461 = vunpack.c.l.b16 %v310
      %v462 = vunpack.c.l.b16 %v311
      %v463 = vunpack.c.l.b16 %v312
      %v464 = vunpack.c.l.b16 %v313
      %v465 = vunpack.c.l.b16 %v314
      %v466 = vunpack.c.l.b16 %v315
      %v467 = vunpack.c.l.b16 %v316
      %v468 = vunpack.c.l.b16 %v317
      %v469 = vunpack.c.l.b16 %v318
      %v470 = vunpack.c.l.b16 %v319
      %v471 = vunpack.c.l.b16 %v320
      %v472 = vunpack.c.l.b16 %v321
      %v473 = vpack.c.b16 %v442, %v441
      %v474 = vpack.c.b16 %v444, %v443
      %v475 = vpack.c.b16 %v446, %v445
      %v476 = vpack.c.b16 %v448, %v447
      %v477 = vpack.c.b16 %v450, %v449
      %v478 = vpack.c.b16 %v452, %v451
      %v479 = vpack.c.b16 %v454, %v453
      %v480 = vpack.c.b16 %v456, %v455
      %v481 = vpack.c.b16 %v458, %v457
      %v482 = vpack.c.b16 %v460, %v459
      %v483 = vpack.c.b16 %v462, %v461
      %v484 = vpack.c.b16 %v464, %v463
      %v485 = vpack.c.b16 %v466, %v465
      %v486 = vpack.c.b16 %v468, %v467
      %v487 = vpack.c.b16 %v470, %v469
      %v488 = vpack.c.b16 %v472, %v471
      %505 = vmatprep.subr.bf16.mxu0 0
      %506 = vmatpush1.bf16.msra.mxu0 %v473
      %507 = vmatprep.subr.bf16.mxu0 0
      %508 = vmatpush1.bf16.msra.mxu0 %v474
      %509 = vmatprep.subr.bf16.mxu0 0
      %510 = vmatpush1.bf16.msra.mxu0 %v475
      %511 = vmatprep.subr.bf16.mxu0 0
      %512 = vmatpush1.bf16.msra.mxu0 %v476
      %513 = vmatprep.subr.bf16.mxu0 0
      %514 = vmatpush1.bf16.msra.mxu0 %v477
      %515 = vmatprep.subr.bf16.mxu0 0
      %516 = vmatpush1.bf16.msra.mxu0 %v478
      %517 = vmatprep.subr.bf16.mxu0 0
      %518 = vmatpush1.bf16.msra.mxu0 %v479
      %519 = vmatprep.subr.bf16.mxu0 0
      %520 = vmatpush1.bf16.msra.mxu0 %v480
      %521 = vmatprep.subr.bf16.mxu0 0
      %522 = vmatpush1.bf16.msra.mxu0 %v481
      %523 = vmatprep.subr.bf16.mxu0 0
      %524 = vmatpush1.bf16.msra.mxu0 %v482
      %525 = vmatprep.subr.bf16.mxu0 0
      %526 = vmatpush1.bf16.msra.mxu0 %v483
      %527 = vmatprep.subr.bf16.mxu0 0
      %528 = vmatpush1.bf16.msra.mxu0 %v484
      %529 = vmatprep.subr.bf16.mxu0 0
      %530 = vmatpush1.bf16.msra.mxu0 %v485
      %531 = vmatprep.subr.bf16.mxu0 0
      %532 = vmatpush1.bf16.msra.mxu0 %v486
      %533 = vmatprep.subr.bf16.mxu0 0
      %534 = vmatpush1.bf16.msra.mxu0 %v487
      %535 = vmatprep.subr.bf16.mxu0 0
      %536 = vmatpush1.bf16.msra.mxu0 %v488
      %537 = vmatprep.mubr.bf16.mxu0 %v378
      %538 = vmatmul.mubr.bf16.gmra.mrb[0].mxu0 %v377
      %v539 = vpop.f32.mrb[0].mxu0
      %v540 = vadd.f32 %v327, %v539
      %v541 = vpop.f32.mrb[0].mxu0
      %v542 = vpop.f32.mrb[0].mxu0
      %v543 = vadd.f32 %v327, %v542
      %v544 = vpop.f32.mrb[0].mxu0
      %545 = vmatprep.mubr.bf16.mxu0 %v380
      %546 = vmatmul.mubr.bf16.gmra.mrb[0].mxu0 %v379
      %v547 = vpop.f32.mrb[0].mxu0
      %v548 = vadd.f32 %v327, %v547
      %v549 = vpop.f32.mrb[0].mxu0
      %v550 = vpop.f32.mrb[0].mxu0
      %v551 = vadd.f32 %v327, %v550
      %v552 = vpop.f32.mrb[0].mxu0
      %553 = vmatprep.mubr.bf16.mxu0 %v382
      %554 = vmatmul.mubr.bf16.gmra.mrb[0].mxu0 %v381
      %v555 = vpop.f32.mrb[0].mxu0
      %v556 = vadd.f32 %v327, %v555
      %v557 = vpop.f32.mrb[0].mxu0
      %v558 = vpop.f32.mrb[0].mxu0
      %v559 = vadd.f32 %v327, %v558
      %v560 = vpop.f32.mrb[0].mxu0
      %561 = vmatprep.mubr.bf16.mxu0 %v384
      %562 = vmatmul.mubr.bf16.gmra.mrb[0].mxu0 %v383
      %v563 = vpop.f32.mrb[0].mxu0
      %v564 = vadd.f32 %v327, %v563
      %v565 = vpop.f32.mrb[0].mxu0
      %v566 = vpop.f32.mrb[0].mxu0
      %v567 = vadd.f32 %v327, %v566
      %v568 = vpop.f32.mrb[0].mxu0
      %569 = vmatprep.mubr.bf16.mxu0 %v386
      %570 = vmatmul.mubr.bf16.gmra.mrb[0].mxu0 %v385
      %v571 = vpop.f32.mrb[0].mxu0
      %v572 = vadd.f32 %v327, %v571
      %v573 = vpop.f32.mrb[0].mxu0
      %v574 = vpop.f32.mrb[0].mxu0
      %v575 = vadd.f32 %v327, %v574
      %v576 = vpop.f32.mrb[0].mxu0
      %577 = vmatprep.mubr.bf16.mxu0 %v388
      %578 = vmatmul.mubr.bf16.gmra.mrb[0].mxu0 %v387
      %v579 = vpop.f32.mrb[0].mxu0
      %v580 = vadd.f32 %v327, %v579
      %v581 = vpop.f32.mrb[0].mxu0
      %v582 = vpop.f32.mrb[0].mxu0
      %v583 = vadd.f32 %v327, %v582
      %v584 = vpop.f32.mrb[0].mxu0
      %585 = vmatprep.mubr.bf16.mxu0 %v390
      %586 = vmatmul.mubr.bf16.gmra.mrb[0].mxu0 %v389
      %v587 = vpop.f32.mrb[0].mxu0
      %v588 = vadd.f32 %v327, %v587
      %v589 = vpop.f32.mrb[0].mxu0
      %v590 = vpop.f32.mrb[0].mxu0
      %v591 = vadd.f32 %v327, %v590
      %v592 = vpop.f32.mrb[0].mxu0
      %593 = vmatprep.mubr.bf16.mxu0 %v392
      %594 = vmatmul.mubr.bf16.gmra.mrb[0].mxu0 %v391
      %v595 = vpop.f32.mrb[0].mxu0
      %v596 = vadd.f32 %v327, %v595
      %v597 = vpop.f32.mrb[0].mxu0
      %v598 = vpop.f32.mrb[0].mxu0
      %v599 = vadd.f32 %v327, %v598
      %v600 = vpop.f32.mrb[0].mxu0
      %601 = vdwg.mxu0
      %v602 = vtanh.pop %v540
      %v603 = vtanh.pop %v543
      %v604 = vtanh.pop %v548
      %v605 = vtanh.pop %v551
      %v606 = vtanh.pop %v556
      %v607 = vtanh.pop %v559
      %v608 = vtanh.pop %v564
      %v609 = vtanh.pop %v567
      %v610 = vtanh.pop %v572
      %v611 = vtanh.pop %v575
      %v612 = vtanh.pop %v580
      %v613 = vtanh.pop %v583
      %v614 = vtanh.pop %v588
      %v615 = vtanh.pop %v591
      %v616 = vtanh.pop %v596
      %v617 = vtanh.pop %v599
      %618 = vst [vmem:[%s271] sm:$0xff] %v602
      %619 = vst [vmem:[%s271 + $0x8] sm:$0xff] %v603
      %620 = vst [vmem:[%s271 + $0x10] sm:$0xff] %v604
      %621 = vst [vmem:[%s271 + $0x18] sm:$0xff] %v605
      %622 = vst [vmem:[%s271 + $0x20] sm:$0xff] %v606
      %623 = vst [vmem:[%s271 + $0x28] sm:$0xff] %v607
      %624 = vst [vmem:[%s271 + $0x30] sm:$0xff] %v608
      %625 = vst [vmem:[%s271 + $0x38] sm:$0xff] %v609
      %626 = vst [vmem:[%s271 + $0x40] sm:$0xff] %v610
      %627 = vst [vmem:[%s271 + $0x48] sm:$0xff] %v611
      %628 = vst [vmem:[%s271 + $0x50] sm:$0xff] %v612
      %629 = vst [vmem:[%s271 + $0x58] sm:$0xff] %v613
      %630 = vst [vmem:[%s271 + $0x60] sm:$0xff] %v614
      %631 = vst [vmem:[%s271 + $0x68] sm:$0xff] %v615
      %632 = vst [vmem:[%s271 + $0x70] sm:$0xff] %v616
      %633 = vst [vmem:[%s271 + $0x78] sm:$0xff] %v617
      %s634 = smul.u32 16, %s20
      %p635 = scmp.lt.s32.totalorder %s19, 3
      %s636 = scalar_select %p635, %s19, 3
      %p637 = scmp.lt.s32.totalorder %s634, 15
      %s638 = scalar_select %p637, %s634, 15
      %p639 = scmp.lt.s32.totalorder %s21, 0
      %s640 = scalar_select %p639, %s21, 0
      %s641 = sadd.s32 %s640, %s638
      %s642 = smul.addr %s636, 16
      %s643 = sadd.s32 %s641, %s642
      %s644 = smul.addr %s643, 8
      %s645 = scalar_lea.vmem %s3, %s644
      // Predicated region
      $region33: #{_generator_forward_impl.15} parent=31 // pred_check
        %p646 = pneg %p137
      $region34: #{_generator_forward_impl.15} parent=31 // pred_check_branch
        %648 = sbr.rel (%p646) target = $region36
      $region35: #{_generator_forward_impl.15} parent=31 // pred_region
        %s649 = smul.u32 16, %s20
      $region36: #{_generator_forward_impl.15} parent=31 // pred_fallthru
        _
    $region32: #{_generator_forward_impl.15} parent=5 // pred_fallthru
      _
    %p650 = scmp.le.s32.totalorder 2, %s9
    // Predicated region
    $region37: #{_generator_forward_impl.15} parent=5 // pred_check
      %p651 = pneg %p650
    $region38: #{_generator_forward_impl.15} parent=5 // pred_check_branch
      %653 = sbr.rel (%p651) target = $region40
    $region39: #{_generator_forward_impl.15} parent=5 // pred_region
      %s654 = ssub.s32 %s9, 2
      // Predicated region
      $region41: #{_generator_forward_impl.15} parent=39 // pred_check
        %p655 = pneg %p143
      $region42: #{_generator_forward_impl.15} parent=39 // pred_check_branch
        %657 = sbr.rel (%p655) target = $region44
      $region43: #{_generator_forward_impl.15} parent=39 // pred_region
        %s658 = smul.u32 16, %s23
        %p659 = scmp.lt.s32.totalorder %s22, 3
        %s660 = scalar_select %p659, %s22, 3
        %p661 = scmp.lt.s32.totalorder %s658, 15
        %s662 = scalar_select %p661, %s658, 15
        %p663 = scmp.lt.s32.totalorder %s24, 0
        %s664 = scalar_select %p663, %s24, 0
        %s665 = sadd.s32 %s664, %s662
        %s666 = smul.addr %s660, 16
        %s667 = sadd.s32 %s665, %s666
        %s668 = smul.addr %s667, 8
        %s669 = scalar_lea.vmem %s3, %s668
      $region44: #{_generator_forward_impl.15} parent=39 // pred_fallthru
        _
    $region40: #{_generator_forward_impl.15} parent=5 // pred_fallthru
      _
  $region6: #{_generator_forward_impl.15} parent=0 // loop_footer
    %s13 = sadd.s32 1, %s9
  $region7: #{_generator_forward_impl.15} parent=0 // loop_footer_branch
    %8 = sbr.rel target = $region3
  $region8: #{_generator_forward_impl.15} parent=0 // loop_exit
    _

</llo_original>
